<compile_context>
chip_gen: v6e
topology: v6e:2x2x1
jax: 0.10.0
libtpu: 0.0.40
codegen_flags: <defaults>
</compile_context>

<pallas_src>
import functools

import jax
import jax.numpy as jnp
from jax.experimental import pallas as pl
from jax.experimental.pallas import tpu as pltpu


# ----------------------------- kernel math ---------------------------------

def _maxpool2(x):
    """nn.MaxPool1d(kernel_size=2) along L.  x: (B, L, C) -> (B, L//2, C)."""
    b, l, c = x.shape
    return jnp.max(x.reshape(b, l // 2, 2, c), axis=2)


def _stack_taps(x):
    """(B, L, C) -> (B, L, 3C) with lanes [x[l-1], x[l], x[l+1]], zero-padded."""
    l = x.shape[1]
    z = jnp.zeros_like(x[:, :1, :])
    xp = jnp.concatenate([z, x, z], axis=1)          # (B, L+2, C)
    return jnp.concatenate(
        [xp[:, 0:l, :], xp[:, 1:l + 1, :], xp[:, 2:l + 2, :]], axis=-1)


def _pipeline(x, w1, s1, t1, w2f, s2, t2, w3f, s3, t3,
              wf1, bf1, wf2, bf2, *, compute_dtype):
    """Shared forward math.  x: (TB, L, 1) f32.  Returns (TB, NC_PAD) f32."""
    f32 = jnp.float32
    tb, seq, _ = x.shape

    # ---- conv1 (Ci=1): VPU broadcast multiply-adds, no MXU ----
    z = jnp.zeros_like(x[:, :1, :])
    xp = jnp.concatenate([z, x, z], axis=1)          # (TB, L+2, 1)
    y = (xp[:, 0:seq, :] * w1[0:1, :]
         + xp[:, 1:seq + 1, :] * w1[1:2, :]
         + xp[:, 2:seq + 2, :] * w1[2:3, :])         # (TB, L, 32)
    y = jnp.maximum(y * s1 + t1, 0.0)
    y = _maxpool2(y)                                 # (TB, L/2, 32)

    # ---- conv2: single fused-tap MXU matmul, K = 96 ----
    xs = _stack_taps(y).astype(compute_dtype)        # (TB, L/2, 96)
    y = jnp.einsum('blk,ko->blo', xs, w2f, preferred_element_type=f32)
    y = jnp.maximum(y * s2 + t2, 0.0)
    y = _maxpool2(y)                                 # (TB, L/4, 64)

    # ---- conv3: single fused-tap MXU matmul, K = 192 ----
    xs = _stack_taps(y).astype(compute_dtype)        # (TB, L/4, 192)
    y = jnp.einsum('blk,ko->blo', xs, w3f, preferred_element_type=f32)
    y = jnp.maximum(y * s3 + t3, 0.0)
    y = _maxpool2(y)                                 # (TB, L/8, 128)

    # ---- fc1 without flattening: contract (L3, C) per position ----
    l3 = y.shape[1]
    acc = jnp.zeros((tb, wf1.shape[-1]), f32)
    for l in range(l3):                              # static unroll, L3 = L//8
        acc = acc + jnp.dot(y[:, l, :].astype(compute_dtype), wf1[l],
                            preferred_element_type=f32)
    h = acc + bf1                                    # (TB, 128)

    # dropout(p=0.5) is identity in eval.
    # TODO(synk): training-mode dropout (random masking) is not reproduced.

    # ---- fc2: lane-dense (padded to 128) output ----
    out = jnp.dot(h.astype(compute_dtype), wf2, preferred_element_type=f32)
    return out + bf2                                 # (TB, NC_PAD)


def _cnn_kernel(x_ref,
                w1_ref, s1_ref, t1_ref,
                w2_ref, s2_ref, t2_ref,
                w3_ref, s3_ref, t3_ref,
                wf1_ref, bf1_ref, wf2_ref, bf2_ref,
                out_ref, *, compute_dtype):
    out = _pipeline(
        x_ref[...],
        w1_ref[...], s1_ref[...], t1_ref[...],
        w2_ref[...], s2_ref[...], t2_ref[...],
        w3_ref[...], s3_ref[...], t3_ref[...],
        wf1_ref[...], bf1_ref[...], wf2_ref[...], bf2_ref[...],
        compute_dtype=compute_dtype)
    out_ref[...] = out


# ------------------------------- wrapper -----------------------------------

def cnn_forward(x_ncl, kparams, num_classes, *, batch_tile=None,
                compute_dtype=jnp.float32):
    """x_ncl: (B, 1, L) float32 (PyTorch layout).  Returns (B, num_classes)."""
    b, cin, seq = x_ncl.shape
    assert cin == 1
    assert seq % 8 == 0, "seq_len must be divisible by 8 (3 pools of 2)"
    if batch_tile is None:
        batch_tile = b if b <= 8 else 8
    assert b % batch_tile == 0
    # Keep the output block (8,128)-aligned (unmasked lane-dense stores).
    assert batch_tile == b or batch_tile % 8 == 0
    g = b // batch_tile

    x = jnp.transpose(x_ncl, (0, 2, 1))              # (B, L, 1), channels-last
    (w1, s1, t1, w2f, s2, t2, w3f, s3, t3, wf1, bf1, wf2p, bf2p) = kparams
    # bf16 (or f32) operands for the wide-K matmuls; accumulation stays f32.
    w2f = w2f.astype(compute_dtype)
    w3f = w3f.astype(compute_dtype)
    wf1 = wf1.astype(compute_dtype)
    wf2p = wf2p.astype(compute_dtype)
    nc_pad = wf2p.shape[1]

    kernel = functools.partial(_cnn_kernel, compute_dtype=compute_dtype)

    # Activations: blocked per batch tile.  Weights: resident blocks
    # (index_map always (0, ...)) so they stay in VMEM across the grid.
    in_specs = [
        pl.BlockSpec((batch_tile, seq, 1), lambda i: (i, 0, 0)),   # x
        pl.BlockSpec(w1.shape, lambda i: (0, 0)),
        pl.BlockSpec(s1.shape, lambda i: (0, 0, 0)),
        pl.BlockSpec(t1.shape, lambda i: (0, 0, 0)),
        pl.BlockSpec(w2f.shape, lambda i: (0, 0)),
        pl.BlockSpec(s2.shape, lambda i: (0, 0, 0)),
        pl.BlockSpec(t2.shape, lambda i: (0, 0, 0)),
        pl.BlockSpec(w3f.shape, lambda i: (0, 0)),
        pl.BlockSpec(s3.shape, lambda i: (0, 0, 0)),
        pl.BlockSpec(t3.shape, lambda i: (0, 0, 0)),
        pl.BlockSpec(wf1.shape, lambda i: (0, 0, 0)),
        pl.BlockSpec(bf1.shape, lambda i: (0, 0)),
        pl.BlockSpec(wf2p.shape, lambda i: (0, 0)),
        pl.BlockSpec(bf2p.shape, lambda i: (0, 0)),
    ]
    # 2-D lane-dense output: block (batch_tile, 128) -> unmasked vst.
    out_spec = pl.BlockSpec((batch_tile, nc_pad), lambda i: (i, 0))

    out = pl.pallas_call(
        kernel,
        out_shape=jax.ShapeDtypeStruct((b, nc_pad), jnp.float32),
        grid=(g,),
        in_specs=in_specs,
        out_specs=out_spec,
        compiler_params=pltpu.CompilerParams(
            # batch tiles are independent -> megacore-shardable on v7x
            dimension_semantics=("parallel",),
            # explicit limit: above v5e's 16 MiB scoped default, within the
            # 32 MiB scoped default of v6e/v7x (v7x physical VMEM is 64 MiB).
            vmem_limit_bytes=32 * 1024 * 1024,
        ),
    )(x, w1, s1, t1, w2f, s2, t2, w3f, s3, t3, wf1, bf1, wf2p, bf2p)

    return out[:, :num_classes]


# --------------------------- parameter creation -----------------------------

def _conv_init(key, ci, co):
    """nn.Conv1d default init shapes: weight (co, ci, 3), bias (co,)."""
    kw, kb = jax.random.split(key)
    bound = 1.0 / (ci * 3) ** 0.5
    w = jax.random.uniform(kw, (co, ci, 3), jnp.float32, -bound, bound)
    b = jax.random.uniform(kb, (co,), jnp.float32, -bound, bound)
    return w, b


def _linear_init(key, fan_in, fan_out):
    kw, kb = jax.random.split(key)
    bound = 1.0 / fan_in ** 0.5
    w = jax.random.uniform(kw, (fan_out, fan_in), jnp.float32, -bound, bound)
    b = jax.random.uniform(kb, (fan_out,), jnp.float32, -bound, bound)
    return w, b


def make_raw_params(key, seq_len, num_classes):
    """Parameters in the original PyTorch layouts."""
    assert seq_len % 8 == 0
    k1, k2, k3, k4, k5 = jax.random.split(key, 5)
    w1, b1 = _conv_init(k1, 1, 32)
    w2, b2 = _conv_init(k2, 32, 64)
    w3, b3 = _conv_init(k3, 64, 128)
    wf1, bf1 = _linear_init(k4, 128 * (seq_len // 8), 128)
    wf2, bf2 = _linear_init(k5, 128, num_classes)
    return (w1, b1, w2, b2, w3, b3, wf1, bf1, wf2, bf2)


def _fold_bn(conv_bias, channels, *, gamma=None, beta=None, mean=None,
             var=None, eps=1e-5):
    """BatchNorm1d eval mode folded with the conv bias into scale/shift."""
    gamma = jnp.ones((channels,), jnp.float32) if gamma is None else gamma
    beta = jnp.zeros((channels,), jnp.float32) if beta is None else beta
    mean = jnp.zeros((channels,), jnp.float32) if mean is None else mean
    var = jnp.ones((channels,), jnp.float32) if var is None else var
    scale = gamma / jnp.sqrt(var + eps)
    shift = beta + (conv_bias - mean) * scale
    return scale.reshape(1, 1, channels), shift.reshape(1, 1, channels)


def pack_params(raw, seq_len, num_classes):
    """Permute/fold PyTorch-layout params into the kernel layouts."""
    (w1t, b1, w2t, b2, w3t, b3, wf1t, bf1, wf2t, bf2) = raw
    l3 = seq_len // 8

    # conv weights (Co, Ci, 3) -> fused-tap (3*Ci, Co); conv1 -> (3, 32)
    w1 = jnp.transpose(w1t, (2, 1, 0)).reshape(3, 32)
    w2f = jnp.transpose(w2t, (2, 1, 0)).reshape(3 * 32, 64)
    w3f = jnp.transpose(w3t, (2, 1, 0)).reshape(3 * 64, 128)

    s1, t1 = _fold_bn(b1, 32)
    s2, t2 = _fold_bn(b2, 64)
    s3, t3 = _fold_bn(b3, 128)

    # fc1: PyTorch flattens (B, C, L3) as c*L3 + l; kernel contracts (l, c).
    wf1 = wf1t.reshape(128, 128, l3).transpose(2, 1, 0)        # (L3, C, 128)
    bf1r = bf1.reshape(1, 128)

    # fc2: pad output dim to a lane-dense multiple of 128.
    nc_pad = ((num_classes + 127) // 128) * 128
    wf2p = jnp.zeros((128, nc_pad), jnp.float32).at[:, :num_classes].set(wf2t.T)
    bf2p = jnp.zeros((1, nc_pad), jnp.float32).at[:, :num_classes].set(
        bf2.reshape(1, -1))

    return (w1, s1, t1, w2f, s2, t2, w3f, s3, t3, wf1, bf1r, wf2p, bf2p)


# ------------------------------ references ----------------------------------

def _jax_reference(x_ncl, kparams, num_classes, compute_dtype):
    """Plain-JAX evaluation of the exact kernel math (same casts)."""
    x = jnp.transpose(x_ncl, (0, 2, 1))
    (w1, s1, t1, w2f, s2, t2, w3f, s3, t3, wf1, bf1, wf2p, bf2p) = kparams
    out = _pipeline(
        x, w1, s1, t1,
        w2f.astype(compute_dtype), s2, t2,
        w3f.astype(compute_dtype), s3, t3,
        wf1.astype(compute_dtype), bf1, wf2p.astype(compute_dtype), bf2p,
        compute_dtype=compute_dtype)
    return out[:, :num_classes]


def _torch_reference(x_ncl, raw, eps=1e-5):
    """Direct transcription of the PyTorch module (eval mode), NCL layout."""
    hi = jax.lax.Precision.HIGHEST

    def stage(x, w, b):
        y = jax.lax.conv_general_dilated(
            x, w, window_strides=(1,), padding=((1, 1),),
            dimension_numbers=("NCH", "OIH", "NCH"), precision=hi)
        y = y + b[None, :, None]
        y = y / jnp.sqrt(1.0 + eps)          # BN eval, default running stats
        y = jnp.maximum(y, 0.0)
        bn, cn, ln = y.shape
        return jnp.max(y.reshape(bn, cn, ln // 2, 2), axis=-1)

    (w1, b1, w2, b2, w3, b3, wf1, bf1, wf2, bf2) = raw
    y = stage(x_ncl, w1, b1)
    y = stage(y, w2, b2)
    y = stage(y, w3, b3)
    h = y.reshape(y.shape[0], -1)            # (B, C*L3), channel-major
    h = jnp.dot(h, wf1.T, precision=hi) + bf1
    return jnp.dot(h, wf2.T, precision=hi) + bf2


# --------------------------------- main -------------------------------------

if __name__ == "__main__":
    B, L, NUM_CLASSES = 16, 64, 4             # L divisible by 8 (three pools)
    key = jax.random.PRNGKey(0)
    kx, kp = jax.random.split(key)

    x = jax.random.normal(kx, (B, 1, L), dtype=jnp.float32)   # PyTorch (N,1,L)
    raw = make_raw_params(kp, L, NUM_CLASSES)
    kparams = pack_params(raw, L, NUM_CLASSES)

    # Single compile in main (keeps runtime short): exact f32 module numerics.
    # For v6e/v7x MXU throughput, pass compute_dtype=jnp.bfloat16 instead
    # (f32 accumulation is preserved either way).
    out32 = jax.block_until_ready(
        cnn_forward(x, kparams, NUM_CLASSES, batch_tile=8,
                    compute_dtype=jnp.float32))

    ref_torch = _torch_reference(x, raw)
    ref32 = _jax_reference(x, kparams, NUM_CLASSES, jnp.float32)

    assert out32.shape == (B, NUM_CLASSES)
    # Pallas lowering vs identical math in plain JAX.
    assert jnp.allclose(out32, ref32, atol=2e-3, rtol=2e-3)
    # Layout / semantics vs a direct transcription of the PyTorch module.
    assert jnp.allclose(out32, ref_torch, atol=2e-2, rtol=2e-2)

    print("KERNEL_OK")
</pallas_src>

<mosaic_0001>
module attributes {stable_mosaic.version = 11 : i64} {
  func.func @_cnn_kernel(%arg0: i32, %arg1: memref<8x64x1xf32, #tpu.memory_space<vmem>>, %arg2: memref<3x32xf32, #tpu.memory_space<vmem>>, %arg3: memref<1x1x32xf32, #tpu.memory_space<vmem>>, %arg4: memref<1x1x32xf32, #tpu.memory_space<vmem>>, %arg5: memref<96x64xf32, #tpu.memory_space<vmem>>, %arg6: memref<1x1x64xf32, #tpu.memory_space<vmem>>, %arg7: memref<1x1x64xf32, #tpu.memory_space<vmem>>, %arg8: memref<192x128xf32, #tpu.memory_space<vmem>>, %arg9: memref<1x1x128xf32, #tpu.memory_space<vmem>>, %arg10: memref<1x1x128xf32, #tpu.memory_space<vmem>>, %arg11: memref<8x128x128xf32, #tpu.memory_space<vmem>>, %arg12: memref<1x128xf32, #tpu.memory_space<vmem>>, %arg13: memref<128x128xf32, #tpu.memory_space<vmem>>, %arg14: memref<1x128xf32, #tpu.memory_space<vmem>>, %arg15: memref<8x128xf32, #tpu.memory_space<vmem>>) attributes {dimension_semantics = [#tpu.dimension_semantics<parallel>], iteration_bounds = array<i64: 2>, scalar_prefetch = 0 : i64, scratch_operands = 0 : i64, tpu.core_type = #tpu.core_type<tc>, window_params = [{transform_indices = @transform_0, window_bounds = array<i64: 8, 64, 1>}, {pipeline_mode = #tpu.pipeline_mode<synchronous>, transform_indices = @transform_1, window_bounds = array<i64: 3, 32>}, {pipeline_mode = #tpu.pipeline_mode<synchronous>, transform_indices = @transform_2, window_bounds = array<i64: 1, 1, 32>}, {pipeline_mode = #tpu.pipeline_mode<synchronous>, transform_indices = @transform_3, window_bounds = array<i64: 1, 1, 32>}, {pipeline_mode = #tpu.pipeline_mode<synchronous>, transform_indices = @transform_4, window_bounds = array<i64: 96, 64>}, {pipeline_mode = #tpu.pipeline_mode<synchronous>, transform_indices = @transform_5, window_bounds = array<i64: 1, 1, 64>}, {pipeline_mode = #tpu.pipeline_mode<synchronous>, transform_indices = @transform_6, window_bounds = array<i64: 1, 1, 64>}, {pipeline_mode = #tpu.pipeline_mode<synchronous>, transform_indices = @transform_7, window_bounds = array<i64: 192, 128>}, {pipeline_mode = #tpu.pipeline_mode<synchronous>, transform_indices = @transform_8, window_bounds = array<i64: 1, 1, 128>}, {pipeline_mode = #tpu.pipeline_mode<synchronous>, transform_indices = @transform_9, window_bounds = array<i64: 1, 1, 128>}, {pipeline_mode = #tpu.pipeline_mode<synchronous>, transform_indices = @transform_10, window_bounds = array<i64: 8, 128, 128>}, {pipeline_mode = #tpu.pipeline_mode<synchronous>, transform_indices = @transform_11, window_bounds = array<i64: 1, 128>}, {pipeline_mode = #tpu.pipeline_mode<synchronous>, transform_indices = @transform_12, window_bounds = array<i64: 128, 128>}, {pipeline_mode = #tpu.pipeline_mode<synchronous>, transform_indices = @transform_13, window_bounds = array<i64: 1, 128>}, {transform_indices = @transform_14, window_bounds = array<i64: 8, 128>}]} {
    %c0 = arith.constant 0 : index
    %c0_0 = arith.constant 0 : index
    %c0_1 = arith.constant 0 : index
    %0 = vector.load %arg1[%c0, %c0_0, %c0_1] : memref<8x64x1xf32, #tpu.memory_space<vmem>>, vector<8x64x1xf32>
    %c0_2 = arith.constant 0 : index
    %c0_3 = arith.constant 0 : index
    %1 = vector.load %arg2[%c0_2, %c0_3] : memref<3x32xf32, #tpu.memory_space<vmem>>, vector<3x32xf32>
    %c0_4 = arith.constant 0 : index
    %c0_5 = arith.constant 0 : index
    %c0_6 = arith.constant 0 : index
    %2 = vector.load %arg3[%c0_4, %c0_5, %c0_6] : memref<1x1x32xf32, #tpu.memory_space<vmem>>, vector<1x1x32xf32>
    %c0_7 = arith.constant 0 : index
    %c0_8 = arith.constant 0 : index
    %c0_9 = arith.constant 0 : index
    %3 = vector.load %arg4[%c0_7, %c0_8, %c0_9] : memref<1x1x32xf32, #tpu.memory_space<vmem>>, vector<1x1x32xf32>
    %c0_10 = arith.constant 0 : index
    %c0_11 = arith.constant 0 : index
    %4 = vector.load %arg5[%c0_10, %c0_11] : memref<96x64xf32, #tpu.memory_space<vmem>>, vector<96x64xf32>
    %c0_12 = arith.constant 0 : index
    %c0_13 = arith.constant 0 : index
    %c0_14 = arith.constant 0 : index
    %5 = vector.load %arg6[%c0_12, %c0_13, %c0_14] : memref<1x1x64xf32, #tpu.memory_space<vmem>>, vector<1x1x64xf32>
    %c0_15 = arith.constant 0 : index
    %c0_16 = arith.constant 0 : index
    %c0_17 = arith.constant 0 : index
    %6 = vector.load %arg7[%c0_15, %c0_16, %c0_17] : memref<1x1x64xf32, #tpu.memory_space<vmem>>, vector<1x1x64xf32>
    %c0_18 = arith.constant 0 : index
    %c0_19 = arith.constant 0 : index
    %7 = vector.load %arg8[%c0_18, %c0_19] : memref<192x128xf32, #tpu.memory_space<vmem>>, vector<192x128xf32>
    %c0_20 = arith.constant 0 : index
    %c0_21 = arith.constant 0 : index
    %c0_22 = arith.constant 0 : index
    %8 = vector.load %arg9[%c0_20, %c0_21, %c0_22] : memref<1x1x128xf32, #tpu.memory_space<vmem>>, vector<1x1x128xf32>
    %c0_23 = arith.constant 0 : index
    %c0_24 = arith.constant 0 : index
    %c0_25 = arith.constant 0 : index
    %9 = vector.load %arg10[%c0_23, %c0_24, %c0_25] : memref<1x1x128xf32, #tpu.memory_space<vmem>>, vector<1x1x128xf32>
    %c0_26 = arith.constant 0 : index
    %c0_27 = arith.constant 0 : index
    %c0_28 = arith.constant 0 : index
    %10 = vector.load %arg11[%c0_26, %c0_27, %c0_28] : memref<8x128x128xf32, #tpu.memory_space<vmem>>, vector<8x128x128xf32>
    %c0_29 = arith.constant 0 : index
    %c0_30 = arith.constant 0 : index
    %11 = vector.load %arg12[%c0_29, %c0_30] : memref<1x128xf32, #tpu.memory_space<vmem>>, vector<1x128xf32>
    %c0_31 = arith.constant 0 : index
    %c0_32 = arith.constant 0 : index
    %12 = vector.load %arg13[%c0_31, %c0_32] : memref<128x128xf32, #tpu.memory_space<vmem>>, vector<128x128xf32>
    %c0_33 = arith.constant 0 : index
    %c0_34 = arith.constant 0 : index
    %13 = vector.load %arg14[%c0_33, %c0_34] : memref<1x128xf32, #tpu.memory_space<vmem>>, vector<1x128xf32>
    %cst = arith.constant 0.000000e+00 : f32
    %14 = vector.broadcast %cst : f32 to vector<8x1x1xf32>
    %15 = tpu.concatenate %14, %0, %14 in 1 : vector<8x1x1xf32>, vector<8x64x1xf32>, vector<8x1x1xf32> -> vector<8x66x1xf32>
    %16 = vector.extract_strided_slice %15 {offsets = [0, 0, 0], sizes = [8, 64, 1], strides = [1, 1, 1]} : vector<8x66x1xf32> to vector<8x64x1xf32>
    %17 = vector.extract_strided_slice %1 {offsets = [0, 0], sizes = [1, 32], strides = [1, 1]} : vector<3x32xf32> to vector<1x32xf32>
    %18 = vector.shape_cast %17 : vector<1x32xf32> to vector<1x1x32xf32>
    %19 = vector.broadcast %16 : vector<8x64x1xf32> to vector<8x64x32xf32>
    %20 = vector.broadcast %18 : vector<1x1x32xf32> to vector<8x64x32xf32>
    %21 = arith.mulf %19, %20 : vector<8x64x32xf32>
    %22 = vector.extract_strided_slice %15 {offsets = [0, 1, 0], sizes = [8, 64, 1], strides = [1, 1, 1]} : vector<8x66x1xf32> to vector<8x64x1xf32>
    %23 = vector.extract_strided_slice %1 {offsets = [1, 0], sizes = [1, 32], strides = [1, 1]} : vector<3x32xf32> to vector<1x32xf32>
    %24 = vector.shape_cast %23 : vector<1x32xf32> to vector<1x1x32xf32>
    %25 = vector.broadcast %22 : vector<8x64x1xf32> to vector<8x64x32xf32>
    %26 = vector.broadcast %24 : vector<1x1x32xf32> to vector<8x64x32xf32>
    %27 = arith.mulf %25, %26 : vector<8x64x32xf32>
    %28 = arith.addf %21, %27 : vector<8x64x32xf32>
    %29 = vector.extract_strided_slice %15 {offsets = [0, 2, 0], sizes = [8, 64, 1], strides = [1, 1, 1]} : vector<8x66x1xf32> to vector<8x64x1xf32>
    %30 = vector.extract_strided_slice %1 {offsets = [2, 0], sizes = [1, 32], strides = [1, 1]} : vector<3x32xf32> to vector<1x32xf32>
    %31 = vector.shape_cast %30 : vector<1x32xf32> to vector<1x1x32xf32>
    %32 = vector.broadcast %29 : vector<8x64x1xf32> to vector<8x64x32xf32>
    %33 = vector.broadcast %31 : vector<1x1x32xf32> to vector<8x64x32xf32>
    %34 = arith.mulf %32, %33 : vector<8x64x32xf32>
    %35 = arith.addf %28, %34 : vector<8x64x32xf32>
    %36 = vector.broadcast %2 : vector<1x1x32xf32> to vector<8x64x32xf32>
    %37 = arith.mulf %35, %36 : vector<8x64x32xf32>
    %38 = vector.broadcast %3 : vector<1x1x32xf32> to vector<8x64x32xf32>
    %39 = arith.addf %37, %38 : vector<8x64x32xf32>
    %cst_35 = arith.constant 0.000000e+00 : f32
    %40 = vector.broadcast %cst_35 : f32 to vector<8x64x32xf32>
    %41 = arith.maximumf %39, %40 : vector<8x64x32xf32>
    %42 = vector.shape_cast %41 : vector<8x64x32xf32> to vector<8x32x2x32xf32>
    %cst_36 = arith.constant dense<0xFF800000> : vector<8x32x32xf32>
    %43 = vector.multi_reduction <maximumf>, %42, %cst_36 [2] : vector<8x32x2x32xf32> to vector<8x32x32xf32>
    %cst_37 = arith.constant 0.000000e+00 : f32
    %44 = vector.broadcast %cst_37 : f32 to vector<8x1x32xf32>
    %45 = tpu.concatenate %44, %43, %44 in 1 : vector<8x1x32xf32>, vector<8x32x32xf32>, vector<8x1x32xf32> -> vector<8x34x32xf32>
    %46 = vector.extract_strided_slice %45 {offsets = [0, 0, 0], sizes = [8, 32, 32], strides = [1, 1, 1]} : vector<8x34x32xf32> to vector<8x32x32xf32>
    %47 = vector.extract_strided_slice %45 {offsets = [0, 1, 0], sizes = [8, 32, 32], strides = [1, 1, 1]} : vector<8x34x32xf32> to vector<8x32x32xf32>
    %48 = vector.extract_strided_slice %45 {offsets = [0, 2, 0], sizes = [8, 32, 32], strides = [1, 1, 1]} : vector<8x34x32xf32> to vector<8x32x32xf32>
    %49 = tpu.concatenate %46, %47, %48 in 2 : vector<8x32x32xf32>, vector<8x32x32xf32>, vector<8x32x32xf32> -> vector<8x32x96xf32>
    "tpu.trace_start"() <{level = 10 : i32, message = "blk,ko->blo"}> : () -> ()
    %cst_38 = arith.constant dense<0.000000e+00> : vector<8x32x64xf32>
    %50 = tpu.matmul %49, %4, %cst_38 {dimension_numbers = #tpu.dot_dimension_numbers<[2], [0], [0, 1], [1], [0, 0, 0, 1, 1, 1], [], []>} : vector<8x32x96xf32>, vector<96x64xf32>, vector<8x32x64xf32> -> vector<8x32x64xf32>
    "tpu.trace_stop"() : () -> ()
    %51 = vector.broadcast %5 : vector<1x1x64xf32> to vector<8x32x64xf32>
    %52 = arith.mulf %50, %51 : vector<8x32x64xf32>
    %53 = vector.broadcast %6 : vector<1x1x64xf32> to vector<8x32x64xf32>
    %54 = arith.addf %52, %53 : vector<8x32x64xf32>
    %cst_39 = arith.constant 0.000000e+00 : f32
    %55 = vector.broadcast %cst_39 : f32 to vector<8x32x64xf32>
    %56 = arith.maximumf %54, %55 : vector<8x32x64xf32>
    %57 = vector.shape_cast %56 : vector<8x32x64xf32> to vector<8x16x2x64xf32>
    %cst_40 = arith.constant dense<0xFF800000> : vector<8x16x64xf32>
    %58 = vector.multi_reduction <maximumf>, %57, %cst_40 [2] : vector<8x16x2x64xf32> to vector<8x16x64xf32>
    %cst_41 = arith.constant 0.000000e+00 : f32
    %59 = vector.broadcast %cst_41 : f32 to vector<8x1x64xf32>
    %60 = tpu.concatenate %59, %58, %59 in 1 : vector<8x1x64xf32>, vector<8x16x64xf32>, vector<8x1x64xf32> -> vector<8x18x64xf32>
    %61 = vector.extract_strided_slice %60 {offsets = [0, 0, 0], sizes = [8, 16, 64], strides = [1, 1, 1]} : vector<8x18x64xf32> to vector<8x16x64xf32>
    %62 = vector.extract_strided_slice %60 {offsets = [0, 1, 0], sizes = [8, 16, 64], strides = [1, 1, 1]} : vector<8x18x64xf32> to vector<8x16x64xf32>
    %63 = vector.extract_strided_slice %60 {offsets = [0, 2, 0], sizes = [8, 16, 64], strides = [1, 1, 1]} : vector<8x18x64xf32> to vector<8x16x64xf32>
    %64 = tpu.concatenate %61, %62, %63 in 2 : vector<8x16x64xf32>, vector<8x16x64xf32>, vector<8x16x64xf32> -> vector<8x16x192xf32>
    "tpu.trace_start"() <{level = 10 : i32, message = "blk,ko->blo"}> : () -> ()
    %cst_42 = arith.constant dense<0.000000e+00> : vector<8x16x128xf32>
    %65 = tpu.matmul %64, %7, %cst_42 {dimension_numbers = #tpu.dot_dimension_numbers<[2], [0], [0, 1], [1], [0, 0, 0, 1, 1, 1], [], []>} : vector<8x16x192xf32>, vector<192x128xf32>, vector<8x16x128xf32> -> vector<8x16x128xf32>
    "tpu.trace_stop"() : () -> ()
    %66 = vector.broadcast %8 : vector<1x1x128xf32> to vector<8x16x128xf32>
    %67 = arith.mulf %65, %66 : vector<8x16x128xf32>
    %68 = vector.broadcast %9 : vector<1x1x128xf32> to vector<8x16x128xf32>
    %69 = arith.addf %67, %68 : vector<8x16x128xf32>
    %cst_43 = arith.constant 0.000000e+00 : f32
    %70 = vector.broadcast %cst_43 : f32 to vector<8x16x128xf32>
    %71 = arith.maximumf %69, %70 : vector<8x16x128xf32>
    %72 = vector.shape_cast %71 : vector<8x16x128xf32> to vector<8x8x2x128xf32>
    %cst_44 = arith.constant dense<0xFF800000> : vector<8x8x128xf32>
    %73 = vector.multi_reduction <maximumf>, %72, %cst_44 [2] : vector<8x8x2x128xf32> to vector<8x8x128xf32>
    %cst_45 = arith.constant 0.000000e+00 : f32
    %74 = vector.broadcast %cst_45 : f32 to vector<8x128xf32>
    %75 = vector.extract_strided_slice %73 {offsets = [0, 0, 0], sizes = [8, 1, 128], strides = [1, 1, 1]} : vector<8x8x128xf32> to vector<8x1x128xf32>
    %76 = vector.shape_cast %75 : vector<8x1x128xf32> to vector<8x128xf32>
    %77 = vector.extract_strided_slice %10 {offsets = [0, 0, 0], sizes = [1, 128, 128], strides = [1, 1, 1]} : vector<8x128x128xf32> to vector<1x128x128xf32>
    %78 = vector.shape_cast %77 : vector<1x128x128xf32> to vector<128x128xf32>
    %cst_46 = arith.constant dense<0.000000e+00> : vector<8x128xf32>
    %79 = tpu.matmul %76, %78, %cst_46 {dimension_numbers = #tpu.dot_dimension_numbers<[1], [0], [0], [1], [0, 0, 1, 1], [], []>} : vector<8x128xf32>, vector<128x128xf32>, vector<8x128xf32> -> vector<8x128xf32>
    %80 = arith.addf %74, %79 : vector<8x128xf32>
    %81 = vector.extract_strided_slice %73 {offsets = [0, 1, 0], sizes = [8, 1, 128], strides = [1, 1, 1]} : vector<8x8x128xf32> to vector<8x1x128xf32>
    %82 = vector.shape_cast %81 : vector<8x1x128xf32> to vector<8x128xf32>
    %83 = vector.extract_strided_slice %10 {offsets = [1, 0, 0], sizes = [1, 128, 128], strides = [1, 1, 1]} : vector<8x128x128xf32> to vector<1x128x128xf32>
    %84 = vector.shape_cast %83 : vector<1x128x128xf32> to vector<128x128xf32>
    %cst_47 = arith.constant dense<0.000000e+00> : vector<8x128xf32>
    %85 = tpu.matmul %82, %84, %cst_47 {dimension_numbers = #tpu.dot_dimension_numbers<[1], [0], [0], [1], [0, 0, 1, 1], [], []>} : vector<8x128xf32>, vector<128x128xf32>, vector<8x128xf32> -> vector<8x128xf32>
    %86 = arith.addf %80, %85 : vector<8x128xf32>
    %87 = vector.extract_strided_slice %73 {offsets = [0, 2, 0], sizes = [8, 1, 128], strides = [1, 1, 1]} : vector<8x8x128xf32> to vector<8x1x128xf32>
    %88 = vector.shape_cast %87 : vector<8x1x128xf32> to vector<8x128xf32>
    %89 = vector.extract_strided_slice %10 {offsets = [2, 0, 0], sizes = [1, 128, 128], strides = [1, 1, 1]} : vector<8x128x128xf32> to vector<1x128x128xf32>
    %90 = vector.shape_cast %89 : vector<1x128x128xf32> to vector<128x128xf32>
    %cst_48 = arith.constant dense<0.000000e+00> : vector<8x128xf32>
    %91 = tpu.matmul %88, %90, %cst_48 {dimension_numbers = #tpu.dot_dimension_numbers<[1], [0], [0], [1], [0, 0, 1, 1], [], []>} : vector<8x128xf32>, vector<128x128xf32>, vector<8x128xf32> -> vector<8x128xf32>
    %92 = arith.addf %86, %91 : vector<8x128xf32>
    %93 = vector.extract_strided_slice %73 {offsets = [0, 3, 0], sizes = [8, 1, 128], strides = [1, 1, 1]} : vector<8x8x128xf32> to vector<8x1x128xf32>
    %94 = vector.shape_cast %93 : vector<8x1x128xf32> to vector<8x128xf32>
    %95 = vector.extract_strided_slice %10 {offsets = [3, 0, 0], sizes = [1, 128, 128], strides = [1, 1, 1]} : vector<8x128x128xf32> to vector<1x128x128xf32>
    %96 = vector.shape_cast %95 : vector<1x128x128xf32> to vector<128x128xf32>
    %cst_49 = arith.constant dense<0.000000e+00> : vector<8x128xf32>
    %97 = tpu.matmul %94, %96, %cst_49 {dimension_numbers = #tpu.dot_dimension_numbers<[1], [0], [0], [1], [0, 0, 1, 1], [], []>} : vector<8x128xf32>, vector<128x128xf32>, vector<8x128xf32> -> vector<8x128xf32>
    %98 = arith.addf %92, %97 : vector<8x128xf32>
    %99 = vector.extract_strided_slice %73 {offsets = [0, 4, 0], sizes = [8, 1, 128], strides = [1, 1, 1]} : vector<8x8x128xf32> to vector<8x1x128xf32>
    %100 = vector.shape_cast %99 : vector<8x1x128xf32> to vector<8x128xf32>
    %101 = vector.extract_strided_slice %10 {offsets = [4, 0, 0], sizes = [1, 128, 128], strides = [1, 1, 1]} : vector<8x128x128xf32> to vector<1x128x128xf32>
    %102 = vector.shape_cast %101 : vector<1x128x128xf32> to vector<128x128xf32>
    %cst_50 = arith.constant dense<0.000000e+00> : vector<8x128xf32>
    %103 = tpu.matmul %100, %102, %cst_50 {dimension_numbers = #tpu.dot_dimension_numbers<[1], [0], [0], [1], [0, 0, 1, 1], [], []>} : vector<8x128xf32>, vector<128x128xf32>, vector<8x128xf32> -> vector<8x128xf32>
    %104 = arith.addf %98, %103 : vector<8x128xf32>
    %105 = vector.extract_strided_slice %73 {offsets = [0, 5, 0], sizes = [8, 1, 128], strides = [1, 1, 1]} : vector<8x8x128xf32> to vector<8x1x128xf32>
    %106 = vector.shape_cast %105 : vector<8x1x128xf32> to vector<8x128xf32>
    %107 = vector.extract_strided_slice %10 {offsets = [5, 0, 0], sizes = [1, 128, 128], strides = [1, 1, 1]} : vector<8x128x128xf32> to vector<1x128x128xf32>
    %108 = vector.shape_cast %107 : vector<1x128x128xf32> to vector<128x128xf32>
    %cst_51 = arith.constant dense<0.000000e+00> : vector<8x128xf32>
    %109 = tpu.matmul %106, %108, %cst_51 {dimension_numbers = #tpu.dot_dimension_numbers<[1], [0], [0], [1], [0, 0, 1, 1], [], []>} : vector<8x128xf32>, vector<128x128xf32>, vector<8x128xf32> -> vector<8x128xf32>
    %110 = arith.addf %104, %109 : vector<8x128xf32>
    %111 = vector.extract_strided_slice %73 {offsets = [0, 6, 0], sizes = [8, 1, 128], strides = [1, 1, 1]} : vector<8x8x128xf32> to vector<8x1x128xf32>
    %112 = vector.shape_cast %111 : vector<8x1x128xf32> to vector<8x128xf32>
    %113 = vector.extract_strided_slice %10 {offsets = [6, 0, 0], sizes = [1, 128, 128], strides = [1, 1, 1]} : vector<8x128x128xf32> to vector<1x128x128xf32>
    %114 = vector.shape_cast %113 : vector<1x128x128xf32> to vector<128x128xf32>
    %cst_52 = arith.constant dense<0.000000e+00> : vector<8x128xf32>
    %115 = tpu.matmul %112, %114, %cst_52 {dimension_numbers = #tpu.dot_dimension_numbers<[1], [0], [0], [1], [0, 0, 1, 1], [], []>} : vector<8x128xf32>, vector<128x128xf32>, vector<8x128xf32> -> vector<8x128xf32>
    %116 = arith.addf %110, %115 : vector<8x128xf32>
    %117 = vector.extract_strided_slice %73 {offsets = [0, 7, 0], sizes = [8, 1, 128], strides = [1, 1, 1]} : vector<8x8x128xf32> to vector<8x1x128xf32>
    %118 = vector.shape_cast %117 : vector<8x1x128xf32> to vector<8x128xf32>
    %119 = vector.extract_strided_slice %10 {offsets = [7, 0, 0], sizes = [1, 128, 128], strides = [1, 1, 1]} : vector<8x128x128xf32> to vector<1x128x128xf32>
    %120 = vector.shape_cast %119 : vector<1x128x128xf32> to vector<128x128xf32>
    %cst_53 = arith.constant dense<0.000000e+00> : vector<8x128xf32>
    %121 = tpu.matmul %118, %120, %cst_53 {dimension_numbers = #tpu.dot_dimension_numbers<[1], [0], [0], [1], [0, 0, 1, 1], [], []>} : vector<8x128xf32>, vector<128x128xf32>, vector<8x128xf32> -> vector<8x128xf32>
    %122 = arith.addf %116, %121 : vector<8x128xf32>
    %123 = vector.broadcast %11 : vector<1x128xf32> to vector<8x128xf32>
    %124 = arith.addf %122, %123 : vector<8x128xf32>
    %cst_54 = arith.constant dense<0.000000e+00> : vector<8x128xf32>
    %125 = tpu.matmul %124, %12, %cst_54 {dimension_numbers = #tpu.dot_dimension_numbers<[1], [0], [0], [1], [0, 0, 1, 1], [], []>} : vector<8x128xf32>, vector<128x128xf32>, vector<8x128xf32> -> vector<8x128xf32>
    %126 = vector.broadcast %13 : vector<1x128xf32> to vector<8x128xf32>
    %127 = arith.addf %125, %126 : vector<8x128xf32>
    %c0_55 = arith.constant 0 : index
    %c0_56 = arith.constant 0 : index
    %128 = vector.load %arg15[%c0_55, %c0_56] : memref<8x128xf32, #tpu.memory_space<vmem>>, vector<8x128xf32>
    tpu.vector_store %arg15[%c0_55, %c0_56], %127 {strides = array<i32>} : memref<8x128xf32, #tpu.memory_space<vmem>>, vector<8x128xf32>,
    return
  }
  func.func @transform_0(%arg0: i32) -> (i32, i32, i32) {
    %c0_i32 = arith.constant 0 : i32
    %c0_i32_0 = arith.constant 0 : i32
    %c0_i32_1 = arith.constant 0 : i32
    return %arg0, %c0_i32, %c0_i32_0 : i32, i32, i32
  }
  func.func @transform_1(%arg0: i32) -> (i32, i32) {
    %c0_i32 = arith.constant 0 : i32
    %c0_i32_0 = arith.constant 0 : i32
    %c0_i32_1 = arith.constant 0 : i32
    return %c0_i32, %c0_i32_0 : i32, i32
  }
  func.func @transform_2(%arg0: i32) -> (i32, i32, i32) {
    %c0_i32 = arith.constant 0 : i32
    %c0_i32_0 = arith.constant 0 : i32
    %c0_i32_1 = arith.constant 0 : i32
    %c0_i32_2 = arith.constant 0 : i32
    return %c0_i32, %c0_i32_0, %c0_i32_1 : i32, i32, i32
  }
  func.func @transform_3(%arg0: i32) -> (i32, i32, i32) {
    %c0_i32 = arith.constant 0 : i32
    %c0_i32_0 = arith.constant 0 : i32
    %c0_i32_1 = arith.constant 0 : i32
    %c0_i32_2 = arith.constant 0 : i32
    return %c0_i32, %c0_i32_0, %c0_i32_1 : i32, i32, i32
  }
  func.func @transform_4(%arg0: i32) -> (i32, i32) {
    %c0_i32 = arith.constant 0 : i32
    %c0_i32_0 = arith.constant 0 : i32
    %c0_i32_1 = arith.constant 0 : i32
    return %c0_i32, %c0_i32_0 : i32, i32
  }
  func.func @transform_5(%arg0: i32) -> (i32, i32, i32) {
    %c0_i32 = arith.constant 0 : i32
    %c0_i32_0 = arith.constant 0 : i32
    %c0_i32_1 = arith.constant 0 : i32
    %c0_i32_2 = arith.constant 0 : i32
    return %c0_i32, %c0_i32_0, %c0_i32_1 : i32, i32, i32
  }
  func.func @transform_6(%arg0: i32) -> (i32, i32, i32) {
    %c0_i32 = arith.constant 0 : i32
    %c0_i32_0 = arith.constant 0 : i32
    %c0_i32_1 = arith.constant 0 : i32
    %c0_i32_2 = arith.constant 0 : i32
    return %c0_i32, %c0_i32_0, %c0_i32_1 : i32, i32, i32
  }
  func.func @transform_7(%arg0: i32) -> (i32, i32) {
    %c0_i32 = arith.constant 0 : i32
    %c0_i32_0 = arith.constant 0 : i32
    %c0_i32_1 = arith.constant 0 : i32
    return %c0_i32, %c0_i32_0 : i32, i32
  }
  func.func @transform_8(%arg0: i32) -> (i32, i32, i32) {
    %c0_i32 = arith.constant 0 : i32
    %c0_i32_0 = arith.constant 0 : i32
    %c0_i32_1 = arith.constant 0 : i32
    %c0_i32_2 = arith.constant 0 : i32
    return %c0_i32, %c0_i32_0, %c0_i32_1 : i32, i32, i32
  }
  func.func @transform_9(%arg0: i32) -> (i32, i32, i32) {
    %c0_i32 = arith.constant 0 : i32
    %c0_i32_0 = arith.constant 0 : i32
    %c0_i32_1 = arith.constant 0 : i32
    %c0_i32_2 = arith.constant 0 : i32
    return %c0_i32, %c0_i32_0, %c0_i32_1 : i32, i32, i32
  }
  func.func @transform_10(%arg0: i32) -> (i32, i32, i32) {
    %c0_i32 = arith.constant 0 : i32
    %c0_i32_0 = arith.constant 0 : i32
    %c0_i32_1 = arith.constant 0 : i32
    %c0_i32_2 = arith.constant 0 : i32
    return %c0_i32, %c0_i32_0, %c0_i32_1 : i32, i32, i32
  }
  func.func @transform_11(%arg0: i32) -> (i32, i32) {
    %c0_i32 = arith.constant 0 : i32
    %c0_i32_0 = arith.constant 0 : i32
    %c0_i32_1 = arith.constant 0 : i32
    return %c0_i32, %c0_i32_0 : i32, i32
  }
  func.func @transform_12(%arg0: i32) -> (i32, i32) {
    %c0_i32 = arith.constant 0 : i32
    %c0_i32_0 = arith.constant 0 : i32
    %c0_i32_1 = arith.constant 0 : i32
    return %c0_i32, %c0_i32_0 : i32, i32
  }
  func.func @transform_13(%arg0: i32) -> (i32, i32) {
    %c0_i32 = arith.constant 0 : i32
    %c0_i32_0 = arith.constant 0 : i32
    %c0_i32_1 = arith.constant 0 : i32
    return %c0_i32, %c0_i32_0 : i32, i32
  }
  func.func @transform_14(%arg0: i32) -> (i32, i32) {
    %c0_i32 = arith.constant 0 : i32
    %c0_i32_0 = arith.constant 0 : i32
    return %arg0, %c0_i32 : i32, i32
  }
}

</mosaic_0001>

<llo_original>
// kernel: tpu_custom_call.1
$region0: #{tpu_custom_call.1}
  #allocation0 [shape = 'u32[]', space=smem, size = 0x4, offset = 0x4, fixed_abs, tag = 'smem constant byte address 0x4 - core index']
  #allocation1 [shape = 'u32[144,128]{1,0:T(1,128)}', space=vmem, size = 0x12000, scoped, tag = 'internal scratch']
  %s0 = inlined_call_operand.vmem [shape: f32[16,64,1], index: 0, kind: input, shape index: {}]
  %s1 = inlined_call_operand.hbm [shape: f32[3,32], index: 1, kind: input, shape index: {}]
  %s2 = inlined_call_operand.vmem [shape: f32[1,1,32], index: 2, kind: input, shape index: {}]
  %s3 = inlined_call_operand.vmem [shape: f32[1,1,32], index: 3, kind: input, shape index: {}]
  %s4 = inlined_call_operand.vmem [shape: f32[96,64], index: 4, kind: input, shape index: {}]
  %s5 = inlined_call_operand.hbm [shape: f32[1,1,64], index: 5, kind: input, shape index: {}]
  %s6 = inlined_call_operand.hbm [shape: f32[1,1,64], index: 6, kind: input, shape index: {}]
  %s7 = inlined_call_operand.vmem [shape: f32[192,128], index: 7, kind: input, shape index: {}]
  %s8 = inlined_call_operand.hbm [shape: f32[1,1,128], index: 8, kind: input, shape index: {}]
  %s9 = inlined_call_operand.hbm [shape: f32[1,1,128], index: 9, kind: input, shape index: {}]
  %s10 = inlined_call_operand.vmem [shape: f32[8,128,128], index: 10, kind: input, shape index: {}]
  %s11 = inlined_call_operand.hbm [shape: f32[1,128], index: 11, kind: input, shape index: {}]
  %s12 = inlined_call_operand.hbm [shape: f32[128,128], index: 12, kind: input, shape index: {}]
  %s13 = inlined_call_operand.hbm [shape: f32[1,128], index: 13, kind: input, shape index: {}]
  %s14 = inlined_call_operand.hbm [shape: f32[16,128], index: 14, kind: output, shape index: {}]
  %s15 = sld [smem:[#allocation0]]
  $region121: #{tpu_custom_call.1} parent=0
    _
  %s17 = ssub.s32 1, %s15
  %s18 = scalar_select 0, %s17, %s15
  $region1: #{tpu_custom_call.1} parent=0
    #allocation2 [shape = 'u8[2048]{0}', space=vmem, size = 0x800, scoped, tag = 'input window, operand 1, single buffered']
    #allocation3 [shape = 's32[2]{0}', space=sflag, size = 0x8, scoped, tag = 'scoped memory for tpu_custom_call.1']
    #allocation4 [shape = 's32[2]{0}', space=sflag, size = 0x8, scoped, tag = 'scoped memory for tpu_custom_call.1']
    #allocation5 [shape = 'u8[512]{0}', space=vmem, size = 0x400, scoped, tag = 'input window, operand 5, single buffered']
    #allocation6 [shape = 's32[1]{0}', space=sflag, size = 0x4, scoped, tag = 'scoped memory for tpu_custom_call.1']
    #allocation7 [shape = 'u8[512]{0}', space=vmem, size = 0x400, scoped, tag = 'input window, operand 6, single buffered']
    #allocation8 [shape = 'u8[512]{0}', space=vmem, size = 0x400, scoped, tag = 'input window, operand 8, single buffered']
    #allocation9 [shape = 's32[1]{0}', space=sflag, size = 0x4, scoped, tag = 'scoped memory for tpu_custom_call.1']
    #allocation10 [shape = 'u8[512]{0}', space=vmem, size = 0x400, scoped, tag = 'input window, operand 9, single buffered']
    #allocation11 [shape = 'u8[512]{0}', space=vmem, size = 0x400, scoped, tag = 'input window, operand 11, single buffered']
    #allocation12 [shape = 's32[1]{0}', space=sflag, size = 0x4, scoped, tag = 'scoped memory for tpu_custom_call.1']
    #allocation13 [shape = 'u8[65536]{0}', space=vmem, size = 0x10000, scoped, tag = 'input window, operand 12, single buffered']
    #allocation14 [shape = 'u8[512]{0}', space=vmem, size = 0x400, scoped, tag = 'input window, operand 13, single buffered']
    #allocation15 [shape = 's32[1]{0}', space=sflag, size = 0x4, scoped, tag = 'scoped memory for tpu_custom_call.1']
    #allocation16 [shape = 'u8[8192]{0}', space=vmem, size = 0x2000, scoped, tag = 'output window, operand 0']
    %19 = vsyncpa [#allocation3], 0
    %20 = vsyncpa [#allocation6], 0
    %21 = vsyncpa [#allocation9], 0
    %22 = vsyncpa [#allocation12], 0
    %23 = vsyncpa [#allocation15], 0
    %24 = vsyncpa [#allocation4], 0
    %s25 = scalar_lea.sflag [#allocation4], 1
    %26 = vsyncpa %s25, 0
    loop: start=0, step=1, limit=4
    $region2: #{tpu_custom_call.1} parent=1 // loop_pre_header
      _
    $region3: #{tpu_custom_call.1} parent=1 // loop_header
      %s28 = sphi 0, %s32
      %p29 = scmp.ge.s32.totalorder %s28, 4
      %s38 = sphi 0, %s40
      %s41 = sphi 0, %s38
      %s42 = sphi 0, %s41
      %s58 = sphi 0, %s42
      %s62 = sphi 0, %s62
      %s64 = sphi 0, %s62
      %s65 = sphi 0, %s64
      %s79 = sphi 0, %s65
      %s83 = sphi 0, %s83
      %s85 = sphi 0, %s83
      %s86 = sphi 0, %s85
      %s100 = sphi 0, %s86
      %s104 = sphi 0, %s104
      %s106 = sphi 0, %s104
      %s107 = sphi 0, %s106
      %s121 = sphi 0, %s107
      %s125 = sphi 0, %s125
      %s127 = sphi 0, %s125
      %s128 = sphi 0, %s127
      %s142 = sphi 0, %s128
      %s146 = sphi 0, %s146
      %s148 = sphi 0, %s146
      %s149 = sphi 0, %s148
      %s163 = sphi 0, %s149
      %s167 = sphi 0, %s167
      %s169 = sphi 0, %s167
      %s170 = sphi 0, %s169
      %s184 = sphi 0, %s170
      %s188 = sphi 0, %s188
      %s190 = sphi 0, %s188
      %s191 = sphi 0, %s190
      %s205 = sphi 0, %s191
      %s209 = sphi 0, %s209
      %s211 = sphi 0, %s209
      %s212 = sphi 0, %s211
      %s226 = sphi 0, %s212
      %s230 = sphi 0, %s230
      %s232 = sphi 0, %s230
      %s233 = sphi 0, %s232
      %s247 = sphi 0, %s233
      %s251 = sphi 0, %s251
      %s253 = sphi 0, %s251
      %s254 = sphi 0, %s253
      %s268 = sphi 0, %s254
      %s272 = sphi 0, %s272
      %s274 = sphi 0, %s272
      %s275 = sphi 0, %s274
      %s289 = sphi 0, %s275
      %s293 = sphi 0, %s293
      %s295 = sphi 0, %s293
      %s296 = sphi 0, %s295
      %s310 = sphi 0, %s296
      %s314 = sphi 0, %s314
      %s316 = sphi 0, %s314
      %s317 = sphi 0, %s316
      %s331 = sphi 0, %s317
      %s337 = sphi 0, %s339
      %s340 = sphi 0, %s337
      %s341 = sphi 0, %s340
      %s357 = sphi 0, %s341
    $region4: #{tpu_custom_call.1} parent=1 // loop_header_branch
      %31 = sbr.rel (%p29) target = $region8
    $region5: #{tpu_custom_call.1} parent=1 // loop_body
      %s33 = ssub.s32 %s28, 1
      %s34 = ssub.s32 %s28, 2
      %s35 = sadd.s32 %s28, 1
      %s36 = ssub.s32 %s28, %s35
      %p37 = scmp.eq.s32.totalorder %s36, 0
      %s39 = sadd.s32 %s38, 1
      %s40 = scalar_select %p37, %s38, %s39
      %p43 = pneg %p37
      %p44 = scmp.eq.s32.totalorder %s28, 1
      %p45 = por %p43, %p44
      %p46 = scmp.ne.s32.totalorder %s38, %s41
      %p47 = scmp.eq.s32.totalorder %s28, 0
      %p48 = por %p46, %p47
      %p49 = scmp.ne.s32.totalorder %s38, %s41
      %p50 = scmp.eq.s32.totalorder %s33, 1
      %p51 = por %p49, %p50
      %p52 = scmp.ne.s32.totalorder %s41, %s42
      %p53 = scmp.eq.s32.totalorder %s33, 0
      %p54 = por %p52, %p53
      %p55 = scmp.ne.s32.totalorder %s41, %s42
      %p56 = scmp.eq.s32.totalorder %s34, 1
      %p57 = por %p55, %p56
      %p59 = scmp.ne.s32.totalorder %s42, %s58
      %p60 = scmp.eq.s32.totalorder %s34, 0
      %p61 = por %p59, %p60
      %s63 = sadd.s32 %s62, 1
      %p66 = scmp.eq.s32.totalorder %s28, 1
      %p67 = scmp.ne.s32.totalorder %s62, %s64
      %p68 = scmp.eq.s32.totalorder %s28, 0
      %p69 = por %p67, %p68
      %p70 = scmp.ne.s32.totalorder %s62, %s64
      %p71 = scmp.eq.s32.totalorder %s33, 1
      %p72 = por %p70, %p71
      %p73 = scmp.ne.s32.totalorder %s64, %s65
      %p74 = scmp.eq.s32.totalorder %s33, 0
      %p75 = por %p73, %p74
      %p76 = scmp.ne.s32.totalorder %s64, %s65
      %p77 = scmp.eq.s32.totalorder %s34, 1
      %p78 = por %p76, %p77
      %p80 = scmp.ne.s32.totalorder %s65, %s79
      %p81 = scmp.eq.s32.totalorder %s34, 0
      %p82 = por %p80, %p81
      %s84 = sadd.s32 %s83, 1
      %p87 = scmp.eq.s32.totalorder %s28, 1
      %p88 = scmp.ne.s32.totalorder %s83, %s85
      %p89 = scmp.eq.s32.totalorder %s28, 0
      %p90 = por %p88, %p89
      %p91 = scmp.ne.s32.totalorder %s83, %s85
      %p92 = scmp.eq.s32.totalorder %s33, 1
      %p93 = por %p91, %p92
      %p94 = scmp.ne.s32.totalorder %s85, %s86
      %p95 = scmp.eq.s32.totalorder %s33, 0
      %p96 = por %p94, %p95
      %p97 = scmp.ne.s32.totalorder %s85, %s86
      %p98 = scmp.eq.s32.totalorder %s34, 1
      %p99 = por %p97, %p98
      %p101 = scmp.ne.s32.totalorder %s86, %s100
      %p102 = scmp.eq.s32.totalorder %s34, 0
      %p103 = por %p101, %p102
      %s105 = sadd.s32 %s104, 1
      %p108 = scmp.eq.s32.totalorder %s28, 1
      %p109 = scmp.ne.s32.totalorder %s104, %s106
      %p110 = scmp.eq.s32.totalorder %s28, 0
      %p111 = por %p109, %p110
      %p112 = scmp.ne.s32.totalorder %s104, %s106
      %p113 = scmp.eq.s32.totalorder %s33, 1
      %p114 = por %p112, %p113
      %p115 = scmp.ne.s32.totalorder %s106, %s107
      %p116 = scmp.eq.s32.totalorder %s33, 0
      %p117 = por %p115, %p116
      %p118 = scmp.ne.s32.totalorder %s106, %s107
      %p119 = scmp.eq.s32.totalorder %s34, 1
      %p120 = por %p118, %p119
      %p122 = scmp.ne.s32.totalorder %s107, %s121
      %p123 = scmp.eq.s32.totalorder %s34, 0
      %p124 = por %p122, %p123
      %s126 = sadd.s32 %s125, 1
      %p129 = scmp.eq.s32.totalorder %s28, 1
      %p130 = scmp.ne.s32.totalorder %s125, %s127
      %p131 = scmp.eq.s32.totalorder %s28, 0
      %p132 = por %p130, %p131
      %p133 = scmp.ne.s32.totalorder %s125, %s127
      %p134 = scmp.eq.s32.totalorder %s33, 1
      %p135 = por %p133, %p134
      %p136 = scmp.ne.s32.totalorder %s127, %s128
      %p137 = scmp.eq.s32.totalorder %s33, 0
      %p138 = por %p136, %p137
      %p139 = scmp.ne.s32.totalorder %s127, %s128
      %p140 = scmp.eq.s32.totalorder %s34, 1
      %p141 = por %p139, %p140
      %p143 = scmp.ne.s32.totalorder %s128, %s142
      %p144 = scmp.eq.s32.totalorder %s34, 0
      %p145 = por %p143, %p144
      %s147 = sadd.s32 %s146, 1
      %p150 = scmp.eq.s32.totalorder %s28, 1
      %p151 = scmp.ne.s32.totalorder %s146, %s148
      %p152 = scmp.eq.s32.totalorder %s28, 0
      %p153 = por %p151, %p152
      %p154 = scmp.ne.s32.totalorder %s146, %s148
      %p155 = scmp.eq.s32.totalorder %s33, 1
      %p156 = por %p154, %p155
      %p157 = scmp.ne.s32.totalorder %s148, %s149
      %p158 = scmp.eq.s32.totalorder %s33, 0
      %p159 = por %p157, %p158
      %p160 = scmp.ne.s32.totalorder %s148, %s149
      %p161 = scmp.eq.s32.totalorder %s34, 1
      %p162 = por %p160, %p161
      %p164 = scmp.ne.s32.totalorder %s149, %s163
      %p165 = scmp.eq.s32.totalorder %s34, 0
      %p166 = por %p164, %p165
      %s168 = sadd.s32 %s167, 1
      %p171 = scmp.eq.s32.totalorder %s28, 1
      %p172 = scmp.ne.s32.totalorder %s167, %s169
      %p173 = scmp.eq.s32.totalorder %s28, 0
      %p174 = por %p172, %p173
      %p175 = scmp.ne.s32.totalorder %s167, %s169
      %p176 = scmp.eq.s32.totalorder %s33, 1
      %p177 = por %p175, %p176
      %p178 = scmp.ne.s32.totalorder %s169, %s170
      %p179 = scmp.eq.s32.totalorder %s33, 0
      %p180 = por %p178, %p179
      %p181 = scmp.ne.s32.totalorder %s169, %s170
      %p182 = scmp.eq.s32.totalorder %s34, 1
      %p183 = por %p181, %p182
      %p185 = scmp.ne.s32.totalorder %s170, %s184
      %p186 = scmp.eq.s32.totalorder %s34, 0
      %p187 = por %p185, %p186
      %s189 = sadd.s32 %s188, 1
      %p192 = scmp.eq.s32.totalorder %s28, 1
      %p193 = scmp.ne.s32.totalorder %s188, %s190
      %p194 = scmp.eq.s32.totalorder %s28, 0
      %p195 = por %p193, %p194
      %p196 = scmp.ne.s32.totalorder %s188, %s190
      %p197 = scmp.eq.s32.totalorder %s33, 1
      %p198 = por %p196, %p197
      %p199 = scmp.ne.s32.totalorder %s190, %s191
      %p200 = scmp.eq.s32.totalorder %s33, 0
      %p201 = por %p199, %p200
      %p202 = scmp.ne.s32.totalorder %s190, %s191
      %p203 = scmp.eq.s32.totalorder %s34, 1
      %p204 = por %p202, %p203
      %p206 = scmp.ne.s32.totalorder %s191, %s205
      %p207 = scmp.eq.s32.totalorder %s34, 0
      %p208 = por %p206, %p207
      %s210 = sadd.s32 %s209, 1
      %p213 = scmp.eq.s32.totalorder %s28, 1
      %p214 = scmp.ne.s32.totalorder %s209, %s211
      %p215 = scmp.eq.s32.totalorder %s28, 0
      %p216 = por %p214, %p215
      %p217 = scmp.ne.s32.totalorder %s209, %s211
      %p218 = scmp.eq.s32.totalorder %s33, 1
      %p219 = por %p217, %p218
      %p220 = scmp.ne.s32.totalorder %s211, %s212
      %p221 = scmp.eq.s32.totalorder %s33, 0
      %p222 = por %p220, %p221
      %p223 = scmp.ne.s32.totalorder %s211, %s212
      %p224 = scmp.eq.s32.totalorder %s34, 1
      %p225 = por %p223, %p224
      %p227 = scmp.ne.s32.totalorder %s212, %s226
      %p228 = scmp.eq.s32.totalorder %s34, 0
      %p229 = por %p227, %p228
      %s231 = sadd.s32 %s230, 1
      %p234 = scmp.eq.s32.totalorder %s28, 1
      %p235 = scmp.ne.s32.totalorder %s230, %s232
      %p236 = scmp.eq.s32.totalorder %s28, 0
      %p237 = por %p235, %p236
      %p238 = scmp.ne.s32.totalorder %s230, %s232
      %p239 = scmp.eq.s32.totalorder %s33, 1
      %p240 = por %p238, %p239
      %p241 = scmp.ne.s32.totalorder %s232, %s233
      %p242 = scmp.eq.s32.totalorder %s33, 0
      %p243 = por %p241, %p242
      %p244 = scmp.ne.s32.totalorder %s232, %s233
      %p245 = scmp.eq.s32.totalorder %s34, 1
      %p246 = por %p244, %p245
      %p248 = scmp.ne.s32.totalorder %s233, %s247
      %p249 = scmp.eq.s32.totalorder %s34, 0
      %p250 = por %p248, %p249
      %s252 = sadd.s32 %s251, 1
      %p255 = scmp.eq.s32.totalorder %s28, 1
      %p256 = scmp.ne.s32.totalorder %s251, %s253
      %p257 = scmp.eq.s32.totalorder %s28, 0
      %p258 = por %p256, %p257
      %p259 = scmp.ne.s32.totalorder %s251, %s253
      %p260 = scmp.eq.s32.totalorder %s33, 1
      %p261 = por %p259, %p260
      %p262 = scmp.ne.s32.totalorder %s253, %s254
      %p263 = scmp.eq.s32.totalorder %s33, 0
      %p264 = por %p262, %p263
      %p265 = scmp.ne.s32.totalorder %s253, %s254
      %p266 = scmp.eq.s32.totalorder %s34, 1
      %p267 = por %p265, %p266
      %p269 = scmp.ne.s32.totalorder %s254, %s268
      %p270 = scmp.eq.s32.totalorder %s34, 0
      %p271 = por %p269, %p270
      %s273 = sadd.s32 %s272, 1
      %p276 = scmp.eq.s32.totalorder %s28, 1
      %p277 = scmp.ne.s32.totalorder %s272, %s274
      %p278 = scmp.eq.s32.totalorder %s28, 0
      %p279 = por %p277, %p278
      %p280 = scmp.ne.s32.totalorder %s272, %s274
      %p281 = scmp.eq.s32.totalorder %s33, 1
      %p282 = por %p280, %p281
      %p283 = scmp.ne.s32.totalorder %s274, %s275
      %p284 = scmp.eq.s32.totalorder %s33, 0
      %p285 = por %p283, %p284
      %p286 = scmp.ne.s32.totalorder %s274, %s275
      %p287 = scmp.eq.s32.totalorder %s34, 1
      %p288 = por %p286, %p287
      %p290 = scmp.ne.s32.totalorder %s275, %s289
      %p291 = scmp.eq.s32.totalorder %s34, 0
      %p292 = por %p290, %p291
      %s294 = sadd.s32 %s293, 1
      %p297 = scmp.eq.s32.totalorder %s28, 1
      %p298 = scmp.ne.s32.totalorder %s293, %s295
      %p299 = scmp.eq.s32.totalorder %s28, 0
      %p300 = por %p298, %p299
      %p301 = scmp.ne.s32.totalorder %s293, %s295
      %p302 = scmp.eq.s32.totalorder %s33, 1
      %p303 = por %p301, %p302
      %p304 = scmp.ne.s32.totalorder %s295, %s296
      %p305 = scmp.eq.s32.totalorder %s33, 0
      %p306 = por %p304, %p305
      %p307 = scmp.ne.s32.totalorder %s295, %s296
      %p308 = scmp.eq.s32.totalorder %s34, 1
      %p309 = por %p307, %p308
      %p311 = scmp.ne.s32.totalorder %s296, %s310
      %p312 = scmp.eq.s32.totalorder %s34, 0
      %p313 = por %p311, %p312
      %s315 = sadd.s32 %s314, 1
      %p318 = scmp.eq.s32.totalorder %s28, 1
      %p319 = scmp.ne.s32.totalorder %s314, %s316
      %p320 = scmp.eq.s32.totalorder %s28, 0
      %p321 = por %p319, %p320
      %p322 = scmp.ne.s32.totalorder %s314, %s316
      %p323 = scmp.eq.s32.totalorder %s33, 1
      %p324 = por %p322, %p323
      %p325 = scmp.ne.s32.totalorder %s316, %s317
      %p326 = scmp.eq.s32.totalorder %s33, 0
      %p327 = por %p325, %p326
      %p328 = scmp.ne.s32.totalorder %s316, %s317
      %p329 = scmp.eq.s32.totalorder %s34, 1
      %p330 = por %p328, %p329
      %p332 = scmp.ne.s32.totalorder %s317, %s331
      %p333 = scmp.eq.s32.totalorder %s34, 0
      %p334 = por %p332, %p333
      %s335 = ssub.s32 %s28, %s35
      %p336 = scmp.eq.s32.totalorder %s335, 0
      %s338 = sadd.s32 %s337, 1
      %s339 = scalar_select %p336, %s337, %s338
      %p342 = pneg %p336
      %p343 = scmp.eq.s32.totalorder %s28, 1
      %p344 = por %p342, %p343
      %p345 = scmp.ne.s32.totalorder %s337, %s340
      %p346 = scmp.eq.s32.totalorder %s28, 0
      %p347 = por %p345, %p346
      %p348 = scmp.ne.s32.totalorder %s337, %s340
      %p349 = scmp.eq.s32.totalorder %s33, 1
      %p350 = por %p348, %p349
      %p351 = scmp.ne.s32.totalorder %s340, %s341
      %p352 = scmp.eq.s32.totalorder %s33, 0
      %p353 = por %p351, %p352
      %p354 = scmp.ne.s32.totalorder %s340, %s341
      %p355 = scmp.eq.s32.totalorder %s34, 1
      %p356 = por %p354, %p355
      %p358 = scmp.ne.s32.totalorder %s341, %s357
      %p359 = scmp.eq.s32.totalorder %s34, 0
      %p360 = por %p358, %p359
      %p361 = scmp.le.s32.totalorder 1, %s28
      %p362 = scmp.lt.s32.totalorder %s28, 3
      %p363 = pnand %p361, %p362
      %p364 = pneg %p363
      // Predicated region
      $region9: #{tpu_custom_call.1} parent=5 // pred_check
        _
      $region10: #{tpu_custom_call.1} parent=5 // pred_check_branch
        %366 = sbr.rel (%p363) target = $region12
      $region11: #{tpu_custom_call.1} parent=5 // pred_region
        %s367 = ssub.s32 %s28, 1
        // Predicated region
        $region13: #{tpu_custom_call.1} parent=11 // pred_check
          %p368 = pneg %p75
        $region14: #{tpu_custom_call.1} parent=11 // pred_check_branch
          %370 = sbr.rel (%p368) target = $region16
        $region15: #{tpu_custom_call.1} parent=11 // pred_region
          %s372 = ssub.s32 64, 64
          %373 = vsyncadd [#allocation3], %s372
          %s375 = sshll.u32 [#allocation2], 4
          %s376 = int_to_ptr.vmem [resolvable:$true] %s375
          %378 = dma.hbm_to_vmem [thread:$0]  %s1, 64, %s376, [#allocation3]
        $region16: #{tpu_custom_call.1} parent=11 // pred_fallthru
          _
        // Predicated region
        $region17: #{tpu_custom_call.1} parent=11 // pred_check
          %p379 = pneg %p96
        $region18: #{tpu_custom_call.1} parent=11 // pred_check_branch
          %381 = sbr.rel (%p379) target = $region20
        $region19: #{tpu_custom_call.1} parent=11 // pred_region
          _
        $region20: #{tpu_custom_call.1} parent=11 // pred_fallthru
          _
        // Predicated region
        $region21: #{tpu_custom_call.1} parent=11 // pred_check
          %p382 = pneg %p117
        $region22: #{tpu_custom_call.1} parent=11 // pred_check_branch
          %384 = sbr.rel (%p382) target = $region24
        $region23: #{tpu_custom_call.1} parent=11 // pred_region
          _
        $region24: #{tpu_custom_call.1} parent=11 // pred_fallthru
          _
        // Predicated region
        $region25: #{tpu_custom_call.1} parent=11 // pred_check
          %p385 = pneg %p138
        $region26: #{tpu_custom_call.1} parent=11 // pred_check_branch
          %387 = sbr.rel (%p385) target = $region28
        $region27: #{tpu_custom_call.1} parent=11 // pred_region
          _
        $region28: #{tpu_custom_call.1} parent=11 // pred_fallthru
          _
        // Predicated region
        $region29: #{tpu_custom_call.1} parent=11 // pred_check
          %p388 = pneg %p159
        $region30: #{tpu_custom_call.1} parent=11 // pred_check_branch
          %390 = sbr.rel (%p388) target = $region32
        $region31: #{tpu_custom_call.1} parent=11 // pred_region
          %s392 = ssub.s32 16, 16
          %393 = vsyncadd [#allocation6], %s392
          %s395 = sshll.u32 [#allocation5], 4
          %s396 = int_to_ptr.vmem [resolvable:$true] %s395
          %398 = dma.hbm_to_vmem [thread:$0]  %s5, 16, %s396, [#allocation6]
        $region32: #{tpu_custom_call.1} parent=11 // pred_fallthru
          _
        // Predicated region
        $region33: #{tpu_custom_call.1} parent=11 // pred_check
          %p399 = pneg %p180
        $region34: #{tpu_custom_call.1} parent=11 // pred_check_branch
          %401 = sbr.rel (%p399) target = $region36
        $region35: #{tpu_custom_call.1} parent=11 // pred_region
          %s403 = ssub.s32 16, 16
          %404 = vsyncadd [#allocation6], %s403
          %s406 = sshll.u32 [#allocation7], 4
          %s407 = int_to_ptr.vmem [resolvable:$true] %s406
          %409 = dma.hbm_to_vmem [thread:$0]  %s6, 16, %s407, [#allocation6]
        $region36: #{tpu_custom_call.1} parent=11 // pred_fallthru
          _
        // Predicated region
        $region37: #{tpu_custom_call.1} parent=11 // pred_check
          %p410 = pneg %p201
        $region38: #{tpu_custom_call.1} parent=11 // pred_check_branch
          %412 = sbr.rel (%p410) target = $region40
        $region39: #{tpu_custom_call.1} parent=11 // pred_region
          _
        $region40: #{tpu_custom_call.1} parent=11 // pred_fallthru
          _
        // Predicated region
        $region41: #{tpu_custom_call.1} parent=11 // pred_check
          %p413 = pneg %p222
        $region42: #{tpu_custom_call.1} parent=11 // pred_check_branch
          %415 = sbr.rel (%p413) target = $region44
        $region43: #{tpu_custom_call.1} parent=11 // pred_region
          %s417 = ssub.s32 16, 16
          %418 = vsyncadd [#allocation9], %s417
          %s420 = sshll.u32 [#allocation8], 4
          %s421 = int_to_ptr.vmem [resolvable:$true] %s420
          %423 = dma.hbm_to_vmem [thread:$0]  %s8, 16, %s421, [#allocation9]
        $region44: #{tpu_custom_call.1} parent=11 // pred_fallthru
          _
        // Predicated region
        $region45: #{tpu_custom_call.1} parent=11 // pred_check
          %p424 = pneg %p243
        $region46: #{tpu_custom_call.1} parent=11 // pred_check_branch
          %426 = sbr.rel (%p424) target = $region48
        $region47: #{tpu_custom_call.1} parent=11 // pred_region
          %s428 = ssub.s32 16, 16
          %429 = vsyncadd [#allocation9], %s428
          %s431 = sshll.u32 [#allocation10], 4
          %s432 = int_to_ptr.vmem [resolvable:$true] %s431
          %434 = dma.hbm_to_vmem [thread:$0]  %s9, 16, %s432, [#allocation9]
        $region48: #{tpu_custom_call.1} parent=11 // pred_fallthru
          _
        // Predicated region
        $region49: #{tpu_custom_call.1} parent=11 // pred_check
          %p435 = pneg %p264
        $region50: #{tpu_custom_call.1} parent=11 // pred_check_branch
          %437 = sbr.rel (%p435) target = $region52
        $region51: #{tpu_custom_call.1} parent=11 // pred_region
          _
        $region52: #{tpu_custom_call.1} parent=11 // pred_fallthru
          _
        // Predicated region
        $region53: #{tpu_custom_call.1} parent=11 // pred_check
          %p438 = pneg %p285
        $region54: #{tpu_custom_call.1} parent=11 // pred_check_branch
          %440 = sbr.rel (%p438) target = $region56
        $region55: #{tpu_custom_call.1} parent=11 // pred_region
          %s442 = ssub.s32 16, 16
          %443 = vsyncadd [#allocation12], %s442
          %s445 = sshll.u32 [#allocation11], 4
          %s446 = int_to_ptr.vmem [resolvable:$true] %s445
          %448 = dma.hbm_to_vmem [thread:$0]  %s11, 16, %s446, [#allocation12]
        $region56: #{tpu_custom_call.1} parent=11 // pred_fallthru
          _
        // Predicated region
        $region57: #{tpu_custom_call.1} parent=11 // pred_check
          %p449 = pneg %p306
        $region58: #{tpu_custom_call.1} parent=11 // pred_check_branch
          %451 = sbr.rel (%p449) target = $region60
        $region59: #{tpu_custom_call.1} parent=11 // pred_region
          %s453 = ssub.s32 2048, 2048
          %454 = vsyncadd [#allocation12], %s453
          %s455 = sshll.u32 [#allocation13], 4
          %s456 = int_to_ptr.vmem [resolvable:$true] %s455
          %461 = dma.hbm_to_vmem [thread:$0]  %s12, 2048, %s456, [#allocation12], 128, 128, 8
        $region60: #{tpu_custom_call.1} parent=11 // pred_fallthru
          _
        // Predicated region
        $region61: #{tpu_custom_call.1} parent=11 // pred_check
          %p462 = pneg %p327
        $region62: #{tpu_custom_call.1} parent=11 // pred_check_branch
          %464 = sbr.rel (%p462) target = $region64
        $region63: #{tpu_custom_call.1} parent=11 // pred_region
          %s466 = ssub.s32 16, 16
          %467 = vsyncadd [#allocation15], %s466
          %s469 = sshll.u32 [#allocation14], 4
          %s470 = int_to_ptr.vmem [resolvable:$true] %s469
          %472 = dma.hbm_to_vmem [thread:$0]  %s13, 16, %s470, [#allocation15]
        $region64: #{tpu_custom_call.1} parent=11 // pred_fallthru
          _
      $region12: #{tpu_custom_call.1} parent=5 // pred_fallthru
        _
      %p473 = scmp.lt.s32.totalorder %s28, 2
      // Predicated region
      $region65: #{tpu_custom_call.1} parent=5 // pred_check
        %p474 = pneg %p473
      $region66: #{tpu_custom_call.1} parent=5 // pred_check_branch
        %476 = sbr.rel (%p474) target = $region68
      $region67: #{tpu_custom_call.1} parent=5 // pred_region
        // Predicated region
        $region69: #{tpu_custom_call.1} parent=67 // pred_check
          %p477 = pneg %p48
        $region70: #{tpu_custom_call.1} parent=67 // pred_check_branch
          %479 = sbr.rel (%p477) target = $region72
        $region71: #{tpu_custom_call.1} parent=67 // pred_region
          %s480 = smul.u32 8, %s28
          %p481 = scmp.lt.s32.totalorder %s480, 15
          %s482 = scalar_select %p481, %s480, 15
          %s483 = smul.addr %s482, 8
          %s484 = smul.addr %s483, 8
          %s485 = scalar_lea.vmem %s0, %s484
          %s486 = smul.u32 8, %s28
        $region72: #{tpu_custom_call.1} parent=67 // pred_fallthru
          _
      $region68: #{tpu_custom_call.1} parent=5 // pred_fallthru
        _
      %p487 = scmp.le.s32.totalorder 1, %s28
      %p488 = scmp.lt.s32.totalorder %s28, 3
      %p489 = pnand %p487, %p488
      %p490 = pneg %p489
      // Predicated region
      $region73: #{tpu_custom_call.1} parent=5 // pred_check
        _
      $region74: #{tpu_custom_call.1} parent=5 // pred_check_branch
        %492 = sbr.rel (%p489) target = $region76
      $region75: #{tpu_custom_call.1} parent=5 // pred_region
        %s493 = ssub.s32 %s28, 1
        // Predicated region
        $region77: #{tpu_custom_call.1} parent=75 // pred_check
          %p494 = pneg %p75
        $region78: #{tpu_custom_call.1} parent=75 // pred_check_branch
          %496 = sbr.rel (%p494) target = $region80
        $region79: #{tpu_custom_call.1} parent=75 // pred_region
          %497 = dma.done [#allocation3], 64
        $region80: #{tpu_custom_call.1} parent=75 // pred_fallthru
          _
        // Predicated region
        $region81: #{tpu_custom_call.1} parent=75 // pred_check
          %p498 = pneg %p159
        $region82: #{tpu_custom_call.1} parent=75 // pred_check_branch
          %500 = sbr.rel (%p498) target = $region84
        $region83: #{tpu_custom_call.1} parent=75 // pred_region
          %501 = dma.done [#allocation6], 16
        $region84: #{tpu_custom_call.1} parent=75 // pred_fallthru
          _
        // Predicated region
        $region85: #{tpu_custom_call.1} parent=75 // pred_check
          %p502 = pneg %p180
        $region86: #{tpu_custom_call.1} parent=75 // pred_check_branch
          %504 = sbr.rel (%p502) target = $region88
        $region87: #{tpu_custom_call.1} parent=75 // pred_region
          %505 = dma.done [#allocation6], 16
        $region88: #{tpu_custom_call.1} parent=75 // pred_fallthru
          _
        // Predicated region
        $region89: #{tpu_custom_call.1} parent=75 // pred_check
          %p506 = pneg %p222
        $region90: #{tpu_custom_call.1} parent=75 // pred_check_branch
          %508 = sbr.rel (%p506) target = $region92
        $region91: #{tpu_custom_call.1} parent=75 // pred_region
          %509 = dma.done [#allocation9], 16
        $region92: #{tpu_custom_call.1} parent=75 // pred_fallthru
          _
        // Predicated region
        $region93: #{tpu_custom_call.1} parent=75 // pred_check
          %p510 = pneg %p243
        $region94: #{tpu_custom_call.1} parent=75 // pred_check_branch
          %512 = sbr.rel (%p510) target = $region96
        $region95: #{tpu_custom_call.1} parent=75 // pred_region
          %513 = dma.done [#allocation9], 16
        $region96: #{tpu_custom_call.1} parent=75 // pred_fallthru
          _
        // Predicated region
        $region97: #{tpu_custom_call.1} parent=75 // pred_check
          %p514 = pneg %p285
        $region98: #{tpu_custom_call.1} parent=75 // pred_check_branch
          %516 = sbr.rel (%p514) target = $region100
        $region99: #{tpu_custom_call.1} parent=75 // pred_region
          %517 = dma.done [#allocation12], 16
        $region100: #{tpu_custom_call.1} parent=75 // pred_fallthru
          _
        // Predicated region
        $region101: #{tpu_custom_call.1} parent=75 // pred_check
          %p518 = pneg %p306
        $region102: #{tpu_custom_call.1} parent=75 // pred_check_branch
          %520 = sbr.rel (%p518) target = $region104
        $region103: #{tpu_custom_call.1} parent=75 // pred_region
          %521 = dma.done [#allocation12], 2048
        $region104: #{tpu_custom_call.1} parent=75 // pred_fallthru
          _
        // Predicated region
        $region105: #{tpu_custom_call.1} parent=75 // pred_check
          %p522 = pneg %p327
        $region106: #{tpu_custom_call.1} parent=75 // pred_check_branch
          %524 = sbr.rel (%p522) target = $region108
        $region107: #{tpu_custom_call.1} parent=75 // pred_region
          %525 = dma.done [#allocation15], 16
        $region108: #{tpu_custom_call.1} parent=75 // pred_fallthru
          _
        %s526 = smul.u32 8, %s33
        %p527 = scmp.lt.s32.totalorder %s526, 15
        %s528 = scalar_select %p527, %s526, 15
        %s529 = smul.addr %s528, 8
        %s530 = smul.addr %s529, 8
        %s531 = scalar_lea.vmem %s0, %s530
        %p532 = pneg %p54
        %p533 = pneg %p51
        %p534 = pneg %p75
        %p535 = pneg %p72
        %p536 = pneg %p96
        %p537 = pneg %p93
        %p538 = pneg %p117
        %p539 = pneg %p114
        %p540 = pneg %p138
        %p541 = pneg %p135
        %p542 = pneg %p159
        %p543 = pneg %p156
        %p544 = pneg %p180
        %p545 = pneg %p177
        %p546 = pneg %p201
        %p547 = pneg %p198
        %p548 = pneg %p222
        %p549 = pneg %p219
        %p550 = pneg %p243
        %p551 = pneg %p240
        %p552 = pneg %p264
        %p553 = pneg %p261
        %p554 = pneg %p285
        %p555 = pneg %p282
        %p556 = pneg %p306
        %p557 = pneg %p303
        %p558 = pneg %p327
        %p559 = pneg %p324
        %p560 = pneg %p353
        %p561 = pneg %p350
        %s562 = sand.u32 %s340, 1
        %s563 = scalar_lea.sflag [#allocation4], %s562
        %s564 = sand.u32 %s340, 1
        %s565 = smul.addr %s564, 8
        %s566 = scalar_lea.vmem [#allocation16], %s565
        %s567 = smul.u32 8, %s33
        %p568 = scmp.lt.s32.totalorder %s567, 15
        %s569 = scalar_select %p568, %s567, 15
        %s570 = smul.addr %s569, 8
        %s571 = smul.addr %s570, 8
        %s572 = scalar_lea.vmem %s0, %s571
        %s573 = smul.u32 8, %s33
        %v574 = vld [vmem:[%s572] sm:$0xff]
        %v575 = vld [vmem:[%s572 + $0x8] sm:$0xff]
        %v576 = vld [vmem:[%s572 + $0x10] sm:$0xff]
        %v577 = vld [vmem:[%s572 + $0x18] sm:$0xff]
        %v578 = vld [vmem:[%s572 + $0x20] sm:$0xff]
        %v579 = vld [vmem:[%s572 + $0x28] sm:$0xff]
        %v580 = vld [vmem:[%s572 + $0x30] sm:$0xff]
        %v581 = vld [vmem:[%s572 + $0x38] sm:$0xff]
        %v582 = vld [vmem:[%s572 + $0x40] sm:$0xff]
        %v583 = vld [vmem:[%s572 + $0x48] sm:$0xff]
        %v584 = vld [vmem:[%s572 + $0x50] sm:$0xff]
        %v585 = vld [vmem:[%s572 + $0x58] sm:$0xff]
        %v586 = vld [vmem:[%s572 + $0x60] sm:$0xff]
        %v587 = vld [vmem:[%s572 + $0x68] sm:$0xff]
        %v588 = vld [vmem:[%s572 + $0x70] sm:$0xff]
        %v589 = vld [vmem:[%s572 + $0x78] sm:$0xff]
        %v590 = vld [vmem:[%s572 + $0x80] sm:$0xff]
        %v591 = vld [vmem:[%s572 + $0x88] sm:$0xff]
        %v592 = vld [vmem:[%s572 + $0x90] sm:$0xff]
        %v593 = vld [vmem:[%s572 + $0x98] sm:$0xff]
        %v594 = vld [vmem:[%s572 + $0xa0] sm:$0xff]
        %v595 = vld [vmem:[%s572 + $0xa8] sm:$0xff]
        %v596 = vld [vmem:[%s572 + $0xb0] sm:$0xff]
        %v597 = vld [vmem:[%s572 + $0xb8] sm:$0xff]
        %v598 = vld [vmem:[%s572 + $0xc0] sm:$0xff]
        %v599 = vld [vmem:[%s572 + $0xc8] sm:$0xff]
        %v600 = vld [vmem:[%s572 + $0xd0] sm:$0xff]
        %v601 = vld [vmem:[%s572 + $0xd8] sm:$0xff]
        %v602 = vld [vmem:[%s572 + $0xe0] sm:$0xff]
        %v603 = vld [vmem:[%s572 + $0xe8] sm:$0xff]
        %v604 = vld [vmem:[%s572 + $0xf0] sm:$0xff]
        %v605 = vld [vmem:[%s572 + $0xf8] sm:$0xff]
        %v606 = vld [vmem:[%s572 + $0x100] sm:$0xff]
        %v607 = vld [vmem:[%s572 + $0x108] sm:$0xff]
        %v608 = vld [vmem:[%s572 + $0x110] sm:$0xff]
        %v609 = vld [vmem:[%s572 + $0x118] sm:$0xff]
        %v610 = vld [vmem:[%s572 + $0x120] sm:$0xff]
        %v611 = vld [vmem:[%s572 + $0x128] sm:$0xff]
        %v612 = vld [vmem:[%s572 + $0x130] sm:$0xff]
        %v613 = vld [vmem:[%s572 + $0x138] sm:$0xff]
        %v614 = vld [vmem:[%s572 + $0x140] sm:$0xff]
        %v615 = vld [vmem:[%s572 + $0x148] sm:$0xff]
        %v616 = vld [vmem:[%s572 + $0x150] sm:$0xff]
        %v617 = vld [vmem:[%s572 + $0x158] sm:$0xff]
        %v618 = vld [vmem:[%s572 + $0x160] sm:$0xff]
        %v619 = vld [vmem:[%s572 + $0x168] sm:$0xff]
        %v620 = vld [vmem:[%s572 + $0x170] sm:$0xff]
        %v621 = vld [vmem:[%s572 + $0x178] sm:$0xff]
        %v622 = vld [vmem:[%s572 + $0x180] sm:$0xff]
        %v623 = vld [vmem:[%s572 + $0x188] sm:$0xff]
        %v624 = vld [vmem:[%s572 + $0x190] sm:$0xff]
        %v625 = vld [vmem:[%s572 + $0x198] sm:$0xff]
        %v626 = vld [vmem:[%s572 + $0x1a0] sm:$0xff]
        %v627 = vld [vmem:[%s572 + $0x1a8] sm:$0xff]
        %v628 = vld [vmem:[%s572 + $0x1b0] sm:$0xff]
        %v629 = vld [vmem:[%s572 + $0x1b8] sm:$0xff]
        %v630 = vld [vmem:[%s572 + $0x1c0] sm:$0xff]
        %v631 = vld [vmem:[%s572 + $0x1c8] sm:$0xff]
        %v632 = vld [vmem:[%s572 + $0x1d0] sm:$0xff]
        %v633 = vld [vmem:[%s572 + $0x1d8] sm:$0xff]
        %v634 = vld [vmem:[%s572 + $0x1e0] sm:$0xff]
        %v635 = vld [vmem:[%s572 + $0x1e8] sm:$0xff]
        %v636 = vld [vmem:[%s572 + $0x1f0] sm:$0xff]
        %v637 = vld [vmem:[%s572 + $0x1f8] sm:$0xff]
        %v638 = vld [vmem:[#allocation2] sm:$0x7]
        %v639 = vld [vmem:[%s2] sm:$0x1]
        %v640 = vld [vmem:[%s3] sm:$0x1]
        %v641 = vld [vmem:[%s4] sm:$0xff]
        %v642 = vld [vmem:[%s4 + $0x8] sm:$0xff]
        %v643 = vld [vmem:[%s4 + $0x10] sm:$0xff]
        %v644 = vld [vmem:[%s4 + $0x18] sm:$0xff]
        %v645 = vld [vmem:[%s4 + $0x20] sm:$0xff]
        %v646 = vld [vmem:[%s4 + $0x28] sm:$0xff]
        %v647 = vld [vmem:[%s4 + $0x30] sm:$0xff]
        %v648 = vld [vmem:[%s4 + $0x38] sm:$0xff]
        %v649 = vld [vmem:[%s4 + $0x40] sm:$0xff]
        %v650 = vld [vmem:[%s4 + $0x48] sm:$0xff]
        %v651 = vld [vmem:[%s4 + $0x50] sm:$0xff]
        %v652 = vld [vmem:[%s4 + $0x58] sm:$0xff]
        %v653 = vld [vmem:[#allocation5] sm:$0x1]
        %v654 = vld [vmem:[#allocation7] sm:$0x1]
        %v655 = vld [vmem:[%s7] sm:$0xff]
        %v656 = vld [vmem:[%s7 + $0x8] sm:$0xff]
        %v657 = vld [vmem:[%s7 + $0x10] sm:$0xff]
        %v658 = vld [vmem:[%s7 + $0x18] sm:$0xff]
        %v659 = vld [vmem:[%s7 + $0x20] sm:$0xff]
        %v660 = vld [vmem:[%s7 + $0x28] sm:$0xff]
        %v661 = vld [vmem:[%s7 + $0x30] sm:$0xff]
        %v662 = vld [vmem:[%s7 + $0x38] sm:$0xff]
        %v663 = vld [vmem:[%s7 + $0x40] sm:$0xff]
        %v664 = vld [vmem:[%s7 + $0x48] sm:$0xff]
        %v665 = vld [vmem:[%s7 + $0x50] sm:$0xff]
        %v666 = vld [vmem:[%s7 + $0x58] sm:$0xff]
        %v667 = vld [vmem:[%s7 + $0x60] sm:$0xff]
        %v668 = vld [vmem:[%s7 + $0x68] sm:$0xff]
        %v669 = vld [vmem:[%s7 + $0x70] sm:$0xff]
        %v670 = vld [vmem:[%s7 + $0x78] sm:$0xff]
        %v671 = vld [vmem:[%s7 + $0x80] sm:$0xff]
        %v672 = vld [vmem:[%s7 + $0x88] sm:$0xff]
        %v673 = vld [vmem:[%s7 + $0x90] sm:$0xff]
        %v674 = vld [vmem:[%s7 + $0x98] sm:$0xff]
        %v675 = vld [vmem:[%s7 + $0xa0] sm:$0xff]
        %v676 = vld [vmem:[%s7 + $0xa8] sm:$0xff]
        %v677 = vld [vmem:[%s7 + $0xb0] sm:$0xff]
        %v678 = vld [vmem:[%s7 + $0xb8] sm:$0xff]
        %v679 = vld [vmem:[#allocation8] sm:$0x1]
        %v680 = vld [vmem:[#allocation10] sm:$0x1]
        %v681 = vld [vmem:[%s10] sm:$0xff]
        %v682 = vld [vmem:[%s10 + $0x8] sm:$0xff]
        %v683 = vld [vmem:[%s10 + $0x10] sm:$0xff]
        %v684 = vld [vmem:[%s10 + $0x18] sm:$0xff]
        %v685 = vld [vmem:[%s10 + $0x20] sm:$0xff]
        %v686 = vld [vmem:[%s10 + $0x28] sm:$0xff]
        %v687 = vld [vmem:[%s10 + $0x30] sm:$0xff]
        %v688 = vld [vmem:[%s10 + $0x38] sm:$0xff]
        %v689 = vld [vmem:[%s10 + $0x40] sm:$0xff]
        %v690 = vld [vmem:[%s10 + $0x48] sm:$0xff]
        %v691 = vld [vmem:[%s10 + $0x50] sm:$0xff]
        %v692 = vld [vmem:[%s10 + $0x58] sm:$0xff]
        %v693 = vld [vmem:[%s10 + $0x60] sm:$0xff]
        %v694 = vld [vmem:[%s10 + $0x68] sm:$0xff]
        %v695 = vld [vmem:[%s10 + $0x70] sm:$0xff]
        %v696 = vld [vmem:[%s10 + $0x78] sm:$0xff]
        %v697 = vld [vmem:[%s10 + $0x80] sm:$0xff]
        %v698 = vld [vmem:[%s10 + $0x88] sm:$0xff]
        %v699 = vld [vmem:[%s10 + $0x90] sm:$0xff]
        %v700 = vld [vmem:[%s10 + $0x98] sm:$0xff]
        %v701 = vld [vmem:[%s10 + $0xa0] sm:$0xff]
        %v702 = vld [vmem:[%s10 + $0xa8] sm:$0xff]
        %v703 = vld [vmem:[%s10 + $0xb0] sm:$0xff]
        %v704 = vld [vmem:[%s10 + $0xb8] sm:$0xff]
        %v705 = vld [vmem:[%s10 + $0xc0] sm:$0xff]
        %v706 = vld [vmem:[%s10 + $0xc8] sm:$0xff]
        %v707 = vld [vmem:[%s10 + $0xd0] sm:$0xff]
        %v708 = vld [vmem:[%s10 + $0xd8] sm:$0xff]
        %v709 = vld [vmem:[%s10 + $0xe0] sm:$0xff]
        %v710 = vld [vmem:[%s10 + $0xe8] sm:$0xff]
        %v711 = vld [vmem:[%s10 + $0xf0] sm:$0xff]
        %v712 = vld [vmem:[%s10 + $0xf8] sm:$0xff]
        %v713 = vld [vmem:[%s10 + $0x100] sm:$0xff]
        %v714 = vld [vmem:[%s10 + $0x108] sm:$0xff]
        %v715 = vld [vmem:[%s10 + $0x110] sm:$0xff]
        %v716 = vld [vmem:[%s10 + $0x118] sm:$0xff]
        %v717 = vld [vmem:[%s10 + $0x120] sm:$0xff]
        %v718 = vld [vmem:[%s10 + $0x128] sm:$0xff]
        %v719 = vld [vmem:[%s10 + $0x130] sm:$0xff]
        %v720 = vld [vmem:[%s10 + $0x138] sm:$0xff]
        %v721 = vld [vmem:[%s10 + $0x140] sm:$0xff]
        %v722 = vld [vmem:[%s10 + $0x148] sm:$0xff]
        %v723 = vld [vmem:[%s10 + $0x150] sm:$0xff]
        %v724 = vld [vmem:[%s10 + $0x158] sm:$0xff]
        %v725 = vld [vmem:[%s10 + $0x160] sm:$0xff]
        %v726 = vld [vmem:[%s10 + $0x168] sm:$0xff]
        %v727 = vld [vmem:[%s10 + $0x170] sm:$0xff]
        %v728 = vld [vmem:[%s10 + $0x178] sm:$0xff]
        %v729 = vld [vmem:[%s10 + $0x180] sm:$0xff]
        %v730 = vld [vmem:[%s10 + $0x188] sm:$0xff]
        %v731 = vld [vmem:[%s10 + $0x190] sm:$0xff]
        %v732 = vld [vmem:[%s10 + $0x198] sm:$0xff]
        %v733 = vld [vmem:[%s10 + $0x1a0] sm:$0xff]
        %v734 = vld [vmem:[%s10 + $0x1a8] sm:$0xff]
        %v735 = vld [vmem:[%s10 + $0x1b0] sm:$0xff]
        %v736 = vld [vmem:[%s10 + $0x1b8] sm:$0xff]
        %v737 = vld [vmem:[%s10 + $0x1c0] sm:$0xff]
        %v738 = vld [vmem:[%s10 + $0x1c8] sm:$0xff]
        %v739 = vld [vmem:[%s10 + $0x1d0] sm:$0xff]
        %v740 = vld [vmem:[%s10 + $0x1d8] sm:$0xff]
        %v741 = vld [vmem:[%s10 + $0x1e0] sm:$0xff]
        %v742 = vld [vmem:[%s10 + $0x1e8] sm:$0xff]
        %v743 = vld [vmem:[%s10 + $0x1f0] sm:$0xff]
        %v744 = vld [vmem:[%s10 + $0x1f8] sm:$0xff]
        %v745 = vld [vmem:[%s10 + $0x200] sm:$0xff]
        %v746 = vld [vmem:[%s10 + $0x208] sm:$0xff]
        %v747 = vld [vmem:[%s10 + $0x210] sm:$0xff]
        %v748 = vld [vmem:[%s10 + $0x218] sm:$0xff]
        %v749 = vld [vmem:[%s10 + $0x220] sm:$0xff]
        %v750 = vld [vmem:[%s10 + $0x228] sm:$0xff]
        %v751 = vld [vmem:[%s10 + $0x230] sm:$0xff]
        %v752 = vld [vmem:[%s10 + $0x238] sm:$0xff]
        %v753 = vld [vmem:[%s10 + $0x240] sm:$0xff]
        %v754 = vld [vmem:[%s10 + $0x248] sm:$0xff]
        %v755 = vld [vmem:[%s10 + $0x250] sm:$0xff]
        %v756 = vld [vmem:[%s10 + $0x258] sm:$0xff]
        %v757 = vld [vmem:[%s10 + $0x260] sm:$0xff]
        %v758 = vld [vmem:[%s10 + $0x268] sm:$0xff]
        %v759 = vld [vmem:[%s10 + $0x270] sm:$0xff]
        %v760 = vld [vmem:[%s10 + $0x278] sm:$0xff]
        %v761 = vld [vmem:[%s10 + $0x280] sm:$0xff]
        %v762 = vld [vmem:[%s10 + $0x288] sm:$0xff]
        %v763 = vld [vmem:[%s10 + $0x290] sm:$0xff]
        %v764 = vld [vmem:[%s10 + $0x298] sm:$0xff]
        %v765 = vld [vmem:[%s10 + $0x2a0] sm:$0xff]
        %v766 = vld [vmem:[%s10 + $0x2a8] sm:$0xff]
        %v767 = vld [vmem:[%s10 + $0x2b0] sm:$0xff]
        %v768 = vld [vmem:[%s10 + $0x2b8] sm:$0xff]
        %v769 = vld [vmem:[%s10 + $0x2c0] sm:$0xff]
        %v770 = vld [vmem:[%s10 + $0x2c8] sm:$0xff]
        %v771 = vld [vmem:[%s10 + $0x2d0] sm:$0xff]
        %v772 = vld [vmem:[%s10 + $0x2d8] sm:$0xff]
        %v773 = vld [vmem:[%s10 + $0x2e0] sm:$0xff]
        %v774 = vld [vmem:[%s10 + $0x2e8] sm:$0xff]
        %v775 = vld [vmem:[%s10 + $0x2f0] sm:$0xff]
        %v776 = vld [vmem:[%s10 + $0x2f8] sm:$0xff]
        %v777 = vld [vmem:[%s10 + $0x300] sm:$0xff]
        %v778 = vld [vmem:[%s10 + $0x308] sm:$0xff]
        %v779 = vld [vmem:[%s10 + $0x310] sm:$0xff]
        %v780 = vld [vmem:[%s10 + $0x318] sm:$0xff]
        %v781 = vld [vmem:[%s10 + $0x320] sm:$0xff]
        %v782 = vld [vmem:[%s10 + $0x328] sm:$0xff]
        %v783 = vld [vmem:[%s10 + $0x330] sm:$0xff]
        %v784 = vld [vmem:[%s10 + $0x338] sm:$0xff]
        %v785 = vld [vmem:[%s10 + $0x340] sm:$0xff]
        %v786 = vld [vmem:[%s10 + $0x348] sm:$0xff]
        %v787 = vld [vmem:[%s10 + $0x350] sm:$0xff]
        %v788 = vld [vmem:[%s10 + $0x358] sm:$0xff]
        %v789 = vld [vmem:[%s10 + $0x360] sm:$0xff]
        %v790 = vld [vmem:[%s10 + $0x368] sm:$0xff]
        %v791 = vld [vmem:[%s10 + $0x370] sm:$0xff]
        %v792 = vld [vmem:[%s10 + $0x378] sm:$0xff]
        %v793 = vld [vmem:[%s10 + $0x380] sm:$0xff]
        %v794 = vld [vmem:[%s10 + $0x388] sm:$0xff]
        %v795 = vld [vmem:[%s10 + $0x390] sm:$0xff]
        %v796 = vld [vmem:[%s10 + $0x398] sm:$0xff]
        %v797 = vld [vmem:[%s10 + $0x3a0] sm:$0xff]
        %v798 = vld [vmem:[%s10 + $0x3a8] sm:$0xff]
        %v799 = vld [vmem:[%s10 + $0x3b0] sm:$0xff]
        %v800 = vld [vmem:[%s10 + $0x3b8] sm:$0xff]
        %v801 = vld [vmem:[%s10 + $0x3c0] sm:$0xff]
        %v802 = vld [vmem:[%s10 + $0x3c8] sm:$0xff]
        %v803 = vld [vmem:[%s10 + $0x3d0] sm:$0xff]
        %v804 = vld [vmem:[%s10 + $0x3d8] sm:$0xff]
        %v805 = vld [vmem:[%s10 + $0x3e0] sm:$0xff]
        %v806 = vld [vmem:[%s10 + $0x3e8] sm:$0xff]
        %v807 = vld [vmem:[%s10 + $0x3f0] sm:$0xff]
        %v808 = vld [vmem:[%s10 + $0x3f8] sm:$0xff]
        %v809 = vld [vmem:[#allocation11] sm:$0x1]
        %v810 = vld [vmem:[#allocation13] sm:$0xff]
        %v811 = vld [vmem:[#allocation13 + $0x8] sm:$0xff]
        %v812 = vld [vmem:[#allocation13 + $0x10] sm:$0xff]
        %v813 = vld [vmem:[#allocation13 + $0x18] sm:$0xff]
        %v814 = vld [vmem:[#allocation13 + $0x20] sm:$0xff]
        %v815 = vld [vmem:[#allocation13 + $0x28] sm:$0xff]
        %v816 = vld [vmem:[#allocation13 + $0x30] sm:$0xff]
        %v817 = vld [vmem:[#allocation13 + $0x38] sm:$0xff]
        %v818 = vld [vmem:[#allocation13 + $0x40] sm:$0xff]
        %v819 = vld [vmem:[#allocation13 + $0x48] sm:$0xff]
        %v820 = vld [vmem:[#allocation13 + $0x50] sm:$0xff]
        %v821 = vld [vmem:[#allocation13 + $0x58] sm:$0xff]
        %v822 = vld [vmem:[#allocation13 + $0x60] sm:$0xff]
        %v823 = vld [vmem:[#allocation13 + $0x68] sm:$0xff]
        %v824 = vld [vmem:[#allocation13 + $0x70] sm:$0xff]
        %v825 = vld [vmem:[#allocation13 + $0x78] sm:$0xff]
        %v826 = vld [vmem:[#allocation14] sm:$0x1]
        %vm891 = vcmask 1040384
        %v892 = vrot.slane %v574, 7
        %v893 = vrot.slane %v575, 7
        %v894 = vsel %vm891, %v892, %v893
        %v895 = vrot.slane %v576, 7
        %v896 = vsel %vm891, %v893, %v895
        %v897 = vrot.slane %v577, 7
        %v898 = vsel %vm891, %v895, %v897
        %v899 = vrot.slane %v578, 7
        %v900 = vsel %vm891, %v897, %v899
        %v901 = vrot.slane %v579, 7
        %v902 = vsel %vm891, %v899, %v901
        %v903 = vrot.slane %v580, 7
        %v904 = vsel %vm891, %v901, %v903
        %v905 = vrot.slane %v581, 7
        %v906 = vsel %vm891, %v903, %v905
        %v907 = vrot.slane %v582, 7
        %v908 = vrot.slane %v583, 7
        %v909 = vsel %vm891, %v907, %v908
        %v910 = vrot.slane %v584, 7
        %v911 = vsel %vm891, %v908, %v910
        %v912 = vrot.slane %v585, 7
        %v913 = vsel %vm891, %v910, %v912
        %v914 = vrot.slane %v586, 7
        %v915 = vsel %vm891, %v912, %v914
        %v916 = vrot.slane %v587, 7
        %v917 = vsel %vm891, %v914, %v916
        %v918 = vrot.slane %v588, 7
        %v919 = vsel %vm891, %v916, %v918
        %v920 = vrot.slane %v589, 7
        %v921 = vsel %vm891, %v918, %v920
        %v922 = vrot.slane %v590, 7
        %v923 = vrot.slane %v591, 7
        %v924 = vsel %vm891, %v922, %v923
        %v925 = vrot.slane %v592, 7
        %v926 = vsel %vm891, %v923, %v925
        %v927 = vrot.slane %v593, 7
        %v928 = vsel %vm891, %v925, %v927
        %v929 = vrot.slane %v594, 7
        %v930 = vsel %vm891, %v927, %v929
        %v931 = vrot.slane %v595, 7
        %v932 = vsel %vm891, %v929, %v931
        %v933 = vrot.slane %v596, 7
        %v934 = vsel %vm891, %v931, %v933
        %v935 = vrot.slane %v597, 7
        %v936 = vsel %vm891, %v933, %v935
        %v937 = vrot.slane %v598, 7
        %v938 = vrot.slane %v599, 7
        %v939 = vsel %vm891, %v937, %v938
        %v940 = vrot.slane %v600, 7
        %v941 = vsel %vm891, %v938, %v940
        %v942 = vrot.slane %v601, 7
        %v943 = vsel %vm891, %v940, %v942
        %v944 = vrot.slane %v602, 7
        %v945 = vsel %vm891, %v942, %v944
        %v946 = vrot.slane %v603, 7
        %v947 = vsel %vm891, %v944, %v946
        %v948 = vrot.slane %v604, 7
        %v949 = vsel %vm891, %v946, %v948
        %v950 = vrot.slane %v605, 7
        %v951 = vsel %vm891, %v948, %v950
        %v952 = vrot.slane %v606, 7
        %v953 = vrot.slane %v607, 7
        %v954 = vsel %vm891, %v952, %v953
        %v955 = vrot.slane %v608, 7
        %v956 = vsel %vm891, %v953, %v955
        %v957 = vrot.slane %v609, 7
        %v958 = vsel %vm891, %v955, %v957
        %v959 = vrot.slane %v610, 7
        %v960 = vsel %vm891, %v957, %v959
        %v961 = vrot.slane %v611, 7
        %v962 = vsel %vm891, %v959, %v961
        %v963 = vrot.slane %v612, 7
        %v964 = vsel %vm891, %v961, %v963
        %v965 = vrot.slane %v613, 7
        %v966 = vsel %vm891, %v963, %v965
        %v967 = vrot.slane %v614, 7
        %v968 = vrot.slane %v615, 7
        %v969 = vsel %vm891, %v967, %v968
        %v970 = vrot.slane %v616, 7
        %v971 = vsel %vm891, %v968, %v970
        %v972 = vrot.slane %v617, 7
        %v973 = vsel %vm891, %v970, %v972
        %v974 = vrot.slane %v618, 7
        %v975 = vsel %vm891, %v972, %v974
        %v976 = vrot.slane %v619, 7
        %v977 = vsel %vm891, %v974, %v976
        %v978 = vrot.slane %v620, 7
        %v979 = vsel %vm891, %v976, %v978
        %v980 = vrot.slane %v621, 7
        %v981 = vsel %vm891, %v978, %v980
        %v982 = vrot.slane %v622, 7
        %v983 = vrot.slane %v623, 7
        %v984 = vsel %vm891, %v982, %v983
        %v985 = vrot.slane %v624, 7
        %v986 = vsel %vm891, %v983, %v985
        %v987 = vrot.slane %v625, 7
        %v988 = vsel %vm891, %v985, %v987
        %v989 = vrot.slane %v626, 7
        %v990 = vsel %vm891, %v987, %v989
        %v991 = vrot.slane %v627, 7
        %v992 = vsel %vm891, %v989, %v991
        %v993 = vrot.slane %v628, 7
        %v994 = vsel %vm891, %v991, %v993
        %v995 = vrot.slane %v629, 7
        %v996 = vsel %vm891, %v993, %v995
        %v997 = vrot.slane %v630, 7
        %v998 = vrot.slane %v631, 7
        %v999 = vsel %vm891, %v997, %v998
        %v1000 = vrot.slane %v632, 7
        %v1001 = vsel %vm891, %v998, %v1000
        %v1002 = vrot.slane %v633, 7
        %v1003 = vsel %vm891, %v1000, %v1002
        %v1004 = vrot.slane %v634, 7
        %v1005 = vsel %vm891, %v1002, %v1004
        %v1006 = vrot.slane %v635, 7
        %v1007 = vsel %vm891, %v1004, %v1006
        %v1008 = vrot.slane %v636, 7
        %v1009 = vsel %vm891, %v1006, %v1008
        %v1010 = vrot.slane %v637, 7
        %v1011 = vsel %vm891, %v1008, %v1010
        %v1028 = vsel %vm891, 0.0, %v892
        %v1029 = vsel %vm891, 0.0, %v907
        %v1030 = vsel %vm891, 0.0, %v922
        %v1031 = vsel %vm891, 0.0, %v937
        %v1032 = vsel %vm891, 0.0, %v952
        %v1033 = vsel %vm891, 0.0, %v967
        %v1034 = vsel %vm891, 0.0, %v982
        %v1035 = vsel %vm891, 0.0, %v997
        %v1036 = vsel %vm891, %v905, 0.0
        %v1037 = vsel %vm891, %v920, 0.0
        %v1038 = vsel %vm891, %v935, 0.0
        %v1039 = vsel %vm891, %v950, 0.0
        %v1040 = vsel %vm891, %v965, 0.0
        %v1041 = vsel %vm891, %v980, 0.0
        %v1042 = vsel %vm891, %v995, 0.0
        %v1043 = vsel %vm891, %v1010, 0.0
        %1045 = vset.pattern.permute.xlu0 0
        %1046 = vperm.xlu0 %1045, %v1028
        %v1047 = vpop.permute.xlu0 %1046
        %1049 = vset.pattern.permute.xlu0 0
        %1050 = vperm.xlu0 %1049, %v894
        %v1051 = vpop.permute.xlu0 %1050
        %1053 = vset.pattern.permute.xlu0 0
        %1054 = vperm.xlu0 %1053, %v896
        %v1055 = vpop.permute.xlu0 %1054
        %1057 = vset.pattern.permute.xlu0 0
        %1058 = vperm.xlu0 %1057, %v898
        %v1059 = vpop.permute.xlu0 %1058
        %1061 = vset.pattern.permute.xlu0 0
        %1062 = vperm.xlu0 %1061, %v900
        %v1063 = vpop.permute.xlu0 %1062
        %1065 = vset.pattern.permute.xlu0 0
        %1066 = vperm.xlu0 %1065, %v902
        %v1067 = vpop.permute.xlu0 %1066
        %1069 = vset.pattern.permute.xlu0 0
        %1070 = vperm.xlu0 %1069, %v904
        %v1071 = vpop.permute.xlu0 %1070
        %1073 = vset.pattern.permute.xlu0 0
        %1074 = vperm.xlu0 %1073, %v906
        %v1075 = vpop.permute.xlu0 %1074
        %1078 = vset.pattern.permute.xlu0 0
        %1079 = vperm.xlu0 %1078, %v1029
        %v1080 = vpop.permute.xlu0 %1079
        %1082 = vset.pattern.permute.xlu0 0
        %1083 = vperm.xlu0 %1082, %v909
        %v1084 = vpop.permute.xlu0 %1083
        %1086 = vset.pattern.permute.xlu0 0
        %1087 = vperm.xlu0 %1086, %v911
        %v1088 = vpop.permute.xlu0 %1087
        %1090 = vset.pattern.permute.xlu0 0
        %1091 = vperm.xlu0 %1090, %v913
        %v1092 = vpop.permute.xlu0 %1091
        %1094 = vset.pattern.permute.xlu0 0
        %1095 = vperm.xlu0 %1094, %v915
        %v1096 = vpop.permute.xlu0 %1095
        %1098 = vset.pattern.permute.xlu0 0
        %1099 = vperm.xlu0 %1098, %v917
        %v1100 = vpop.permute.xlu0 %1099
        %1102 = vset.pattern.permute.xlu0 0
        %1103 = vperm.xlu0 %1102, %v919
        %v1104 = vpop.permute.xlu0 %1103
        %1106 = vset.pattern.permute.xlu0 0
        %1107 = vperm.xlu0 %1106, %v921
        %v1108 = vpop.permute.xlu0 %1107
        %1111 = vset.pattern.permute.xlu0 0
        %1112 = vperm.xlu0 %1111, %v1030
        %v1113 = vpop.permute.xlu0 %1112
        %1115 = vset.pattern.permute.xlu0 0
        %1116 = vperm.xlu0 %1115, %v924
        %v1117 = vpop.permute.xlu0 %1116
        %1119 = vset.pattern.permute.xlu0 0
        %1120 = vperm.xlu0 %1119, %v926
        %v1121 = vpop.permute.xlu0 %1120
        %1123 = vset.pattern.permute.xlu0 0
        %1124 = vperm.xlu0 %1123, %v928
        %v1125 = vpop.permute.xlu0 %1124
        %1127 = vset.pattern.permute.xlu0 0
        %1128 = vperm.xlu0 %1127, %v930
        %v1129 = vpop.permute.xlu0 %1128
        %1131 = vset.pattern.permute.xlu0 0
        %1132 = vperm.xlu0 %1131, %v932
        %v1133 = vpop.permute.xlu0 %1132
        %1135 = vset.pattern.permute.xlu0 0
        %1136 = vperm.xlu0 %1135, %v934
        %v1137 = vpop.permute.xlu0 %1136
        %1139 = vset.pattern.permute.xlu0 0
        %1140 = vperm.xlu0 %1139, %v936
        %v1141 = vpop.permute.xlu0 %1140
        %1144 = vset.pattern.permute.xlu0 0
        %1145 = vperm.xlu0 %1144, %v1031
        %v1146 = vpop.permute.xlu0 %1145
        %1148 = vset.pattern.permute.xlu0 0
        %1149 = vperm.xlu0 %1148, %v939
        %v1150 = vpop.permute.xlu0 %1149
        %1152 = vset.pattern.permute.xlu0 0
        %1153 = vperm.xlu0 %1152, %v941
        %v1154 = vpop.permute.xlu0 %1153
        %1156 = vset.pattern.permute.xlu0 0
        %1157 = vperm.xlu0 %1156, %v943
        %v1158 = vpop.permute.xlu0 %1157
        %1160 = vset.pattern.permute.xlu0 0
        %1161 = vperm.xlu0 %1160, %v945
        %v1162 = vpop.permute.xlu0 %1161
        %1164 = vset.pattern.permute.xlu0 0
        %1165 = vperm.xlu0 %1164, %v947
        %v1166 = vpop.permute.xlu0 %1165
        %1168 = vset.pattern.permute.xlu0 0
        %1169 = vperm.xlu0 %1168, %v949
        %v1170 = vpop.permute.xlu0 %1169
        %1172 = vset.pattern.permute.xlu0 0
        %1173 = vperm.xlu0 %1172, %v951
        %v1174 = vpop.permute.xlu0 %1173
        %1177 = vset.pattern.permute.xlu0 0
        %1178 = vperm.xlu0 %1177, %v1032
        %v1179 = vpop.permute.xlu0 %1178
        %1181 = vset.pattern.permute.xlu0 0
        %1182 = vperm.xlu0 %1181, %v954
        %v1183 = vpop.permute.xlu0 %1182
        %1185 = vset.pattern.permute.xlu0 0
        %1186 = vperm.xlu0 %1185, %v956
        %v1187 = vpop.permute.xlu0 %1186
        %1189 = vset.pattern.permute.xlu0 0
        %1190 = vperm.xlu0 %1189, %v958
        %v1191 = vpop.permute.xlu0 %1190
        %1193 = vset.pattern.permute.xlu0 0
        %1194 = vperm.xlu0 %1193, %v960
        %v1195 = vpop.permute.xlu0 %1194
        %1197 = vset.pattern.permute.xlu0 0
        %1198 = vperm.xlu0 %1197, %v962
        %v1199 = vpop.permute.xlu0 %1198
        %1201 = vset.pattern.permute.xlu0 0
        %1202 = vperm.xlu0 %1201, %v964
        %v1203 = vpop.permute.xlu0 %1202
        %1205 = vset.pattern.permute.xlu0 0
        %1206 = vperm.xlu0 %1205, %v966
        %v1207 = vpop.permute.xlu0 %1206
        %1210 = vset.pattern.permute.xlu0 0
        %1211 = vperm.xlu0 %1210, %v1033
        %v1212 = vpop.permute.xlu0 %1211
        %1214 = vset.pattern.permute.xlu0 0
        %1215 = vperm.xlu0 %1214, %v969
        %v1216 = vpop.permute.xlu0 %1215
        %1218 = vset.pattern.permute.xlu0 0
        %1219 = vperm.xlu0 %1218, %v971
        %v1220 = vpop.permute.xlu0 %1219
        %1222 = vset.pattern.permute.xlu0 0
        %1223 = vperm.xlu0 %1222, %v973
        %v1224 = vpop.permute.xlu0 %1223
        %1226 = vset.pattern.permute.xlu0 0
        %1227 = vperm.xlu0 %1226, %v975
        %v1228 = vpop.permute.xlu0 %1227
        %1230 = vset.pattern.permute.xlu0 0
        %1231 = vperm.xlu0 %1230, %v977
        %v1232 = vpop.permute.xlu0 %1231
        %1234 = vset.pattern.permute.xlu0 0
        %1235 = vperm.xlu0 %1234, %v979
        %v1236 = vpop.permute.xlu0 %1235
        %1238 = vset.pattern.permute.xlu0 0
        %1239 = vperm.xlu0 %1238, %v981
        %v1240 = vpop.permute.xlu0 %1239
        %1243 = vset.pattern.permute.xlu0 0
        %1244 = vperm.xlu0 %1243, %v1034
        %v1245 = vpop.permute.xlu0 %1244
        %1247 = vset.pattern.permute.xlu0 0
        %1248 = vperm.xlu0 %1247, %v984
        %v1249 = vpop.permute.xlu0 %1248
        %1251 = vset.pattern.permute.xlu0 0
        %1252 = vperm.xlu0 %1251, %v986
        %v1253 = vpop.permute.xlu0 %1252
        %1255 = vset.pattern.permute.xlu0 0
        %1256 = vperm.xlu0 %1255, %v988
        %v1257 = vpop.permute.xlu0 %1256
        %1259 = vset.pattern.permute.xlu0 0
        %1260 = vperm.xlu0 %1259, %v990
        %v1261 = vpop.permute.xlu0 %1260
        %1263 = vset.pattern.permute.xlu0 0
        %1264 = vperm.xlu0 %1263, %v992
        %v1265 = vpop.permute.xlu0 %1264
        %1267 = vset.pattern.permute.xlu0 0
        %1268 = vperm.xlu0 %1267, %v994
        %v1269 = vpop.permute.xlu0 %1268
        %1271 = vset.pattern.permute.xlu0 0
        %1272 = vperm.xlu0 %1271, %v996
        %v1273 = vpop.permute.xlu0 %1272
        %1276 = vset.pattern.permute.xlu0 0
        %1277 = vperm.xlu0 %1276, %v1035
        %v1278 = vpop.permute.xlu0 %1277
        %1280 = vset.pattern.permute.xlu0 0
        %1281 = vperm.xlu0 %1280, %v999
        %v1282 = vpop.permute.xlu0 %1281
        %1284 = vset.pattern.permute.xlu0 0
        %1285 = vperm.xlu0 %1284, %v1001
        %v1286 = vpop.permute.xlu0 %1285
        %1288 = vset.pattern.permute.xlu0 0
        %1289 = vperm.xlu0 %1288, %v1003
        %v1290 = vpop.permute.xlu0 %1289
        %1292 = vset.pattern.permute.xlu0 0
        %1293 = vperm.xlu0 %1292, %v1005
        %v1294 = vpop.permute.xlu0 %1293
        %1296 = vset.pattern.permute.xlu0 0
        %1297 = vperm.xlu0 %1296, %v1007
        %v1298 = vpop.permute.xlu0 %1297
        %1300 = vset.pattern.permute.xlu0 0
        %1301 = vperm.xlu0 %1300, %v1009
        %v1302 = vpop.permute.xlu0 %1301
        %1304 = vset.pattern.permute.xlu0 0
        %1305 = vperm.xlu0 %1304, %v1011
        %v1306 = vpop.permute.xlu0 %1305
        %v1308 = vlaneseq
        %v1309 = vshrl.u32 %v1308, 7
        %v1310 = vsub.s32 0, %v1309
        %v1311 = vrot.slane %v638, %v1310
        %v1312 = vmul.f32 %v1047, %v1311
        %v1313 = vmul.f32 %v1051, %v1311
        %v1314 = vmul.f32 %v1055, %v1311
        %v1315 = vmul.f32 %v1059, %v1311
        %v1316 = vmul.f32 %v1063, %v1311
        %v1317 = vmul.f32 %v1067, %v1311
        %v1318 = vmul.f32 %v1071, %v1311
        %v1319 = vmul.f32 %v1075, %v1311
        %v1320 = vmul.f32 %v1080, %v1311
        %v1321 = vmul.f32 %v1084, %v1311
        %v1322 = vmul.f32 %v1088, %v1311
        %v1323 = vmul.f32 %v1092, %v1311
        %v1324 = vmul.f32 %v1096, %v1311
        %v1325 = vmul.f32 %v1100, %v1311
        %v1326 = vmul.f32 %v1104, %v1311
        %v1327 = vmul.f32 %v1108, %v1311
        %v1328 = vmul.f32 %v1113, %v1311
        %v1329 = vmul.f32 %v1117, %v1311
        %v1330 = vmul.f32 %v1121, %v1311
        %v1331 = vmul.f32 %v1125, %v1311
        %v1332 = vmul.f32 %v1129, %v1311
        %v1333 = vmul.f32 %v1133, %v1311
        %v1334 = vmul.f32 %v1137, %v1311
        %v1335 = vmul.f32 %v1141, %v1311
        %v1336 = vmul.f32 %v1146, %v1311
        %v1337 = vmul.f32 %v1150, %v1311
        %v1338 = vmul.f32 %v1154, %v1311
        %v1339 = vmul.f32 %v1158, %v1311
        %v1340 = vmul.f32 %v1162, %v1311
        %v1341 = vmul.f32 %v1166, %v1311
        %v1342 = vmul.f32 %v1170, %v1311
        %v1343 = vmul.f32 %v1174, %v1311
        %v1344 = vmul.f32 %v1179, %v1311
        %v1345 = vmul.f32 %v1183, %v1311
        %v1346 = vmul.f32 %v1187, %v1311
        %v1347 = vmul.f32 %v1191, %v1311
        %v1348 = vmul.f32 %v1195, %v1311
        %v1349 = vmul.f32 %v1199, %v1311
        %v1350 = vmul.f32 %v1203, %v1311
        %v1351 = vmul.f32 %v1207, %v1311
        %v1352 = vmul.f32 %v1212, %v1311
        %v1353 = vmul.f32 %v1216, %v1311
        %v1354 = vmul.f32 %v1220, %v1311
        %v1355 = vmul.f32 %v1224, %v1311
        %v1356 = vmul.f32 %v1228, %v1311
        %v1357 = vmul.f32 %v1232, %v1311
        %v1358 = vmul.f32 %v1236, %v1311
        %v1359 = vmul.f32 %v1240, %v1311
        %v1360 = vmul.f32 %v1245, %v1311
        %v1361 = vmul.f32 %v1249, %v1311
        %v1362 = vmul.f32 %v1253, %v1311
        %v1363 = vmul.f32 %v1257, %v1311
        %v1364 = vmul.f32 %v1261, %v1311
        %v1365 = vmul.f32 %v1265, %v1311
        %v1366 = vmul.f32 %v1269, %v1311
        %v1367 = vmul.f32 %v1273, %v1311
        %v1368 = vmul.f32 %v1278, %v1311
        %v1369 = vmul.f32 %v1282, %v1311
        %v1370 = vmul.f32 %v1286, %v1311
        %v1371 = vmul.f32 %v1290, %v1311
        %v1372 = vmul.f32 %v1294, %v1311
        %v1373 = vmul.f32 %v1298, %v1311
        %v1374 = vmul.f32 %v1302, %v1311
        %v1375 = vmul.f32 %v1306, %v1311
        %1377 = vset.pattern.permute.xlu0 0
        %1378 = vperm.xlu0 %1377, %v1036
        %v1379 = vpop.permute.xlu0 %1378
        %1382 = vset.pattern.permute.xlu0 0
        %1383 = vperm.xlu0 %1382, %v1037
        %v1384 = vpop.permute.xlu0 %1383
        %1387 = vset.pattern.permute.xlu0 0
        %1388 = vperm.xlu0 %1387, %v1038
        %v1389 = vpop.permute.xlu0 %1388
        %1392 = vset.pattern.permute.xlu0 0
        %1393 = vperm.xlu0 %1392, %v1039
        %v1394 = vpop.permute.xlu0 %1393
        %1397 = vset.pattern.permute.xlu0 0
        %1398 = vperm.xlu0 %1397, %v1040
        %v1399 = vpop.permute.xlu0 %1398
        %1402 = vset.pattern.permute.xlu0 0
        %1403 = vperm.xlu0 %1402, %v1041
        %v1404 = vpop.permute.xlu0 %1403
        %1407 = vset.pattern.permute.xlu0 0
        %1408 = vperm.xlu0 %1407, %v1042
        %v1409 = vpop.permute.xlu0 %1408
        %1412 = vset.pattern.permute.xlu0 0
        %1413 = vperm.xlu0 %1412, %v1043
        %v1414 = vpop.permute.xlu0 %1413
        %v1416 = vlaneseq
        %v1417 = vshrl.u32 %v1416, 7
        %v1418 = vsub.s32 1, %v1417
        %v1419 = vrot.slane %v638, %v1418
        %v1420 = vmul.f32 %v1047, %v1419
        %v1421 = vmul.f32 %v1051, %v1419
        %v1422 = vmul.f32 %v1055, %v1419
        %v1423 = vmul.f32 %v1059, %v1419
        %v1424 = vmul.f32 %v1063, %v1419
        %v1425 = vmul.f32 %v1067, %v1419
        %v1426 = vmul.f32 %v1071, %v1419
        %v1427 = vmul.f32 %v1075, %v1419
        %v1428 = vmul.f32 %v1379, %v1419
        %v1429 = vmul.f32 %v1080, %v1419
        %v1430 = vmul.f32 %v1084, %v1419
        %v1431 = vmul.f32 %v1088, %v1419
        %v1432 = vmul.f32 %v1092, %v1419
        %v1433 = vmul.f32 %v1096, %v1419
        %v1434 = vmul.f32 %v1100, %v1419
        %v1435 = vmul.f32 %v1104, %v1419
        %v1436 = vmul.f32 %v1108, %v1419
        %v1437 = vmul.f32 %v1384, %v1419
        %v1438 = vmul.f32 %v1113, %v1419
        %v1439 = vmul.f32 %v1117, %v1419
        %v1440 = vmul.f32 %v1121, %v1419
        %v1441 = vmul.f32 %v1125, %v1419
        %v1442 = vmul.f32 %v1129, %v1419
        %v1443 = vmul.f32 %v1133, %v1419
        %v1444 = vmul.f32 %v1137, %v1419
        %v1445 = vmul.f32 %v1141, %v1419
        %v1446 = vmul.f32 %v1389, %v1419
        %v1447 = vmul.f32 %v1146, %v1419
        %v1448 = vmul.f32 %v1150, %v1419
        %v1449 = vmul.f32 %v1154, %v1419
        %v1450 = vmul.f32 %v1158, %v1419
        %v1451 = vmul.f32 %v1162, %v1419
        %v1452 = vmul.f32 %v1166, %v1419
        %v1453 = vmul.f32 %v1170, %v1419
        %v1454 = vmul.f32 %v1174, %v1419
        %v1455 = vmul.f32 %v1394, %v1419
        %v1456 = vmul.f32 %v1179, %v1419
        %v1457 = vmul.f32 %v1183, %v1419
        %v1458 = vmul.f32 %v1187, %v1419
        %v1459 = vmul.f32 %v1191, %v1419
        %v1460 = vmul.f32 %v1195, %v1419
        %v1461 = vmul.f32 %v1199, %v1419
        %v1462 = vmul.f32 %v1203, %v1419
        %v1463 = vmul.f32 %v1207, %v1419
        %v1464 = vmul.f32 %v1399, %v1419
        %v1465 = vmul.f32 %v1212, %v1419
        %v1466 = vmul.f32 %v1216, %v1419
        %v1467 = vmul.f32 %v1220, %v1419
        %v1468 = vmul.f32 %v1224, %v1419
        %v1469 = vmul.f32 %v1228, %v1419
        %v1470 = vmul.f32 %v1232, %v1419
        %v1471 = vmul.f32 %v1236, %v1419
        %v1472 = vmul.f32 %v1240, %v1419
        %v1473 = vmul.f32 %v1404, %v1419
        %v1474 = vmul.f32 %v1245, %v1419
        %v1475 = vmul.f32 %v1249, %v1419
        %v1476 = vmul.f32 %v1253, %v1419
        %v1477 = vmul.f32 %v1257, %v1419
        %v1478 = vmul.f32 %v1261, %v1419
        %v1479 = vmul.f32 %v1265, %v1419
        %v1480 = vmul.f32 %v1269, %v1419
        %v1481 = vmul.f32 %v1273, %v1419
        %v1482 = vmul.f32 %v1409, %v1419
        %v1483 = vmul.f32 %v1278, %v1419
        %v1484 = vmul.f32 %v1282, %v1419
        %v1485 = vmul.f32 %v1286, %v1419
        %v1486 = vmul.f32 %v1290, %v1419
        %v1487 = vmul.f32 %v1294, %v1419
        %v1488 = vmul.f32 %v1298, %v1419
        %v1489 = vmul.f32 %v1302, %v1419
        %v1490 = vmul.f32 %v1306, %v1419
        %v1491 = vmul.f32 %v1414, %v1419
        %vm1564 = vcmask 1046528
        %v1565 = vrot.slane %v1420, 1
        %v1566 = vrot.slane %v1421, 1
        %v1567 = vsel %vm1564, %v1565, %v1566
        %v1568 = vrot.slane %v1422, 1
        %v1569 = vsel %vm1564, %v1566, %v1568
        %v1570 = vrot.slane %v1423, 1
        %v1571 = vsel %vm1564, %v1568, %v1570
        %v1572 = vrot.slane %v1424, 1
        %v1573 = vsel %vm1564, %v1570, %v1572
        %v1574 = vrot.slane %v1425, 1
        %v1575 = vsel %vm1564, %v1572, %v1574
        %v1576 = vrot.slane %v1426, 1
        %v1577 = vsel %vm1564, %v1574, %v1576
        %v1578 = vrot.slane %v1427, 1
        %v1579 = vsel %vm1564, %v1576, %v1578
        %v1580 = vrot.slane %v1428, 1
        %v1581 = vsel %vm1564, %v1578, %v1580
        %v1582 = vrot.slane %v1429, 1
        %v1583 = vrot.slane %v1430, 1
        %v1584 = vsel %vm1564, %v1582, %v1583
        %v1585 = vrot.slane %v1431, 1
        %v1586 = vsel %vm1564, %v1583, %v1585
        %v1587 = vrot.slane %v1432, 1
        %v1588 = vsel %vm1564, %v1585, %v1587
        %v1589 = vrot.slane %v1433, 1
        %v1590 = vsel %vm1564, %v1587, %v1589
        %v1591 = vrot.slane %v1434, 1
        %v1592 = vsel %vm1564, %v1589, %v1591
        %v1593 = vrot.slane %v1435, 1
        %v1594 = vsel %vm1564, %v1591, %v1593
        %v1595 = vrot.slane %v1436, 1
        %v1596 = vsel %vm1564, %v1593, %v1595
        %v1597 = vrot.slane %v1437, 1
        %v1598 = vsel %vm1564, %v1595, %v1597
        %v1599 = vrot.slane %v1438, 1
        %v1600 = vrot.slane %v1439, 1
        %v1601 = vsel %vm1564, %v1599, %v1600
        %v1602 = vrot.slane %v1440, 1
        %v1603 = vsel %vm1564, %v1600, %v1602
        %v1604 = vrot.slane %v1441, 1
        %v1605 = vsel %vm1564, %v1602, %v1604
        %v1606 = vrot.slane %v1442, 1
        %v1607 = vsel %vm1564, %v1604, %v1606
        %v1608 = vrot.slane %v1443, 1
        %v1609 = vsel %vm1564, %v1606, %v1608
        %v1610 = vrot.slane %v1444, 1
        %v1611 = vsel %vm1564, %v1608, %v1610
        %v1612 = vrot.slane %v1445, 1
        %v1613 = vsel %vm1564, %v1610, %v1612
        %v1614 = vrot.slane %v1446, 1
        %v1615 = vsel %vm1564, %v1612, %v1614
        %v1616 = vrot.slane %v1447, 1
        %v1617 = vrot.slane %v1448, 1
        %v1618 = vsel %vm1564, %v1616, %v1617
        %v1619 = vrot.slane %v1449, 1
        %v1620 = vsel %vm1564, %v1617, %v1619
        %v1621 = vrot.slane %v1450, 1
        %v1622 = vsel %vm1564, %v1619, %v1621
        %v1623 = vrot.slane %v1451, 1
        %v1624 = vsel %vm1564, %v1621, %v1623
        %v1625 = vrot.slane %v1452, 1
        %v1626 = vsel %vm1564, %v1623, %v1625
        %v1627 = vrot.slane %v1453, 1
        %v1628 = vsel %vm1564, %v1625, %v1627
        %v1629 = vrot.slane %v1454, 1
        %v1630 = vsel %vm1564, %v1627, %v1629
        %v1631 = vrot.slane %v1455, 1
        %v1632 = vsel %vm1564, %v1629, %v1631
        %v1633 = vrot.slane %v1456, 1
        %v1634 = vrot.slane %v1457, 1
        %v1635 = vsel %vm1564, %v1633, %v1634
        %v1636 = vrot.slane %v1458, 1
        %v1637 = vsel %vm1564, %v1634, %v1636
        %v1638 = vrot.slane %v1459, 1
        %v1639 = vsel %vm1564, %v1636, %v1638
        %v1640 = vrot.slane %v1460, 1
        %v1641 = vsel %vm1564, %v1638, %v1640
        %v1642 = vrot.slane %v1461, 1
        %v1643 = vsel %vm1564, %v1640, %v1642
        %v1644 = vrot.slane %v1462, 1
        %v1645 = vsel %vm1564, %v1642, %v1644
        %v1646 = vrot.slane %v1463, 1
        %v1647 = vsel %vm1564, %v1644, %v1646
        %v1648 = vrot.slane %v1464, 1
        %v1649 = vsel %vm1564, %v1646, %v1648
        %v1650 = vrot.slane %v1465, 1
        %v1651 = vrot.slane %v1466, 1
        %v1652 = vsel %vm1564, %v1650, %v1651
        %v1653 = vrot.slane %v1467, 1
        %v1654 = vsel %vm1564, %v1651, %v1653
        %v1655 = vrot.slane %v1468, 1
        %v1656 = vsel %vm1564, %v1653, %v1655
        %v1657 = vrot.slane %v1469, 1
        %v1658 = vsel %vm1564, %v1655, %v1657
        %v1659 = vrot.slane %v1470, 1
        %v1660 = vsel %vm1564, %v1657, %v1659
        %v1661 = vrot.slane %v1471, 1
        %v1662 = vsel %vm1564, %v1659, %v1661
        %v1663 = vrot.slane %v1472, 1
        %v1664 = vsel %vm1564, %v1661, %v1663
        %v1665 = vrot.slane %v1473, 1
        %v1666 = vsel %vm1564, %v1663, %v1665
        %v1667 = vrot.slane %v1474, 1
        %v1668 = vrot.slane %v1475, 1
        %v1669 = vsel %vm1564, %v1667, %v1668
        %v1670 = vrot.slane %v1476, 1
        %v1671 = vsel %vm1564, %v1668, %v1670
        %v1672 = vrot.slane %v1477, 1
        %v1673 = vsel %vm1564, %v1670, %v1672
        %v1674 = vrot.slane %v1478, 1
        %v1675 = vsel %vm1564, %v1672, %v1674
        %v1676 = vrot.slane %v1479, 1
        %v1677 = vsel %vm1564, %v1674, %v1676
        %v1678 = vrot.slane %v1480, 1
        %v1679 = vsel %vm1564, %v1676, %v1678
        %v1680 = vrot.slane %v1481, 1
        %v1681 = vsel %vm1564, %v1678, %v1680
        %v1682 = vrot.slane %v1482, 1
        %v1683 = vsel %vm1564, %v1680, %v1682
        %v1684 = vrot.slane %v1483, 1
        %v1685 = vrot.slane %v1484, 1
        %v1686 = vsel %vm1564, %v1684, %v1685
        %v1687 = vrot.slane %v1485, 1
        %v1688 = vsel %vm1564, %v1685, %v1687
        %v1689 = vrot.slane %v1486, 1
        %v1690 = vsel %vm1564, %v1687, %v1689
        %v1691 = vrot.slane %v1487, 1
        %v1692 = vsel %vm1564, %v1689, %v1691
        %v1693 = vrot.slane %v1488, 1
        %v1694 = vsel %vm1564, %v1691, %v1693
        %v1695 = vrot.slane %v1489, 1
        %v1696 = vsel %vm1564, %v1693, %v1695
        %v1697 = vrot.slane %v1490, 1
        %v1698 = vsel %vm1564, %v1695, %v1697
        %v1699 = vrot.slane %v1491, 1
        %v1700 = vsel %vm1564, %v1697, %v1699
        %v1765 = vadd.f32 %v1312, %v1567
        %v1766 = vadd.f32 %v1313, %v1569
        %v1767 = vadd.f32 %v1314, %v1571
        %v1768 = vadd.f32 %v1315, %v1573
        %v1769 = vadd.f32 %v1316, %v1575
        %v1770 = vadd.f32 %v1317, %v1577
        %v1771 = vadd.f32 %v1318, %v1579
        %v1772 = vadd.f32 %v1319, %v1581
        %v1773 = vadd.f32 %v1320, %v1584
        %v1774 = vadd.f32 %v1321, %v1586
        %v1775 = vadd.f32 %v1322, %v1588
        %v1776 = vadd.f32 %v1323, %v1590
        %v1777 = vadd.f32 %v1324, %v1592
        %v1778 = vadd.f32 %v1325, %v1594
        %v1779 = vadd.f32 %v1326, %v1596
        %v1780 = vadd.f32 %v1327, %v1598
        %v1781 = vadd.f32 %v1328, %v1601
        %v1782 = vadd.f32 %v1329, %v1603
        %v1783 = vadd.f32 %v1330, %v1605
        %v1784 = vadd.f32 %v1331, %v1607
        %v1785 = vadd.f32 %v1332, %v1609
        %v1786 = vadd.f32 %v1333, %v1611
        %v1787 = vadd.f32 %v1334, %v1613
        %v1788 = vadd.f32 %v1335, %v1615
        %v1789 = vadd.f32 %v1336, %v1618
        %v1790 = vadd.f32 %v1337, %v1620
        %v1791 = vadd.f32 %v1338, %v1622
        %v1792 = vadd.f32 %v1339, %v1624
        %v1793 = vadd.f32 %v1340, %v1626
        %v1794 = vadd.f32 %v1341, %v1628
        %v1795 = vadd.f32 %v1342, %v1630
        %v1796 = vadd.f32 %v1343, %v1632
        %v1797 = vadd.f32 %v1344, %v1635
        %v1798 = vadd.f32 %v1345, %v1637
        %v1799 = vadd.f32 %v1346, %v1639
        %v1800 = vadd.f32 %v1347, %v1641
        %v1801 = vadd.f32 %v1348, %v1643
        %v1802 = vadd.f32 %v1349, %v1645
        %v1803 = vadd.f32 %v1350, %v1647
        %v1804 = vadd.f32 %v1351, %v1649
        %v1805 = vadd.f32 %v1352, %v1652
        %v1806 = vadd.f32 %v1353, %v1654
        %v1807 = vadd.f32 %v1354, %v1656
        %v1808 = vadd.f32 %v1355, %v1658
        %v1809 = vadd.f32 %v1356, %v1660
        %v1810 = vadd.f32 %v1357, %v1662
        %v1811 = vadd.f32 %v1358, %v1664
        %v1812 = vadd.f32 %v1359, %v1666
        %v1813 = vadd.f32 %v1360, %v1669
        %v1814 = vadd.f32 %v1361, %v1671
        %v1815 = vadd.f32 %v1362, %v1673
        %v1816 = vadd.f32 %v1363, %v1675
        %v1817 = vadd.f32 %v1364, %v1677
        %v1818 = vadd.f32 %v1365, %v1679
        %v1819 = vadd.f32 %v1366, %v1681
        %v1820 = vadd.f32 %v1367, %v1683
        %v1821 = vadd.f32 %v1368, %v1686
        %v1822 = vadd.f32 %v1369, %v1688
        %v1823 = vadd.f32 %v1370, %v1690
        %v1824 = vadd.f32 %v1371, %v1692
        %v1825 = vadd.f32 %v1372, %v1694
        %v1826 = vadd.f32 %v1373, %v1696
        %v1827 = vadd.f32 %v1374, %v1698
        %v1828 = vadd.f32 %v1375, %v1700
        %v1829 = vlaneseq
        %v1830 = vshrl.u32 %v1829, 7
        %v1831 = vsub.s32 2, %v1830
        %v1832 = vrot.slane %v638, %v1831
        %v1833 = vmul.f32 %v1047, %v1832
        %v1834 = vmul.f32 %v1051, %v1832
        %v1835 = vmul.f32 %v1055, %v1832
        %v1836 = vmul.f32 %v1059, %v1832
        %v1837 = vmul.f32 %v1063, %v1832
        %v1838 = vmul.f32 %v1067, %v1832
        %v1839 = vmul.f32 %v1071, %v1832
        %v1840 = vmul.f32 %v1075, %v1832
        %v1841 = vmul.f32 %v1379, %v1832
        %v1842 = vmul.f32 %v1080, %v1832
        %v1843 = vmul.f32 %v1084, %v1832
        %v1844 = vmul.f32 %v1088, %v1832
        %v1845 = vmul.f32 %v1092, %v1832
        %v1846 = vmul.f32 %v1096, %v1832
        %v1847 = vmul.f32 %v1100, %v1832
        %v1848 = vmul.f32 %v1104, %v1832
        %v1849 = vmul.f32 %v1108, %v1832
        %v1850 = vmul.f32 %v1384, %v1832
        %v1851 = vmul.f32 %v1113, %v1832
        %v1852 = vmul.f32 %v1117, %v1832
        %v1853 = vmul.f32 %v1121, %v1832
        %v1854 = vmul.f32 %v1125, %v1832
        %v1855 = vmul.f32 %v1129, %v1832
        %v1856 = vmul.f32 %v1133, %v1832
        %v1857 = vmul.f32 %v1137, %v1832
        %v1858 = vmul.f32 %v1141, %v1832
        %v1859 = vmul.f32 %v1389, %v1832
        %v1860 = vmul.f32 %v1146, %v1832
        %v1861 = vmul.f32 %v1150, %v1832
        %v1862 = vmul.f32 %v1154, %v1832
        %v1863 = vmul.f32 %v1158, %v1832
        %v1864 = vmul.f32 %v1162, %v1832
        %v1865 = vmul.f32 %v1166, %v1832
        %v1866 = vmul.f32 %v1170, %v1832
        %v1867 = vmul.f32 %v1174, %v1832
        %v1868 = vmul.f32 %v1394, %v1832
        %v1869 = vmul.f32 %v1179, %v1832
        %v1870 = vmul.f32 %v1183, %v1832
        %v1871 = vmul.f32 %v1187, %v1832
        %v1872 = vmul.f32 %v1191, %v1832
        %v1873 = vmul.f32 %v1195, %v1832
        %v1874 = vmul.f32 %v1199, %v1832
        %v1875 = vmul.f32 %v1203, %v1832
        %v1876 = vmul.f32 %v1207, %v1832
        %v1877 = vmul.f32 %v1399, %v1832
        %v1878 = vmul.f32 %v1212, %v1832
        %v1879 = vmul.f32 %v1216, %v1832
        %v1880 = vmul.f32 %v1220, %v1832
        %v1881 = vmul.f32 %v1224, %v1832
        %v1882 = vmul.f32 %v1228, %v1832
        %v1883 = vmul.f32 %v1232, %v1832
        %v1884 = vmul.f32 %v1236, %v1832
        %v1885 = vmul.f32 %v1240, %v1832
        %v1886 = vmul.f32 %v1404, %v1832
        %v1887 = vmul.f32 %v1245, %v1832
        %v1888 = vmul.f32 %v1249, %v1832
        %v1889 = vmul.f32 %v1253, %v1832
        %v1890 = vmul.f32 %v1257, %v1832
        %v1891 = vmul.f32 %v1261, %v1832
        %v1892 = vmul.f32 %v1265, %v1832
        %v1893 = vmul.f32 %v1269, %v1832
        %v1894 = vmul.f32 %v1273, %v1832
        %v1895 = vmul.f32 %v1409, %v1832
        %v1896 = vmul.f32 %v1278, %v1832
        %v1897 = vmul.f32 %v1282, %v1832
        %v1898 = vmul.f32 %v1286, %v1832
        %v1899 = vmul.f32 %v1290, %v1832
        %v1900 = vmul.f32 %v1294, %v1832
        %v1901 = vmul.f32 %v1298, %v1832
        %v1902 = vmul.f32 %v1302, %v1832
        %v1903 = vmul.f32 %v1306, %v1832
        %v1904 = vmul.f32 %v1414, %v1832
        %vm1977 = vcmask 1045504
        %v1978 = vrot.slane %v1833, 2
        %v1979 = vrot.slane %v1834, 2
        %v1980 = vsel %vm1977, %v1978, %v1979
        %v1981 = vrot.slane %v1835, 2
        %v1982 = vsel %vm1977, %v1979, %v1981
        %v1983 = vrot.slane %v1836, 2
        %v1984 = vsel %vm1977, %v1981, %v1983
        %v1985 = vrot.slane %v1837, 2
        %v1986 = vsel %vm1977, %v1983, %v1985
        %v1987 = vrot.slane %v1838, 2
        %v1988 = vsel %vm1977, %v1985, %v1987
        %v1989 = vrot.slane %v1839, 2
        %v1990 = vsel %vm1977, %v1987, %v1989
        %v1991 = vrot.slane %v1840, 2
        %v1992 = vsel %vm1977, %v1989, %v1991
        %v1993 = vrot.slane %v1841, 2
        %v1994 = vsel %vm1977, %v1991, %v1993
        %v1995 = vrot.slane %v1842, 2
        %v1996 = vrot.slane %v1843, 2
        %v1997 = vsel %vm1977, %v1995, %v1996
        %v1998 = vrot.slane %v1844, 2
        %v1999 = vsel %vm1977, %v1996, %v1998
        %v2000 = vrot.slane %v1845, 2
        %v2001 = vsel %vm1977, %v1998, %v2000
        %v2002 = vrot.slane %v1846, 2
        %v2003 = vsel %vm1977, %v2000, %v2002
        %v2004 = vrot.slane %v1847, 2
        %v2005 = vsel %vm1977, %v2002, %v2004
        %v2006 = vrot.slane %v1848, 2
        %v2007 = vsel %vm1977, %v2004, %v2006
        %v2008 = vrot.slane %v1849, 2
        %v2009 = vsel %vm1977, %v2006, %v2008
        %v2010 = vrot.slane %v1850, 2
        %v2011 = vsel %vm1977, %v2008, %v2010
        %v2012 = vrot.slane %v1851, 2
        %v2013 = vrot.slane %v1852, 2
        %v2014 = vsel %vm1977, %v2012, %v2013
        %v2015 = vrot.slane %v1853, 2
        %v2016 = vsel %vm1977, %v2013, %v2015
        %v2017 = vrot.slane %v1854, 2
        %v2018 = vsel %vm1977, %v2015, %v2017
        %v2019 = vrot.slane %v1855, 2
        %v2020 = vsel %vm1977, %v2017, %v2019
        %v2021 = vrot.slane %v1856, 2
        %v2022 = vsel %vm1977, %v2019, %v2021
        %v2023 = vrot.slane %v1857, 2
        %v2024 = vsel %vm1977, %v2021, %v2023
        %v2025 = vrot.slane %v1858, 2
        %v2026 = vsel %vm1977, %v2023, %v2025
        %v2027 = vrot.slane %v1859, 2
        %v2028 = vsel %vm1977, %v2025, %v2027
        %v2029 = vrot.slane %v1860, 2
        %v2030 = vrot.slane %v1861, 2
        %v2031 = vsel %vm1977, %v2029, %v2030
        %v2032 = vrot.slane %v1862, 2
        %v2033 = vsel %vm1977, %v2030, %v2032
        %v2034 = vrot.slane %v1863, 2
        %v2035 = vsel %vm1977, %v2032, %v2034
        %v2036 = vrot.slane %v1864, 2
        %v2037 = vsel %vm1977, %v2034, %v2036
        %v2038 = vrot.slane %v1865, 2
        %v2039 = vsel %vm1977, %v2036, %v2038
        %v2040 = vrot.slane %v1866, 2
        %v2041 = vsel %vm1977, %v2038, %v2040
        %v2042 = vrot.slane %v1867, 2
        %v2043 = vsel %vm1977, %v2040, %v2042
        %v2044 = vrot.slane %v1868, 2
        %v2045 = vsel %vm1977, %v2042, %v2044
        %v2046 = vrot.slane %v1869, 2
        %v2047 = vrot.slane %v1870, 2
        %v2048 = vsel %vm1977, %v2046, %v2047
        %v2049 = vrot.slane %v1871, 2
        %v2050 = vsel %vm1977, %v2047, %v2049
        %v2051 = vrot.slane %v1872, 2
        %v2052 = vsel %vm1977, %v2049, %v2051
        %v2053 = vrot.slane %v1873, 2
        %v2054 = vsel %vm1977, %v2051, %v2053
        %v2055 = vrot.slane %v1874, 2
        %v2056 = vsel %vm1977, %v2053, %v2055
        %v2057 = vrot.slane %v1875, 2
        %v2058 = vsel %vm1977, %v2055, %v2057
        %v2059 = vrot.slane %v1876, 2
        %v2060 = vsel %vm1977, %v2057, %v2059
        %v2061 = vrot.slane %v1877, 2
        %v2062 = vsel %vm1977, %v2059, %v2061
        %v2063 = vrot.slane %v1878, 2
        %v2064 = vrot.slane %v1879, 2
        %v2065 = vsel %vm1977, %v2063, %v2064
        %v2066 = vrot.slane %v1880, 2
        %v2067 = vsel %vm1977, %v2064, %v2066
        %v2068 = vrot.slane %v1881, 2
        %v2069 = vsel %vm1977, %v2066, %v2068
        %v2070 = vrot.slane %v1882, 2
        %v2071 = vsel %vm1977, %v2068, %v2070
        %v2072 = vrot.slane %v1883, 2
        %v2073 = vsel %vm1977, %v2070, %v2072
        %v2074 = vrot.slane %v1884, 2
        %v2075 = vsel %vm1977, %v2072, %v2074
        %v2076 = vrot.slane %v1885, 2
        %v2077 = vsel %vm1977, %v2074, %v2076
        %v2078 = vrot.slane %v1886, 2
        %v2079 = vsel %vm1977, %v2076, %v2078
        %v2080 = vrot.slane %v1887, 2
        %v2081 = vrot.slane %v1888, 2
        %v2082 = vsel %vm1977, %v2080, %v2081
        %v2083 = vrot.slane %v1889, 2
        %v2084 = vsel %vm1977, %v2081, %v2083
        %v2085 = vrot.slane %v1890, 2
        %v2086 = vsel %vm1977, %v2083, %v2085
        %v2087 = vrot.slane %v1891, 2
        %v2088 = vsel %vm1977, %v2085, %v2087
        %v2089 = vrot.slane %v1892, 2
        %v2090 = vsel %vm1977, %v2087, %v2089
        %v2091 = vrot.slane %v1893, 2
        %v2092 = vsel %vm1977, %v2089, %v2091
        %v2093 = vrot.slane %v1894, 2
        %v2094 = vsel %vm1977, %v2091, %v2093
        %v2095 = vrot.slane %v1895, 2
        %v2096 = vsel %vm1977, %v2093, %v2095
        %v2097 = vrot.slane %v1896, 2
        %v2098 = vrot.slane %v1897, 2
        %v2099 = vsel %vm1977, %v2097, %v2098
        %v2100 = vrot.slane %v1898, 2
        %v2101 = vsel %vm1977, %v2098, %v2100
        %v2102 = vrot.slane %v1899, 2
        %v2103 = vsel %vm1977, %v2100, %v2102
        %v2104 = vrot.slane %v1900, 2
        %v2105 = vsel %vm1977, %v2102, %v2104
        %v2106 = vrot.slane %v1901, 2
        %v2107 = vsel %vm1977, %v2104, %v2106
        %v2108 = vrot.slane %v1902, 2
        %v2109 = vsel %vm1977, %v2106, %v2108
        %v2110 = vrot.slane %v1903, 2
        %v2111 = vsel %vm1977, %v2108, %v2110
        %v2112 = vrot.slane %v1904, 2
        %v2113 = vsel %vm1977, %v2110, %v2112
        %v2178 = vadd.f32 %v1765, %v1980
        %v2179 = vadd.f32 %v1766, %v1982
        %v2180 = vadd.f32 %v1767, %v1984
        %v2181 = vadd.f32 %v1768, %v1986
        %v2182 = vadd.f32 %v1769, %v1988
        %v2183 = vadd.f32 %v1770, %v1990
        %v2184 = vadd.f32 %v1771, %v1992
        %v2185 = vadd.f32 %v1772, %v1994
        %v2186 = vadd.f32 %v1773, %v1997
        %v2187 = vadd.f32 %v1774, %v1999
        %v2188 = vadd.f32 %v1775, %v2001
        %v2189 = vadd.f32 %v1776, %v2003
        %v2190 = vadd.f32 %v1777, %v2005
        %v2191 = vadd.f32 %v1778, %v2007
        %v2192 = vadd.f32 %v1779, %v2009
        %v2193 = vadd.f32 %v1780, %v2011
        %v2194 = vadd.f32 %v1781, %v2014
        %v2195 = vadd.f32 %v1782, %v2016
        %v2196 = vadd.f32 %v1783, %v2018
        %v2197 = vadd.f32 %v1784, %v2020
        %v2198 = vadd.f32 %v1785, %v2022
        %v2199 = vadd.f32 %v1786, %v2024
        %v2200 = vadd.f32 %v1787, %v2026
        %v2201 = vadd.f32 %v1788, %v2028
        %v2202 = vadd.f32 %v1789, %v2031
        %v2203 = vadd.f32 %v1790, %v2033
        %v2204 = vadd.f32 %v1791, %v2035
        %v2205 = vadd.f32 %v1792, %v2037
        %v2206 = vadd.f32 %v1793, %v2039
        %v2207 = vadd.f32 %v1794, %v2041
        %v2208 = vadd.f32 %v1795, %v2043
        %v2209 = vadd.f32 %v1796, %v2045
        %v2210 = vadd.f32 %v1797, %v2048
        %v2211 = vadd.f32 %v1798, %v2050
        %v2212 = vadd.f32 %v1799, %v2052
        %v2213 = vadd.f32 %v1800, %v2054
        %v2214 = vadd.f32 %v1801, %v2056
        %v2215 = vadd.f32 %v1802, %v2058
        %v2216 = vadd.f32 %v1803, %v2060
        %v2217 = vadd.f32 %v1804, %v2062
        %v2218 = vadd.f32 %v1805, %v2065
        %v2219 = vadd.f32 %v1806, %v2067
        %v2220 = vadd.f32 %v1807, %v2069
        %v2221 = vadd.f32 %v1808, %v2071
        %v2222 = vadd.f32 %v1809, %v2073
        %v2223 = vadd.f32 %v1810, %v2075
        %v2224 = vadd.f32 %v1811, %v2077
        %v2225 = vadd.f32 %v1812, %v2079
        %v2226 = vadd.f32 %v1813, %v2082
        %v2227 = vadd.f32 %v1814, %v2084
        %v2228 = vadd.f32 %v1815, %v2086
        %v2229 = vadd.f32 %v1816, %v2088
        %v2230 = vadd.f32 %v1817, %v2090
        %v2231 = vadd.f32 %v1818, %v2092
        %v2232 = vadd.f32 %v1819, %v2094
        %v2233 = vadd.f32 %v1820, %v2096
        %v2234 = vadd.f32 %v1821, %v2099
        %v2235 = vadd.f32 %v1822, %v2101
        %v2236 = vadd.f32 %v1823, %v2103
        %v2237 = vadd.f32 %v1824, %v2105
        %v2238 = vadd.f32 %v1825, %v2107
        %v2239 = vadd.f32 %v1826, %v2109
        %v2240 = vadd.f32 %v1827, %v2111
        %v2241 = vadd.f32 %v1828, %v2113
        %v2243 = vlaneseq
        %v2244 = vshrl.u32 %v2243, 7
        %v2245 = vsub.s32 0, %v2244
        %v2246 = vrot.slane %v639, %v2245
        %v2248 = vmul.f32 %v2178, %v2246
        %v2249 = vmul.f32 %v2179, %v2246
        %v2250 = vmul.f32 %v2180, %v2246
        %v2251 = vmul.f32 %v2181, %v2246
        %v2252 = vmul.f32 %v2182, %v2246
        %v2253 = vmul.f32 %v2183, %v2246
        %v2254 = vmul.f32 %v2184, %v2246
        %v2255 = vmul.f32 %v2185, %v2246
        %v2256 = vmul.f32 %v2186, %v2246
        %v2257 = vmul.f32 %v2187, %v2246
        %v2258 = vmul.f32 %v2188, %v2246
        %v2259 = vmul.f32 %v2189, %v2246
        %v2260 = vmul.f32 %v2190, %v2246
        %v2261 = vmul.f32 %v2191, %v2246
        %v2262 = vmul.f32 %v2192, %v2246
        %v2263 = vmul.f32 %v2193, %v2246
        %v2264 = vmul.f32 %v2194, %v2246
        %v2265 = vmul.f32 %v2195, %v2246
        %v2266 = vmul.f32 %v2196, %v2246
        %v2267 = vmul.f32 %v2197, %v2246
        %v2268 = vmul.f32 %v2198, %v2246
        %v2269 = vmul.f32 %v2199, %v2246
        %v2270 = vmul.f32 %v2200, %v2246
        %v2271 = vmul.f32 %v2201, %v2246
        %v2272 = vmul.f32 %v2202, %v2246
        %v2273 = vmul.f32 %v2203, %v2246
        %v2274 = vmul.f32 %v2204, %v2246
        %v2275 = vmul.f32 %v2205, %v2246
        %v2276 = vmul.f32 %v2206, %v2246
        %v2277 = vmul.f32 %v2207, %v2246
        %v2278 = vmul.f32 %v2208, %v2246
        %v2279 = vmul.f32 %v2209, %v2246
        %v2280 = vmul.f32 %v2210, %v2246
        %v2281 = vmul.f32 %v2211, %v2246
        %v2282 = vmul.f32 %v2212, %v2246
        %v2283 = vmul.f32 %v2213, %v2246
        %v2284 = vmul.f32 %v2214, %v2246
        %v2285 = vmul.f32 %v2215, %v2246
        %v2286 = vmul.f32 %v2216, %v2246
        %v2287 = vmul.f32 %v2217, %v2246
        %v2288 = vmul.f32 %v2218, %v2246
        %v2289 = vmul.f32 %v2219, %v2246
        %v2290 = vmul.f32 %v2220, %v2246
        %v2291 = vmul.f32 %v2221, %v2246
        %v2292 = vmul.f32 %v2222, %v2246
        %v2293 = vmul.f32 %v2223, %v2246
        %v2294 = vmul.f32 %v2224, %v2246
        %v2295 = vmul.f32 %v2225, %v2246
        %v2296 = vmul.f32 %v2226, %v2246
        %v2297 = vmul.f32 %v2227, %v2246
        %v2298 = vmul.f32 %v2228, %v2246
        %v2299 = vmul.f32 %v2229, %v2246
        %v2300 = vmul.f32 %v2230, %v2246
        %v2301 = vmul.f32 %v2231, %v2246
        %v2302 = vmul.f32 %v2232, %v2246
        %v2303 = vmul.f32 %v2233, %v2246
        %v2304 = vmul.f32 %v2234, %v2246
        %v2305 = vmul.f32 %v2235, %v2246
        %v2306 = vmul.f32 %v2236, %v2246
        %v2307 = vmul.f32 %v2237, %v2246
        %v2308 = vmul.f32 %v2238, %v2246
        %v2309 = vmul.f32 %v2239, %v2246
        %v2310 = vmul.f32 %v2240, %v2246
        %v2311 = vmul.f32 %v2241, %v2246
        %v2313 = vlaneseq
        %v2314 = vshrl.u32 %v2313, 7
        %v2315 = vsub.s32 0, %v2314
        %v2316 = vrot.slane %v640, %v2315
        %v2318 = vadd.f32 %v2248, %v2316
        %v2319 = vadd.f32 %v2249, %v2316
        %v2320 = vadd.f32 %v2250, %v2316
        %v2321 = vadd.f32 %v2251, %v2316
        %v2322 = vadd.f32 %v2252, %v2316
        %v2323 = vadd.f32 %v2253, %v2316
        %v2324 = vadd.f32 %v2254, %v2316
        %v2325 = vadd.f32 %v2255, %v2316
        %v2326 = vadd.f32 %v2256, %v2316
        %v2327 = vadd.f32 %v2257, %v2316
        %v2328 = vadd.f32 %v2258, %v2316
        %v2329 = vadd.f32 %v2259, %v2316
        %v2330 = vadd.f32 %v2260, %v2316
        %v2331 = vadd.f32 %v2261, %v2316
        %v2332 = vadd.f32 %v2262, %v2316
        %v2333 = vadd.f32 %v2263, %v2316
        %v2334 = vadd.f32 %v2264, %v2316
        %v2335 = vadd.f32 %v2265, %v2316
        %v2336 = vadd.f32 %v2266, %v2316
        %v2337 = vadd.f32 %v2267, %v2316
        %v2338 = vadd.f32 %v2268, %v2316
        %v2339 = vadd.f32 %v2269, %v2316
        %v2340 = vadd.f32 %v2270, %v2316
        %v2341 = vadd.f32 %v2271, %v2316
        %v2342 = vadd.f32 %v2272, %v2316
        %v2343 = vadd.f32 %v2273, %v2316
        %v2344 = vadd.f32 %v2274, %v2316
        %v2345 = vadd.f32 %v2275, %v2316
        %v2346 = vadd.f32 %v2276, %v2316
        %v2347 = vadd.f32 %v2277, %v2316
        %v2348 = vadd.f32 %v2278, %v2316
        %v2349 = vadd.f32 %v2279, %v2316
        %v2350 = vadd.f32 %v2280, %v2316
        %v2351 = vadd.f32 %v2281, %v2316
        %v2352 = vadd.f32 %v2282, %v2316
        %v2353 = vadd.f32 %v2283, %v2316
        %v2354 = vadd.f32 %v2284, %v2316
        %v2355 = vadd.f32 %v2285, %v2316
        %v2356 = vadd.f32 %v2286, %v2316
        %v2357 = vadd.f32 %v2287, %v2316
        %v2358 = vadd.f32 %v2288, %v2316
        %v2359 = vadd.f32 %v2289, %v2316
        %v2360 = vadd.f32 %v2290, %v2316
        %v2361 = vadd.f32 %v2291, %v2316
        %v2362 = vadd.f32 %v2292, %v2316
        %v2363 = vadd.f32 %v2293, %v2316
        %v2364 = vadd.f32 %v2294, %v2316
        %v2365 = vadd.f32 %v2295, %v2316
        %v2366 = vadd.f32 %v2296, %v2316
        %v2367 = vadd.f32 %v2297, %v2316
        %v2368 = vadd.f32 %v2298, %v2316
        %v2369 = vadd.f32 %v2299, %v2316
        %v2370 = vadd.f32 %v2300, %v2316
        %v2371 = vadd.f32 %v2301, %v2316
        %v2372 = vadd.f32 %v2302, %v2316
        %v2373 = vadd.f32 %v2303, %v2316
        %v2374 = vadd.f32 %v2304, %v2316
        %v2375 = vadd.f32 %v2305, %v2316
        %v2376 = vadd.f32 %v2306, %v2316
        %v2377 = vadd.f32 %v2307, %v2316
        %v2378 = vadd.f32 %v2308, %v2316
        %v2379 = vadd.f32 %v2309, %v2316
        %v2380 = vadd.f32 %v2310, %v2316
        %v2381 = vadd.f32 %v2311, %v2316
        %v2382 = vmax.f32 %v2318, 0.0
        %v2383 = vmax.f32 %v2319, 0.0
        %v2384 = vmax.f32 %v2320, 0.0
        %v2385 = vmax.f32 %v2321, 0.0
        %v2386 = vmax.f32 %v2322, 0.0
        %v2387 = vmax.f32 %v2323, 0.0
        %v2388 = vmax.f32 %v2324, 0.0
        %v2389 = vmax.f32 %v2325, 0.0
        %v2390 = vmax.f32 %v2326, 0.0
        %v2391 = vmax.f32 %v2327, 0.0
        %v2392 = vmax.f32 %v2328, 0.0
        %v2393 = vmax.f32 %v2329, 0.0
        %v2394 = vmax.f32 %v2330, 0.0
        %v2395 = vmax.f32 %v2331, 0.0
        %v2396 = vmax.f32 %v2332, 0.0
        %v2397 = vmax.f32 %v2333, 0.0
        %v2398 = vmax.f32 %v2334, 0.0
        %v2399 = vmax.f32 %v2335, 0.0
        %v2400 = vmax.f32 %v2336, 0.0
        %v2401 = vmax.f32 %v2337, 0.0
        %v2402 = vmax.f32 %v2338, 0.0
        %v2403 = vmax.f32 %v2339, 0.0
        %v2404 = vmax.f32 %v2340, 0.0
        %v2405 = vmax.f32 %v2341, 0.0
        %v2406 = vmax.f32 %v2342, 0.0
        %v2407 = vmax.f32 %v2343, 0.0
        %v2408 = vmax.f32 %v2344, 0.0
        %v2409 = vmax.f32 %v2345, 0.0
        %v2410 = vmax.f32 %v2346, 0.0
        %v2411 = vmax.f32 %v2347, 0.0
        %v2412 = vmax.f32 %v2348, 0.0
        %v2413 = vmax.f32 %v2349, 0.0
        %v2414 = vmax.f32 %v2350, 0.0
        %v2415 = vmax.f32 %v2351, 0.0
        %v2416 = vmax.f32 %v2352, 0.0
        %v2417 = vmax.f32 %v2353, 0.0
        %v2418 = vmax.f32 %v2354, 0.0
        %v2419 = vmax.f32 %v2355, 0.0
        %v2420 = vmax.f32 %v2356, 0.0
        %v2421 = vmax.f32 %v2357, 0.0
        %v2422 = vmax.f32 %v2358, 0.0
        %v2423 = vmax.f32 %v2359, 0.0
        %v2424 = vmax.f32 %v2360, 0.0
        %v2425 = vmax.f32 %v2361, 0.0
        %v2426 = vmax.f32 %v2362, 0.0
        %v2427 = vmax.f32 %v2363, 0.0
        %v2428 = vmax.f32 %v2364, 0.0
        %v2429 = vmax.f32 %v2365, 0.0
        %v2430 = vmax.f32 %v2366, 0.0
        %v2431 = vmax.f32 %v2367, 0.0
        %v2432 = vmax.f32 %v2368, 0.0
        %v2433 = vmax.f32 %v2369, 0.0
        %v2434 = vmax.f32 %v2370, 0.0
        %v2435 = vmax.f32 %v2371, 0.0
        %v2436 = vmax.f32 %v2372, 0.0
        %v2437 = vmax.f32 %v2373, 0.0
        %v2438 = vmax.f32 %v2374, 0.0
        %v2439 = vmax.f32 %v2375, 0.0
        %v2440 = vmax.f32 %v2376, 0.0
        %v2441 = vmax.f32 %v2377, 0.0
        %v2442 = vmax.f32 %v2378, 0.0
        %v2443 = vmax.f32 %v2379, 0.0
        %v2444 = vmax.f32 %v2380, 0.0
        %v2445 = vmax.f32 %v2381, 0.0
        %v2510 = vcombine.high %v2382, %v2382
        %v2512 = vunpack.c.l.s4 1983009808
        %v2513 = vunpack.c.0.s8 %v2512
        %v2514 = vlaneseq
        %v2515 = vshrl.u32 %v2514, 7
        %v2516 = vsub.s32 %v2513, %v2515
        %v2517 = vrot.slane %v2382, %v2516
        %v2519 = vunpack.c.l.s4 1983009808
        %v2520 = vunpack.c.0.s8 %v2519
        %v2521 = vlaneseq
        %v2522 = vshrl.u32 %v2521, 7
        %v2523 = vsub.s32 %v2520, %v2522
        %v2524 = vrot.slane %v2510, %v2523
        %v2525 = vcombine.high %v2517, %v2517
        %v2526 = vcombine.high %v2524, %v2524
        %v2527 = vcombine.high %v2383, %v2383
        %v2529 = vunpack.c.l.s4 1983009808
        %v2530 = vunpack.c.0.s8 %v2529
        %v2531 = vlaneseq
        %v2532 = vshrl.u32 %v2531, 7
        %v2533 = vsub.s32 %v2530, %v2532
        %v2534 = vrot.slane %v2383, %v2533
        %v2536 = vunpack.c.l.s4 1983009808
        %v2537 = vunpack.c.0.s8 %v2536
        %v2538 = vlaneseq
        %v2539 = vshrl.u32 %v2538, 7
        %v2540 = vsub.s32 %v2537, %v2539
        %v2541 = vrot.slane %v2527, %v2540
        %v2542 = vcombine.high %v2534, %v2534
        %v2543 = vcombine.high %v2541, %v2541
        %v2544 = vcombine.high %v2384, %v2384
        %v2546 = vunpack.c.l.s4 1983009808
        %v2547 = vunpack.c.0.s8 %v2546
        %v2548 = vlaneseq
        %v2549 = vshrl.u32 %v2548, 7
        %v2550 = vsub.s32 %v2547, %v2549
        %v2551 = vrot.slane %v2384, %v2550
        %v2553 = vunpack.c.l.s4 1983009808
        %v2554 = vunpack.c.0.s8 %v2553
        %v2555 = vlaneseq
        %v2556 = vshrl.u32 %v2555, 7
        %v2557 = vsub.s32 %v2554, %v2556
        %v2558 = vrot.slane %v2544, %v2557
        %v2559 = vcombine.high %v2551, %v2551
        %v2560 = vcombine.high %v2558, %v2558
        %v2561 = vcombine.high %v2385, %v2385
        %v2563 = vunpack.c.l.s4 1983009808
        %v2564 = vunpack.c.0.s8 %v2563
        %v2565 = vlaneseq
        %v2566 = vshrl.u32 %v2565, 7
        %v2567 = vsub.s32 %v2564, %v2566
        %v2568 = vrot.slane %v2385, %v2567
        %v2570 = vunpack.c.l.s4 1983009808
        %v2571 = vunpack.c.0.s8 %v2570
        %v2572 = vlaneseq
        %v2573 = vshrl.u32 %v2572, 7
        %v2574 = vsub.s32 %v2571, %v2573
        %v2575 = vrot.slane %v2561, %v2574
        %v2576 = vcombine.high %v2568, %v2568
        %v2577 = vcombine.high %v2575, %v2575
        %v2578 = vcombine.high %v2386, %v2386
        %v2580 = vunpack.c.l.s4 1983009808
        %v2581 = vunpack.c.0.s8 %v2580
        %v2582 = vlaneseq
        %v2583 = vshrl.u32 %v2582, 7
        %v2584 = vsub.s32 %v2581, %v2583
        %v2585 = vrot.slane %v2386, %v2584
        %v2587 = vunpack.c.l.s4 1983009808
        %v2588 = vunpack.c.0.s8 %v2587
        %v2589 = vlaneseq
        %v2590 = vshrl.u32 %v2589, 7
        %v2591 = vsub.s32 %v2588, %v2590
        %v2592 = vrot.slane %v2578, %v2591
        %v2593 = vcombine.high %v2585, %v2585
        %v2594 = vcombine.high %v2592, %v2592
        %v2595 = vcombine.high %v2387, %v2387
        %v2597 = vunpack.c.l.s4 1983009808
        %v2598 = vunpack.c.0.s8 %v2597
        %v2599 = vlaneseq
        %v2600 = vshrl.u32 %v2599, 7
        %v2601 = vsub.s32 %v2598, %v2600
        %v2602 = vrot.slane %v2387, %v2601
        %v2604 = vunpack.c.l.s4 1983009808
        %v2605 = vunpack.c.0.s8 %v2604
        %v2606 = vlaneseq
        %v2607 = vshrl.u32 %v2606, 7
        %v2608 = vsub.s32 %v2605, %v2607
        %v2609 = vrot.slane %v2595, %v2608
        %v2610 = vcombine.high %v2602, %v2602
        %v2611 = vcombine.high %v2609, %v2609
        %v2612 = vcombine.high %v2388, %v2388
        %v2614 = vunpack.c.l.s4 1983009808
        %v2615 = vunpack.c.0.s8 %v2614
        %v2616 = vlaneseq
        %v2617 = vshrl.u32 %v2616, 7
        %v2618 = vsub.s32 %v2615, %v2617
        %v2619 = vrot.slane %v2388, %v2618
        %v2621 = vunpack.c.l.s4 1983009808
        %v2622 = vunpack.c.0.s8 %v2621
        %v2623 = vlaneseq
        %v2624 = vshrl.u32 %v2623, 7
        %v2625 = vsub.s32 %v2622, %v2624
        %v2626 = vrot.slane %v2612, %v2625
        %v2627 = vcombine.high %v2619, %v2619
        %v2628 = vcombine.high %v2626, %v2626
        %v2629 = vcombine.high %v2389, %v2389
        %v2631 = vunpack.c.l.s4 1983009808
        %v2632 = vunpack.c.0.s8 %v2631
        %v2633 = vlaneseq
        %v2634 = vshrl.u32 %v2633, 7
        %v2635 = vsub.s32 %v2632, %v2634
        %v2636 = vrot.slane %v2389, %v2635
        %v2638 = vunpack.c.l.s4 1983009808
        %v2639 = vunpack.c.0.s8 %v2638
        %v2640 = vlaneseq
        %v2641 = vshrl.u32 %v2640, 7
        %v2642 = vsub.s32 %v2639, %v2641
        %v2643 = vrot.slane %v2629, %v2642
        %v2644 = vcombine.high %v2636, %v2636
        %v2645 = vcombine.high %v2643, %v2643
        %v2646 = vcombine.high %v2390, %v2390
        %v2648 = vunpack.c.l.s4 1983009808
        %v2649 = vunpack.c.0.s8 %v2648
        %v2650 = vlaneseq
        %v2651 = vshrl.u32 %v2650, 7
        %v2652 = vsub.s32 %v2649, %v2651
        %v2653 = vrot.slane %v2390, %v2652
        %v2655 = vunpack.c.l.s4 1983009808
        %v2656 = vunpack.c.0.s8 %v2655
        %v2657 = vlaneseq
        %v2658 = vshrl.u32 %v2657, 7
        %v2659 = vsub.s32 %v2656, %v2658
        %v2660 = vrot.slane %v2646, %v2659
        %v2661 = vcombine.high %v2653, %v2653
        %v2662 = vcombine.high %v2660, %v2660
        %v2663 = vcombine.high %v2391, %v2391
        %v2665 = vunpack.c.l.s4 1983009808
        %v2666 = vunpack.c.0.s8 %v2665
        %v2667 = vlaneseq
        %v2668 = vshrl.u32 %v2667, 7
        %v2669 = vsub.s32 %v2666, %v2668
        %v2670 = vrot.slane %v2391, %v2669
        %v2672 = vunpack.c.l.s4 1983009808
        %v2673 = vunpack.c.0.s8 %v2672
        %v2674 = vlaneseq
        %v2675 = vshrl.u32 %v2674, 7
        %v2676 = vsub.s32 %v2673, %v2675
        %v2677 = vrot.slane %v2663, %v2676
        %v2678 = vcombine.high %v2670, %v2670
        %v2679 = vcombine.high %v2677, %v2677
        %v2680 = vcombine.high %v2392, %v2392
        %v2682 = vunpack.c.l.s4 1983009808
        %v2683 = vunpack.c.0.s8 %v2682
        %v2684 = vlaneseq
        %v2685 = vshrl.u32 %v2684, 7
        %v2686 = vsub.s32 %v2683, %v2685
        %v2687 = vrot.slane %v2392, %v2686
        %v2689 = vunpack.c.l.s4 1983009808
        %v2690 = vunpack.c.0.s8 %v2689
        %v2691 = vlaneseq
        %v2692 = vshrl.u32 %v2691, 7
        %v2693 = vsub.s32 %v2690, %v2692
        %v2694 = vrot.slane %v2680, %v2693
        %v2695 = vcombine.high %v2687, %v2687
        %v2696 = vcombine.high %v2694, %v2694
        %v2697 = vcombine.high %v2393, %v2393
        %v2699 = vunpack.c.l.s4 1983009808
        %v2700 = vunpack.c.0.s8 %v2699
        %v2701 = vlaneseq
        %v2702 = vshrl.u32 %v2701, 7
        %v2703 = vsub.s32 %v2700, %v2702
        %v2704 = vrot.slane %v2393, %v2703
        %v2706 = vunpack.c.l.s4 1983009808
        %v2707 = vunpack.c.0.s8 %v2706
        %v2708 = vlaneseq
        %v2709 = vshrl.u32 %v2708, 7
        %v2710 = vsub.s32 %v2707, %v2709
        %v2711 = vrot.slane %v2697, %v2710
        %v2712 = vcombine.high %v2704, %v2704
        %v2713 = vcombine.high %v2711, %v2711
        %v2714 = vcombine.high %v2394, %v2394
        %v2716 = vunpack.c.l.s4 1983009808
        %v2717 = vunpack.c.0.s8 %v2716
        %v2718 = vlaneseq
        %v2719 = vshrl.u32 %v2718, 7
        %v2720 = vsub.s32 %v2717, %v2719
        %v2721 = vrot.slane %v2394, %v2720
        %v2723 = vunpack.c.l.s4 1983009808
        %v2724 = vunpack.c.0.s8 %v2723
        %v2725 = vlaneseq
        %v2726 = vshrl.u32 %v2725, 7
        %v2727 = vsub.s32 %v2724, %v2726
        %v2728 = vrot.slane %v2714, %v2727
        %v2729 = vcombine.high %v2721, %v2721
        %v2730 = vcombine.high %v2728, %v2728
        %v2731 = vcombine.high %v2395, %v2395
        %v2733 = vunpack.c.l.s4 1983009808
        %v2734 = vunpack.c.0.s8 %v2733
        %v2735 = vlaneseq
        %v2736 = vshrl.u32 %v2735, 7
        %v2737 = vsub.s32 %v2734, %v2736
        %v2738 = vrot.slane %v2395, %v2737
        %v2740 = vunpack.c.l.s4 1983009808
        %v2741 = vunpack.c.0.s8 %v2740
        %v2742 = vlaneseq
        %v2743 = vshrl.u32 %v2742, 7
        %v2744 = vsub.s32 %v2741, %v2743
        %v2745 = vrot.slane %v2731, %v2744
        %v2746 = vcombine.high %v2738, %v2738
        %v2747 = vcombine.high %v2745, %v2745
        %v2748 = vcombine.high %v2396, %v2396
        %v2750 = vunpack.c.l.s4 1983009808
        %v2751 = vunpack.c.0.s8 %v2750
        %v2752 = vlaneseq
        %v2753 = vshrl.u32 %v2752, 7
        %v2754 = vsub.s32 %v2751, %v2753
        %v2755 = vrot.slane %v2396, %v2754
        %v2757 = vunpack.c.l.s4 1983009808
        %v2758 = vunpack.c.0.s8 %v2757
        %v2759 = vlaneseq
        %v2760 = vshrl.u32 %v2759, 7
        %v2761 = vsub.s32 %v2758, %v2760
        %v2762 = vrot.slane %v2748, %v2761
        %v2763 = vcombine.high %v2755, %v2755
        %v2764 = vcombine.high %v2762, %v2762
        %v2765 = vcombine.high %v2397, %v2397
        %v2767 = vunpack.c.l.s4 1983009808
        %v2768 = vunpack.c.0.s8 %v2767
        %v2769 = vlaneseq
        %v2770 = vshrl.u32 %v2769, 7
        %v2771 = vsub.s32 %v2768, %v2770
        %v2772 = vrot.slane %v2397, %v2771
        %v2774 = vunpack.c.l.s4 1983009808
        %v2775 = vunpack.c.0.s8 %v2774
        %v2776 = vlaneseq
        %v2777 = vshrl.u32 %v2776, 7
        %v2778 = vsub.s32 %v2775, %v2777
        %v2779 = vrot.slane %v2765, %v2778
        %v2780 = vcombine.high %v2772, %v2772
        %v2781 = vcombine.high %v2779, %v2779
        %v2782 = vcombine.high %v2398, %v2398
        %v2784 = vunpack.c.l.s4 1983009808
        %v2785 = vunpack.c.0.s8 %v2784
        %v2786 = vlaneseq
        %v2787 = vshrl.u32 %v2786, 7
        %v2788 = vsub.s32 %v2785, %v2787
        %v2789 = vrot.slane %v2398, %v2788
        %v2791 = vunpack.c.l.s4 1983009808
        %v2792 = vunpack.c.0.s8 %v2791
        %v2793 = vlaneseq
        %v2794 = vshrl.u32 %v2793, 7
        %v2795 = vsub.s32 %v2792, %v2794
        %v2796 = vrot.slane %v2782, %v2795
        %v2797 = vcombine.high %v2789, %v2789
        %v2798 = vcombine.high %v2796, %v2796
        %v2799 = vcombine.high %v2399, %v2399
        %v2801 = vunpack.c.l.s4 1983009808
        %v2802 = vunpack.c.0.s8 %v2801
        %v2803 = vlaneseq
        %v2804 = vshrl.u32 %v2803, 7
        %v2805 = vsub.s32 %v2802, %v2804
        %v2806 = vrot.slane %v2399, %v2805
        %v2808 = vunpack.c.l.s4 1983009808
        %v2809 = vunpack.c.0.s8 %v2808
        %v2810 = vlaneseq
        %v2811 = vshrl.u32 %v2810, 7
        %v2812 = vsub.s32 %v2809, %v2811
        %v2813 = vrot.slane %v2799, %v2812
        %v2814 = vcombine.high %v2806, %v2806
        %v2815 = vcombine.high %v2813, %v2813
        %v2816 = vcombine.high %v2400, %v2400
        %v2818 = vunpack.c.l.s4 1983009808
        %v2819 = vunpack.c.0.s8 %v2818
        %v2820 = vlaneseq
        %v2821 = vshrl.u32 %v2820, 7
        %v2822 = vsub.s32 %v2819, %v2821
        %v2823 = vrot.slane %v2400, %v2822
        %v2825 = vunpack.c.l.s4 1983009808
        %v2826 = vunpack.c.0.s8 %v2825
        %v2827 = vlaneseq
        %v2828 = vshrl.u32 %v2827, 7
        %v2829 = vsub.s32 %v2826, %v2828
        %v2830 = vrot.slane %v2816, %v2829
        %v2831 = vcombine.high %v2823, %v2823
        %v2832 = vcombine.high %v2830, %v2830
        %v2833 = vcombine.high %v2401, %v2401
        %v2835 = vunpack.c.l.s4 1983009808
        %v2836 = vunpack.c.0.s8 %v2835
        %v2837 = vlaneseq
        %v2838 = vshrl.u32 %v2837, 7
        %v2839 = vsub.s32 %v2836, %v2838
        %v2840 = vrot.slane %v2401, %v2839
        %v2842 = vunpack.c.l.s4 1983009808
        %v2843 = vunpack.c.0.s8 %v2842
        %v2844 = vlaneseq
        %v2845 = vshrl.u32 %v2844, 7
        %v2846 = vsub.s32 %v2843, %v2845
        %v2847 = vrot.slane %v2833, %v2846
        %v2848 = vcombine.high %v2840, %v2840
        %v2849 = vcombine.high %v2847, %v2847
        %v2850 = vcombine.high %v2402, %v2402
        %v2852 = vunpack.c.l.s4 1983009808
        %v2853 = vunpack.c.0.s8 %v2852
        %v2854 = vlaneseq
        %v2855 = vshrl.u32 %v2854, 7
        %v2856 = vsub.s32 %v2853, %v2855
        %v2857 = vrot.slane %v2402, %v2856
        %v2859 = vunpack.c.l.s4 1983009808
        %v2860 = vunpack.c.0.s8 %v2859
        %v2861 = vlaneseq
        %v2862 = vshrl.u32 %v2861, 7
        %v2863 = vsub.s32 %v2860, %v2862
        %v2864 = vrot.slane %v2850, %v2863
        %v2865 = vcombine.high %v2857, %v2857
        %v2866 = vcombine.high %v2864, %v2864
        %v2867 = vcombine.high %v2403, %v2403
        %v2869 = vunpack.c.l.s4 1983009808
        %v2870 = vunpack.c.0.s8 %v2869
        %v2871 = vlaneseq
        %v2872 = vshrl.u32 %v2871, 7
        %v2873 = vsub.s32 %v2870, %v2872
        %v2874 = vrot.slane %v2403, %v2873
        %v2876 = vunpack.c.l.s4 1983009808
        %v2877 = vunpack.c.0.s8 %v2876
        %v2878 = vlaneseq
        %v2879 = vshrl.u32 %v2878, 7
        %v2880 = vsub.s32 %v2877, %v2879
        %v2881 = vrot.slane %v2867, %v2880
        %v2882 = vcombine.high %v2874, %v2874
        %v2883 = vcombine.high %v2881, %v2881
        %v2884 = vcombine.high %v2404, %v2404
        %v2886 = vunpack.c.l.s4 1983009808
        %v2887 = vunpack.c.0.s8 %v2886
        %v2888 = vlaneseq
        %v2889 = vshrl.u32 %v2888, 7
        %v2890 = vsub.s32 %v2887, %v2889
        %v2891 = vrot.slane %v2404, %v2890
        %v2893 = vunpack.c.l.s4 1983009808
        %v2894 = vunpack.c.0.s8 %v2893
        %v2895 = vlaneseq
        %v2896 = vshrl.u32 %v2895, 7
        %v2897 = vsub.s32 %v2894, %v2896
        %v2898 = vrot.slane %v2884, %v2897
        %v2899 = vcombine.high %v2891, %v2891
        %v2900 = vcombine.high %v2898, %v2898
        %v2901 = vcombine.high %v2405, %v2405
        %v2903 = vunpack.c.l.s4 1983009808
        %v2904 = vunpack.c.0.s8 %v2903
        %v2905 = vlaneseq
        %v2906 = vshrl.u32 %v2905, 7
        %v2907 = vsub.s32 %v2904, %v2906
        %v2908 = vrot.slane %v2405, %v2907
        %v2910 = vunpack.c.l.s4 1983009808
        %v2911 = vunpack.c.0.s8 %v2910
        %v2912 = vlaneseq
        %v2913 = vshrl.u32 %v2912, 7
        %v2914 = vsub.s32 %v2911, %v2913
        %v2915 = vrot.slane %v2901, %v2914
        %v2916 = vcombine.high %v2908, %v2908
        %v2917 = vcombine.high %v2915, %v2915
        %v2918 = vcombine.high %v2406, %v2406
        %v2920 = vunpack.c.l.s4 1983009808
        %v2921 = vunpack.c.0.s8 %v2920
        %v2922 = vlaneseq
        %v2923 = vshrl.u32 %v2922, 7
        %v2924 = vsub.s32 %v2921, %v2923
        %v2925 = vrot.slane %v2406, %v2924
        %v2927 = vunpack.c.l.s4 1983009808
        %v2928 = vunpack.c.0.s8 %v2927
        %v2929 = vlaneseq
        %v2930 = vshrl.u32 %v2929, 7
        %v2931 = vsub.s32 %v2928, %v2930
        %v2932 = vrot.slane %v2918, %v2931
        %v2933 = vcombine.high %v2925, %v2925
        %v2934 = vcombine.high %v2932, %v2932
        %v2935 = vcombine.high %v2407, %v2407
        %v2937 = vunpack.c.l.s4 1983009808
        %v2938 = vunpack.c.0.s8 %v2937
        %v2939 = vlaneseq
        %v2940 = vshrl.u32 %v2939, 7
        %v2941 = vsub.s32 %v2938, %v2940
        %v2942 = vrot.slane %v2407, %v2941
        %v2944 = vunpack.c.l.s4 1983009808
        %v2945 = vunpack.c.0.s8 %v2944
        %v2946 = vlaneseq
        %v2947 = vshrl.u32 %v2946, 7
        %v2948 = vsub.s32 %v2945, %v2947
        %v2949 = vrot.slane %v2935, %v2948
        %v2950 = vcombine.high %v2942, %v2942
        %v2951 = vcombine.high %v2949, %v2949
        %v2952 = vcombine.high %v2408, %v2408
        %v2954 = vunpack.c.l.s4 1983009808
        %v2955 = vunpack.c.0.s8 %v2954
        %v2956 = vlaneseq
        %v2957 = vshrl.u32 %v2956, 7
        %v2958 = vsub.s32 %v2955, %v2957
        %v2959 = vrot.slane %v2408, %v2958
        %v2961 = vunpack.c.l.s4 1983009808
        %v2962 = vunpack.c.0.s8 %v2961
        %v2963 = vlaneseq
        %v2964 = vshrl.u32 %v2963, 7
        %v2965 = vsub.s32 %v2962, %v2964
        %v2966 = vrot.slane %v2952, %v2965
        %v2967 = vcombine.high %v2959, %v2959
        %v2968 = vcombine.high %v2966, %v2966
        %v2969 = vcombine.high %v2409, %v2409
        %v2971 = vunpack.c.l.s4 1983009808
        %v2972 = vunpack.c.0.s8 %v2971
        %v2973 = vlaneseq
        %v2974 = vshrl.u32 %v2973, 7
        %v2975 = vsub.s32 %v2972, %v2974
        %v2976 = vrot.slane %v2409, %v2975
        %v2978 = vunpack.c.l.s4 1983009808
        %v2979 = vunpack.c.0.s8 %v2978
        %v2980 = vlaneseq
        %v2981 = vshrl.u32 %v2980, 7
        %v2982 = vsub.s32 %v2979, %v2981
        %v2983 = vrot.slane %v2969, %v2982
        %v2984 = vcombine.high %v2976, %v2976
        %v2985 = vcombine.high %v2983, %v2983
        %v2986 = vcombine.high %v2410, %v2410
        %v2988 = vunpack.c.l.s4 1983009808
        %v2989 = vunpack.c.0.s8 %v2988
        %v2990 = vlaneseq
        %v2991 = vshrl.u32 %v2990, 7
        %v2992 = vsub.s32 %v2989, %v2991
        %v2993 = vrot.slane %v2410, %v2992
        %v2995 = vunpack.c.l.s4 1983009808
        %v2996 = vunpack.c.0.s8 %v2995
        %v2997 = vlaneseq
        %v2998 = vshrl.u32 %v2997, 7
        %v2999 = vsub.s32 %v2996, %v2998
        %v3000 = vrot.slane %v2986, %v2999
        %v3001 = vcombine.high %v2993, %v2993
        %v3002 = vcombine.high %v3000, %v3000
        %v3003 = vcombine.high %v2411, %v2411
        %v3005 = vunpack.c.l.s4 1983009808
        %v3006 = vunpack.c.0.s8 %v3005
        %v3007 = vlaneseq
        %v3008 = vshrl.u32 %v3007, 7
        %v3009 = vsub.s32 %v3006, %v3008
        %v3010 = vrot.slane %v2411, %v3009
        %v3012 = vunpack.c.l.s4 1983009808
        %v3013 = vunpack.c.0.s8 %v3012
        %v3014 = vlaneseq
        %v3015 = vshrl.u32 %v3014, 7
        %v3016 = vsub.s32 %v3013, %v3015
        %v3017 = vrot.slane %v3003, %v3016
        %v3018 = vcombine.high %v3010, %v3010
        %v3019 = vcombine.high %v3017, %v3017
        %v3020 = vcombine.high %v2412, %v2412
        %v3022 = vunpack.c.l.s4 1983009808
        %v3023 = vunpack.c.0.s8 %v3022
        %v3024 = vlaneseq
        %v3025 = vshrl.u32 %v3024, 7
        %v3026 = vsub.s32 %v3023, %v3025
        %v3027 = vrot.slane %v2412, %v3026
        %v3029 = vunpack.c.l.s4 1983009808
        %v3030 = vunpack.c.0.s8 %v3029
        %v3031 = vlaneseq
        %v3032 = vshrl.u32 %v3031, 7
        %v3033 = vsub.s32 %v3030, %v3032
        %v3034 = vrot.slane %v3020, %v3033
        %v3035 = vcombine.high %v3027, %v3027
        %v3036 = vcombine.high %v3034, %v3034
        %v3037 = vcombine.high %v2413, %v2413
        %v3039 = vunpack.c.l.s4 1983009808
        %v3040 = vunpack.c.0.s8 %v3039
        %v3041 = vlaneseq
        %v3042 = vshrl.u32 %v3041, 7
        %v3043 = vsub.s32 %v3040, %v3042
        %v3044 = vrot.slane %v2413, %v3043
        %v3046 = vunpack.c.l.s4 1983009808
        %v3047 = vunpack.c.0.s8 %v3046
        %v3048 = vlaneseq
        %v3049 = vshrl.u32 %v3048, 7
        %v3050 = vsub.s32 %v3047, %v3049
        %v3051 = vrot.slane %v3037, %v3050
        %v3052 = vcombine.high %v3044, %v3044
        %v3053 = vcombine.high %v3051, %v3051
        %v3054 = vcombine.high %v2414, %v2414
        %v3056 = vunpack.c.l.s4 1983009808
        %v3057 = vunpack.c.0.s8 %v3056
        %v3058 = vlaneseq
        %v3059 = vshrl.u32 %v3058, 7
        %v3060 = vsub.s32 %v3057, %v3059
        %v3061 = vrot.slane %v2414, %v3060
        %v3063 = vunpack.c.l.s4 1983009808
        %v3064 = vunpack.c.0.s8 %v3063
        %v3065 = vlaneseq
        %v3066 = vshrl.u32 %v3065, 7
        %v3067 = vsub.s32 %v3064, %v3066
        %v3068 = vrot.slane %v3054, %v3067
        %v3069 = vcombine.high %v3061, %v3061
        %v3070 = vcombine.high %v3068, %v3068
        %v3071 = vcombine.high %v2415, %v2415
        %v3073 = vunpack.c.l.s4 1983009808
        %v3074 = vunpack.c.0.s8 %v3073
        %v3075 = vlaneseq
        %v3076 = vshrl.u32 %v3075, 7
        %v3077 = vsub.s32 %v3074, %v3076
        %v3078 = vrot.slane %v2415, %v3077
        %v3080 = vunpack.c.l.s4 1983009808
        %v3081 = vunpack.c.0.s8 %v3080
        %v3082 = vlaneseq
        %v3083 = vshrl.u32 %v3082, 7
        %v3084 = vsub.s32 %v3081, %v3083
        %v3085 = vrot.slane %v3071, %v3084
        %v3086 = vcombine.high %v3078, %v3078
        %v3087 = vcombine.high %v3085, %v3085
        %v3088 = vcombine.high %v2416, %v2416
        %v3090 = vunpack.c.l.s4 1983009808
        %v3091 = vunpack.c.0.s8 %v3090
        %v3092 = vlaneseq
        %v3093 = vshrl.u32 %v3092, 7
        %v3094 = vsub.s32 %v3091, %v3093
        %v3095 = vrot.slane %v2416, %v3094
        %v3097 = vunpack.c.l.s4 1983009808
        %v3098 = vunpack.c.0.s8 %v3097
        %v3099 = vlaneseq
        %v3100 = vshrl.u32 %v3099, 7
        %v3101 = vsub.s32 %v3098, %v3100
        %v3102 = vrot.slane %v3088, %v3101
        %v3103 = vcombine.high %v3095, %v3095
        %v3104 = vcombine.high %v3102, %v3102
        %v3105 = vcombine.high %v2417, %v2417
        %v3107 = vunpack.c.l.s4 1983009808
        %v3108 = vunpack.c.0.s8 %v3107
        %v3109 = vlaneseq
        %v3110 = vshrl.u32 %v3109, 7
        %v3111 = vsub.s32 %v3108, %v3110
        %v3112 = vrot.slane %v2417, %v3111
        %v3114 = vunpack.c.l.s4 1983009808
        %v3115 = vunpack.c.0.s8 %v3114
        %v3116 = vlaneseq
        %v3117 = vshrl.u32 %v3116, 7
        %v3118 = vsub.s32 %v3115, %v3117
        %v3119 = vrot.slane %v3105, %v3118
        %v3120 = vcombine.high %v3112, %v3112
        %v3121 = vcombine.high %v3119, %v3119
        %v3122 = vcombine.high %v2418, %v2418
        %v3124 = vunpack.c.l.s4 1983009808
        %v3125 = vunpack.c.0.s8 %v3124
        %v3126 = vlaneseq
        %v3127 = vshrl.u32 %v3126, 7
        %v3128 = vsub.s32 %v3125, %v3127
        %v3129 = vrot.slane %v2418, %v3128
        %v3131 = vunpack.c.l.s4 1983009808
        %v3132 = vunpack.c.0.s8 %v3131
        %v3133 = vlaneseq
        %v3134 = vshrl.u32 %v3133, 7
        %v3135 = vsub.s32 %v3132, %v3134
        %v3136 = vrot.slane %v3122, %v3135
        %v3137 = vcombine.high %v3129, %v3129
        %v3138 = vcombine.high %v3136, %v3136
        %v3139 = vcombine.high %v2419, %v2419
        %v3141 = vunpack.c.l.s4 1983009808
        %v3142 = vunpack.c.0.s8 %v3141
        %v3143 = vlaneseq
        %v3144 = vshrl.u32 %v3143, 7
        %v3145 = vsub.s32 %v3142, %v3144
        %v3146 = vrot.slane %v2419, %v3145
        %v3148 = vunpack.c.l.s4 1983009808
        %v3149 = vunpack.c.0.s8 %v3148
        %v3150 = vlaneseq
        %v3151 = vshrl.u32 %v3150, 7
        %v3152 = vsub.s32 %v3149, %v3151
        %v3153 = vrot.slane %v3139, %v3152
        %v3154 = vcombine.high %v3146, %v3146
        %v3155 = vcombine.high %v3153, %v3153
        %v3156 = vcombine.high %v2420, %v2420
        %v3158 = vunpack.c.l.s4 1983009808
        %v3159 = vunpack.c.0.s8 %v3158
        %v3160 = vlaneseq
        %v3161 = vshrl.u32 %v3160, 7
        %v3162 = vsub.s32 %v3159, %v3161
        %v3163 = vrot.slane %v2420, %v3162
        %v3165 = vunpack.c.l.s4 1983009808
        %v3166 = vunpack.c.0.s8 %v3165
        %v3167 = vlaneseq
        %v3168 = vshrl.u32 %v3167, 7
        %v3169 = vsub.s32 %v3166, %v3168
        %v3170 = vrot.slane %v3156, %v3169
        %v3171 = vcombine.high %v3163, %v3163
        %v3172 = vcombine.high %v3170, %v3170
        %v3173 = vcombine.high %v2421, %v2421
        %v3175 = vunpack.c.l.s4 1983009808
        %v3176 = vunpack.c.0.s8 %v3175
        %v3177 = vlaneseq
        %v3178 = vshrl.u32 %v3177, 7
        %v3179 = vsub.s32 %v3176, %v3178
        %v3180 = vrot.slane %v2421, %v3179
        %v3182 = vunpack.c.l.s4 1983009808
        %v3183 = vunpack.c.0.s8 %v3182
        %v3184 = vlaneseq
        %v3185 = vshrl.u32 %v3184, 7
        %v3186 = vsub.s32 %v3183, %v3185
        %v3187 = vrot.slane %v3173, %v3186
        %v3188 = vcombine.high %v3180, %v3180
        %v3189 = vcombine.high %v3187, %v3187
        %v3190 = vcombine.high %v2422, %v2422
        %v3192 = vunpack.c.l.s4 1983009808
        %v3193 = vunpack.c.0.s8 %v3192
        %v3194 = vlaneseq
        %v3195 = vshrl.u32 %v3194, 7
        %v3196 = vsub.s32 %v3193, %v3195
        %v3197 = vrot.slane %v2422, %v3196
        %v3199 = vunpack.c.l.s4 1983009808
        %v3200 = vunpack.c.0.s8 %v3199
        %v3201 = vlaneseq
        %v3202 = vshrl.u32 %v3201, 7
        %v3203 = vsub.s32 %v3200, %v3202
        %v3204 = vrot.slane %v3190, %v3203
        %v3205 = vcombine.high %v3197, %v3197
        %v3206 = vcombine.high %v3204, %v3204
        %v3207 = vcombine.high %v2423, %v2423
        %v3209 = vunpack.c.l.s4 1983009808
        %v3210 = vunpack.c.0.s8 %v3209
        %v3211 = vlaneseq
        %v3212 = vshrl.u32 %v3211, 7
        %v3213 = vsub.s32 %v3210, %v3212
        %v3214 = vrot.slane %v2423, %v3213
        %v3216 = vunpack.c.l.s4 1983009808
        %v3217 = vunpack.c.0.s8 %v3216
        %v3218 = vlaneseq
        %v3219 = vshrl.u32 %v3218, 7
        %v3220 = vsub.s32 %v3217, %v3219
        %v3221 = vrot.slane %v3207, %v3220
        %v3222 = vcombine.high %v3214, %v3214
        %v3223 = vcombine.high %v3221, %v3221
        %v3224 = vcombine.high %v2424, %v2424
        %v3226 = vunpack.c.l.s4 1983009808
        %v3227 = vunpack.c.0.s8 %v3226
        %v3228 = vlaneseq
        %v3229 = vshrl.u32 %v3228, 7
        %v3230 = vsub.s32 %v3227, %v3229
        %v3231 = vrot.slane %v2424, %v3230
        %v3233 = vunpack.c.l.s4 1983009808
        %v3234 = vunpack.c.0.s8 %v3233
        %v3235 = vlaneseq
        %v3236 = vshrl.u32 %v3235, 7
        %v3237 = vsub.s32 %v3234, %v3236
        %v3238 = vrot.slane %v3224, %v3237
        %v3239 = vcombine.high %v3231, %v3231
        %v3240 = vcombine.high %v3238, %v3238
        %v3241 = vcombine.high %v2425, %v2425
        %v3243 = vunpack.c.l.s4 1983009808
        %v3244 = vunpack.c.0.s8 %v3243
        %v3245 = vlaneseq
        %v3246 = vshrl.u32 %v3245, 7
        %v3247 = vsub.s32 %v3244, %v3246
        %v3248 = vrot.slane %v2425, %v3247
        %v3250 = vunpack.c.l.s4 1983009808
        %v3251 = vunpack.c.0.s8 %v3250
        %v3252 = vlaneseq
        %v3253 = vshrl.u32 %v3252, 7
        %v3254 = vsub.s32 %v3251, %v3253
        %v3255 = vrot.slane %v3241, %v3254
        %v3256 = vcombine.high %v3248, %v3248
        %v3257 = vcombine.high %v3255, %v3255
        %v3258 = vcombine.high %v2426, %v2426
        %v3260 = vunpack.c.l.s4 1983009808
        %v3261 = vunpack.c.0.s8 %v3260
        %v3262 = vlaneseq
        %v3263 = vshrl.u32 %v3262, 7
        %v3264 = vsub.s32 %v3261, %v3263
        %v3265 = vrot.slane %v2426, %v3264
        %v3267 = vunpack.c.l.s4 1983009808
        %v3268 = vunpack.c.0.s8 %v3267
        %v3269 = vlaneseq
        %v3270 = vshrl.u32 %v3269, 7
        %v3271 = vsub.s32 %v3268, %v3270
        %v3272 = vrot.slane %v3258, %v3271
        %v3273 = vcombine.high %v3265, %v3265
        %v3274 = vcombine.high %v3272, %v3272
        %v3275 = vcombine.high %v2427, %v2427
        %v3277 = vunpack.c.l.s4 1983009808
        %v3278 = vunpack.c.0.s8 %v3277
        %v3279 = vlaneseq
        %v3280 = vshrl.u32 %v3279, 7
        %v3281 = vsub.s32 %v3278, %v3280
        %v3282 = vrot.slane %v2427, %v3281
        %v3284 = vunpack.c.l.s4 1983009808
        %v3285 = vunpack.c.0.s8 %v3284
        %v3286 = vlaneseq
        %v3287 = vshrl.u32 %v3286, 7
        %v3288 = vsub.s32 %v3285, %v3287
        %v3289 = vrot.slane %v3275, %v3288
        %v3290 = vcombine.high %v3282, %v3282
        %v3291 = vcombine.high %v3289, %v3289
        %v3292 = vcombine.high %v2428, %v2428
        %v3294 = vunpack.c.l.s4 1983009808
        %v3295 = vunpack.c.0.s8 %v3294
        %v3296 = vlaneseq
        %v3297 = vshrl.u32 %v3296, 7
        %v3298 = vsub.s32 %v3295, %v3297
        %v3299 = vrot.slane %v2428, %v3298
        %v3301 = vunpack.c.l.s4 1983009808
        %v3302 = vunpack.c.0.s8 %v3301
        %v3303 = vlaneseq
        %v3304 = vshrl.u32 %v3303, 7
        %v3305 = vsub.s32 %v3302, %v3304
        %v3306 = vrot.slane %v3292, %v3305
        %v3307 = vcombine.high %v3299, %v3299
        %v3308 = vcombine.high %v3306, %v3306
        %v3309 = vcombine.high %v2429, %v2429
        %v3311 = vunpack.c.l.s4 1983009808
        %v3312 = vunpack.c.0.s8 %v3311
        %v3313 = vlaneseq
        %v3314 = vshrl.u32 %v3313, 7
        %v3315 = vsub.s32 %v3312, %v3314
        %v3316 = vrot.slane %v2429, %v3315
        %v3318 = vunpack.c.l.s4 1983009808
        %v3319 = vunpack.c.0.s8 %v3318
        %v3320 = vlaneseq
        %v3321 = vshrl.u32 %v3320, 7
        %v3322 = vsub.s32 %v3319, %v3321
        %v3323 = vrot.slane %v3309, %v3322
        %v3324 = vcombine.high %v3316, %v3316
        %v3325 = vcombine.high %v3323, %v3323
        %v3326 = vcombine.high %v2430, %v2430
        %v3328 = vunpack.c.l.s4 1983009808
        %v3329 = vunpack.c.0.s8 %v3328
        %v3330 = vlaneseq
        %v3331 = vshrl.u32 %v3330, 7
        %v3332 = vsub.s32 %v3329, %v3331
        %v3333 = vrot.slane %v2430, %v3332
        %v3335 = vunpack.c.l.s4 1983009808
        %v3336 = vunpack.c.0.s8 %v3335
        %v3337 = vlaneseq
        %v3338 = vshrl.u32 %v3337, 7
        %v3339 = vsub.s32 %v3336, %v3338
        %v3340 = vrot.slane %v3326, %v3339
        %v3341 = vcombine.high %v3333, %v3333
        %v3342 = vcombine.high %v3340, %v3340
        %v3343 = vcombine.high %v2431, %v2431
        %v3345 = vunpack.c.l.s4 1983009808
        %v3346 = vunpack.c.0.s8 %v3345
        %v3347 = vlaneseq
        %v3348 = vshrl.u32 %v3347, 7
        %v3349 = vsub.s32 %v3346, %v3348
        %v3350 = vrot.slane %v2431, %v3349
        %v3352 = vunpack.c.l.s4 1983009808
        %v3353 = vunpack.c.0.s8 %v3352
        %v3354 = vlaneseq
        %v3355 = vshrl.u32 %v3354, 7
        %v3356 = vsub.s32 %v3353, %v3355
        %v3357 = vrot.slane %v3343, %v3356
        %v3358 = vcombine.high %v3350, %v3350
        %v3359 = vcombine.high %v3357, %v3357
        %v3360 = vcombine.high %v2432, %v2432
        %v3362 = vunpack.c.l.s4 1983009808
        %v3363 = vunpack.c.0.s8 %v3362
        %v3364 = vlaneseq
        %v3365 = vshrl.u32 %v3364, 7
        %v3366 = vsub.s32 %v3363, %v3365
        %v3367 = vrot.slane %v2432, %v3366
        %v3369 = vunpack.c.l.s4 1983009808
        %v3370 = vunpack.c.0.s8 %v3369
        %v3371 = vlaneseq
        %v3372 = vshrl.u32 %v3371, 7
        %v3373 = vsub.s32 %v3370, %v3372
        %v3374 = vrot.slane %v3360, %v3373
        %v3375 = vcombine.high %v3367, %v3367
        %v3376 = vcombine.high %v3374, %v3374
        %v3377 = vcombine.high %v2433, %v2433
        %v3379 = vunpack.c.l.s4 1983009808
        %v3380 = vunpack.c.0.s8 %v3379
        %v3381 = vlaneseq
        %v3382 = vshrl.u32 %v3381, 7
        %v3383 = vsub.s32 %v3380, %v3382
        %v3384 = vrot.slane %v2433, %v3383
        %v3386 = vunpack.c.l.s4 1983009808
        %v3387 = vunpack.c.0.s8 %v3386
        %v3388 = vlaneseq
        %v3389 = vshrl.u32 %v3388, 7
        %v3390 = vsub.s32 %v3387, %v3389
        %v3391 = vrot.slane %v3377, %v3390
        %v3392 = vcombine.high %v3384, %v3384
        %v3393 = vcombine.high %v3391, %v3391
        %v3394 = vcombine.high %v2434, %v2434
        %v3396 = vunpack.c.l.s4 1983009808
        %v3397 = vunpack.c.0.s8 %v3396
        %v3398 = vlaneseq
        %v3399 = vshrl.u32 %v3398, 7
        %v3400 = vsub.s32 %v3397, %v3399
        %v3401 = vrot.slane %v2434, %v3400
        %v3403 = vunpack.c.l.s4 1983009808
        %v3404 = vunpack.c.0.s8 %v3403
        %v3405 = vlaneseq
        %v3406 = vshrl.u32 %v3405, 7
        %v3407 = vsub.s32 %v3404, %v3406
        %v3408 = vrot.slane %v3394, %v3407
        %v3409 = vcombine.high %v3401, %v3401
        %v3410 = vcombine.high %v3408, %v3408
        %v3411 = vcombine.high %v2435, %v2435
        %v3413 = vunpack.c.l.s4 1983009808
        %v3414 = vunpack.c.0.s8 %v3413
        %v3415 = vlaneseq
        %v3416 = vshrl.u32 %v3415, 7
        %v3417 = vsub.s32 %v3414, %v3416
        %v3418 = vrot.slane %v2435, %v3417
        %v3420 = vunpack.c.l.s4 1983009808
        %v3421 = vunpack.c.0.s8 %v3420
        %v3422 = vlaneseq
        %v3423 = vshrl.u32 %v3422, 7
        %v3424 = vsub.s32 %v3421, %v3423
        %v3425 = vrot.slane %v3411, %v3424
        %v3426 = vcombine.high %v3418, %v3418
        %v3427 = vcombine.high %v3425, %v3425
        %v3428 = vcombine.high %v2436, %v2436
        %v3430 = vunpack.c.l.s4 1983009808
        %v3431 = vunpack.c.0.s8 %v3430
        %v3432 = vlaneseq
        %v3433 = vshrl.u32 %v3432, 7
        %v3434 = vsub.s32 %v3431, %v3433
        %v3435 = vrot.slane %v2436, %v3434
        %v3437 = vunpack.c.l.s4 1983009808
        %v3438 = vunpack.c.0.s8 %v3437
        %v3439 = vlaneseq
        %v3440 = vshrl.u32 %v3439, 7
        %v3441 = vsub.s32 %v3438, %v3440
        %v3442 = vrot.slane %v3428, %v3441
        %v3443 = vcombine.high %v3435, %v3435
        %v3444 = vcombine.high %v3442, %v3442
        %v3445 = vcombine.high %v2437, %v2437
        %v3447 = vunpack.c.l.s4 1983009808
        %v3448 = vunpack.c.0.s8 %v3447
        %v3449 = vlaneseq
        %v3450 = vshrl.u32 %v3449, 7
        %v3451 = vsub.s32 %v3448, %v3450
        %v3452 = vrot.slane %v2437, %v3451
        %v3454 = vunpack.c.l.s4 1983009808
        %v3455 = vunpack.c.0.s8 %v3454
        %v3456 = vlaneseq
        %v3457 = vshrl.u32 %v3456, 7
        %v3458 = vsub.s32 %v3455, %v3457
        %v3459 = vrot.slane %v3445, %v3458
        %v3460 = vcombine.high %v3452, %v3452
        %v3461 = vcombine.high %v3459, %v3459
        %v3462 = vcombine.high %v2438, %v2438
        %v3464 = vunpack.c.l.s4 1983009808
        %v3465 = vunpack.c.0.s8 %v3464
        %v3466 = vlaneseq
        %v3467 = vshrl.u32 %v3466, 7
        %v3468 = vsub.s32 %v3465, %v3467
        %v3469 = vrot.slane %v2438, %v3468
        %v3471 = vunpack.c.l.s4 1983009808
        %v3472 = vunpack.c.0.s8 %v3471
        %v3473 = vlaneseq
        %v3474 = vshrl.u32 %v3473, 7
        %v3475 = vsub.s32 %v3472, %v3474
        %v3476 = vrot.slane %v3462, %v3475
        %v3477 = vcombine.high %v3469, %v3469
        %v3478 = vcombine.high %v3476, %v3476
        %v3479 = vcombine.high %v2439, %v2439
        %v3481 = vunpack.c.l.s4 1983009808
        %v3482 = vunpack.c.0.s8 %v3481
        %v3483 = vlaneseq
        %v3484 = vshrl.u32 %v3483, 7
        %v3485 = vsub.s32 %v3482, %v3484
        %v3486 = vrot.slane %v2439, %v3485
        %v3488 = vunpack.c.l.s4 1983009808
        %v3489 = vunpack.c.0.s8 %v3488
        %v3490 = vlaneseq
        %v3491 = vshrl.u32 %v3490, 7
        %v3492 = vsub.s32 %v3489, %v3491
        %v3493 = vrot.slane %v3479, %v3492
        %v3494 = vcombine.high %v3486, %v3486
        %v3495 = vcombine.high %v3493, %v3493
        %v3496 = vcombine.high %v2440, %v2440
        %v3498 = vunpack.c.l.s4 1983009808
        %v3499 = vunpack.c.0.s8 %v3498
        %v3500 = vlaneseq
        %v3501 = vshrl.u32 %v3500, 7
        %v3502 = vsub.s32 %v3499, %v3501
        %v3503 = vrot.slane %v2440, %v3502
        %v3505 = vunpack.c.l.s4 1983009808
        %v3506 = vunpack.c.0.s8 %v3505
        %v3507 = vlaneseq
        %v3508 = vshrl.u32 %v3507, 7
        %v3509 = vsub.s32 %v3506, %v3508
        %v3510 = vrot.slane %v3496, %v3509
        %v3511 = vcombine.high %v3503, %v3503
        %v3512 = vcombine.high %v3510, %v3510
        %v3513 = vcombine.high %v2441, %v2441
        %v3515 = vunpack.c.l.s4 1983009808
        %v3516 = vunpack.c.0.s8 %v3515
        %v3517 = vlaneseq
        %v3518 = vshrl.u32 %v3517, 7
        %v3519 = vsub.s32 %v3516, %v3518
        %v3520 = vrot.slane %v2441, %v3519
        %v3522 = vunpack.c.l.s4 1983009808
        %v3523 = vunpack.c.0.s8 %v3522
        %v3524 = vlaneseq
        %v3525 = vshrl.u32 %v3524, 7
        %v3526 = vsub.s32 %v3523, %v3525
        %v3527 = vrot.slane %v3513, %v3526
        %v3528 = vcombine.high %v3520, %v3520
        %v3529 = vcombine.high %v3527, %v3527
        %v3530 = vcombine.high %v2442, %v2442
        %v3532 = vunpack.c.l.s4 1983009808
        %v3533 = vunpack.c.0.s8 %v3532
        %v3534 = vlaneseq
        %v3535 = vshrl.u32 %v3534, 7
        %v3536 = vsub.s32 %v3533, %v3535
        %v3537 = vrot.slane %v2442, %v3536
        %v3539 = vunpack.c.l.s4 1983009808
        %v3540 = vunpack.c.0.s8 %v3539
        %v3541 = vlaneseq
        %v3542 = vshrl.u32 %v3541, 7
        %v3543 = vsub.s32 %v3540, %v3542
        %v3544 = vrot.slane %v3530, %v3543
        %v3545 = vcombine.high %v3537, %v3537
        %v3546 = vcombine.high %v3544, %v3544
        %v3547 = vcombine.high %v2443, %v2443
        %v3549 = vunpack.c.l.s4 1983009808
        %v3550 = vunpack.c.0.s8 %v3549
        %v3551 = vlaneseq
        %v3552 = vshrl.u32 %v3551, 7
        %v3553 = vsub.s32 %v3550, %v3552
        %v3554 = vrot.slane %v2443, %v3553
        %v3556 = vunpack.c.l.s4 1983009808
        %v3557 = vunpack.c.0.s8 %v3556
        %v3558 = vlaneseq
        %v3559 = vshrl.u32 %v3558, 7
        %v3560 = vsub.s32 %v3557, %v3559
        %v3561 = vrot.slane %v3547, %v3560
        %v3562 = vcombine.high %v3554, %v3554
        %v3563 = vcombine.high %v3561, %v3561
        %v3564 = vcombine.high %v2444, %v2444
        %v3566 = vunpack.c.l.s4 1983009808
        %v3567 = vunpack.c.0.s8 %v3566
        %v3568 = vlaneseq
        %v3569 = vshrl.u32 %v3568, 7
        %v3570 = vsub.s32 %v3567, %v3569
        %v3571 = vrot.slane %v2444, %v3570
        %v3573 = vunpack.c.l.s4 1983009808
        %v3574 = vunpack.c.0.s8 %v3573
        %v3575 = vlaneseq
        %v3576 = vshrl.u32 %v3575, 7
        %v3577 = vsub.s32 %v3574, %v3576
        %v3578 = vrot.slane %v3564, %v3577
        %v3579 = vcombine.high %v3571, %v3571
        %v3580 = vcombine.high %v3578, %v3578
        %v3581 = vcombine.high %v2445, %v2445
        %v3583 = vunpack.c.l.s4 1983009808
        %v3584 = vunpack.c.0.s8 %v3583
        %v3585 = vlaneseq
        %v3586 = vshrl.u32 %v3585, 7
        %v3587 = vsub.s32 %v3584, %v3586
        %v3588 = vrot.slane %v2445, %v3587
        %v3590 = vunpack.c.l.s4 1983009808
        %v3591 = vunpack.c.0.s8 %v3590
        %v3592 = vlaneseq
        %v3593 = vshrl.u32 %v3592, 7
        %v3594 = vsub.s32 %v3591, %v3593
        %v3595 = vrot.slane %v3581, %v3594
        %v3596 = vcombine.high %v3588, %v3588
        %v3597 = vcombine.high %v3595, %v3595
        %vm3854 = vcmask 254976
        %v3855 = vsel %vm3854, %v2517, -inf
        %v3856 = vrot.slane %v3855, 4
        %v3857 = vmax.f32 %v3855, %v3856
        %v3858 = vrot.slane %v3857, 2
        %v3859 = vmax.f32 %v3857, %v3858
        %v3860 = vrot.slane %v3859, 1
        %v3861 = vmax.f32 %v3859, %v3860
        %v3862 = vsel %vm3854, %v2525, -inf
        %v3863 = vrot.slane %v3862, 4
        %v3864 = vmax.f32 %v3862, %v3863
        %v3865 = vrot.slane %v3864, 2
        %v3866 = vmax.f32 %v3864, %v3865
        %v3867 = vrot.slane %v3866, 1
        %v3868 = vmax.f32 %v3866, %v3867
        %v3869 = vsel %vm3854, %v2524, -inf
        %v3870 = vrot.slane %v3869, 4
        %v3871 = vmax.f32 %v3869, %v3870
        %v3872 = vrot.slane %v3871, 2
        %v3873 = vmax.f32 %v3871, %v3872
        %v3874 = vrot.slane %v3873, 1
        %v3875 = vmax.f32 %v3873, %v3874
        %v3876 = vsel %vm3854, %v2526, -inf
        %v3877 = vrot.slane %v3876, 4
        %v3878 = vmax.f32 %v3876, %v3877
        %v3879 = vrot.slane %v3878, 2
        %v3880 = vmax.f32 %v3878, %v3879
        %v3881 = vrot.slane %v3880, 1
        %v3882 = vmax.f32 %v3880, %v3881
        %v3883 = vsel %vm3854, %v2534, -inf
        %v3884 = vrot.slane %v3883, 4
        %v3885 = vmax.f32 %v3883, %v3884
        %v3886 = vrot.slane %v3885, 2
        %v3887 = vmax.f32 %v3885, %v3886
        %v3888 = vrot.slane %v3887, 1
        %v3889 = vmax.f32 %v3887, %v3888
        %v3890 = vsel %vm3854, %v2542, -inf
        %v3891 = vrot.slane %v3890, 4
        %v3892 = vmax.f32 %v3890, %v3891
        %v3893 = vrot.slane %v3892, 2
        %v3894 = vmax.f32 %v3892, %v3893
        %v3895 = vrot.slane %v3894, 1
        %v3896 = vmax.f32 %v3894, %v3895
        %v3897 = vsel %vm3854, %v2541, -inf
        %v3898 = vrot.slane %v3897, 4
        %v3899 = vmax.f32 %v3897, %v3898
        %v3900 = vrot.slane %v3899, 2
        %v3901 = vmax.f32 %v3899, %v3900
        %v3902 = vrot.slane %v3901, 1
        %v3903 = vmax.f32 %v3901, %v3902
        %v3904 = vsel %vm3854, %v2543, -inf
        %v3905 = vrot.slane %v3904, 4
        %v3906 = vmax.f32 %v3904, %v3905
        %v3907 = vrot.slane %v3906, 2
        %v3908 = vmax.f32 %v3906, %v3907
        %v3909 = vrot.slane %v3908, 1
        %v3910 = vmax.f32 %v3908, %v3909
        %v3911 = vsel %vm3854, %v2551, -inf
        %v3912 = vrot.slane %v3911, 4
        %v3913 = vmax.f32 %v3911, %v3912
        %v3914 = vrot.slane %v3913, 2
        %v3915 = vmax.f32 %v3913, %v3914
        %v3916 = vrot.slane %v3915, 1
        %v3917 = vmax.f32 %v3915, %v3916
        %v3918 = vsel %vm3854, %v2559, -inf
        %v3919 = vrot.slane %v3918, 4
        %v3920 = vmax.f32 %v3918, %v3919
        %v3921 = vrot.slane %v3920, 2
        %v3922 = vmax.f32 %v3920, %v3921
        %v3923 = vrot.slane %v3922, 1
        %v3924 = vmax.f32 %v3922, %v3923
        %v3925 = vsel %vm3854, %v2558, -inf
        %v3926 = vrot.slane %v3925, 4
        %v3927 = vmax.f32 %v3925, %v3926
        %v3928 = vrot.slane %v3927, 2
        %v3929 = vmax.f32 %v3927, %v3928
        %v3930 = vrot.slane %v3929, 1
        %v3931 = vmax.f32 %v3929, %v3930
        %v3932 = vsel %vm3854, %v2560, -inf
        %v3933 = vrot.slane %v3932, 4
        %v3934 = vmax.f32 %v3932, %v3933
        %v3935 = vrot.slane %v3934, 2
        %v3936 = vmax.f32 %v3934, %v3935
        %v3937 = vrot.slane %v3936, 1
        %v3938 = vmax.f32 %v3936, %v3937
        %v3939 = vsel %vm3854, %v2568, -inf
        %v3940 = vrot.slane %v3939, 4
        %v3941 = vmax.f32 %v3939, %v3940
        %v3942 = vrot.slane %v3941, 2
        %v3943 = vmax.f32 %v3941, %v3942
        %v3944 = vrot.slane %v3943, 1
        %v3945 = vmax.f32 %v3943, %v3944
        %v3946 = vsel %vm3854, %v2576, -inf
        %v3947 = vrot.slane %v3946, 4
        %v3948 = vmax.f32 %v3946, %v3947
        %v3949 = vrot.slane %v3948, 2
        %v3950 = vmax.f32 %v3948, %v3949
        %v3951 = vrot.slane %v3950, 1
        %v3952 = vmax.f32 %v3950, %v3951
        %v3953 = vsel %vm3854, %v2575, -inf
        %v3954 = vrot.slane %v3953, 4
        %v3955 = vmax.f32 %v3953, %v3954
        %v3956 = vrot.slane %v3955, 2
        %v3957 = vmax.f32 %v3955, %v3956
        %v3958 = vrot.slane %v3957, 1
        %v3959 = vmax.f32 %v3957, %v3958
        %v3960 = vsel %vm3854, %v2577, -inf
        %v3961 = vrot.slane %v3960, 4
        %v3962 = vmax.f32 %v3960, %v3961
        %v3963 = vrot.slane %v3962, 2
        %v3964 = vmax.f32 %v3962, %v3963
        %v3965 = vrot.slane %v3964, 1
        %v3966 = vmax.f32 %v3964, %v3965
        %v3967 = vsel %vm3854, %v2585, -inf
        %v3968 = vrot.slane %v3967, 4
        %v3969 = vmax.f32 %v3967, %v3968
        %v3970 = vrot.slane %v3969, 2
        %v3971 = vmax.f32 %v3969, %v3970
        %v3972 = vrot.slane %v3971, 1
        %v3973 = vmax.f32 %v3971, %v3972
        %v3974 = vsel %vm3854, %v2593, -inf
        %v3975 = vrot.slane %v3974, 4
        %v3976 = vmax.f32 %v3974, %v3975
        %v3977 = vrot.slane %v3976, 2
        %v3978 = vmax.f32 %v3976, %v3977
        %v3979 = vrot.slane %v3978, 1
        %v3980 = vmax.f32 %v3978, %v3979
        %v3981 = vsel %vm3854, %v2592, -inf
        %v3982 = vrot.slane %v3981, 4
        %v3983 = vmax.f32 %v3981, %v3982
        %v3984 = vrot.slane %v3983, 2
        %v3985 = vmax.f32 %v3983, %v3984
        %v3986 = vrot.slane %v3985, 1
        %v3987 = vmax.f32 %v3985, %v3986
        %v3988 = vsel %vm3854, %v2594, -inf
        %v3989 = vrot.slane %v3988, 4
        %v3990 = vmax.f32 %v3988, %v3989
        %v3991 = vrot.slane %v3990, 2
        %v3992 = vmax.f32 %v3990, %v3991
        %v3993 = vrot.slane %v3992, 1
        %v3994 = vmax.f32 %v3992, %v3993
        %v3995 = vsel %vm3854, %v2602, -inf
        %v3996 = vrot.slane %v3995, 4
        %v3997 = vmax.f32 %v3995, %v3996
        %v3998 = vrot.slane %v3997, 2
        %v3999 = vmax.f32 %v3997, %v3998
        %v4000 = vrot.slane %v3999, 1
        %v4001 = vmax.f32 %v3999, %v4000
        %v4002 = vsel %vm3854, %v2610, -inf
        %v4003 = vrot.slane %v4002, 4
        %v4004 = vmax.f32 %v4002, %v4003
        %v4005 = vrot.slane %v4004, 2
        %v4006 = vmax.f32 %v4004, %v4005
        %v4007 = vrot.slane %v4006, 1
        %v4008 = vmax.f32 %v4006, %v4007
        %v4009 = vsel %vm3854, %v2609, -inf
        %v4010 = vrot.slane %v4009, 4
        %v4011 = vmax.f32 %v4009, %v4010
        %v4012 = vrot.slane %v4011, 2
        %v4013 = vmax.f32 %v4011, %v4012
        %v4014 = vrot.slane %v4013, 1
        %v4015 = vmax.f32 %v4013, %v4014
        %v4016 = vsel %vm3854, %v2611, -inf
        %v4017 = vrot.slane %v4016, 4
        %v4018 = vmax.f32 %v4016, %v4017
        %v4019 = vrot.slane %v4018, 2
        %v4020 = vmax.f32 %v4018, %v4019
        %v4021 = vrot.slane %v4020, 1
        %v4022 = vmax.f32 %v4020, %v4021
        %v4023 = vsel %vm3854, %v2619, -inf
        %v4024 = vrot.slane %v4023, 4
        %v4025 = vmax.f32 %v4023, %v4024
        %v4026 = vrot.slane %v4025, 2
        %v4027 = vmax.f32 %v4025, %v4026
        %v4028 = vrot.slane %v4027, 1
        %v4029 = vmax.f32 %v4027, %v4028
        %v4030 = vsel %vm3854, %v2627, -inf
        %v4031 = vrot.slane %v4030, 4
        %v4032 = vmax.f32 %v4030, %v4031
        %v4033 = vrot.slane %v4032, 2
        %v4034 = vmax.f32 %v4032, %v4033
        %v4035 = vrot.slane %v4034, 1
        %v4036 = vmax.f32 %v4034, %v4035
        %v4037 = vsel %vm3854, %v2626, -inf
        %v4038 = vrot.slane %v4037, 4
        %v4039 = vmax.f32 %v4037, %v4038
        %v4040 = vrot.slane %v4039, 2
        %v4041 = vmax.f32 %v4039, %v4040
        %v4042 = vrot.slane %v4041, 1
        %v4043 = vmax.f32 %v4041, %v4042
        %v4044 = vsel %vm3854, %v2628, -inf
        %v4045 = vrot.slane %v4044, 4
        %v4046 = vmax.f32 %v4044, %v4045
        %v4047 = vrot.slane %v4046, 2
        %v4048 = vmax.f32 %v4046, %v4047
        %v4049 = vrot.slane %v4048, 1
        %v4050 = vmax.f32 %v4048, %v4049
        %v4051 = vsel %vm3854, %v2636, -inf
        %v4052 = vrot.slane %v4051, 4
        %v4053 = vmax.f32 %v4051, %v4052
        %v4054 = vrot.slane %v4053, 2
        %v4055 = vmax.f32 %v4053, %v4054
        %v4056 = vrot.slane %v4055, 1
        %v4057 = vmax.f32 %v4055, %v4056
        %v4058 = vsel %vm3854, %v2644, -inf
        %v4059 = vrot.slane %v4058, 4
        %v4060 = vmax.f32 %v4058, %v4059
        %v4061 = vrot.slane %v4060, 2
        %v4062 = vmax.f32 %v4060, %v4061
        %v4063 = vrot.slane %v4062, 1
        %v4064 = vmax.f32 %v4062, %v4063
        %v4065 = vsel %vm3854, %v2643, -inf
        %v4066 = vrot.slane %v4065, 4
        %v4067 = vmax.f32 %v4065, %v4066
        %v4068 = vrot.slane %v4067, 2
        %v4069 = vmax.f32 %v4067, %v4068
        %v4070 = vrot.slane %v4069, 1
        %v4071 = vmax.f32 %v4069, %v4070
        %v4072 = vsel %vm3854, %v2645, -inf
        %v4073 = vrot.slane %v4072, 4
        %v4074 = vmax.f32 %v4072, %v4073
        %v4075 = vrot.slane %v4074, 2
        %v4076 = vmax.f32 %v4074, %v4075
        %v4077 = vrot.slane %v4076, 1
        %v4078 = vmax.f32 %v4076, %v4077
        %v4079 = vsel %vm3854, %v2653, -inf
        %v4080 = vrot.slane %v4079, 4
        %v4081 = vmax.f32 %v4079, %v4080
        %v4082 = vrot.slane %v4081, 2
        %v4083 = vmax.f32 %v4081, %v4082
        %v4084 = vrot.slane %v4083, 1
        %v4085 = vmax.f32 %v4083, %v4084
        %v4086 = vsel %vm3854, %v2661, -inf
        %v4087 = vrot.slane %v4086, 4
        %v4088 = vmax.f32 %v4086, %v4087
        %v4089 = vrot.slane %v4088, 2
        %v4090 = vmax.f32 %v4088, %v4089
        %v4091 = vrot.slane %v4090, 1
        %v4092 = vmax.f32 %v4090, %v4091
        %v4093 = vsel %vm3854, %v2660, -inf
        %v4094 = vrot.slane %v4093, 4
        %v4095 = vmax.f32 %v4093, %v4094
        %v4096 = vrot.slane %v4095, 2
        %v4097 = vmax.f32 %v4095, %v4096
        %v4098 = vrot.slane %v4097, 1
        %v4099 = vmax.f32 %v4097, %v4098
        %v4100 = vsel %vm3854, %v2662, -inf
        %v4101 = vrot.slane %v4100, 4
        %v4102 = vmax.f32 %v4100, %v4101
        %v4103 = vrot.slane %v4102, 2
        %v4104 = vmax.f32 %v4102, %v4103
        %v4105 = vrot.slane %v4104, 1
        %v4106 = vmax.f32 %v4104, %v4105
        %v4107 = vsel %vm3854, %v2670, -inf
        %v4108 = vrot.slane %v4107, 4
        %v4109 = vmax.f32 %v4107, %v4108
        %v4110 = vrot.slane %v4109, 2
        %v4111 = vmax.f32 %v4109, %v4110
        %v4112 = vrot.slane %v4111, 1
        %v4113 = vmax.f32 %v4111, %v4112
        %v4114 = vsel %vm3854, %v2678, -inf
        %v4115 = vrot.slane %v4114, 4
        %v4116 = vmax.f32 %v4114, %v4115
        %v4117 = vrot.slane %v4116, 2
        %v4118 = vmax.f32 %v4116, %v4117
        %v4119 = vrot.slane %v4118, 1
        %v4120 = vmax.f32 %v4118, %v4119
        %v4121 = vsel %vm3854, %v2677, -inf
        %v4122 = vrot.slane %v4121, 4
        %v4123 = vmax.f32 %v4121, %v4122
        %v4124 = vrot.slane %v4123, 2
        %v4125 = vmax.f32 %v4123, %v4124
        %v4126 = vrot.slane %v4125, 1
        %v4127 = vmax.f32 %v4125, %v4126
        %v4128 = vsel %vm3854, %v2679, -inf
        %v4129 = vrot.slane %v4128, 4
        %v4130 = vmax.f32 %v4128, %v4129
        %v4131 = vrot.slane %v4130, 2
        %v4132 = vmax.f32 %v4130, %v4131
        %v4133 = vrot.slane %v4132, 1
        %v4134 = vmax.f32 %v4132, %v4133
        %v4135 = vsel %vm3854, %v2687, -inf
        %v4136 = vrot.slane %v4135, 4
        %v4137 = vmax.f32 %v4135, %v4136
        %v4138 = vrot.slane %v4137, 2
        %v4139 = vmax.f32 %v4137, %v4138
        %v4140 = vrot.slane %v4139, 1
        %v4141 = vmax.f32 %v4139, %v4140
        %v4142 = vsel %vm3854, %v2695, -inf
        %v4143 = vrot.slane %v4142, 4
        %v4144 = vmax.f32 %v4142, %v4143
        %v4145 = vrot.slane %v4144, 2
        %v4146 = vmax.f32 %v4144, %v4145
        %v4147 = vrot.slane %v4146, 1
        %v4148 = vmax.f32 %v4146, %v4147
        %v4149 = vsel %vm3854, %v2694, -inf
        %v4150 = vrot.slane %v4149, 4
        %v4151 = vmax.f32 %v4149, %v4150
        %v4152 = vrot.slane %v4151, 2
        %v4153 = vmax.f32 %v4151, %v4152
        %v4154 = vrot.slane %v4153, 1
        %v4155 = vmax.f32 %v4153, %v4154
        %v4156 = vsel %vm3854, %v2696, -inf
        %v4157 = vrot.slane %v4156, 4
        %v4158 = vmax.f32 %v4156, %v4157
        %v4159 = vrot.slane %v4158, 2
        %v4160 = vmax.f32 %v4158, %v4159
        %v4161 = vrot.slane %v4160, 1
        %v4162 = vmax.f32 %v4160, %v4161
        %v4163 = vsel %vm3854, %v2704, -inf
        %v4164 = vrot.slane %v4163, 4
        %v4165 = vmax.f32 %v4163, %v4164
        %v4166 = vrot.slane %v4165, 2
        %v4167 = vmax.f32 %v4165, %v4166
        %v4168 = vrot.slane %v4167, 1
        %v4169 = vmax.f32 %v4167, %v4168
        %v4170 = vsel %vm3854, %v2712, -inf
        %v4171 = vrot.slane %v4170, 4
        %v4172 = vmax.f32 %v4170, %v4171
        %v4173 = vrot.slane %v4172, 2
        %v4174 = vmax.f32 %v4172, %v4173
        %v4175 = vrot.slane %v4174, 1
        %v4176 = vmax.f32 %v4174, %v4175
        %v4177 = vsel %vm3854, %v2711, -inf
        %v4178 = vrot.slane %v4177, 4
        %v4179 = vmax.f32 %v4177, %v4178
        %v4180 = vrot.slane %v4179, 2
        %v4181 = vmax.f32 %v4179, %v4180
        %v4182 = vrot.slane %v4181, 1
        %v4183 = vmax.f32 %v4181, %v4182
        %v4184 = vsel %vm3854, %v2713, -inf
        %v4185 = vrot.slane %v4184, 4
        %v4186 = vmax.f32 %v4184, %v4185
        %v4187 = vrot.slane %v4186, 2
        %v4188 = vmax.f32 %v4186, %v4187
        %v4189 = vrot.slane %v4188, 1
        %v4190 = vmax.f32 %v4188, %v4189
        %v4191 = vsel %vm3854, %v2721, -inf
        %v4192 = vrot.slane %v4191, 4
        %v4193 = vmax.f32 %v4191, %v4192
        %v4194 = vrot.slane %v4193, 2
        %v4195 = vmax.f32 %v4193, %v4194
        %v4196 = vrot.slane %v4195, 1
        %v4197 = vmax.f32 %v4195, %v4196
        %v4198 = vsel %vm3854, %v2729, -inf
        %v4199 = vrot.slane %v4198, 4
        %v4200 = vmax.f32 %v4198, %v4199
        %v4201 = vrot.slane %v4200, 2
        %v4202 = vmax.f32 %v4200, %v4201
        %v4203 = vrot.slane %v4202, 1
        %v4204 = vmax.f32 %v4202, %v4203
        %v4205 = vsel %vm3854, %v2728, -inf
        %v4206 = vrot.slane %v4205, 4
        %v4207 = vmax.f32 %v4205, %v4206
        %v4208 = vrot.slane %v4207, 2
        %v4209 = vmax.f32 %v4207, %v4208
        %v4210 = vrot.slane %v4209, 1
        %v4211 = vmax.f32 %v4209, %v4210
        %v4212 = vsel %vm3854, %v2730, -inf
        %v4213 = vrot.slane %v4212, 4
        %v4214 = vmax.f32 %v4212, %v4213
        %v4215 = vrot.slane %v4214, 2
        %v4216 = vmax.f32 %v4214, %v4215
        %v4217 = vrot.slane %v4216, 1
        %v4218 = vmax.f32 %v4216, %v4217
        %v4219 = vsel %vm3854, %v2738, -inf
        %v4220 = vrot.slane %v4219, 4
        %v4221 = vmax.f32 %v4219, %v4220
        %v4222 = vrot.slane %v4221, 2
        %v4223 = vmax.f32 %v4221, %v4222
        %v4224 = vrot.slane %v4223, 1
        %v4225 = vmax.f32 %v4223, %v4224
        %v4226 = vsel %vm3854, %v2746, -inf
        %v4227 = vrot.slane %v4226, 4
        %v4228 = vmax.f32 %v4226, %v4227
        %v4229 = vrot.slane %v4228, 2
        %v4230 = vmax.f32 %v4228, %v4229
        %v4231 = vrot.slane %v4230, 1
        %v4232 = vmax.f32 %v4230, %v4231
        %v4233 = vsel %vm3854, %v2745, -inf
        %v4234 = vrot.slane %v4233, 4
        %v4235 = vmax.f32 %v4233, %v4234
        %v4236 = vrot.slane %v4235, 2
        %v4237 = vmax.f32 %v4235, %v4236
        %v4238 = vrot.slane %v4237, 1
        %v4239 = vmax.f32 %v4237, %v4238
        %v4240 = vsel %vm3854, %v2747, -inf
        %v4241 = vrot.slane %v4240, 4
        %v4242 = vmax.f32 %v4240, %v4241
        %v4243 = vrot.slane %v4242, 2
        %v4244 = vmax.f32 %v4242, %v4243
        %v4245 = vrot.slane %v4244, 1
        %v4246 = vmax.f32 %v4244, %v4245
        %v4247 = vsel %vm3854, %v2755, -inf
        %v4248 = vrot.slane %v4247, 4
        %v4249 = vmax.f32 %v4247, %v4248
        %v4250 = vrot.slane %v4249, 2
        %v4251 = vmax.f32 %v4249, %v4250
        %v4252 = vrot.slane %v4251, 1
        %v4253 = vmax.f32 %v4251, %v4252
        %v4254 = vsel %vm3854, %v2763, -inf
        %v4255 = vrot.slane %v4254, 4
        %v4256 = vmax.f32 %v4254, %v4255
        %v4257 = vrot.slane %v4256, 2
        %v4258 = vmax.f32 %v4256, %v4257
        %v4259 = vrot.slane %v4258, 1
        %v4260 = vmax.f32 %v4258, %v4259
        %v4261 = vsel %vm3854, %v2762, -inf
        %v4262 = vrot.slane %v4261, 4
        %v4263 = vmax.f32 %v4261, %v4262
        %v4264 = vrot.slane %v4263, 2
        %v4265 = vmax.f32 %v4263, %v4264
        %v4266 = vrot.slane %v4265, 1
        %v4267 = vmax.f32 %v4265, %v4266
        %v4268 = vsel %vm3854, %v2764, -inf
        %v4269 = vrot.slane %v4268, 4
        %v4270 = vmax.f32 %v4268, %v4269
        %v4271 = vrot.slane %v4270, 2
        %v4272 = vmax.f32 %v4270, %v4271
        %v4273 = vrot.slane %v4272, 1
        %v4274 = vmax.f32 %v4272, %v4273
        %v4275 = vsel %vm3854, %v2772, -inf
        %v4276 = vrot.slane %v4275, 4
        %v4277 = vmax.f32 %v4275, %v4276
        %v4278 = vrot.slane %v4277, 2
        %v4279 = vmax.f32 %v4277, %v4278
        %v4280 = vrot.slane %v4279, 1
        %v4281 = vmax.f32 %v4279, %v4280
        %v4282 = vsel %vm3854, %v2780, -inf
        %v4283 = vrot.slane %v4282, 4
        %v4284 = vmax.f32 %v4282, %v4283
        %v4285 = vrot.slane %v4284, 2
        %v4286 = vmax.f32 %v4284, %v4285
        %v4287 = vrot.slane %v4286, 1
        %v4288 = vmax.f32 %v4286, %v4287
        %v4289 = vsel %vm3854, %v2779, -inf
        %v4290 = vrot.slane %v4289, 4
        %v4291 = vmax.f32 %v4289, %v4290
        %v4292 = vrot.slane %v4291, 2
        %v4293 = vmax.f32 %v4291, %v4292
        %v4294 = vrot.slane %v4293, 1
        %v4295 = vmax.f32 %v4293, %v4294
        %v4296 = vsel %vm3854, %v2781, -inf
        %v4297 = vrot.slane %v4296, 4
        %v4298 = vmax.f32 %v4296, %v4297
        %v4299 = vrot.slane %v4298, 2
        %v4300 = vmax.f32 %v4298, %v4299
        %v4301 = vrot.slane %v4300, 1
        %v4302 = vmax.f32 %v4300, %v4301
        %v4303 = vsel %vm3854, %v2789, -inf
        %v4304 = vrot.slane %v4303, 4
        %v4305 = vmax.f32 %v4303, %v4304
        %v4306 = vrot.slane %v4305, 2
        %v4307 = vmax.f32 %v4305, %v4306
        %v4308 = vrot.slane %v4307, 1
        %v4309 = vmax.f32 %v4307, %v4308
        %v4310 = vsel %vm3854, %v2797, -inf
        %v4311 = vrot.slane %v4310, 4
        %v4312 = vmax.f32 %v4310, %v4311
        %v4313 = vrot.slane %v4312, 2
        %v4314 = vmax.f32 %v4312, %v4313
        %v4315 = vrot.slane %v4314, 1
        %v4316 = vmax.f32 %v4314, %v4315
        %v4317 = vsel %vm3854, %v2796, -inf
        %v4318 = vrot.slane %v4317, 4
        %v4319 = vmax.f32 %v4317, %v4318
        %v4320 = vrot.slane %v4319, 2
        %v4321 = vmax.f32 %v4319, %v4320
        %v4322 = vrot.slane %v4321, 1
        %v4323 = vmax.f32 %v4321, %v4322
        %v4324 = vsel %vm3854, %v2798, -inf
        %v4325 = vrot.slane %v4324, 4
        %v4326 = vmax.f32 %v4324, %v4325
        %v4327 = vrot.slane %v4326, 2
        %v4328 = vmax.f32 %v4326, %v4327
        %v4329 = vrot.slane %v4328, 1
        %v4330 = vmax.f32 %v4328, %v4329
        %v4331 = vsel %vm3854, %v2806, -inf
        %v4332 = vrot.slane %v4331, 4
        %v4333 = vmax.f32 %v4331, %v4332
        %v4334 = vrot.slane %v4333, 2
        %v4335 = vmax.f32 %v4333, %v4334
        %v4336 = vrot.slane %v4335, 1
        %v4337 = vmax.f32 %v4335, %v4336
        %v4338 = vsel %vm3854, %v2814, -inf
        %v4339 = vrot.slane %v4338, 4
        %v4340 = vmax.f32 %v4338, %v4339
        %v4341 = vrot.slane %v4340, 2
        %v4342 = vmax.f32 %v4340, %v4341
        %v4343 = vrot.slane %v4342, 1
        %v4344 = vmax.f32 %v4342, %v4343
        %v4345 = vsel %vm3854, %v2813, -inf
        %v4346 = vrot.slane %v4345, 4
        %v4347 = vmax.f32 %v4345, %v4346
        %v4348 = vrot.slane %v4347, 2
        %v4349 = vmax.f32 %v4347, %v4348
        %v4350 = vrot.slane %v4349, 1
        %v4351 = vmax.f32 %v4349, %v4350
        %v4352 = vsel %vm3854, %v2815, -inf
        %v4353 = vrot.slane %v4352, 4
        %v4354 = vmax.f32 %v4352, %v4353
        %v4355 = vrot.slane %v4354, 2
        %v4356 = vmax.f32 %v4354, %v4355
        %v4357 = vrot.slane %v4356, 1
        %v4358 = vmax.f32 %v4356, %v4357
        %v4359 = vsel %vm3854, %v2823, -inf
        %v4360 = vrot.slane %v4359, 4
        %v4361 = vmax.f32 %v4359, %v4360
        %v4362 = vrot.slane %v4361, 2
        %v4363 = vmax.f32 %v4361, %v4362
        %v4364 = vrot.slane %v4363, 1
        %v4365 = vmax.f32 %v4363, %v4364
        %v4366 = vsel %vm3854, %v2831, -inf
        %v4367 = vrot.slane %v4366, 4
        %v4368 = vmax.f32 %v4366, %v4367
        %v4369 = vrot.slane %v4368, 2
        %v4370 = vmax.f32 %v4368, %v4369
        %v4371 = vrot.slane %v4370, 1
        %v4372 = vmax.f32 %v4370, %v4371
        %v4373 = vsel %vm3854, %v2830, -inf
        %v4374 = vrot.slane %v4373, 4
        %v4375 = vmax.f32 %v4373, %v4374
        %v4376 = vrot.slane %v4375, 2
        %v4377 = vmax.f32 %v4375, %v4376
        %v4378 = vrot.slane %v4377, 1
        %v4379 = vmax.f32 %v4377, %v4378
        %v4380 = vsel %vm3854, %v2832, -inf
        %v4381 = vrot.slane %v4380, 4
        %v4382 = vmax.f32 %v4380, %v4381
        %v4383 = vrot.slane %v4382, 2
        %v4384 = vmax.f32 %v4382, %v4383
        %v4385 = vrot.slane %v4384, 1
        %v4386 = vmax.f32 %v4384, %v4385
        %v4387 = vsel %vm3854, %v2840, -inf
        %v4388 = vrot.slane %v4387, 4
        %v4389 = vmax.f32 %v4387, %v4388
        %v4390 = vrot.slane %v4389, 2
        %v4391 = vmax.f32 %v4389, %v4390
        %v4392 = vrot.slane %v4391, 1
        %v4393 = vmax.f32 %v4391, %v4392
        %v4394 = vsel %vm3854, %v2848, -inf
        %v4395 = vrot.slane %v4394, 4
        %v4396 = vmax.f32 %v4394, %v4395
        %v4397 = vrot.slane %v4396, 2
        %v4398 = vmax.f32 %v4396, %v4397
        %v4399 = vrot.slane %v4398, 1
        %v4400 = vmax.f32 %v4398, %v4399
        %v4401 = vsel %vm3854, %v2847, -inf
        %v4402 = vrot.slane %v4401, 4
        %v4403 = vmax.f32 %v4401, %v4402
        %v4404 = vrot.slane %v4403, 2
        %v4405 = vmax.f32 %v4403, %v4404
        %v4406 = vrot.slane %v4405, 1
        %v4407 = vmax.f32 %v4405, %v4406
        %v4408 = vsel %vm3854, %v2849, -inf
        %v4409 = vrot.slane %v4408, 4
        %v4410 = vmax.f32 %v4408, %v4409
        %v4411 = vrot.slane %v4410, 2
        %v4412 = vmax.f32 %v4410, %v4411
        %v4413 = vrot.slane %v4412, 1
        %v4414 = vmax.f32 %v4412, %v4413
        %v4415 = vsel %vm3854, %v2857, -inf
        %v4416 = vrot.slane %v4415, 4
        %v4417 = vmax.f32 %v4415, %v4416
        %v4418 = vrot.slane %v4417, 2
        %v4419 = vmax.f32 %v4417, %v4418
        %v4420 = vrot.slane %v4419, 1
        %v4421 = vmax.f32 %v4419, %v4420
        %v4422 = vsel %vm3854, %v2865, -inf
        %v4423 = vrot.slane %v4422, 4
        %v4424 = vmax.f32 %v4422, %v4423
        %v4425 = vrot.slane %v4424, 2
        %v4426 = vmax.f32 %v4424, %v4425
        %v4427 = vrot.slane %v4426, 1
        %v4428 = vmax.f32 %v4426, %v4427
        %v4429 = vsel %vm3854, %v2864, -inf
        %v4430 = vrot.slane %v4429, 4
        %v4431 = vmax.f32 %v4429, %v4430
        %v4432 = vrot.slane %v4431, 2
        %v4433 = vmax.f32 %v4431, %v4432
        %v4434 = vrot.slane %v4433, 1
        %v4435 = vmax.f32 %v4433, %v4434
        %v4436 = vsel %vm3854, %v2866, -inf
        %v4437 = vrot.slane %v4436, 4
        %v4438 = vmax.f32 %v4436, %v4437
        %v4439 = vrot.slane %v4438, 2
        %v4440 = vmax.f32 %v4438, %v4439
        %v4441 = vrot.slane %v4440, 1
        %v4442 = vmax.f32 %v4440, %v4441
        %v4443 = vsel %vm3854, %v2874, -inf
        %v4444 = vrot.slane %v4443, 4
        %v4445 = vmax.f32 %v4443, %v4444
        %v4446 = vrot.slane %v4445, 2
        %v4447 = vmax.f32 %v4445, %v4446
        %v4448 = vrot.slane %v4447, 1
        %v4449 = vmax.f32 %v4447, %v4448
        %v4450 = vsel %vm3854, %v2882, -inf
        %v4451 = vrot.slane %v4450, 4
        %v4452 = vmax.f32 %v4450, %v4451
        %v4453 = vrot.slane %v4452, 2
        %v4454 = vmax.f32 %v4452, %v4453
        %v4455 = vrot.slane %v4454, 1
        %v4456 = vmax.f32 %v4454, %v4455
        %v4457 = vsel %vm3854, %v2881, -inf
        %v4458 = vrot.slane %v4457, 4
        %v4459 = vmax.f32 %v4457, %v4458
        %v4460 = vrot.slane %v4459, 2
        %v4461 = vmax.f32 %v4459, %v4460
        %v4462 = vrot.slane %v4461, 1
        %v4463 = vmax.f32 %v4461, %v4462
        %v4464 = vsel %vm3854, %v2883, -inf
        %v4465 = vrot.slane %v4464, 4
        %v4466 = vmax.f32 %v4464, %v4465
        %v4467 = vrot.slane %v4466, 2
        %v4468 = vmax.f32 %v4466, %v4467
        %v4469 = vrot.slane %v4468, 1
        %v4470 = vmax.f32 %v4468, %v4469
        %v4471 = vsel %vm3854, %v2891, -inf
        %v4472 = vrot.slane %v4471, 4
        %v4473 = vmax.f32 %v4471, %v4472
        %v4474 = vrot.slane %v4473, 2
        %v4475 = vmax.f32 %v4473, %v4474
        %v4476 = vrot.slane %v4475, 1
        %v4477 = vmax.f32 %v4475, %v4476
        %v4478 = vsel %vm3854, %v2899, -inf
        %v4479 = vrot.slane %v4478, 4
        %v4480 = vmax.f32 %v4478, %v4479
        %v4481 = vrot.slane %v4480, 2
        %v4482 = vmax.f32 %v4480, %v4481
        %v4483 = vrot.slane %v4482, 1
        %v4484 = vmax.f32 %v4482, %v4483
        %v4485 = vsel %vm3854, %v2898, -inf
        %v4486 = vrot.slane %v4485, 4
        %v4487 = vmax.f32 %v4485, %v4486
        %v4488 = vrot.slane %v4487, 2
        %v4489 = vmax.f32 %v4487, %v4488
        %v4490 = vrot.slane %v4489, 1
        %v4491 = vmax.f32 %v4489, %v4490
        %v4492 = vsel %vm3854, %v2900, -inf
        %v4493 = vrot.slane %v4492, 4
        %v4494 = vmax.f32 %v4492, %v4493
        %v4495 = vrot.slane %v4494, 2
        %v4496 = vmax.f32 %v4494, %v4495
        %v4497 = vrot.slane %v4496, 1
        %v4498 = vmax.f32 %v4496, %v4497
        %v4499 = vsel %vm3854, %v2908, -inf
        %v4500 = vrot.slane %v4499, 4
        %v4501 = vmax.f32 %v4499, %v4500
        %v4502 = vrot.slane %v4501, 2
        %v4503 = vmax.f32 %v4501, %v4502
        %v4504 = vrot.slane %v4503, 1
        %v4505 = vmax.f32 %v4503, %v4504
        %v4506 = vsel %vm3854, %v2916, -inf
        %v4507 = vrot.slane %v4506, 4
        %v4508 = vmax.f32 %v4506, %v4507
        %v4509 = vrot.slane %v4508, 2
        %v4510 = vmax.f32 %v4508, %v4509
        %v4511 = vrot.slane %v4510, 1
        %v4512 = vmax.f32 %v4510, %v4511
        %v4513 = vsel %vm3854, %v2915, -inf
        %v4514 = vrot.slane %v4513, 4
        %v4515 = vmax.f32 %v4513, %v4514
        %v4516 = vrot.slane %v4515, 2
        %v4517 = vmax.f32 %v4515, %v4516
        %v4518 = vrot.slane %v4517, 1
        %v4519 = vmax.f32 %v4517, %v4518
        %v4520 = vsel %vm3854, %v2917, -inf
        %v4521 = vrot.slane %v4520, 4
        %v4522 = vmax.f32 %v4520, %v4521
        %v4523 = vrot.slane %v4522, 2
        %v4524 = vmax.f32 %v4522, %v4523
        %v4525 = vrot.slane %v4524, 1
        %v4526 = vmax.f32 %v4524, %v4525
        %v4527 = vsel %vm3854, %v2925, -inf
        %v4528 = vrot.slane %v4527, 4
        %v4529 = vmax.f32 %v4527, %v4528
        %v4530 = vrot.slane %v4529, 2
        %v4531 = vmax.f32 %v4529, %v4530
        %v4532 = vrot.slane %v4531, 1
        %v4533 = vmax.f32 %v4531, %v4532
        %v4534 = vsel %vm3854, %v2933, -inf
        %v4535 = vrot.slane %v4534, 4
        %v4536 = vmax.f32 %v4534, %v4535
        %v4537 = vrot.slane %v4536, 2
        %v4538 = vmax.f32 %v4536, %v4537
        %v4539 = vrot.slane %v4538, 1
        %v4540 = vmax.f32 %v4538, %v4539
        %v4541 = vsel %vm3854, %v2932, -inf
        %v4542 = vrot.slane %v4541, 4
        %v4543 = vmax.f32 %v4541, %v4542
        %v4544 = vrot.slane %v4543, 2
        %v4545 = vmax.f32 %v4543, %v4544
        %v4546 = vrot.slane %v4545, 1
        %v4547 = vmax.f32 %v4545, %v4546
        %v4548 = vsel %vm3854, %v2934, -inf
        %v4549 = vrot.slane %v4548, 4
        %v4550 = vmax.f32 %v4548, %v4549
        %v4551 = vrot.slane %v4550, 2
        %v4552 = vmax.f32 %v4550, %v4551
        %v4553 = vrot.slane %v4552, 1
        %v4554 = vmax.f32 %v4552, %v4553
        %v4555 = vsel %vm3854, %v2942, -inf
        %v4556 = vrot.slane %v4555, 4
        %v4557 = vmax.f32 %v4555, %v4556
        %v4558 = vrot.slane %v4557, 2
        %v4559 = vmax.f32 %v4557, %v4558
        %v4560 = vrot.slane %v4559, 1
        %v4561 = vmax.f32 %v4559, %v4560
        %v4562 = vsel %vm3854, %v2950, -inf
        %v4563 = vrot.slane %v4562, 4
        %v4564 = vmax.f32 %v4562, %v4563
        %v4565 = vrot.slane %v4564, 2
        %v4566 = vmax.f32 %v4564, %v4565
        %v4567 = vrot.slane %v4566, 1
        %v4568 = vmax.f32 %v4566, %v4567
        %v4569 = vsel %vm3854, %v2949, -inf
        %v4570 = vrot.slane %v4569, 4
        %v4571 = vmax.f32 %v4569, %v4570
        %v4572 = vrot.slane %v4571, 2
        %v4573 = vmax.f32 %v4571, %v4572
        %v4574 = vrot.slane %v4573, 1
        %v4575 = vmax.f32 %v4573, %v4574
        %v4576 = vsel %vm3854, %v2951, -inf
        %v4577 = vrot.slane %v4576, 4
        %v4578 = vmax.f32 %v4576, %v4577
        %v4579 = vrot.slane %v4578, 2
        %v4580 = vmax.f32 %v4578, %v4579
        %v4581 = vrot.slane %v4580, 1
        %v4582 = vmax.f32 %v4580, %v4581
        %v4583 = vsel %vm3854, %v2959, -inf
        %v4584 = vrot.slane %v4583, 4
        %v4585 = vmax.f32 %v4583, %v4584
        %v4586 = vrot.slane %v4585, 2
        %v4587 = vmax.f32 %v4585, %v4586
        %v4588 = vrot.slane %v4587, 1
        %v4589 = vmax.f32 %v4587, %v4588
        %v4590 = vsel %vm3854, %v2967, -inf
        %v4591 = vrot.slane %v4590, 4
        %v4592 = vmax.f32 %v4590, %v4591
        %v4593 = vrot.slane %v4592, 2
        %v4594 = vmax.f32 %v4592, %v4593
        %v4595 = vrot.slane %v4594, 1
        %v4596 = vmax.f32 %v4594, %v4595
        %v4597 = vsel %vm3854, %v2966, -inf
        %v4598 = vrot.slane %v4597, 4
        %v4599 = vmax.f32 %v4597, %v4598
        %v4600 = vrot.slane %v4599, 2
        %v4601 = vmax.f32 %v4599, %v4600
        %v4602 = vrot.slane %v4601, 1
        %v4603 = vmax.f32 %v4601, %v4602
        %v4604 = vsel %vm3854, %v2968, -inf
        %v4605 = vrot.slane %v4604, 4
        %v4606 = vmax.f32 %v4604, %v4605
        %v4607 = vrot.slane %v4606, 2
        %v4608 = vmax.f32 %v4606, %v4607
        %v4609 = vrot.slane %v4608, 1
        %v4610 = vmax.f32 %v4608, %v4609
        %v4611 = vsel %vm3854, %v2976, -inf
        %v4612 = vrot.slane %v4611, 4
        %v4613 = vmax.f32 %v4611, %v4612
        %v4614 = vrot.slane %v4613, 2
        %v4615 = vmax.f32 %v4613, %v4614
        %v4616 = vrot.slane %v4615, 1
        %v4617 = vmax.f32 %v4615, %v4616
        %v4618 = vsel %vm3854, %v2984, -inf
        %v4619 = vrot.slane %v4618, 4
        %v4620 = vmax.f32 %v4618, %v4619
        %v4621 = vrot.slane %v4620, 2
        %v4622 = vmax.f32 %v4620, %v4621
        %v4623 = vrot.slane %v4622, 1
        %v4624 = vmax.f32 %v4622, %v4623
        %v4625 = vsel %vm3854, %v2983, -inf
        %v4626 = vrot.slane %v4625, 4
        %v4627 = vmax.f32 %v4625, %v4626
        %v4628 = vrot.slane %v4627, 2
        %v4629 = vmax.f32 %v4627, %v4628
        %v4630 = vrot.slane %v4629, 1
        %v4631 = vmax.f32 %v4629, %v4630
        %v4632 = vsel %vm3854, %v2985, -inf
        %v4633 = vrot.slane %v4632, 4
        %v4634 = vmax.f32 %v4632, %v4633
        %v4635 = vrot.slane %v4634, 2
        %v4636 = vmax.f32 %v4634, %v4635
        %v4637 = vrot.slane %v4636, 1
        %v4638 = vmax.f32 %v4636, %v4637
        %v4639 = vsel %vm3854, %v2993, -inf
        %v4640 = vrot.slane %v4639, 4
        %v4641 = vmax.f32 %v4639, %v4640
        %v4642 = vrot.slane %v4641, 2
        %v4643 = vmax.f32 %v4641, %v4642
        %v4644 = vrot.slane %v4643, 1
        %v4645 = vmax.f32 %v4643, %v4644
        %v4646 = vsel %vm3854, %v3001, -inf
        %v4647 = vrot.slane %v4646, 4
        %v4648 = vmax.f32 %v4646, %v4647
        %v4649 = vrot.slane %v4648, 2
        %v4650 = vmax.f32 %v4648, %v4649
        %v4651 = vrot.slane %v4650, 1
        %v4652 = vmax.f32 %v4650, %v4651
        %v4653 = vsel %vm3854, %v3000, -inf
        %v4654 = vrot.slane %v4653, 4
        %v4655 = vmax.f32 %v4653, %v4654
        %v4656 = vrot.slane %v4655, 2
        %v4657 = vmax.f32 %v4655, %v4656
        %v4658 = vrot.slane %v4657, 1
        %v4659 = vmax.f32 %v4657, %v4658
        %v4660 = vsel %vm3854, %v3002, -inf
        %v4661 = vrot.slane %v4660, 4
        %v4662 = vmax.f32 %v4660, %v4661
        %v4663 = vrot.slane %v4662, 2
        %v4664 = vmax.f32 %v4662, %v4663
        %v4665 = vrot.slane %v4664, 1
        %v4666 = vmax.f32 %v4664, %v4665
        %v4667 = vsel %vm3854, %v3010, -inf
        %v4668 = vrot.slane %v4667, 4
        %v4669 = vmax.f32 %v4667, %v4668
        %v4670 = vrot.slane %v4669, 2
        %v4671 = vmax.f32 %v4669, %v4670
        %v4672 = vrot.slane %v4671, 1
        %v4673 = vmax.f32 %v4671, %v4672
        %v4674 = vsel %vm3854, %v3018, -inf
        %v4675 = vrot.slane %v4674, 4
        %v4676 = vmax.f32 %v4674, %v4675
        %v4677 = vrot.slane %v4676, 2
        %v4678 = vmax.f32 %v4676, %v4677
        %v4679 = vrot.slane %v4678, 1
        %v4680 = vmax.f32 %v4678, %v4679
        %v4681 = vsel %vm3854, %v3017, -inf
        %v4682 = vrot.slane %v4681, 4
        %v4683 = vmax.f32 %v4681, %v4682
        %v4684 = vrot.slane %v4683, 2
        %v4685 = vmax.f32 %v4683, %v4684
        %v4686 = vrot.slane %v4685, 1
        %v4687 = vmax.f32 %v4685, %v4686
        %v4688 = vsel %vm3854, %v3019, -inf
        %v4689 = vrot.slane %v4688, 4
        %v4690 = vmax.f32 %v4688, %v4689
        %v4691 = vrot.slane %v4690, 2
        %v4692 = vmax.f32 %v4690, %v4691
        %v4693 = vrot.slane %v4692, 1
        %v4694 = vmax.f32 %v4692, %v4693
        %v4695 = vsel %vm3854, %v3027, -inf
        %v4696 = vrot.slane %v4695, 4
        %v4697 = vmax.f32 %v4695, %v4696
        %v4698 = vrot.slane %v4697, 2
        %v4699 = vmax.f32 %v4697, %v4698
        %v4700 = vrot.slane %v4699, 1
        %v4701 = vmax.f32 %v4699, %v4700
        %v4702 = vsel %vm3854, %v3035, -inf
        %v4703 = vrot.slane %v4702, 4
        %v4704 = vmax.f32 %v4702, %v4703
        %v4705 = vrot.slane %v4704, 2
        %v4706 = vmax.f32 %v4704, %v4705
        %v4707 = vrot.slane %v4706, 1
        %v4708 = vmax.f32 %v4706, %v4707
        %v4709 = vsel %vm3854, %v3034, -inf
        %v4710 = vrot.slane %v4709, 4
        %v4711 = vmax.f32 %v4709, %v4710
        %v4712 = vrot.slane %v4711, 2
        %v4713 = vmax.f32 %v4711, %v4712
        %v4714 = vrot.slane %v4713, 1
        %v4715 = vmax.f32 %v4713, %v4714
        %v4716 = vsel %vm3854, %v3036, -inf
        %v4717 = vrot.slane %v4716, 4
        %v4718 = vmax.f32 %v4716, %v4717
        %v4719 = vrot.slane %v4718, 2
        %v4720 = vmax.f32 %v4718, %v4719
        %v4721 = vrot.slane %v4720, 1
        %v4722 = vmax.f32 %v4720, %v4721
        %v4723 = vsel %vm3854, %v3044, -inf
        %v4724 = vrot.slane %v4723, 4
        %v4725 = vmax.f32 %v4723, %v4724
        %v4726 = vrot.slane %v4725, 2
        %v4727 = vmax.f32 %v4725, %v4726
        %v4728 = vrot.slane %v4727, 1
        %v4729 = vmax.f32 %v4727, %v4728
        %v4730 = vsel %vm3854, %v3052, -inf
        %v4731 = vrot.slane %v4730, 4
        %v4732 = vmax.f32 %v4730, %v4731
        %v4733 = vrot.slane %v4732, 2
        %v4734 = vmax.f32 %v4732, %v4733
        %v4735 = vrot.slane %v4734, 1
        %v4736 = vmax.f32 %v4734, %v4735
        %v4737 = vsel %vm3854, %v3051, -inf
        %v4738 = vrot.slane %v4737, 4
        %v4739 = vmax.f32 %v4737, %v4738
        %v4740 = vrot.slane %v4739, 2
        %v4741 = vmax.f32 %v4739, %v4740
        %v4742 = vrot.slane %v4741, 1
        %v4743 = vmax.f32 %v4741, %v4742
        %v4744 = vsel %vm3854, %v3053, -inf
        %v4745 = vrot.slane %v4744, 4
        %v4746 = vmax.f32 %v4744, %v4745
        %v4747 = vrot.slane %v4746, 2
        %v4748 = vmax.f32 %v4746, %v4747
        %v4749 = vrot.slane %v4748, 1
        %v4750 = vmax.f32 %v4748, %v4749
        %v4751 = vsel %vm3854, %v3061, -inf
        %v4752 = vrot.slane %v4751, 4
        %v4753 = vmax.f32 %v4751, %v4752
        %v4754 = vrot.slane %v4753, 2
        %v4755 = vmax.f32 %v4753, %v4754
        %v4756 = vrot.slane %v4755, 1
        %v4757 = vmax.f32 %v4755, %v4756
        %v4758 = vsel %vm3854, %v3069, -inf
        %v4759 = vrot.slane %v4758, 4
        %v4760 = vmax.f32 %v4758, %v4759
        %v4761 = vrot.slane %v4760, 2
        %v4762 = vmax.f32 %v4760, %v4761
        %v4763 = vrot.slane %v4762, 1
        %v4764 = vmax.f32 %v4762, %v4763
        %v4765 = vsel %vm3854, %v3068, -inf
        %v4766 = vrot.slane %v4765, 4
        %v4767 = vmax.f32 %v4765, %v4766
        %v4768 = vrot.slane %v4767, 2
        %v4769 = vmax.f32 %v4767, %v4768
        %v4770 = vrot.slane %v4769, 1
        %v4771 = vmax.f32 %v4769, %v4770
        %v4772 = vsel %vm3854, %v3070, -inf
        %v4773 = vrot.slane %v4772, 4
        %v4774 = vmax.f32 %v4772, %v4773
        %v4775 = vrot.slane %v4774, 2
        %v4776 = vmax.f32 %v4774, %v4775
        %v4777 = vrot.slane %v4776, 1
        %v4778 = vmax.f32 %v4776, %v4777
        %v4779 = vsel %vm3854, %v3078, -inf
        %v4780 = vrot.slane %v4779, 4
        %v4781 = vmax.f32 %v4779, %v4780
        %v4782 = vrot.slane %v4781, 2
        %v4783 = vmax.f32 %v4781, %v4782
        %v4784 = vrot.slane %v4783, 1
        %v4785 = vmax.f32 %v4783, %v4784
        %v4786 = vsel %vm3854, %v3086, -inf
        %v4787 = vrot.slane %v4786, 4
        %v4788 = vmax.f32 %v4786, %v4787
        %v4789 = vrot.slane %v4788, 2
        %v4790 = vmax.f32 %v4788, %v4789
        %v4791 = vrot.slane %v4790, 1
        %v4792 = vmax.f32 %v4790, %v4791
        %v4793 = vsel %vm3854, %v3085, -inf
        %v4794 = vrot.slane %v4793, 4
        %v4795 = vmax.f32 %v4793, %v4794
        %v4796 = vrot.slane %v4795, 2
        %v4797 = vmax.f32 %v4795, %v4796
        %v4798 = vrot.slane %v4797, 1
        %v4799 = vmax.f32 %v4797, %v4798
        %v4800 = vsel %vm3854, %v3087, -inf
        %v4801 = vrot.slane %v4800, 4
        %v4802 = vmax.f32 %v4800, %v4801
        %v4803 = vrot.slane %v4802, 2
        %v4804 = vmax.f32 %v4802, %v4803
        %v4805 = vrot.slane %v4804, 1
        %v4806 = vmax.f32 %v4804, %v4805
        %v4807 = vsel %vm3854, %v3095, -inf
        %v4808 = vrot.slane %v4807, 4
        %v4809 = vmax.f32 %v4807, %v4808
        %v4810 = vrot.slane %v4809, 2
        %v4811 = vmax.f32 %v4809, %v4810
        %v4812 = vrot.slane %v4811, 1
        %v4813 = vmax.f32 %v4811, %v4812
        %v4814 = vsel %vm3854, %v3103, -inf
        %v4815 = vrot.slane %v4814, 4
        %v4816 = vmax.f32 %v4814, %v4815
        %v4817 = vrot.slane %v4816, 2
        %v4818 = vmax.f32 %v4816, %v4817
        %v4819 = vrot.slane %v4818, 1
        %v4820 = vmax.f32 %v4818, %v4819
        %v4821 = vsel %vm3854, %v3102, -inf
        %v4822 = vrot.slane %v4821, 4
        %v4823 = vmax.f32 %v4821, %v4822
        %v4824 = vrot.slane %v4823, 2
        %v4825 = vmax.f32 %v4823, %v4824
        %v4826 = vrot.slane %v4825, 1
        %v4827 = vmax.f32 %v4825, %v4826
        %v4828 = vsel %vm3854, %v3104, -inf
        %v4829 = vrot.slane %v4828, 4
        %v4830 = vmax.f32 %v4828, %v4829
        %v4831 = vrot.slane %v4830, 2
        %v4832 = vmax.f32 %v4830, %v4831
        %v4833 = vrot.slane %v4832, 1
        %v4834 = vmax.f32 %v4832, %v4833
        %v4835 = vsel %vm3854, %v3112, -inf
        %v4836 = vrot.slane %v4835, 4
        %v4837 = vmax.f32 %v4835, %v4836
        %v4838 = vrot.slane %v4837, 2
        %v4839 = vmax.f32 %v4837, %v4838
        %v4840 = vrot.slane %v4839, 1
        %v4841 = vmax.f32 %v4839, %v4840
        %v4842 = vsel %vm3854, %v3120, -inf
        %v4843 = vrot.slane %v4842, 4
        %v4844 = vmax.f32 %v4842, %v4843
        %v4845 = vrot.slane %v4844, 2
        %v4846 = vmax.f32 %v4844, %v4845
        %v4847 = vrot.slane %v4846, 1
        %v4848 = vmax.f32 %v4846, %v4847
        %v4849 = vsel %vm3854, %v3119, -inf
        %v4850 = vrot.slane %v4849, 4
        %v4851 = vmax.f32 %v4849, %v4850
        %v4852 = vrot.slane %v4851, 2
        %v4853 = vmax.f32 %v4851, %v4852
        %v4854 = vrot.slane %v4853, 1
        %v4855 = vmax.f32 %v4853, %v4854
        %v4856 = vsel %vm3854, %v3121, -inf
        %v4857 = vrot.slane %v4856, 4
        %v4858 = vmax.f32 %v4856, %v4857
        %v4859 = vrot.slane %v4858, 2
        %v4860 = vmax.f32 %v4858, %v4859
        %v4861 = vrot.slane %v4860, 1
        %v4862 = vmax.f32 %v4860, %v4861
        %v4863 = vsel %vm3854, %v3129, -inf
        %v4864 = vrot.slane %v4863, 4
        %v4865 = vmax.f32 %v4863, %v4864
        %v4866 = vrot.slane %v4865, 2
        %v4867 = vmax.f32 %v4865, %v4866
        %v4868 = vrot.slane %v4867, 1
        %v4869 = vmax.f32 %v4867, %v4868
        %v4870 = vsel %vm3854, %v3137, -inf
        %v4871 = vrot.slane %v4870, 4
        %v4872 = vmax.f32 %v4870, %v4871
        %v4873 = vrot.slane %v4872, 2
        %v4874 = vmax.f32 %v4872, %v4873
        %v4875 = vrot.slane %v4874, 1
        %v4876 = vmax.f32 %v4874, %v4875
        %v4877 = vsel %vm3854, %v3136, -inf
        %v4878 = vrot.slane %v4877, 4
        %v4879 = vmax.f32 %v4877, %v4878
        %v4880 = vrot.slane %v4879, 2
        %v4881 = vmax.f32 %v4879, %v4880
        %v4882 = vrot.slane %v4881, 1
        %v4883 = vmax.f32 %v4881, %v4882
        %v4884 = vsel %vm3854, %v3138, -inf
        %v4885 = vrot.slane %v4884, 4
        %v4886 = vmax.f32 %v4884, %v4885
        %v4887 = vrot.slane %v4886, 2
        %v4888 = vmax.f32 %v4886, %v4887
        %v4889 = vrot.slane %v4888, 1
        %v4890 = vmax.f32 %v4888, %v4889
        %v4891 = vsel %vm3854, %v3146, -inf
        %v4892 = vrot.slane %v4891, 4
        %v4893 = vmax.f32 %v4891, %v4892
        %v4894 = vrot.slane %v4893, 2
        %v4895 = vmax.f32 %v4893, %v4894
        %v4896 = vrot.slane %v4895, 1
        %v4897 = vmax.f32 %v4895, %v4896
        %v4898 = vsel %vm3854, %v3154, -inf
        %v4899 = vrot.slane %v4898, 4
        %v4900 = vmax.f32 %v4898, %v4899
        %v4901 = vrot.slane %v4900, 2
        %v4902 = vmax.f32 %v4900, %v4901
        %v4903 = vrot.slane %v4902, 1
        %v4904 = vmax.f32 %v4902, %v4903
        %v4905 = vsel %vm3854, %v3153, -inf
        %v4906 = vrot.slane %v4905, 4
        %v4907 = vmax.f32 %v4905, %v4906
        %v4908 = vrot.slane %v4907, 2
        %v4909 = vmax.f32 %v4907, %v4908
        %v4910 = vrot.slane %v4909, 1
        %v4911 = vmax.f32 %v4909, %v4910
        %v4912 = vsel %vm3854, %v3155, -inf
        %v4913 = vrot.slane %v4912, 4
        %v4914 = vmax.f32 %v4912, %v4913
        %v4915 = vrot.slane %v4914, 2
        %v4916 = vmax.f32 %v4914, %v4915
        %v4917 = vrot.slane %v4916, 1
        %v4918 = vmax.f32 %v4916, %v4917
        %v4919 = vsel %vm3854, %v3163, -inf
        %v4920 = vrot.slane %v4919, 4
        %v4921 = vmax.f32 %v4919, %v4920
        %v4922 = vrot.slane %v4921, 2
        %v4923 = vmax.f32 %v4921, %v4922
        %v4924 = vrot.slane %v4923, 1
        %v4925 = vmax.f32 %v4923, %v4924
        %v4926 = vsel %vm3854, %v3171, -inf
        %v4927 = vrot.slane %v4926, 4
        %v4928 = vmax.f32 %v4926, %v4927
        %v4929 = vrot.slane %v4928, 2
        %v4930 = vmax.f32 %v4928, %v4929
        %v4931 = vrot.slane %v4930, 1
        %v4932 = vmax.f32 %v4930, %v4931
        %v4933 = vsel %vm3854, %v3170, -inf
        %v4934 = vrot.slane %v4933, 4
        %v4935 = vmax.f32 %v4933, %v4934
        %v4936 = vrot.slane %v4935, 2
        %v4937 = vmax.f32 %v4935, %v4936
        %v4938 = vrot.slane %v4937, 1
        %v4939 = vmax.f32 %v4937, %v4938
        %v4940 = vsel %vm3854, %v3172, -inf
        %v4941 = vrot.slane %v4940, 4
        %v4942 = vmax.f32 %v4940, %v4941
        %v4943 = vrot.slane %v4942, 2
        %v4944 = vmax.f32 %v4942, %v4943
        %v4945 = vrot.slane %v4944, 1
        %v4946 = vmax.f32 %v4944, %v4945
        %v4947 = vsel %vm3854, %v3180, -inf
        %v4948 = vrot.slane %v4947, 4
        %v4949 = vmax.f32 %v4947, %v4948
        %v4950 = vrot.slane %v4949, 2
        %v4951 = vmax.f32 %v4949, %v4950
        %v4952 = vrot.slane %v4951, 1
        %v4953 = vmax.f32 %v4951, %v4952
        %v4954 = vsel %vm3854, %v3188, -inf
        %v4955 = vrot.slane %v4954, 4
        %v4956 = vmax.f32 %v4954, %v4955
        %v4957 = vrot.slane %v4956, 2
        %v4958 = vmax.f32 %v4956, %v4957
        %v4959 = vrot.slane %v4958, 1
        %v4960 = vmax.f32 %v4958, %v4959
        %v4961 = vsel %vm3854, %v3187, -inf
        %v4962 = vrot.slane %v4961, 4
        %v4963 = vmax.f32 %v4961, %v4962
        %v4964 = vrot.slane %v4963, 2
        %v4965 = vmax.f32 %v4963, %v4964
        %v4966 = vrot.slane %v4965, 1
        %v4967 = vmax.f32 %v4965, %v4966
        %v4968 = vsel %vm3854, %v3189, -inf
        %v4969 = vrot.slane %v4968, 4
        %v4970 = vmax.f32 %v4968, %v4969
        %v4971 = vrot.slane %v4970, 2
        %v4972 = vmax.f32 %v4970, %v4971
        %v4973 = vrot.slane %v4972, 1
        %v4974 = vmax.f32 %v4972, %v4973
        %v4975 = vsel %vm3854, %v3197, -inf
        %v4976 = vrot.slane %v4975, 4
        %v4977 = vmax.f32 %v4975, %v4976
        %v4978 = vrot.slane %v4977, 2
        %v4979 = vmax.f32 %v4977, %v4978
        %v4980 = vrot.slane %v4979, 1
        %v4981 = vmax.f32 %v4979, %v4980
        %v4982 = vsel %vm3854, %v3205, -inf
        %v4983 = vrot.slane %v4982, 4
        %v4984 = vmax.f32 %v4982, %v4983
        %v4985 = vrot.slane %v4984, 2
        %v4986 = vmax.f32 %v4984, %v4985
        %v4987 = vrot.slane %v4986, 1
        %v4988 = vmax.f32 %v4986, %v4987
        %v4989 = vsel %vm3854, %v3204, -inf
        %v4990 = vrot.slane %v4989, 4
        %v4991 = vmax.f32 %v4989, %v4990
        %v4992 = vrot.slane %v4991, 2
        %v4993 = vmax.f32 %v4991, %v4992
        %v4994 = vrot.slane %v4993, 1
        %v4995 = vmax.f32 %v4993, %v4994
        %v4996 = vsel %vm3854, %v3206, -inf
        %v4997 = vrot.slane %v4996, 4
        %v4998 = vmax.f32 %v4996, %v4997
        %v4999 = vrot.slane %v4998, 2
        %v5000 = vmax.f32 %v4998, %v4999
        %v5001 = vrot.slane %v5000, 1
        %v5002 = vmax.f32 %v5000, %v5001
        %v5003 = vsel %vm3854, %v3214, -inf
        %v5004 = vrot.slane %v5003, 4
        %v5005 = vmax.f32 %v5003, %v5004
        %v5006 = vrot.slane %v5005, 2
        %v5007 = vmax.f32 %v5005, %v5006
        %v5008 = vrot.slane %v5007, 1
        %v5009 = vmax.f32 %v5007, %v5008
        %v5010 = vsel %vm3854, %v3222, -inf
        %v5011 = vrot.slane %v5010, 4
        %v5012 = vmax.f32 %v5010, %v5011
        %v5013 = vrot.slane %v5012, 2
        %v5014 = vmax.f32 %v5012, %v5013
        %v5015 = vrot.slane %v5014, 1
        %v5016 = vmax.f32 %v5014, %v5015
        %v5017 = vsel %vm3854, %v3221, -inf
        %v5018 = vrot.slane %v5017, 4
        %v5019 = vmax.f32 %v5017, %v5018
        %v5020 = vrot.slane %v5019, 2
        %v5021 = vmax.f32 %v5019, %v5020
        %v5022 = vrot.slane %v5021, 1
        %v5023 = vmax.f32 %v5021, %v5022
        %v5024 = vsel %vm3854, %v3223, -inf
        %v5025 = vrot.slane %v5024, 4
        %v5026 = vmax.f32 %v5024, %v5025
        %v5027 = vrot.slane %v5026, 2
        %v5028 = vmax.f32 %v5026, %v5027
        %v5029 = vrot.slane %v5028, 1
        %v5030 = vmax.f32 %v5028, %v5029
        %v5031 = vsel %vm3854, %v3231, -inf
        %v5032 = vrot.slane %v5031, 4
        %v5033 = vmax.f32 %v5031, %v5032
        %v5034 = vrot.slane %v5033, 2
        %v5035 = vmax.f32 %v5033, %v5034
        %v5036 = vrot.slane %v5035, 1
        %v5037 = vmax.f32 %v5035, %v5036
        %v5038 = vsel %vm3854, %v3239, -inf
        %v5039 = vrot.slane %v5038, 4
        %v5040 = vmax.f32 %v5038, %v5039
        %v5041 = vrot.slane %v5040, 2
        %v5042 = vmax.f32 %v5040, %v5041
        %v5043 = vrot.slane %v5042, 1
        %v5044 = vmax.f32 %v5042, %v5043
        %v5045 = vsel %vm3854, %v3238, -inf
        %v5046 = vrot.slane %v5045, 4
        %v5047 = vmax.f32 %v5045, %v5046
        %v5048 = vrot.slane %v5047, 2
        %v5049 = vmax.f32 %v5047, %v5048
        %v5050 = vrot.slane %v5049, 1
        %v5051 = vmax.f32 %v5049, %v5050
        %v5052 = vsel %vm3854, %v3240, -inf
        %v5053 = vrot.slane %v5052, 4
        %v5054 = vmax.f32 %v5052, %v5053
        %v5055 = vrot.slane %v5054, 2
        %v5056 = vmax.f32 %v5054, %v5055
        %v5057 = vrot.slane %v5056, 1
        %v5058 = vmax.f32 %v5056, %v5057
        %v5059 = vsel %vm3854, %v3248, -inf
        %v5060 = vrot.slane %v5059, 4
        %v5061 = vmax.f32 %v5059, %v5060
        %v5062 = vrot.slane %v5061, 2
        %v5063 = vmax.f32 %v5061, %v5062
        %v5064 = vrot.slane %v5063, 1
        %v5065 = vmax.f32 %v5063, %v5064
        %v5066 = vsel %vm3854, %v3256, -inf
        %v5067 = vrot.slane %v5066, 4
        %v5068 = vmax.f32 %v5066, %v5067
        %v5069 = vrot.slane %v5068, 2
        %v5070 = vmax.f32 %v5068, %v5069
        %v5071 = vrot.slane %v5070, 1
        %v5072 = vmax.f32 %v5070, %v5071
        %v5073 = vsel %vm3854, %v3255, -inf
        %v5074 = vrot.slane %v5073, 4
        %v5075 = vmax.f32 %v5073, %v5074
        %v5076 = vrot.slane %v5075, 2
        %v5077 = vmax.f32 %v5075, %v5076
        %v5078 = vrot.slane %v5077, 1
        %v5079 = vmax.f32 %v5077, %v5078
        %v5080 = vsel %vm3854, %v3257, -inf
        %v5081 = vrot.slane %v5080, 4
        %v5082 = vmax.f32 %v5080, %v5081
        %v5083 = vrot.slane %v5082, 2
        %v5084 = vmax.f32 %v5082, %v5083
        %v5085 = vrot.slane %v5084, 1
        %v5086 = vmax.f32 %v5084, %v5085
        %v5087 = vsel %vm3854, %v3265, -inf
        %v5088 = vrot.slane %v5087, 4
        %v5089 = vmax.f32 %v5087, %v5088
        %v5090 = vrot.slane %v5089, 2
        %v5091 = vmax.f32 %v5089, %v5090
        %v5092 = vrot.slane %v5091, 1
        %v5093 = vmax.f32 %v5091, %v5092
        %v5094 = vsel %vm3854, %v3273, -inf
        %v5095 = vrot.slane %v5094, 4
        %v5096 = vmax.f32 %v5094, %v5095
        %v5097 = vrot.slane %v5096, 2
        %v5098 = vmax.f32 %v5096, %v5097
        %v5099 = vrot.slane %v5098, 1
        %v5100 = vmax.f32 %v5098, %v5099
        %v5101 = vsel %vm3854, %v3272, -inf
        %v5102 = vrot.slane %v5101, 4
        %v5103 = vmax.f32 %v5101, %v5102
        %v5104 = vrot.slane %v5103, 2
        %v5105 = vmax.f32 %v5103, %v5104
        %v5106 = vrot.slane %v5105, 1
        %v5107 = vmax.f32 %v5105, %v5106
        %v5108 = vsel %vm3854, %v3274, -inf
        %v5109 = vrot.slane %v5108, 4
        %v5110 = vmax.f32 %v5108, %v5109
        %v5111 = vrot.slane %v5110, 2
        %v5112 = vmax.f32 %v5110, %v5111
        %v5113 = vrot.slane %v5112, 1
        %v5114 = vmax.f32 %v5112, %v5113
        %v5115 = vsel %vm3854, %v3282, -inf
        %v5116 = vrot.slane %v5115, 4
        %v5117 = vmax.f32 %v5115, %v5116
        %v5118 = vrot.slane %v5117, 2
        %v5119 = vmax.f32 %v5117, %v5118
        %v5120 = vrot.slane %v5119, 1
        %v5121 = vmax.f32 %v5119, %v5120
        %v5122 = vsel %vm3854, %v3290, -inf
        %v5123 = vrot.slane %v5122, 4
        %v5124 = vmax.f32 %v5122, %v5123
        %v5125 = vrot.slane %v5124, 2
        %v5126 = vmax.f32 %v5124, %v5125
        %v5127 = vrot.slane %v5126, 1
        %v5128 = vmax.f32 %v5126, %v5127
        %v5129 = vsel %vm3854, %v3289, -inf
        %v5130 = vrot.slane %v5129, 4
        %v5131 = vmax.f32 %v5129, %v5130
        %v5132 = vrot.slane %v5131, 2
        %v5133 = vmax.f32 %v5131, %v5132
        %v5134 = vrot.slane %v5133, 1
        %v5135 = vmax.f32 %v5133, %v5134
        %v5136 = vsel %vm3854, %v3291, -inf
        %v5137 = vrot.slane %v5136, 4
        %v5138 = vmax.f32 %v5136, %v5137
        %v5139 = vrot.slane %v5138, 2
        %v5140 = vmax.f32 %v5138, %v5139
        %v5141 = vrot.slane %v5140, 1
        %v5142 = vmax.f32 %v5140, %v5141
        %v5143 = vsel %vm3854, %v3299, -inf
        %v5144 = vrot.slane %v5143, 4
        %v5145 = vmax.f32 %v5143, %v5144
        %v5146 = vrot.slane %v5145, 2
        %v5147 = vmax.f32 %v5145, %v5146
        %v5148 = vrot.slane %v5147, 1
        %v5149 = vmax.f32 %v5147, %v5148
        %v5150 = vsel %vm3854, %v3307, -inf
        %v5151 = vrot.slane %v5150, 4
        %v5152 = vmax.f32 %v5150, %v5151
        %v5153 = vrot.slane %v5152, 2
        %v5154 = vmax.f32 %v5152, %v5153
        %v5155 = vrot.slane %v5154, 1
        %v5156 = vmax.f32 %v5154, %v5155
        %v5157 = vsel %vm3854, %v3306, -inf
        %v5158 = vrot.slane %v5157, 4
        %v5159 = vmax.f32 %v5157, %v5158
        %v5160 = vrot.slane %v5159, 2
        %v5161 = vmax.f32 %v5159, %v5160
        %v5162 = vrot.slane %v5161, 1
        %v5163 = vmax.f32 %v5161, %v5162
        %v5164 = vsel %vm3854, %v3308, -inf
        %v5165 = vrot.slane %v5164, 4
        %v5166 = vmax.f32 %v5164, %v5165
        %v5167 = vrot.slane %v5166, 2
        %v5168 = vmax.f32 %v5166, %v5167
        %v5169 = vrot.slane %v5168, 1
        %v5170 = vmax.f32 %v5168, %v5169
        %v5171 = vsel %vm3854, %v3316, -inf
        %v5172 = vrot.slane %v5171, 4
        %v5173 = vmax.f32 %v5171, %v5172
        %v5174 = vrot.slane %v5173, 2
        %v5175 = vmax.f32 %v5173, %v5174
        %v5176 = vrot.slane %v5175, 1
        %v5177 = vmax.f32 %v5175, %v5176
        %v5178 = vsel %vm3854, %v3324, -inf
        %v5179 = vrot.slane %v5178, 4
        %v5180 = vmax.f32 %v5178, %v5179
        %v5181 = vrot.slane %v5180, 2
        %v5182 = vmax.f32 %v5180, %v5181
        %v5183 = vrot.slane %v5182, 1
        %v5184 = vmax.f32 %v5182, %v5183
        %v5185 = vsel %vm3854, %v3323, -inf
        %v5186 = vrot.slane %v5185, 4
        %v5187 = vmax.f32 %v5185, %v5186
        %v5188 = vrot.slane %v5187, 2
        %v5189 = vmax.f32 %v5187, %v5188
        %v5190 = vrot.slane %v5189, 1
        %v5191 = vmax.f32 %v5189, %v5190
        %v5192 = vsel %vm3854, %v3325, -inf
        %v5193 = vrot.slane %v5192, 4
        %v5194 = vmax.f32 %v5192, %v5193
        %v5195 = vrot.slane %v5194, 2
        %v5196 = vmax.f32 %v5194, %v5195
        %v5197 = vrot.slane %v5196, 1
        %v5198 = vmax.f32 %v5196, %v5197
        %v5199 = vsel %vm3854, %v3333, -inf
        %v5200 = vrot.slane %v5199, 4
        %v5201 = vmax.f32 %v5199, %v5200
        %v5202 = vrot.slane %v5201, 2
        %v5203 = vmax.f32 %v5201, %v5202
        %v5204 = vrot.slane %v5203, 1
        %v5205 = vmax.f32 %v5203, %v5204
        %v5206 = vsel %vm3854, %v3341, -inf
        %v5207 = vrot.slane %v5206, 4
        %v5208 = vmax.f32 %v5206, %v5207
        %v5209 = vrot.slane %v5208, 2
        %v5210 = vmax.f32 %v5208, %v5209
        %v5211 = vrot.slane %v5210, 1
        %v5212 = vmax.f32 %v5210, %v5211
        %v5213 = vsel %vm3854, %v3340, -inf
        %v5214 = vrot.slane %v5213, 4
        %v5215 = vmax.f32 %v5213, %v5214
        %v5216 = vrot.slane %v5215, 2
        %v5217 = vmax.f32 %v5215, %v5216
        %v5218 = vrot.slane %v5217, 1
        %v5219 = vmax.f32 %v5217, %v5218
        %v5220 = vsel %vm3854, %v3342, -inf
        %v5221 = vrot.slane %v5220, 4
        %v5222 = vmax.f32 %v5220, %v5221
        %v5223 = vrot.slane %v5222, 2
        %v5224 = vmax.f32 %v5222, %v5223
        %v5225 = vrot.slane %v5224, 1
        %v5226 = vmax.f32 %v5224, %v5225
        %v5227 = vsel %vm3854, %v3350, -inf
        %v5228 = vrot.slane %v5227, 4
        %v5229 = vmax.f32 %v5227, %v5228
        %v5230 = vrot.slane %v5229, 2
        %v5231 = vmax.f32 %v5229, %v5230
        %v5232 = vrot.slane %v5231, 1
        %v5233 = vmax.f32 %v5231, %v5232
        %v5234 = vsel %vm3854, %v3358, -inf
        %v5235 = vrot.slane %v5234, 4
        %v5236 = vmax.f32 %v5234, %v5235
        %v5237 = vrot.slane %v5236, 2
        %v5238 = vmax.f32 %v5236, %v5237
        %v5239 = vrot.slane %v5238, 1
        %v5240 = vmax.f32 %v5238, %v5239
        %v5241 = vsel %vm3854, %v3357, -inf
        %v5242 = vrot.slane %v5241, 4
        %v5243 = vmax.f32 %v5241, %v5242
        %v5244 = vrot.slane %v5243, 2
        %v5245 = vmax.f32 %v5243, %v5244
        %v5246 = vrot.slane %v5245, 1
        %v5247 = vmax.f32 %v5245, %v5246
        %v5248 = vsel %vm3854, %v3359, -inf
        %v5249 = vrot.slane %v5248, 4
        %v5250 = vmax.f32 %v5248, %v5249
        %v5251 = vrot.slane %v5250, 2
        %v5252 = vmax.f32 %v5250, %v5251
        %v5253 = vrot.slane %v5252, 1
        %v5254 = vmax.f32 %v5252, %v5253
        %v5255 = vsel %vm3854, %v3367, -inf
        %v5256 = vrot.slane %v5255, 4
        %v5257 = vmax.f32 %v5255, %v5256
        %v5258 = vrot.slane %v5257, 2
        %v5259 = vmax.f32 %v5257, %v5258
        %v5260 = vrot.slane %v5259, 1
        %v5261 = vmax.f32 %v5259, %v5260
        %v5262 = vsel %vm3854, %v3375, -inf
        %v5263 = vrot.slane %v5262, 4
        %v5264 = vmax.f32 %v5262, %v5263
        %v5265 = vrot.slane %v5264, 2
        %v5266 = vmax.f32 %v5264, %v5265
        %v5267 = vrot.slane %v5266, 1
        %v5268 = vmax.f32 %v5266, %v5267
        %v5269 = vsel %vm3854, %v3374, -inf
        %v5270 = vrot.slane %v5269, 4
        %v5271 = vmax.f32 %v5269, %v5270
        %v5272 = vrot.slane %v5271, 2
        %v5273 = vmax.f32 %v5271, %v5272
        %v5274 = vrot.slane %v5273, 1
        %v5275 = vmax.f32 %v5273, %v5274
        %v5276 = vsel %vm3854, %v3376, -inf
        %v5277 = vrot.slane %v5276, 4
        %v5278 = vmax.f32 %v5276, %v5277
        %v5279 = vrot.slane %v5278, 2
        %v5280 = vmax.f32 %v5278, %v5279
        %v5281 = vrot.slane %v5280, 1
        %v5282 = vmax.f32 %v5280, %v5281
        %v5283 = vsel %vm3854, %v3384, -inf
        %v5284 = vrot.slane %v5283, 4
        %v5285 = vmax.f32 %v5283, %v5284
        %v5286 = vrot.slane %v5285, 2
        %v5287 = vmax.f32 %v5285, %v5286
        %v5288 = vrot.slane %v5287, 1
        %v5289 = vmax.f32 %v5287, %v5288
        %v5290 = vsel %vm3854, %v3392, -inf
        %v5291 = vrot.slane %v5290, 4
        %v5292 = vmax.f32 %v5290, %v5291
        %v5293 = vrot.slane %v5292, 2
        %v5294 = vmax.f32 %v5292, %v5293
        %v5295 = vrot.slane %v5294, 1
        %v5296 = vmax.f32 %v5294, %v5295
        %v5297 = vsel %vm3854, %v3391, -inf
        %v5298 = vrot.slane %v5297, 4
        %v5299 = vmax.f32 %v5297, %v5298
        %v5300 = vrot.slane %v5299, 2
        %v5301 = vmax.f32 %v5299, %v5300
        %v5302 = vrot.slane %v5301, 1
        %v5303 = vmax.f32 %v5301, %v5302
        %v5304 = vsel %vm3854, %v3393, -inf
        %v5305 = vrot.slane %v5304, 4
        %v5306 = vmax.f32 %v5304, %v5305
        %v5307 = vrot.slane %v5306, 2
        %v5308 = vmax.f32 %v5306, %v5307
        %v5309 = vrot.slane %v5308, 1
        %v5310 = vmax.f32 %v5308, %v5309
        %v5311 = vsel %vm3854, %v3401, -inf
        %v5312 = vrot.slane %v5311, 4
        %v5313 = vmax.f32 %v5311, %v5312
        %v5314 = vrot.slane %v5313, 2
        %v5315 = vmax.f32 %v5313, %v5314
        %v5316 = vrot.slane %v5315, 1
        %v5317 = vmax.f32 %v5315, %v5316
        %v5318 = vsel %vm3854, %v3409, -inf
        %v5319 = vrot.slane %v5318, 4
        %v5320 = vmax.f32 %v5318, %v5319
        %v5321 = vrot.slane %v5320, 2
        %v5322 = vmax.f32 %v5320, %v5321
        %v5323 = vrot.slane %v5322, 1
        %v5324 = vmax.f32 %v5322, %v5323
        %v5325 = vsel %vm3854, %v3408, -inf
        %v5326 = vrot.slane %v5325, 4
        %v5327 = vmax.f32 %v5325, %v5326
        %v5328 = vrot.slane %v5327, 2
        %v5329 = vmax.f32 %v5327, %v5328
        %v5330 = vrot.slane %v5329, 1
        %v5331 = vmax.f32 %v5329, %v5330
        %v5332 = vsel %vm3854, %v3410, -inf
        %v5333 = vrot.slane %v5332, 4
        %v5334 = vmax.f32 %v5332, %v5333
        %v5335 = vrot.slane %v5334, 2
        %v5336 = vmax.f32 %v5334, %v5335
        %v5337 = vrot.slane %v5336, 1
        %v5338 = vmax.f32 %v5336, %v5337
        %v5339 = vsel %vm3854, %v3418, -inf
        %v5340 = vrot.slane %v5339, 4
        %v5341 = vmax.f32 %v5339, %v5340
        %v5342 = vrot.slane %v5341, 2
        %v5343 = vmax.f32 %v5341, %v5342
        %v5344 = vrot.slane %v5343, 1
        %v5345 = vmax.f32 %v5343, %v5344
        %v5346 = vsel %vm3854, %v3426, -inf
        %v5347 = vrot.slane %v5346, 4
        %v5348 = vmax.f32 %v5346, %v5347
        %v5349 = vrot.slane %v5348, 2
        %v5350 = vmax.f32 %v5348, %v5349
        %v5351 = vrot.slane %v5350, 1
        %v5352 = vmax.f32 %v5350, %v5351
        %v5353 = vsel %vm3854, %v3425, -inf
        %v5354 = vrot.slane %v5353, 4
        %v5355 = vmax.f32 %v5353, %v5354
        %v5356 = vrot.slane %v5355, 2
        %v5357 = vmax.f32 %v5355, %v5356
        %v5358 = vrot.slane %v5357, 1
        %v5359 = vmax.f32 %v5357, %v5358
        %v5360 = vsel %vm3854, %v3427, -inf
        %v5361 = vrot.slane %v5360, 4
        %v5362 = vmax.f32 %v5360, %v5361
        %v5363 = vrot.slane %v5362, 2
        %v5364 = vmax.f32 %v5362, %v5363
        %v5365 = vrot.slane %v5364, 1
        %v5366 = vmax.f32 %v5364, %v5365
        %v5367 = vsel %vm3854, %v3435, -inf
        %v5368 = vrot.slane %v5367, 4
        %v5369 = vmax.f32 %v5367, %v5368
        %v5370 = vrot.slane %v5369, 2
        %v5371 = vmax.f32 %v5369, %v5370
        %v5372 = vrot.slane %v5371, 1
        %v5373 = vmax.f32 %v5371, %v5372
        %v5374 = vsel %vm3854, %v3443, -inf
        %v5375 = vrot.slane %v5374, 4
        %v5376 = vmax.f32 %v5374, %v5375
        %v5377 = vrot.slane %v5376, 2
        %v5378 = vmax.f32 %v5376, %v5377
        %v5379 = vrot.slane %v5378, 1
        %v5380 = vmax.f32 %v5378, %v5379
        %v5381 = vsel %vm3854, %v3442, -inf
        %v5382 = vrot.slane %v5381, 4
        %v5383 = vmax.f32 %v5381, %v5382
        %v5384 = vrot.slane %v5383, 2
        %v5385 = vmax.f32 %v5383, %v5384
        %v5386 = vrot.slane %v5385, 1
        %v5387 = vmax.f32 %v5385, %v5386
        %v5388 = vsel %vm3854, %v3444, -inf
        %v5389 = vrot.slane %v5388, 4
        %v5390 = vmax.f32 %v5388, %v5389
        %v5391 = vrot.slane %v5390, 2
        %v5392 = vmax.f32 %v5390, %v5391
        %v5393 = vrot.slane %v5392, 1
        %v5394 = vmax.f32 %v5392, %v5393
        %v5395 = vsel %vm3854, %v3452, -inf
        %v5396 = vrot.slane %v5395, 4
        %v5397 = vmax.f32 %v5395, %v5396
        %v5398 = vrot.slane %v5397, 2
        %v5399 = vmax.f32 %v5397, %v5398
        %v5400 = vrot.slane %v5399, 1
        %v5401 = vmax.f32 %v5399, %v5400
        %v5402 = vsel %vm3854, %v3460, -inf
        %v5403 = vrot.slane %v5402, 4
        %v5404 = vmax.f32 %v5402, %v5403
        %v5405 = vrot.slane %v5404, 2
        %v5406 = vmax.f32 %v5404, %v5405
        %v5407 = vrot.slane %v5406, 1
        %v5408 = vmax.f32 %v5406, %v5407
        %v5409 = vsel %vm3854, %v3459, -inf
        %v5410 = vrot.slane %v5409, 4
        %v5411 = vmax.f32 %v5409, %v5410
        %v5412 = vrot.slane %v5411, 2
        %v5413 = vmax.f32 %v5411, %v5412
        %v5414 = vrot.slane %v5413, 1
        %v5415 = vmax.f32 %v5413, %v5414
        %v5416 = vsel %vm3854, %v3461, -inf
        %v5417 = vrot.slane %v5416, 4
        %v5418 = vmax.f32 %v5416, %v5417
        %v5419 = vrot.slane %v5418, 2
        %v5420 = vmax.f32 %v5418, %v5419
        %v5421 = vrot.slane %v5420, 1
        %v5422 = vmax.f32 %v5420, %v5421
        %v5423 = vsel %vm3854, %v3469, -inf
        %v5424 = vrot.slane %v5423, 4
        %v5425 = vmax.f32 %v5423, %v5424
        %v5426 = vrot.slane %v5425, 2
        %v5427 = vmax.f32 %v5425, %v5426
        %v5428 = vrot.slane %v5427, 1
        %v5429 = vmax.f32 %v5427, %v5428
        %v5430 = vsel %vm3854, %v3477, -inf
        %v5431 = vrot.slane %v5430, 4
        %v5432 = vmax.f32 %v5430, %v5431
        %v5433 = vrot.slane %v5432, 2
        %v5434 = vmax.f32 %v5432, %v5433
        %v5435 = vrot.slane %v5434, 1
        %v5436 = vmax.f32 %v5434, %v5435
        %v5437 = vsel %vm3854, %v3476, -inf
        %v5438 = vrot.slane %v5437, 4
        %v5439 = vmax.f32 %v5437, %v5438
        %v5440 = vrot.slane %v5439, 2
        %v5441 = vmax.f32 %v5439, %v5440
        %v5442 = vrot.slane %v5441, 1
        %v5443 = vmax.f32 %v5441, %v5442
        %v5444 = vsel %vm3854, %v3478, -inf
        %v5445 = vrot.slane %v5444, 4
        %v5446 = vmax.f32 %v5444, %v5445
        %v5447 = vrot.slane %v5446, 2
        %v5448 = vmax.f32 %v5446, %v5447
        %v5449 = vrot.slane %v5448, 1
        %v5450 = vmax.f32 %v5448, %v5449
        %v5451 = vsel %vm3854, %v3486, -inf
        %v5452 = vrot.slane %v5451, 4
        %v5453 = vmax.f32 %v5451, %v5452
        %v5454 = vrot.slane %v5453, 2
        %v5455 = vmax.f32 %v5453, %v5454
        %v5456 = vrot.slane %v5455, 1
        %v5457 = vmax.f32 %v5455, %v5456
        %v5458 = vsel %vm3854, %v3494, -inf
        %v5459 = vrot.slane %v5458, 4
        %v5460 = vmax.f32 %v5458, %v5459
        %v5461 = vrot.slane %v5460, 2
        %v5462 = vmax.f32 %v5460, %v5461
        %v5463 = vrot.slane %v5462, 1
        %v5464 = vmax.f32 %v5462, %v5463
        %v5465 = vsel %vm3854, %v3493, -inf
        %v5466 = vrot.slane %v5465, 4
        %v5467 = vmax.f32 %v5465, %v5466
        %v5468 = vrot.slane %v5467, 2
        %v5469 = vmax.f32 %v5467, %v5468
        %v5470 = vrot.slane %v5469, 1
        %v5471 = vmax.f32 %v5469, %v5470
        %v5472 = vsel %vm3854, %v3495, -inf
        %v5473 = vrot.slane %v5472, 4
        %v5474 = vmax.f32 %v5472, %v5473
        %v5475 = vrot.slane %v5474, 2
        %v5476 = vmax.f32 %v5474, %v5475
        %v5477 = vrot.slane %v5476, 1
        %v5478 = vmax.f32 %v5476, %v5477
        %v5479 = vsel %vm3854, %v3503, -inf
        %v5480 = vrot.slane %v5479, 4
        %v5481 = vmax.f32 %v5479, %v5480
        %v5482 = vrot.slane %v5481, 2
        %v5483 = vmax.f32 %v5481, %v5482
        %v5484 = vrot.slane %v5483, 1
        %v5485 = vmax.f32 %v5483, %v5484
        %v5486 = vsel %vm3854, %v3511, -inf
        %v5487 = vrot.slane %v5486, 4
        %v5488 = vmax.f32 %v5486, %v5487
        %v5489 = vrot.slane %v5488, 2
        %v5490 = vmax.f32 %v5488, %v5489
        %v5491 = vrot.slane %v5490, 1
        %v5492 = vmax.f32 %v5490, %v5491
        %v5493 = vsel %vm3854, %v3510, -inf
        %v5494 = vrot.slane %v5493, 4
        %v5495 = vmax.f32 %v5493, %v5494
        %v5496 = vrot.slane %v5495, 2
        %v5497 = vmax.f32 %v5495, %v5496
        %v5498 = vrot.slane %v5497, 1
        %v5499 = vmax.f32 %v5497, %v5498
        %v5500 = vsel %vm3854, %v3512, -inf
        %v5501 = vrot.slane %v5500, 4
        %v5502 = vmax.f32 %v5500, %v5501
        %v5503 = vrot.slane %v5502, 2
        %v5504 = vmax.f32 %v5502, %v5503
        %v5505 = vrot.slane %v5504, 1
        %v5506 = vmax.f32 %v5504, %v5505
        %v5507 = vsel %vm3854, %v3520, -inf
        %v5508 = vrot.slane %v5507, 4
        %v5509 = vmax.f32 %v5507, %v5508
        %v5510 = vrot.slane %v5509, 2
        %v5511 = vmax.f32 %v5509, %v5510
        %v5512 = vrot.slane %v5511, 1
        %v5513 = vmax.f32 %v5511, %v5512
        %v5514 = vsel %vm3854, %v3528, -inf
        %v5515 = vrot.slane %v5514, 4
        %v5516 = vmax.f32 %v5514, %v5515
        %v5517 = vrot.slane %v5516, 2
        %v5518 = vmax.f32 %v5516, %v5517
        %v5519 = vrot.slane %v5518, 1
        %v5520 = vmax.f32 %v5518, %v5519
        %v5521 = vsel %vm3854, %v3527, -inf
        %v5522 = vrot.slane %v5521, 4
        %v5523 = vmax.f32 %v5521, %v5522
        %v5524 = vrot.slane %v5523, 2
        %v5525 = vmax.f32 %v5523, %v5524
        %v5526 = vrot.slane %v5525, 1
        %v5527 = vmax.f32 %v5525, %v5526
        %v5528 = vsel %vm3854, %v3529, -inf
        %v5529 = vrot.slane %v5528, 4
        %v5530 = vmax.f32 %v5528, %v5529
        %v5531 = vrot.slane %v5530, 2
        %v5532 = vmax.f32 %v5530, %v5531
        %v5533 = vrot.slane %v5532, 1
        %v5534 = vmax.f32 %v5532, %v5533
        %v5535 = vsel %vm3854, %v3537, -inf
        %v5536 = vrot.slane %v5535, 4
        %v5537 = vmax.f32 %v5535, %v5536
        %v5538 = vrot.slane %v5537, 2
        %v5539 = vmax.f32 %v5537, %v5538
        %v5540 = vrot.slane %v5539, 1
        %v5541 = vmax.f32 %v5539, %v5540
        %v5542 = vsel %vm3854, %v3545, -inf
        %v5543 = vrot.slane %v5542, 4
        %v5544 = vmax.f32 %v5542, %v5543
        %v5545 = vrot.slane %v5544, 2
        %v5546 = vmax.f32 %v5544, %v5545
        %v5547 = vrot.slane %v5546, 1
        %v5548 = vmax.f32 %v5546, %v5547
        %v5549 = vsel %vm3854, %v3544, -inf
        %v5550 = vrot.slane %v5549, 4
        %v5551 = vmax.f32 %v5549, %v5550
        %v5552 = vrot.slane %v5551, 2
        %v5553 = vmax.f32 %v5551, %v5552
        %v5554 = vrot.slane %v5553, 1
        %v5555 = vmax.f32 %v5553, %v5554
        %v5556 = vsel %vm3854, %v3546, -inf
        %v5557 = vrot.slane %v5556, 4
        %v5558 = vmax.f32 %v5556, %v5557
        %v5559 = vrot.slane %v5558, 2
        %v5560 = vmax.f32 %v5558, %v5559
        %v5561 = vrot.slane %v5560, 1
        %v5562 = vmax.f32 %v5560, %v5561
        %v5563 = vsel %vm3854, %v3554, -inf
        %v5564 = vrot.slane %v5563, 4
        %v5565 = vmax.f32 %v5563, %v5564
        %v5566 = vrot.slane %v5565, 2
        %v5567 = vmax.f32 %v5565, %v5566
        %v5568 = vrot.slane %v5567, 1
        %v5569 = vmax.f32 %v5567, %v5568
        %v5570 = vsel %vm3854, %v3562, -inf
        %v5571 = vrot.slane %v5570, 4
        %v5572 = vmax.f32 %v5570, %v5571
        %v5573 = vrot.slane %v5572, 2
        %v5574 = vmax.f32 %v5572, %v5573
        %v5575 = vrot.slane %v5574, 1
        %v5576 = vmax.f32 %v5574, %v5575
        %v5577 = vsel %vm3854, %v3561, -inf
        %v5578 = vrot.slane %v5577, 4
        %v5579 = vmax.f32 %v5577, %v5578
        %v5580 = vrot.slane %v5579, 2
        %v5581 = vmax.f32 %v5579, %v5580
        %v5582 = vrot.slane %v5581, 1
        %v5583 = vmax.f32 %v5581, %v5582
        %v5584 = vsel %vm3854, %v3563, -inf
        %v5585 = vrot.slane %v5584, 4
        %v5586 = vmax.f32 %v5584, %v5585
        %v5587 = vrot.slane %v5586, 2
        %v5588 = vmax.f32 %v5586, %v5587
        %v5589 = vrot.slane %v5588, 1
        %v5590 = vmax.f32 %v5588, %v5589
        %v5591 = vsel %vm3854, %v3571, -inf
        %v5592 = vrot.slane %v5591, 4
        %v5593 = vmax.f32 %v5591, %v5592
        %v5594 = vrot.slane %v5593, 2
        %v5595 = vmax.f32 %v5593, %v5594
        %v5596 = vrot.slane %v5595, 1
        %v5597 = vmax.f32 %v5595, %v5596
        %v5598 = vsel %vm3854, %v3579, -inf
        %v5599 = vrot.slane %v5598, 4
        %v5600 = vmax.f32 %v5598, %v5599
        %v5601 = vrot.slane %v5600, 2
        %v5602 = vmax.f32 %v5600, %v5601
        %v5603 = vrot.slane %v5602, 1
        %v5604 = vmax.f32 %v5602, %v5603
        %v5605 = vsel %vm3854, %v3578, -inf
        %v5606 = vrot.slane %v5605, 4
        %v5607 = vmax.f32 %v5605, %v5606
        %v5608 = vrot.slane %v5607, 2
        %v5609 = vmax.f32 %v5607, %v5608
        %v5610 = vrot.slane %v5609, 1
        %v5611 = vmax.f32 %v5609, %v5610
        %v5612 = vsel %vm3854, %v3580, -inf
        %v5613 = vrot.slane %v5612, 4
        %v5614 = vmax.f32 %v5612, %v5613
        %v5615 = vrot.slane %v5614, 2
        %v5616 = vmax.f32 %v5614, %v5615
        %v5617 = vrot.slane %v5616, 1
        %v5618 = vmax.f32 %v5616, %v5617
        %v5619 = vsel %vm3854, %v3588, -inf
        %v5620 = vrot.slane %v5619, 4
        %v5621 = vmax.f32 %v5619, %v5620
        %v5622 = vrot.slane %v5621, 2
        %v5623 = vmax.f32 %v5621, %v5622
        %v5624 = vrot.slane %v5623, 1
        %v5625 = vmax.f32 %v5623, %v5624
        %v5626 = vsel %vm3854, %v3596, -inf
        %v5627 = vrot.slane %v5626, 4
        %v5628 = vmax.f32 %v5626, %v5627
        %v5629 = vrot.slane %v5628, 2
        %v5630 = vmax.f32 %v5628, %v5629
        %v5631 = vrot.slane %v5630, 1
        %v5632 = vmax.f32 %v5630, %v5631
        %v5633 = vsel %vm3854, %v3595, -inf
        %v5634 = vrot.slane %v5633, 4
        %v5635 = vmax.f32 %v5633, %v5634
        %v5636 = vrot.slane %v5635, 2
        %v5637 = vmax.f32 %v5635, %v5636
        %v5638 = vrot.slane %v5637, 1
        %v5639 = vmax.f32 %v5637, %v5638
        %v5640 = vsel %vm3854, %v3597, -inf
        %v5641 = vrot.slane %v5640, 4
        %v5642 = vmax.f32 %v5640, %v5641
        %v5643 = vrot.slane %v5642, 2
        %v5644 = vmax.f32 %v5642, %v5643
        %v5645 = vrot.slane %v5644, 1
        %v5646 = vmax.f32 %v5644, %v5645
        %vm5903 = vcmask 1042434
        %v5904 = vsel %vm5903, %v3868, %v3861
        %vm5905 = vcmask 1043459
        %v5906 = vsel %vm5905, %v3875, %v5904
        %vm5907 = vcmask 1044484
        %v5908 = vsel %vm5907, %v3882, %v5906
        %vm5909 = vcmask 1045509
        %v5910 = vsel %vm5909, %v3889, %v5908
        %vm5911 = vcmask 1046534
        %v5912 = vsel %vm5911, %v3896, %v5910
        %vm5913 = vcmask 1047559
        %v5914 = vsel %vm5913, %v3903, %v5912
        %vm5915 = vcmask 1041409
        %v5916 = vsel %vm5915, %v3917, %v3910
        %v5917 = vsel %vm5903, %v3924, %v5916
        %v5918 = vsel %vm5905, %v3931, %v5917
        %v5919 = vsel %vm5907, %v3938, %v5918
        %v5920 = vsel %vm5909, %v3945, %v5919
        %v5921 = vsel %vm5911, %v3952, %v5920
        %v5922 = vsel %vm5913, %v3959, %v5921
        %v5923 = vsel %vm5915, %v3973, %v3966
        %v5924 = vsel %vm5903, %v3980, %v5923
        %v5925 = vsel %vm5905, %v3987, %v5924
        %v5926 = vsel %vm5907, %v3994, %v5925
        %v5927 = vsel %vm5909, %v4001, %v5926
        %v5928 = vsel %vm5911, %v4008, %v5927
        %v5929 = vsel %vm5913, %v4015, %v5928
        %v5930 = vsel %vm5915, %v4029, %v4022
        %v5931 = vsel %vm5903, %v4036, %v5930
        %v5932 = vsel %vm5905, %v4043, %v5931
        %v5933 = vsel %vm5907, %v4050, %v5932
        %v5934 = vsel %vm5909, %v4057, %v5933
        %v5935 = vsel %vm5911, %v4064, %v5934
        %v5936 = vsel %vm5913, %v4071, %v5935
        %v5937 = vsel %vm5903, %v4092, %v4085
        %v5938 = vsel %vm5905, %v4099, %v5937
        %v5939 = vsel %vm5907, %v4106, %v5938
        %v5940 = vsel %vm5909, %v4113, %v5939
        %v5941 = vsel %vm5911, %v4120, %v5940
        %v5942 = vsel %vm5913, %v4127, %v5941
        %v5943 = vsel %vm5915, %v4141, %v4134
        %v5944 = vsel %vm5903, %v4148, %v5943
        %v5945 = vsel %vm5905, %v4155, %v5944
        %v5946 = vsel %vm5907, %v4162, %v5945
        %v5947 = vsel %vm5909, %v4169, %v5946
        %v5948 = vsel %vm5911, %v4176, %v5947
        %v5949 = vsel %vm5913, %v4183, %v5948
        %v5950 = vsel %vm5915, %v4197, %v4190
        %v5951 = vsel %vm5903, %v4204, %v5950
        %v5952 = vsel %vm5905, %v4211, %v5951
        %v5953 = vsel %vm5907, %v4218, %v5952
        %v5954 = vsel %vm5909, %v4225, %v5953
        %v5955 = vsel %vm5911, %v4232, %v5954
        %v5956 = vsel %vm5913, %v4239, %v5955
        %v5957 = vsel %vm5915, %v4253, %v4246
        %v5958 = vsel %vm5903, %v4260, %v5957
        %v5959 = vsel %vm5905, %v4267, %v5958
        %v5960 = vsel %vm5907, %v4274, %v5959
        %v5961 = vsel %vm5909, %v4281, %v5960
        %v5962 = vsel %vm5911, %v4288, %v5961
        %v5963 = vsel %vm5913, %v4295, %v5962
        %v5964 = vsel %vm5903, %v4316, %v4309
        %v5965 = vsel %vm5905, %v4323, %v5964
        %v5966 = vsel %vm5907, %v4330, %v5965
        %v5967 = vsel %vm5909, %v4337, %v5966
        %v5968 = vsel %vm5911, %v4344, %v5967
        %v5969 = vsel %vm5913, %v4351, %v5968
        %v5970 = vsel %vm5915, %v4365, %v4358
        %v5971 = vsel %vm5903, %v4372, %v5970
        %v5972 = vsel %vm5905, %v4379, %v5971
        %v5973 = vsel %vm5907, %v4386, %v5972
        %v5974 = vsel %vm5909, %v4393, %v5973
        %v5975 = vsel %vm5911, %v4400, %v5974
        %v5976 = vsel %vm5913, %v4407, %v5975
        %v5977 = vsel %vm5915, %v4421, %v4414
        %v5978 = vsel %vm5903, %v4428, %v5977
        %v5979 = vsel %vm5905, %v4435, %v5978
        %v5980 = vsel %vm5907, %v4442, %v5979
        %v5981 = vsel %vm5909, %v4449, %v5980
        %v5982 = vsel %vm5911, %v4456, %v5981
        %v5983 = vsel %vm5913, %v4463, %v5982
        %v5984 = vsel %vm5915, %v4477, %v4470
        %v5985 = vsel %vm5903, %v4484, %v5984
        %v5986 = vsel %vm5905, %v4491, %v5985
        %v5987 = vsel %vm5907, %v4498, %v5986
        %v5988 = vsel %vm5909, %v4505, %v5987
        %v5989 = vsel %vm5911, %v4512, %v5988
        %v5990 = vsel %vm5913, %v4519, %v5989
        %v5991 = vsel %vm5903, %v4540, %v4533
        %v5992 = vsel %vm5905, %v4547, %v5991
        %v5993 = vsel %vm5907, %v4554, %v5992
        %v5994 = vsel %vm5909, %v4561, %v5993
        %v5995 = vsel %vm5911, %v4568, %v5994
        %v5996 = vsel %vm5913, %v4575, %v5995
        %v5997 = vsel %vm5915, %v4589, %v4582
        %v5998 = vsel %vm5903, %v4596, %v5997
        %v5999 = vsel %vm5905, %v4603, %v5998
        %v6000 = vsel %vm5907, %v4610, %v5999
        %v6001 = vsel %vm5909, %v4617, %v6000
        %v6002 = vsel %vm5911, %v4624, %v6001
        %v6003 = vsel %vm5913, %v4631, %v6002
        %v6004 = vsel %vm5915, %v4645, %v4638
        %v6005 = vsel %vm5903, %v4652, %v6004
        %v6006 = vsel %vm5905, %v4659, %v6005
        %v6007 = vsel %vm5907, %v4666, %v6006
        %v6008 = vsel %vm5909, %v4673, %v6007
        %v6009 = vsel %vm5911, %v4680, %v6008
        %v6010 = vsel %vm5913, %v4687, %v6009
        %v6011 = vsel %vm5915, %v4701, %v4694
        %v6012 = vsel %vm5903, %v4708, %v6011
        %v6013 = vsel %vm5905, %v4715, %v6012
        %v6014 = vsel %vm5907, %v4722, %v6013
        %v6015 = vsel %vm5909, %v4729, %v6014
        %v6016 = vsel %vm5911, %v4736, %v6015
        %v6017 = vsel %vm5913, %v4743, %v6016
        %v6018 = vsel %vm5903, %v4764, %v4757
        %v6019 = vsel %vm5905, %v4771, %v6018
        %v6020 = vsel %vm5907, %v4778, %v6019
        %v6021 = vsel %vm5909, %v4785, %v6020
        %v6022 = vsel %vm5911, %v4792, %v6021
        %v6023 = vsel %vm5913, %v4799, %v6022
        %v6024 = vsel %vm5915, %v4813, %v4806
        %v6025 = vsel %vm5903, %v4820, %v6024
        %v6026 = vsel %vm5905, %v4827, %v6025
        %v6027 = vsel %vm5907, %v4834, %v6026
        %v6028 = vsel %vm5909, %v4841, %v6027
        %v6029 = vsel %vm5911, %v4848, %v6028
        %v6030 = vsel %vm5913, %v4855, %v6029
        %v6031 = vsel %vm5915, %v4869, %v4862
        %v6032 = vsel %vm5903, %v4876, %v6031
        %v6033 = vsel %vm5905, %v4883, %v6032
        %v6034 = vsel %vm5907, %v4890, %v6033
        %v6035 = vsel %vm5909, %v4897, %v6034
        %v6036 = vsel %vm5911, %v4904, %v6035
        %v6037 = vsel %vm5913, %v4911, %v6036
        %v6038 = vsel %vm5915, %v4925, %v4918
        %v6039 = vsel %vm5903, %v4932, %v6038
        %v6040 = vsel %vm5905, %v4939, %v6039
        %v6041 = vsel %vm5907, %v4946, %v6040
        %v6042 = vsel %vm5909, %v4953, %v6041
        %v6043 = vsel %vm5911, %v4960, %v6042
        %v6044 = vsel %vm5913, %v4967, %v6043
        %v6045 = vsel %vm5903, %v4988, %v4981
        %v6046 = vsel %vm5905, %v4995, %v6045
        %v6047 = vsel %vm5907, %v5002, %v6046
        %v6048 = vsel %vm5909, %v5009, %v6047
        %v6049 = vsel %vm5911, %v5016, %v6048
        %v6050 = vsel %vm5913, %v5023, %v6049
        %v6051 = vsel %vm5915, %v5037, %v5030
        %v6052 = vsel %vm5903, %v5044, %v6051
        %v6053 = vsel %vm5905, %v5051, %v6052
        %v6054 = vsel %vm5907, %v5058, %v6053
        %v6055 = vsel %vm5909, %v5065, %v6054
        %v6056 = vsel %vm5911, %v5072, %v6055
        %v6057 = vsel %vm5913, %v5079, %v6056
        %v6058 = vsel %vm5915, %v5093, %v5086
        %v6059 = vsel %vm5903, %v5100, %v6058
        %v6060 = vsel %vm5905, %v5107, %v6059
        %v6061 = vsel %vm5907, %v5114, %v6060
        %v6062 = vsel %vm5909, %v5121, %v6061
        %v6063 = vsel %vm5911, %v5128, %v6062
        %v6064 = vsel %vm5913, %v5135, %v6063
        %v6065 = vsel %vm5915, %v5149, %v5142
        %v6066 = vsel %vm5903, %v5156, %v6065
        %v6067 = vsel %vm5905, %v5163, %v6066
        %v6068 = vsel %vm5907, %v5170, %v6067
        %v6069 = vsel %vm5909, %v5177, %v6068
        %v6070 = vsel %vm5911, %v5184, %v6069
        %v6071 = vsel %vm5913, %v5191, %v6070
        %v6072 = vsel %vm5903, %v5212, %v5205
        %v6073 = vsel %vm5905, %v5219, %v6072
        %v6074 = vsel %vm5907, %v5226, %v6073
        %v6075 = vsel %vm5909, %v5233, %v6074
        %v6076 = vsel %vm5911, %v5240, %v6075
        %v6077 = vsel %vm5913, %v5247, %v6076
        %v6078 = vsel %vm5915, %v5261, %v5254
        %v6079 = vsel %vm5903, %v5268, %v6078
        %v6080 = vsel %vm5905, %v5275, %v6079
        %v6081 = vsel %vm5907, %v5282, %v6080
        %v6082 = vsel %vm5909, %v5289, %v6081
        %v6083 = vsel %vm5911, %v5296, %v6082
        %v6084 = vsel %vm5913, %v5303, %v6083
        %v6085 = vsel %vm5915, %v5317, %v5310
        %v6086 = vsel %vm5903, %v5324, %v6085
        %v6087 = vsel %vm5905, %v5331, %v6086
        %v6088 = vsel %vm5907, %v5338, %v6087
        %v6089 = vsel %vm5909, %v5345, %v6088
        %v6090 = vsel %vm5911, %v5352, %v6089
        %v6091 = vsel %vm5913, %v5359, %v6090
        %v6092 = vsel %vm5915, %v5373, %v5366
        %v6093 = vsel %vm5903, %v5380, %v6092
        %v6094 = vsel %vm5905, %v5387, %v6093
        %v6095 = vsel %vm5907, %v5394, %v6094
        %v6096 = vsel %vm5909, %v5401, %v6095
        %v6097 = vsel %vm5911, %v5408, %v6096
        %v6098 = vsel %vm5913, %v5415, %v6097
        %v6099 = vsel %vm5903, %v5436, %v5429
        %v6100 = vsel %vm5905, %v5443, %v6099
        %v6101 = vsel %vm5907, %v5450, %v6100
        %v6102 = vsel %vm5909, %v5457, %v6101
        %v6103 = vsel %vm5911, %v5464, %v6102
        %v6104 = vsel %vm5913, %v5471, %v6103
        %v6105 = vsel %vm5915, %v5485, %v5478
        %v6106 = vsel %vm5903, %v5492, %v6105
        %v6107 = vsel %vm5905, %v5499, %v6106
        %v6108 = vsel %vm5907, %v5506, %v6107
        %v6109 = vsel %vm5909, %v5513, %v6108
        %v6110 = vsel %vm5911, %v5520, %v6109
        %v6111 = vsel %vm5913, %v5527, %v6110
        %v6112 = vsel %vm5915, %v5541, %v5534
        %v6113 = vsel %vm5903, %v5548, %v6112
        %v6114 = vsel %vm5905, %v5555, %v6113
        %v6115 = vsel %vm5907, %v5562, %v6114
        %v6116 = vsel %vm5909, %v5569, %v6115
        %v6117 = vsel %vm5911, %v5576, %v6116
        %v6118 = vsel %vm5913, %v5583, %v6117
        %v6119 = vsel %vm5915, %v5597, %v5590
        %v6120 = vsel %vm5903, %v5604, %v6119
        %v6121 = vsel %vm5905, %v5611, %v6120
        %v6122 = vsel %vm5907, %v5618, %v6121
        %v6123 = vsel %vm5909, %v5625, %v6122
        %v6124 = vsel %vm5911, %v5632, %v6123
        %v6125 = vsel %vm5913, %v5639, %v6124
        %v6166 = vsel %vm891, 0.0, %v5914
        %v6167 = vsel %vm891, 0.0, %v5942
        %v6168 = vsel %vm891, 0.0, %v5969
        %v6169 = vsel %vm891, 0.0, %v5996
        %v6170 = vsel %vm891, 0.0, %v6023
        %v6171 = vsel %vm891, 0.0, %v6050
        %v6172 = vsel %vm891, 0.0, %v6077
        %v6173 = vsel %vm891, 0.0, %v6104
        %v6174 = vsel %vm891, %v4078, 0.0
        %v6175 = vsel %vm891, %v4302, 0.0
        %v6176 = vsel %vm891, %v4526, 0.0
        %v6177 = vsel %vm891, %v4750, 0.0
        %v6178 = vsel %vm891, %v4974, 0.0
        %v6179 = vsel %vm891, %v5198, 0.0
        %v6180 = vsel %vm891, %v5422, 0.0
        %v6181 = vsel %vm891, %v5646, 0.0
        %v6198 = vrot.slane %v6166, 1
        %v6199 = vrot.slane %v5922, 1
        %v6200 = vsel %vm1564, %v6198, %v6199
        %v6201 = vrot.slane %v5929, 1
        %v6202 = vsel %vm1564, %v6199, %v6201
        %v6203 = vrot.slane %v5936, 1
        %v6204 = vsel %vm1564, %v6201, %v6203
        %v6205 = vrot.slane %v6174, 1
        %v6206 = vsel %vm1564, %v6203, %v6205
        %v6207 = vrot.slane %v6167, 1
        %v6208 = vrot.slane %v5949, 1
        %v6209 = vsel %vm1564, %v6207, %v6208
        %v6210 = vrot.slane %v5956, 1
        %v6211 = vsel %vm1564, %v6208, %v6210
        %v6212 = vrot.slane %v5963, 1
        %v6213 = vsel %vm1564, %v6210, %v6212
        %v6214 = vrot.slane %v6175, 1
        %v6215 = vsel %vm1564, %v6212, %v6214
        %v6216 = vrot.slane %v6168, 1
        %v6217 = vrot.slane %v5976, 1
        %v6218 = vsel %vm1564, %v6216, %v6217
        %v6219 = vrot.slane %v5983, 1
        %v6220 = vsel %vm1564, %v6217, %v6219
        %v6221 = vrot.slane %v5990, 1
        %v6222 = vsel %vm1564, %v6219, %v6221
        %v6223 = vrot.slane %v6176, 1
        %v6224 = vsel %vm1564, %v6221, %v6223
        %v6225 = vrot.slane %v6169, 1
        %v6226 = vrot.slane %v6003, 1
        %v6227 = vsel %vm1564, %v6225, %v6226
        %v6228 = vrot.slane %v6010, 1
        %v6229 = vsel %vm1564, %v6226, %v6228
        %v6230 = vrot.slane %v6017, 1
        %v6231 = vsel %vm1564, %v6228, %v6230
        %v6232 = vrot.slane %v6177, 1
        %v6233 = vsel %vm1564, %v6230, %v6232
        %v6234 = vrot.slane %v6170, 1
        %v6235 = vrot.slane %v6030, 1
        %v6236 = vsel %vm1564, %v6234, %v6235
        %v6237 = vrot.slane %v6037, 1
        %v6238 = vsel %vm1564, %v6235, %v6237
        %v6239 = vrot.slane %v6044, 1
        %v6240 = vsel %vm1564, %v6237, %v6239
        %v6241 = vrot.slane %v6178, 1
        %v6242 = vsel %vm1564, %v6239, %v6241
        %v6243 = vrot.slane %v6171, 1
        %v6244 = vrot.slane %v6057, 1
        %v6245 = vsel %vm1564, %v6243, %v6244
        %v6246 = vrot.slane %v6064, 1
        %v6247 = vsel %vm1564, %v6244, %v6246
        %v6248 = vrot.slane %v6071, 1
        %v6249 = vsel %vm1564, %v6246, %v6248
        %v6250 = vrot.slane %v6179, 1
        %v6251 = vsel %vm1564, %v6248, %v6250
        %v6252 = vrot.slane %v6172, 1
        %v6253 = vrot.slane %v6084, 1
        %v6254 = vsel %vm1564, %v6252, %v6253
        %v6255 = vrot.slane %v6091, 1
        %v6256 = vsel %vm1564, %v6253, %v6255
        %v6257 = vrot.slane %v6098, 1
        %v6258 = vsel %vm1564, %v6255, %v6257
        %v6259 = vrot.slane %v6180, 1
        %v6260 = vsel %vm1564, %v6257, %v6259
        %v6261 = vrot.slane %v6173, 1
        %v6262 = vrot.slane %v6111, 1
        %v6263 = vsel %vm1564, %v6261, %v6262
        %v6264 = vrot.slane %v6118, 1
        %v6265 = vsel %vm1564, %v6262, %v6264
        %v6266 = vrot.slane %v6125, 1
        %v6267 = vsel %vm1564, %v6264, %v6266
        %v6268 = vrot.slane %v6181, 1
        %v6269 = vsel %vm1564, %v6266, %v6268
        %6270 = vrot.lane.b32.xlu0 %v6200, 32
        %v6271 = vpop.permute.xlu0 %6270
        %6272 = vrot.lane.b32.xlu0 %v6202, 32
        %v6273 = vpop.permute.xlu0 %6272
        %6274 = vrot.lane.b32.xlu0 %v6204, 32
        %v6275 = vpop.permute.xlu0 %6274
        %6276 = vrot.lane.b32.xlu0 %v6206, 32
        %v6277 = vpop.permute.xlu0 %6276
        %6278 = vrot.lane.b32.xlu0 %v6209, 32
        %v6279 = vpop.permute.xlu0 %6278
        %6280 = vrot.lane.b32.xlu0 %v6211, 32
        %v6281 = vpop.permute.xlu0 %6280
        %6282 = vrot.lane.b32.xlu0 %v6213, 32
        %v6283 = vpop.permute.xlu0 %6282
        %6284 = vrot.lane.b32.xlu0 %v6215, 32
        %v6285 = vpop.permute.xlu0 %6284
        %6286 = vrot.lane.b32.xlu0 %v6218, 32
        %v6287 = vpop.permute.xlu0 %6286
        %6288 = vrot.lane.b32.xlu0 %v6220, 32
        %v6289 = vpop.permute.xlu0 %6288
        %6290 = vrot.lane.b32.xlu0 %v6222, 32
        %v6291 = vpop.permute.xlu0 %6290
        %6292 = vrot.lane.b32.xlu0 %v6224, 32
        %v6293 = vpop.permute.xlu0 %6292
        %6294 = vrot.lane.b32.xlu0 %v6227, 32
        %v6295 = vpop.permute.xlu0 %6294
        %6296 = vrot.lane.b32.xlu0 %v6229, 32
        %v6297 = vpop.permute.xlu0 %6296
        %6298 = vrot.lane.b32.xlu0 %v6231, 32
        %v6299 = vpop.permute.xlu0 %6298
        %6300 = vrot.lane.b32.xlu0 %v6233, 32
        %v6301 = vpop.permute.xlu0 %6300
        %6302 = vrot.lane.b32.xlu0 %v6236, 32
        %v6303 = vpop.permute.xlu0 %6302
        %6304 = vrot.lane.b32.xlu0 %v6238, 32
        %v6305 = vpop.permute.xlu0 %6304
        %6306 = vrot.lane.b32.xlu0 %v6240, 32
        %v6307 = vpop.permute.xlu0 %6306
        %6308 = vrot.lane.b32.xlu0 %v6242, 32
        %v6309 = vpop.permute.xlu0 %6308
        %6310 = vrot.lane.b32.xlu0 %v6245, 32
        %v6311 = vpop.permute.xlu0 %6310
        %6312 = vrot.lane.b32.xlu0 %v6247, 32
        %v6313 = vpop.permute.xlu0 %6312
        %6314 = vrot.lane.b32.xlu0 %v6249, 32
        %v6315 = vpop.permute.xlu0 %6314
        %6316 = vrot.lane.b32.xlu0 %v6251, 32
        %v6317 = vpop.permute.xlu0 %6316
        %6318 = vrot.lane.b32.xlu0 %v6254, 32
        %v6319 = vpop.permute.xlu0 %6318
        %6320 = vrot.lane.b32.xlu0 %v6256, 32
        %v6321 = vpop.permute.xlu0 %6320
        %6322 = vrot.lane.b32.xlu0 %v6258, 32
        %v6323 = vpop.permute.xlu0 %6322
        %6324 = vrot.lane.b32.xlu0 %v6260, 32
        %v6325 = vpop.permute.xlu0 %6324
        %6326 = vrot.lane.b32.xlu0 %v6263, 32
        %v6327 = vpop.permute.xlu0 %6326
        %6328 = vrot.lane.b32.xlu0 %v6265, 32
        %v6329 = vpop.permute.xlu0 %6328
        %6330 = vrot.lane.b32.xlu0 %v6267, 32
        %v6331 = vpop.permute.xlu0 %6330
        %6332 = vrot.lane.b32.xlu0 %v6269, 32
        %v6333 = vpop.permute.xlu0 %6332
        %v6366 = vrot.slane %v6166, 2
        %v6367 = vrot.slane %v5922, 2
        %v6368 = vsel %vm1977, %v6366, %v6367
        %v6369 = vrot.slane %v5929, 2
        %v6370 = vsel %vm1977, %v6367, %v6369
        %v6371 = vrot.slane %v5936, 2
        %v6372 = vsel %vm1977, %v6369, %v6371
        %v6373 = vrot.slane %v6174, 2
        %v6374 = vsel %vm1977, %v6371, %v6373
        %v6375 = vrot.slane %v6167, 2
        %v6376 = vrot.slane %v5949, 2
        %v6377 = vsel %vm1977, %v6375, %v6376
        %v6378 = vrot.slane %v5956, 2
        %v6379 = vsel %vm1977, %v6376, %v6378
        %v6380 = vrot.slane %v5963, 2
        %v6381 = vsel %vm1977, %v6378, %v6380
        %v6382 = vrot.slane %v6175, 2
        %v6383 = vsel %vm1977, %v6380, %v6382
        %v6384 = vrot.slane %v6168, 2
        %v6385 = vrot.slane %v5976, 2
        %v6386 = vsel %vm1977, %v6384, %v6385
        %v6387 = vrot.slane %v5983, 2
        %v6388 = vsel %vm1977, %v6385, %v6387
        %v6389 = vrot.slane %v5990, 2
        %v6390 = vsel %vm1977, %v6387, %v6389
        %v6391 = vrot.slane %v6176, 2
        %v6392 = vsel %vm1977, %v6389, %v6391
        %v6393 = vrot.slane %v6169, 2
        %v6394 = vrot.slane %v6003, 2
        %v6395 = vsel %vm1977, %v6393, %v6394
        %v6396 = vrot.slane %v6010, 2
        %v6397 = vsel %vm1977, %v6394, %v6396
        %v6398 = vrot.slane %v6017, 2
        %v6399 = vsel %vm1977, %v6396, %v6398
        %v6400 = vrot.slane %v6177, 2
        %v6401 = vsel %vm1977, %v6398, %v6400
        %v6402 = vrot.slane %v6170, 2
        %v6403 = vrot.slane %v6030, 2
        %v6404 = vsel %vm1977, %v6402, %v6403
        %v6405 = vrot.slane %v6037, 2
        %v6406 = vsel %vm1977, %v6403, %v6405
        %v6407 = vrot.slane %v6044, 2
        %v6408 = vsel %vm1977, %v6405, %v6407
        %v6409 = vrot.slane %v6178, 2
        %v6410 = vsel %vm1977, %v6407, %v6409
        %v6411 = vrot.slane %v6171, 2
        %v6412 = vrot.slane %v6057, 2
        %v6413 = vsel %vm1977, %v6411, %v6412
        %v6414 = vrot.slane %v6064, 2
        %v6415 = vsel %vm1977, %v6412, %v6414
        %v6416 = vrot.slane %v6071, 2
        %v6417 = vsel %vm1977, %v6414, %v6416
        %v6418 = vrot.slane %v6179, 2
        %v6419 = vsel %vm1977, %v6416, %v6418
        %v6420 = vrot.slane %v6172, 2
        %v6421 = vrot.slane %v6084, 2
        %v6422 = vsel %vm1977, %v6420, %v6421
        %v6423 = vrot.slane %v6091, 2
        %v6424 = vsel %vm1977, %v6421, %v6423
        %v6425 = vrot.slane %v6098, 2
        %v6426 = vsel %vm1977, %v6423, %v6425
        %v6427 = vrot.slane %v6180, 2
        %v6428 = vsel %vm1977, %v6425, %v6427
        %v6429 = vrot.slane %v6173, 2
        %v6430 = vrot.slane %v6111, 2
        %v6431 = vsel %vm1977, %v6429, %v6430
        %v6432 = vrot.slane %v6118, 2
        %v6433 = vsel %vm1977, %v6430, %v6432
        %v6434 = vrot.slane %v6125, 2
        %v6435 = vsel %vm1977, %v6432, %v6434
        %v6436 = vrot.slane %v6181, 2
        %v6437 = vsel %vm1977, %v6434, %v6436
        %6438 = vrot.lane.b32.xlu0 %v6368, 64
        %v6439 = vpop.permute.xlu0 %6438
        %6440 = vrot.lane.b32.xlu0 %v6370, 64
        %v6441 = vpop.permute.xlu0 %6440
        %6442 = vrot.lane.b32.xlu0 %v6372, 64
        %v6443 = vpop.permute.xlu0 %6442
        %6444 = vrot.lane.b32.xlu0 %v6374, 64
        %v6445 = vpop.permute.xlu0 %6444
        %6446 = vrot.lane.b32.xlu0 %v6377, 64
        %v6447 = vpop.permute.xlu0 %6446
        %6448 = vrot.lane.b32.xlu0 %v6379, 64
        %v6449 = vpop.permute.xlu0 %6448
        %6450 = vrot.lane.b32.xlu0 %v6381, 64
        %v6451 = vpop.permute.xlu0 %6450
        %6452 = vrot.lane.b32.xlu0 %v6383, 64
        %v6453 = vpop.permute.xlu0 %6452
        %6454 = vrot.lane.b32.xlu0 %v6386, 64
        %v6455 = vpop.permute.xlu0 %6454
        %6456 = vrot.lane.b32.xlu0 %v6388, 64
        %v6457 = vpop.permute.xlu0 %6456
        %6458 = vrot.lane.b32.xlu0 %v6390, 64
        %v6459 = vpop.permute.xlu0 %6458
        %6460 = vrot.lane.b32.xlu0 %v6392, 64
        %v6461 = vpop.permute.xlu0 %6460
        %6462 = vrot.lane.b32.xlu0 %v6395, 64
        %v6463 = vpop.permute.xlu0 %6462
        %6464 = vrot.lane.b32.xlu0 %v6397, 64
        %v6465 = vpop.permute.xlu0 %6464
        %6466 = vrot.lane.b32.xlu0 %v6399, 64
        %v6467 = vpop.permute.xlu0 %6466
        %6468 = vrot.lane.b32.xlu0 %v6401, 64
        %v6469 = vpop.permute.xlu0 %6468
        %6470 = vrot.lane.b32.xlu0 %v6404, 64
        %v6471 = vpop.permute.xlu0 %6470
        %6472 = vrot.lane.b32.xlu0 %v6406, 64
        %v6473 = vpop.permute.xlu0 %6472
        %6474 = vrot.lane.b32.xlu0 %v6408, 64
        %v6475 = vpop.permute.xlu0 %6474
        %6476 = vrot.lane.b32.xlu0 %v6410, 64
        %v6477 = vpop.permute.xlu0 %6476
        %6478 = vrot.lane.b32.xlu0 %v6413, 64
        %v6479 = vpop.permute.xlu0 %6478
        %6480 = vrot.lane.b32.xlu0 %v6415, 64
        %v6481 = vpop.permute.xlu0 %6480
        %6482 = vrot.lane.b32.xlu0 %v6417, 64
        %v6483 = vpop.permute.xlu0 %6482
        %6484 = vrot.lane.b32.xlu0 %v6419, 64
        %v6485 = vpop.permute.xlu0 %6484
        %6486 = vrot.lane.b32.xlu0 %v6422, 64
        %v6487 = vpop.permute.xlu0 %6486
        %6488 = vrot.lane.b32.xlu0 %v6424, 64
        %v6489 = vpop.permute.xlu0 %6488
        %6490 = vrot.lane.b32.xlu0 %v6426, 64
        %v6491 = vpop.permute.xlu0 %6490
        %6492 = vrot.lane.b32.xlu0 %v6428, 64
        %v6493 = vpop.permute.xlu0 %6492
        %6494 = vrot.lane.b32.xlu0 %v6431, 64
        %v6495 = vpop.permute.xlu0 %6494
        %6496 = vrot.lane.b32.xlu0 %v6433, 64
        %v6497 = vpop.permute.xlu0 %6496
        %6498 = vrot.lane.b32.xlu0 %v6435, 64
        %v6499 = vpop.permute.xlu0 %6498
        %6500 = vrot.lane.b32.xlu0 %v6437, 64
        %v6501 = vpop.permute.xlu0 %6500
        %vm6534 = vcmask 261120
        %v6535 = vsel %vm6534, %v6166, %v6271
        %v6536 = vsel %vm6534, %v5922, %v6273
        %v6537 = vsel %vm6534, %v5929, %v6275
        %v6538 = vsel %vm6534, %v5936, %v6277
        %v6539 = vsel %vm6534, %v6167, %v6279
        %v6540 = vsel %vm6534, %v5949, %v6281
        %v6541 = vsel %vm6534, %v5956, %v6283
        %v6542 = vsel %vm6534, %v5963, %v6285
        %v6543 = vsel %vm6534, %v6168, %v6287
        %v6544 = vsel %vm6534, %v5976, %v6289
        %v6545 = vsel %vm6534, %v5983, %v6291
        %v6546 = vsel %vm6534, %v5990, %v6293
        %v6547 = vsel %vm6534, %v6169, %v6295
        %v6548 = vsel %vm6534, %v6003, %v6297
        %v6549 = vsel %vm6534, %v6010, %v6299
        %v6550 = vsel %vm6534, %v6017, %v6301
        %v6551 = vsel %vm6534, %v6170, %v6303
        %v6552 = vsel %vm6534, %v6030, %v6305
        %v6553 = vsel %vm6534, %v6037, %v6307
        %v6554 = vsel %vm6534, %v6044, %v6309
        %v6555 = vsel %vm6534, %v6171, %v6311
        %v6556 = vsel %vm6534, %v6057, %v6313
        %v6557 = vsel %vm6534, %v6064, %v6315
        %v6558 = vsel %vm6534, %v6071, %v6317
        %v6559 = vsel %vm6534, %v6172, %v6319
        %v6560 = vsel %vm6534, %v6084, %v6321
        %v6561 = vsel %vm6534, %v6091, %v6323
        %v6562 = vsel %vm6534, %v6098, %v6325
        %v6563 = vsel %vm6534, %v6173, %v6327
        %v6564 = vsel %vm6534, %v6111, %v6329
        %v6565 = vsel %vm6534, %v6118, %v6331
        %v6566 = vsel %vm6534, %v6125, %v6333
        %vm6567 = vcmask 523264
        %v6568 = vsel %vm6567, %v6535, %v6439
        %v6569 = vsel %vm6567, %v6536, %v6441
        %v6570 = vsel %vm6567, %v6537, %v6443
        %v6571 = vsel %vm6567, %v6538, %v6445
        %v6572 = vsel %vm6567, %v6539, %v6447
        %v6573 = vsel %vm6567, %v6540, %v6449
        %v6574 = vsel %vm6567, %v6541, %v6451
        %v6575 = vsel %vm6567, %v6542, %v6453
        %v6576 = vsel %vm6567, %v6543, %v6455
        %v6577 = vsel %vm6567, %v6544, %v6457
        %v6578 = vsel %vm6567, %v6545, %v6459
        %v6579 = vsel %vm6567, %v6546, %v6461
        %v6580 = vsel %vm6567, %v6547, %v6463
        %v6581 = vsel %vm6567, %v6548, %v6465
        %v6582 = vsel %vm6567, %v6549, %v6467
        %v6583 = vsel %vm6567, %v6550, %v6469
        %v6584 = vsel %vm6567, %v6551, %v6471
        %v6585 = vsel %vm6567, %v6552, %v6473
        %v6586 = vsel %vm6567, %v6553, %v6475
        %v6587 = vsel %vm6567, %v6554, %v6477
        %v6588 = vsel %vm6567, %v6555, %v6479
        %v6589 = vsel %vm6567, %v6556, %v6481
        %v6590 = vsel %vm6567, %v6557, %v6483
        %v6591 = vsel %vm6567, %v6558, %v6485
        %v6592 = vsel %vm6567, %v6559, %v6487
        %v6593 = vsel %vm6567, %v6560, %v6489
        %v6594 = vsel %vm6567, %v6561, %v6491
        %v6595 = vsel %vm6567, %v6562, %v6493
        %v6596 = vsel %vm6567, %v6563, %v6495
        %v6597 = vsel %vm6567, %v6564, %v6497
        %v6598 = vsel %vm6567, %v6565, %v6499
        %v6599 = vsel %vm6567, %v6566, %v6501
        %vm6600 = vcmask 785408
        %v6602 = vsel %vm6600, %v6568, 0
        %v6605 = vsel %vm6600, %v6569, 0
        %v6608 = vsel %vm6600, %v6570, 0
        %v6611 = vsel %vm6600, %v6571, 0
        %v6614 = vsel %vm6600, %v6572, 0
        %v6617 = vsel %vm6600, %v6573, 0
        %v6620 = vsel %vm6600, %v6574, 0
        %v6623 = vsel %vm6600, %v6575, 0
        %v6626 = vsel %vm6600, %v6576, 0
        %v6629 = vsel %vm6600, %v6577, 0
        %v6632 = vsel %vm6600, %v6578, 0
        %v6635 = vsel %vm6600, %v6579, 0
        %v6638 = vsel %vm6600, %v6580, 0
        %v6641 = vsel %vm6600, %v6581, 0
        %v6644 = vsel %vm6600, %v6582, 0
        %v6647 = vsel %vm6600, %v6583, 0
        %v6650 = vsel %vm6600, %v6584, 0
        %v6653 = vsel %vm6600, %v6585, 0
        %v6656 = vsel %vm6600, %v6586, 0
        %v6659 = vsel %vm6600, %v6587, 0
        %v6662 = vsel %vm6600, %v6588, 0
        %v6665 = vsel %vm6600, %v6589, 0
        %v6668 = vsel %vm6600, %v6590, 0
        %v6671 = vsel %vm6600, %v6591, 0
        %v6674 = vsel %vm6600, %v6592, 0
        %v6677 = vsel %vm6600, %v6593, 0
        %v6680 = vsel %vm6600, %v6594, 0
        %v6683 = vsel %vm6600, %v6595, 0
        %v6686 = vsel %vm6600, %v6596, 0
        %v6689 = vsel %vm6600, %v6597, 0
        %v6692 = vsel %vm6600, %v6598, 0
        %v6695 = vsel %vm6600, %v6599, 0
        %6697 = vmatprep.subr.mxu0 0.0
        %6698 = vmatpush1.msra.mxu0 0.0
        %6699 = vmatprep.subr.mxu0 0.0
        %6700 = vmatpush1.msra.mxu0 0.0
        %6701 = vmatprep.subr.mxu0 0.0
        %6702 = vmatpush1.msra.mxu0 0.0
        %6703 = vmatprep.subr.mxu0 0.0
        %6704 = vmatpush1.msra.mxu0 0.0
        %6705 = vmatprep.subr.mxu0 0.0
        %6706 = vmatpush1.msra.mxu0 %v652
        %6707 = vmatprep.subr.mxu0 0.0
        %6708 = vmatpush1.msra.mxu0 %v651
        %6709 = vmatprep.subr.mxu0 0.0
        %6710 = vmatpush1.msra.mxu0 %v650
        %6711 = vmatprep.subr.mxu0 0.0
        %6712 = vmatpush1.msra.mxu0 %v649
        %6713 = vmatprep.subr.mxu0 0.0
        %6714 = vmatpush1.msra.mxu0 %v648
        %6715 = vmatprep.subr.mxu0 0.0
        %6716 = vmatpush1.msra.mxu0 %v647
        %6717 = vmatprep.subr.mxu0 0.0
        %6718 = vmatpush1.msra.mxu0 %v646
        %6719 = vmatprep.subr.mxu0 0.0
        %6720 = vmatpush1.msra.mxu0 %v645
        %6721 = vmatprep.subr.mxu0 0.0
        %6722 = vmatpush1.msra.mxu0 %v644
        %6723 = vmatprep.subr.mxu0 0.0
        %6724 = vmatpush1.msra.mxu0 %v643
        %6725 = vmatprep.subr.mxu0 0.0
        %6726 = vmatpush1.msra.mxu0 %v642
        %6727 = vmatprep.subr.mxu0 0.0
        %6728 = vmatpush1.msra.mxu0 %v641
        %6729 = vmatprep.subr.mxu0 0.0
        %6730 = vmatpush2.msra.mxu0 0.0
        %6731 = vmatprep.subr.mxu0 0.0
        %6732 = vmatpush2.msra.mxu0 0.0
        %6733 = vmatprep.subr.mxu0 0.0
        %6734 = vmatpush2.msra.mxu0 0.0
        %6735 = vmatprep.subr.mxu0 0.0
        %6736 = vmatpush2.msra.mxu0 0.0
        %6737 = vmatprep.subr.mxu0 0.0
        %6738 = vmatpush2.msra.mxu0 0.0
        %6739 = vmatprep.subr.mxu0 0.0
        %6740 = vmatpush2.msra.mxu0 0.0
        %6741 = vmatprep.subr.mxu0 0.0
        %6742 = vmatpush2.msra.mxu0 0.0
        %6743 = vmatprep.subr.mxu0 0.0
        %6744 = vmatpush2.msra.mxu0 0.0
        %6745 = vmatprep.subr.mxu0 0.0
        %6746 = vmatpush2.msra.mxu0 0.0
        %6747 = vmatprep.subr.mxu0 0.0
        %6748 = vmatpush2.msra.mxu0 0.0
        %6749 = vmatprep.subr.mxu0 0.0
        %6750 = vmatpush2.msra.mxu0 0.0
        %6751 = vmatprep.subr.mxu0 0.0
        %6752 = vmatpush2.msra.mxu0 0.0
        %6753 = vmatprep.subr.mxu0 0.0
        %6754 = vmatpush2.msra.mxu0 0.0
        %6755 = vmatprep.subr.mxu0 0.0
        %6756 = vmatpush2.msra.mxu0 0.0
        %6757 = vmatprep.subr.mxu0 0.0
        %6758 = vmatpush2.msra.mxu0 0.0
        %6759 = vmatprep.subr.mxu0 0.0
        %6760 = vmatpush2.msra.mxu0 0.0
        %6761 = vmatprep.mubr.f32.mxu0 0.0
        %6762 = vmatmul.mubr.f32.gmra.mxu0 %v6602
        %v6763 = vpop.f32.mrf.mxu0
        %v6764 = vadd.f32 0.0, %v6763
        %v6765 = vpop.f32.mrf.mxu0
        %6766 = vmatprep.mubr.f32.mxu0 0.0
        %6767 = vmatmul.mubr.f32.gmra.mxu0 %v6605
        %v6768 = vpop.f32.mrf.mxu0
        %v6769 = vadd.f32 0.0, %v6768
        %v6770 = vpop.f32.mrf.mxu0
        %6771 = vmatprep.mubr.f32.mxu0 0.0
        %6772 = vmatmul.mubr.f32.gmra.mxu0 %v6608
        %v6773 = vpop.f32.mrf.mxu0
        %v6774 = vadd.f32 0.0, %v6773
        %v6775 = vpop.f32.mrf.mxu0
        %6776 = vmatprep.mubr.f32.mxu0 0.0
        %6777 = vmatmul.mubr.f32.gmra.mxu0 %v6611
        %v6778 = vpop.f32.mrf.mxu0
        %v6779 = vadd.f32 0.0, %v6778
        %v6780 = vpop.f32.mrf.mxu0
        %6781 = vmatprep.mubr.f32.mxu0 0.0
        %6782 = vmatmul.mubr.f32.gmra.mxu0 %v6614
        %v6783 = vpop.f32.mrf.mxu0
        %v6784 = vadd.f32 0.0, %v6783
        %v6785 = vpop.f32.mrf.mxu0
        %6786 = vmatprep.mubr.f32.mxu0 0.0
        %6787 = vmatmul.mubr.f32.gmra.mxu0 %v6617
        %v6788 = vpop.f32.mrf.mxu0
        %v6789 = vadd.f32 0.0, %v6788
        %v6790 = vpop.f32.mrf.mxu0
        %6791 = vmatprep.mubr.f32.mxu0 0.0
        %6792 = vmatmul.mubr.f32.gmra.mxu0 %v6620
        %v6793 = vpop.f32.mrf.mxu0
        %v6794 = vadd.f32 0.0, %v6793
        %v6795 = vpop.f32.mrf.mxu0
        %6796 = vmatprep.mubr.f32.mxu0 0.0
        %6797 = vmatmul.mubr.f32.gmra.mxu0 %v6623
        %v6798 = vpop.f32.mrf.mxu0
        %v6799 = vadd.f32 0.0, %v6798
        %v6800 = vpop.f32.mrf.mxu0
        %6801 = vmatprep.mubr.f32.mxu0 0.0
        %6802 = vmatmul.mubr.f32.gmra.mxu0 %v6626
        %v6803 = vpop.f32.mrf.mxu0
        %v6804 = vadd.f32 0.0, %v6803
        %v6805 = vpop.f32.mrf.mxu0
        %6806 = vmatprep.mubr.f32.mxu0 0.0
        %6807 = vmatmul.mubr.f32.gmra.mxu0 %v6629
        %v6808 = vpop.f32.mrf.mxu0
        %v6809 = vadd.f32 0.0, %v6808
        %v6810 = vpop.f32.mrf.mxu0
        %6811 = vmatprep.mubr.f32.mxu0 0.0
        %6812 = vmatmul.mubr.f32.gmra.mxu0 %v6632
        %v6813 = vpop.f32.mrf.mxu0
        %v6814 = vadd.f32 0.0, %v6813
        %v6815 = vpop.f32.mrf.mxu0
        %6816 = vmatprep.mubr.f32.mxu0 0.0
        %6817 = vmatmul.mubr.f32.gmra.mxu0 %v6635
        %v6818 = vpop.f32.mrf.mxu0
        %v6819 = vadd.f32 0.0, %v6818
        %v6820 = vpop.f32.mrf.mxu0
        %6821 = vmatprep.mubr.f32.mxu0 0.0
        %6822 = vmatmul.mubr.f32.gmra.mxu0 %v6638
        %v6823 = vpop.f32.mrf.mxu0
        %v6824 = vadd.f32 0.0, %v6823
        %v6825 = vpop.f32.mrf.mxu0
        %6826 = vmatprep.mubr.f32.mxu0 0.0
        %6827 = vmatmul.mubr.f32.gmra.mxu0 %v6641
        %v6828 = vpop.f32.mrf.mxu0
        %v6829 = vadd.f32 0.0, %v6828
        %v6830 = vpop.f32.mrf.mxu0
        %6831 = vmatprep.mubr.f32.mxu0 0.0
        %6832 = vmatmul.mubr.f32.gmra.mxu0 %v6644
        %v6833 = vpop.f32.mrf.mxu0
        %v6834 = vadd.f32 0.0, %v6833
        %v6835 = vpop.f32.mrf.mxu0
        %6836 = vmatprep.mubr.f32.mxu0 0.0
        %6837 = vmatmul.mubr.f32.gmra.mxu0 %v6647
        %v6838 = vpop.f32.mrf.mxu0
        %v6839 = vadd.f32 0.0, %v6838
        %v6840 = vpop.f32.mrf.mxu0
        %6841 = vmatprep.mubr.f32.mxu0 0.0
        %6842 = vmatmul.mubr.f32.gmra.mxu0 %v6650
        %v6843 = vpop.f32.mrf.mxu0
        %v6844 = vadd.f32 0.0, %v6843
        %v6845 = vpop.f32.mrf.mxu0
        %6846 = vmatprep.mubr.f32.mxu0 0.0
        %6847 = vmatmul.mubr.f32.gmra.mxu0 %v6653
        %v6848 = vpop.f32.mrf.mxu0
        %v6849 = vadd.f32 0.0, %v6848
        %v6850 = vpop.f32.mrf.mxu0
        %6851 = vmatprep.mubr.f32.mxu0 0.0
        %6852 = vmatmul.mubr.f32.gmra.mxu0 %v6656
        %v6853 = vpop.f32.mrf.mxu0
        %v6854 = vadd.f32 0.0, %v6853
        %v6855 = vpop.f32.mrf.mxu0
        %6856 = vmatprep.mubr.f32.mxu0 0.0
        %6857 = vmatmul.mubr.f32.gmra.mxu0 %v6659
        %v6858 = vpop.f32.mrf.mxu0
        %v6859 = vadd.f32 0.0, %v6858
        %v6860 = vpop.f32.mrf.mxu0
        %6861 = vmatprep.mubr.f32.mxu0 0.0
        %6862 = vmatmul.mubr.f32.gmra.mxu0 %v6662
        %v6863 = vpop.f32.mrf.mxu0
        %v6864 = vadd.f32 0.0, %v6863
        %v6865 = vpop.f32.mrf.mxu0
        %6866 = vmatprep.mubr.f32.mxu0 0.0
        %6867 = vmatmul.mubr.f32.gmra.mxu0 %v6665
        %v6868 = vpop.f32.mrf.mxu0
        %v6869 = vadd.f32 0.0, %v6868
        %v6870 = vpop.f32.mrf.mxu0
        %6871 = vmatprep.mubr.f32.mxu0 0.0
        %6872 = vmatmul.mubr.f32.gmra.mxu0 %v6668
        %v6873 = vpop.f32.mrf.mxu0
        %v6874 = vadd.f32 0.0, %v6873
        %v6875 = vpop.f32.mrf.mxu0
        %6876 = vmatprep.mubr.f32.mxu0 0.0
        %6877 = vmatmul.mubr.f32.gmra.mxu0 %v6671
        %v6878 = vpop.f32.mrf.mxu0
        %v6879 = vadd.f32 0.0, %v6878
        %v6880 = vpop.f32.mrf.mxu0
        %6881 = vmatprep.mubr.f32.mxu0 0.0
        %6882 = vmatmul.mubr.f32.gmra.mxu0 %v6674
        %v6883 = vpop.f32.mrf.mxu0
        %v6884 = vadd.f32 0.0, %v6883
        %v6885 = vpop.f32.mrf.mxu0
        %6886 = vmatprep.mubr.f32.mxu0 0.0
        %6887 = vmatmul.mubr.f32.gmra.mxu0 %v6677
        %v6888 = vpop.f32.mrf.mxu0
        %v6889 = vadd.f32 0.0, %v6888
        %v6890 = vpop.f32.mrf.mxu0
        %6891 = vmatprep.mubr.f32.mxu0 0.0
        %6892 = vmatmul.mubr.f32.gmra.mxu0 %v6680
        %v6893 = vpop.f32.mrf.mxu0
        %v6894 = vadd.f32 0.0, %v6893
        %v6895 = vpop.f32.mrf.mxu0
        %6896 = vmatprep.mubr.f32.mxu0 0.0
        %6897 = vmatmul.mubr.f32.gmra.mxu0 %v6683
        %v6898 = vpop.f32.mrf.mxu0
        %v6899 = vadd.f32 0.0, %v6898
        %v6900 = vpop.f32.mrf.mxu0
        %6901 = vmatprep.mubr.f32.mxu0 0.0
        %6902 = vmatmul.mubr.f32.gmra.mxu0 %v6686
        %v6903 = vpop.f32.mrf.mxu0
        %v6904 = vadd.f32 0.0, %v6903
        %v6905 = vpop.f32.mrf.mxu0
        %6906 = vmatprep.mubr.f32.mxu0 0.0
        %6907 = vmatmul.mubr.f32.gmra.mxu0 %v6689
        %v6908 = vpop.f32.mrf.mxu0
        %v6909 = vadd.f32 0.0, %v6908
        %v6910 = vpop.f32.mrf.mxu0
        %6911 = vmatprep.mubr.f32.mxu0 0.0
        %6912 = vmatmul.mubr.f32.gmra.mxu0 %v6692
        %v6913 = vpop.f32.mrf.mxu0
        %v6914 = vadd.f32 0.0, %v6913
        %v6915 = vpop.f32.mrf.mxu0
        %6916 = vmatprep.mubr.f32.mxu0 0.0
        %6917 = vmatmul.mubr.f32.gmra.mxu0 %v6695
        %v6918 = vpop.f32.mrf.mxu0
        %v6919 = vadd.f32 0.0, %v6918
        %v6920 = vpop.f32.mrf.mxu0
        %6921 = vdwg.mxu0
        %v6923 = vlaneseq
        %v6924 = vshrl.u32 %v6923, 7
        %v6925 = vsub.s32 0, %v6924
        %v6926 = vrot.slane %v653, %v6925
        %v6928 = vmul.f32 %v6764, %v6926
        %v6929 = vmul.f32 %v6769, %v6926
        %v6930 = vmul.f32 %v6774, %v6926
        %v6931 = vmul.f32 %v6779, %v6926
        %v6932 = vmul.f32 %v6784, %v6926
        %v6933 = vmul.f32 %v6789, %v6926
        %v6934 = vmul.f32 %v6794, %v6926
        %v6935 = vmul.f32 %v6799, %v6926
        %v6936 = vmul.f32 %v6804, %v6926
        %v6937 = vmul.f32 %v6809, %v6926
        %v6938 = vmul.f32 %v6814, %v6926
        %v6939 = vmul.f32 %v6819, %v6926
        %v6940 = vmul.f32 %v6824, %v6926
        %v6941 = vmul.f32 %v6829, %v6926
        %v6942 = vmul.f32 %v6834, %v6926
        %v6943 = vmul.f32 %v6839, %v6926
        %v6944 = vmul.f32 %v6844, %v6926
        %v6945 = vmul.f32 %v6849, %v6926
        %v6946 = vmul.f32 %v6854, %v6926
        %v6947 = vmul.f32 %v6859, %v6926
        %v6948 = vmul.f32 %v6864, %v6926
        %v6949 = vmul.f32 %v6869, %v6926
        %v6950 = vmul.f32 %v6874, %v6926
        %v6951 = vmul.f32 %v6879, %v6926
        %v6952 = vmul.f32 %v6884, %v6926
        %v6953 = vmul.f32 %v6889, %v6926
        %v6954 = vmul.f32 %v6894, %v6926
        %v6955 = vmul.f32 %v6899, %v6926
        %v6956 = vmul.f32 %v6904, %v6926
        %v6957 = vmul.f32 %v6909, %v6926
        %v6958 = vmul.f32 %v6914, %v6926
        %v6959 = vmul.f32 %v6919, %v6926
        %v6961 = vlaneseq
        %v6962 = vshrl.u32 %v6961, 7
        %v6963 = vsub.s32 0, %v6962
        %v6964 = vrot.slane %v654, %v6963
        %v6966 = vadd.f32 %v6928, %v6964
        %v6967 = vadd.f32 %v6929, %v6964
        %v6968 = vadd.f32 %v6930, %v6964
        %v6969 = vadd.f32 %v6931, %v6964
        %v6970 = vadd.f32 %v6932, %v6964
        %v6971 = vadd.f32 %v6933, %v6964
        %v6972 = vadd.f32 %v6934, %v6964
        %v6973 = vadd.f32 %v6935, %v6964
        %v6974 = vadd.f32 %v6936, %v6964
        %v6975 = vadd.f32 %v6937, %v6964
        %v6976 = vadd.f32 %v6938, %v6964
        %v6977 = vadd.f32 %v6939, %v6964
        %v6978 = vadd.f32 %v6940, %v6964
        %v6979 = vadd.f32 %v6941, %v6964
        %v6980 = vadd.f32 %v6942, %v6964
        %v6981 = vadd.f32 %v6943, %v6964
        %v6982 = vadd.f32 %v6944, %v6964
        %v6983 = vadd.f32 %v6945, %v6964
        %v6984 = vadd.f32 %v6946, %v6964
        %v6985 = vadd.f32 %v6947, %v6964
        %v6986 = vadd.f32 %v6948, %v6964
        %v6987 = vadd.f32 %v6949, %v6964
        %v6988 = vadd.f32 %v6950, %v6964
        %v6989 = vadd.f32 %v6951, %v6964
        %v6990 = vadd.f32 %v6952, %v6964
        %v6991 = vadd.f32 %v6953, %v6964
        %v6992 = vadd.f32 %v6954, %v6964
        %v6993 = vadd.f32 %v6955, %v6964
        %v6994 = vadd.f32 %v6956, %v6964
        %v6995 = vadd.f32 %v6957, %v6964
        %v6996 = vadd.f32 %v6958, %v6964
        %v6997 = vadd.f32 %v6959, %v6964
        %v6998 = vmax.f32 %v6966, 0.0
        %v6999 = vmax.f32 %v6967, 0.0
        %v7000 = vmax.f32 %v6968, 0.0
        %v7001 = vmax.f32 %v6969, 0.0
        %v7002 = vmax.f32 %v6970, 0.0
        %v7003 = vmax.f32 %v6971, 0.0
        %v7004 = vmax.f32 %v6972, 0.0
        %v7005 = vmax.f32 %v6973, 0.0
        %v7006 = vmax.f32 %v6974, 0.0
        %v7007 = vmax.f32 %v6975, 0.0
        %v7008 = vmax.f32 %v6976, 0.0
        %v7009 = vmax.f32 %v6977, 0.0
        %v7010 = vmax.f32 %v6978, 0.0
        %v7011 = vmax.f32 %v6979, 0.0
        %v7012 = vmax.f32 %v6980, 0.0
        %v7013 = vmax.f32 %v6981, 0.0
        %v7014 = vmax.f32 %v6982, 0.0
        %v7015 = vmax.f32 %v6983, 0.0
        %v7016 = vmax.f32 %v6984, 0.0
        %v7017 = vmax.f32 %v6985, 0.0
        %v7018 = vmax.f32 %v6986, 0.0
        %v7019 = vmax.f32 %v6987, 0.0
        %v7020 = vmax.f32 %v6988, 0.0
        %v7021 = vmax.f32 %v6989, 0.0
        %v7022 = vmax.f32 %v6990, 0.0
        %v7023 = vmax.f32 %v6991, 0.0
        %v7024 = vmax.f32 %v6992, 0.0
        %v7025 = vmax.f32 %v6993, 0.0
        %v7026 = vmax.f32 %v6994, 0.0
        %v7027 = vmax.f32 %v6995, 0.0
        %v7028 = vmax.f32 %v6996, 0.0
        %v7029 = vmax.f32 %v6997, 0.0
        %v7062 = vcombine.high %v6998, %v6998
        %v7064 = vunpack.c.l.s4 1983009808
        %v7065 = vunpack.c.0.s8 %v7064
        %v7066 = vlaneseq
        %v7067 = vshrl.u32 %v7066, 7
        %v7068 = vsub.s32 %v7065, %v7067
        %v7069 = vrot.slane %v6998, %v7068
        %v7071 = vunpack.c.l.s4 1983009808
        %v7072 = vunpack.c.0.s8 %v7071
        %v7073 = vlaneseq
        %v7074 = vshrl.u32 %v7073, 7
        %v7075 = vsub.s32 %v7072, %v7074
        %v7076 = vrot.slane %v7062, %v7075
        %v7077 = vcombine.high %v7069, %v7069
        %v7078 = vcombine.high %v7076, %v7076
        %v7079 = vcombine.high %v6999, %v6999
        %v7081 = vunpack.c.l.s4 1983009808
        %v7082 = vunpack.c.0.s8 %v7081
        %v7083 = vlaneseq
        %v7084 = vshrl.u32 %v7083, 7
        %v7085 = vsub.s32 %v7082, %v7084
        %v7086 = vrot.slane %v6999, %v7085
        %v7088 = vunpack.c.l.s4 1983009808
        %v7089 = vunpack.c.0.s8 %v7088
        %v7090 = vlaneseq
        %v7091 = vshrl.u32 %v7090, 7
        %v7092 = vsub.s32 %v7089, %v7091
        %v7093 = vrot.slane %v7079, %v7092
        %v7094 = vcombine.high %v7086, %v7086
        %v7095 = vcombine.high %v7093, %v7093
        %v7096 = vcombine.high %v7000, %v7000
        %v7098 = vunpack.c.l.s4 1983009808
        %v7099 = vunpack.c.0.s8 %v7098
        %v7100 = vlaneseq
        %v7101 = vshrl.u32 %v7100, 7
        %v7102 = vsub.s32 %v7099, %v7101
        %v7103 = vrot.slane %v7000, %v7102
        %v7105 = vunpack.c.l.s4 1983009808
        %v7106 = vunpack.c.0.s8 %v7105
        %v7107 = vlaneseq
        %v7108 = vshrl.u32 %v7107, 7
        %v7109 = vsub.s32 %v7106, %v7108
        %v7110 = vrot.slane %v7096, %v7109
        %v7111 = vcombine.high %v7103, %v7103
        %v7112 = vcombine.high %v7110, %v7110
        %v7113 = vcombine.high %v7001, %v7001
        %v7115 = vunpack.c.l.s4 1983009808
        %v7116 = vunpack.c.0.s8 %v7115
        %v7117 = vlaneseq
        %v7118 = vshrl.u32 %v7117, 7
        %v7119 = vsub.s32 %v7116, %v7118
        %v7120 = vrot.slane %v7001, %v7119
        %v7122 = vunpack.c.l.s4 1983009808
        %v7123 = vunpack.c.0.s8 %v7122
        %v7124 = vlaneseq
        %v7125 = vshrl.u32 %v7124, 7
        %v7126 = vsub.s32 %v7123, %v7125
        %v7127 = vrot.slane %v7113, %v7126
        %v7128 = vcombine.high %v7120, %v7120
        %v7129 = vcombine.high %v7127, %v7127
        %v7130 = vcombine.high %v7002, %v7002
        %v7132 = vunpack.c.l.s4 1983009808
        %v7133 = vunpack.c.0.s8 %v7132
        %v7134 = vlaneseq
        %v7135 = vshrl.u32 %v7134, 7
        %v7136 = vsub.s32 %v7133, %v7135
        %v7137 = vrot.slane %v7002, %v7136
        %v7139 = vunpack.c.l.s4 1983009808
        %v7140 = vunpack.c.0.s8 %v7139
        %v7141 = vlaneseq
        %v7142 = vshrl.u32 %v7141, 7
        %v7143 = vsub.s32 %v7140, %v7142
        %v7144 = vrot.slane %v7130, %v7143
        %v7145 = vcombine.high %v7137, %v7137
        %v7146 = vcombine.high %v7144, %v7144
        %v7147 = vcombine.high %v7003, %v7003
        %v7149 = vunpack.c.l.s4 1983009808
        %v7150 = vunpack.c.0.s8 %v7149
        %v7151 = vlaneseq
        %v7152 = vshrl.u32 %v7151, 7
        %v7153 = vsub.s32 %v7150, %v7152
        %v7154 = vrot.slane %v7003, %v7153
        %v7156 = vunpack.c.l.s4 1983009808
        %v7157 = vunpack.c.0.s8 %v7156
        %v7158 = vlaneseq
        %v7159 = vshrl.u32 %v7158, 7
        %v7160 = vsub.s32 %v7157, %v7159
        %v7161 = vrot.slane %v7147, %v7160
        %v7162 = vcombine.high %v7154, %v7154
        %v7163 = vcombine.high %v7161, %v7161
        %v7164 = vcombine.high %v7004, %v7004
        %v7166 = vunpack.c.l.s4 1983009808
        %v7167 = vunpack.c.0.s8 %v7166
        %v7168 = vlaneseq
        %v7169 = vshrl.u32 %v7168, 7
        %v7170 = vsub.s32 %v7167, %v7169
        %v7171 = vrot.slane %v7004, %v7170
        %v7173 = vunpack.c.l.s4 1983009808
        %v7174 = vunpack.c.0.s8 %v7173
        %v7175 = vlaneseq
        %v7176 = vshrl.u32 %v7175, 7
        %v7177 = vsub.s32 %v7174, %v7176
        %v7178 = vrot.slane %v7164, %v7177
        %v7179 = vcombine.high %v7171, %v7171
        %v7180 = vcombine.high %v7178, %v7178
        %v7181 = vcombine.high %v7005, %v7005
        %v7183 = vunpack.c.l.s4 1983009808
        %v7184 = vunpack.c.0.s8 %v7183
        %v7185 = vlaneseq
        %v7186 = vshrl.u32 %v7185, 7
        %v7187 = vsub.s32 %v7184, %v7186
        %v7188 = vrot.slane %v7005, %v7187
        %v7190 = vunpack.c.l.s4 1983009808
        %v7191 = vunpack.c.0.s8 %v7190
        %v7192 = vlaneseq
        %v7193 = vshrl.u32 %v7192, 7
        %v7194 = vsub.s32 %v7191, %v7193
        %v7195 = vrot.slane %v7181, %v7194
        %v7196 = vcombine.high %v7188, %v7188
        %v7197 = vcombine.high %v7195, %v7195
        %v7198 = vcombine.high %v7006, %v7006
        %v7200 = vunpack.c.l.s4 1983009808
        %v7201 = vunpack.c.0.s8 %v7200
        %v7202 = vlaneseq
        %v7203 = vshrl.u32 %v7202, 7
        %v7204 = vsub.s32 %v7201, %v7203
        %v7205 = vrot.slane %v7006, %v7204
        %v7207 = vunpack.c.l.s4 1983009808
        %v7208 = vunpack.c.0.s8 %v7207
        %v7209 = vlaneseq
        %v7210 = vshrl.u32 %v7209, 7
        %v7211 = vsub.s32 %v7208, %v7210
        %v7212 = vrot.slane %v7198, %v7211
        %v7213 = vcombine.high %v7205, %v7205
        %v7214 = vcombine.high %v7212, %v7212
        %v7215 = vcombine.high %v7007, %v7007
        %v7217 = vunpack.c.l.s4 1983009808
        %v7218 = vunpack.c.0.s8 %v7217
        %v7219 = vlaneseq
        %v7220 = vshrl.u32 %v7219, 7
        %v7221 = vsub.s32 %v7218, %v7220
        %v7222 = vrot.slane %v7007, %v7221
        %v7224 = vunpack.c.l.s4 1983009808
        %v7225 = vunpack.c.0.s8 %v7224
        %v7226 = vlaneseq
        %v7227 = vshrl.u32 %v7226, 7
        %v7228 = vsub.s32 %v7225, %v7227
        %v7229 = vrot.slane %v7215, %v7228
        %v7230 = vcombine.high %v7222, %v7222
        %v7231 = vcombine.high %v7229, %v7229
        %v7232 = vcombine.high %v7008, %v7008
        %v7234 = vunpack.c.l.s4 1983009808
        %v7235 = vunpack.c.0.s8 %v7234
        %v7236 = vlaneseq
        %v7237 = vshrl.u32 %v7236, 7
        %v7238 = vsub.s32 %v7235, %v7237
        %v7239 = vrot.slane %v7008, %v7238
        %v7241 = vunpack.c.l.s4 1983009808
        %v7242 = vunpack.c.0.s8 %v7241
        %v7243 = vlaneseq
        %v7244 = vshrl.u32 %v7243, 7
        %v7245 = vsub.s32 %v7242, %v7244
        %v7246 = vrot.slane %v7232, %v7245
        %v7247 = vcombine.high %v7239, %v7239
        %v7248 = vcombine.high %v7246, %v7246
        %v7249 = vcombine.high %v7009, %v7009
        %v7251 = vunpack.c.l.s4 1983009808
        %v7252 = vunpack.c.0.s8 %v7251
        %v7253 = vlaneseq
        %v7254 = vshrl.u32 %v7253, 7
        %v7255 = vsub.s32 %v7252, %v7254
        %v7256 = vrot.slane %v7009, %v7255
        %v7258 = vunpack.c.l.s4 1983009808
        %v7259 = vunpack.c.0.s8 %v7258
        %v7260 = vlaneseq
        %v7261 = vshrl.u32 %v7260, 7
        %v7262 = vsub.s32 %v7259, %v7261
        %v7263 = vrot.slane %v7249, %v7262
        %v7264 = vcombine.high %v7256, %v7256
        %v7265 = vcombine.high %v7263, %v7263
        %v7266 = vcombine.high %v7010, %v7010
        %v7268 = vunpack.c.l.s4 1983009808
        %v7269 = vunpack.c.0.s8 %v7268
        %v7270 = vlaneseq
        %v7271 = vshrl.u32 %v7270, 7
        %v7272 = vsub.s32 %v7269, %v7271
        %v7273 = vrot.slane %v7010, %v7272
        %v7275 = vunpack.c.l.s4 1983009808
        %v7276 = vunpack.c.0.s8 %v7275
        %v7277 = vlaneseq
        %v7278 = vshrl.u32 %v7277, 7
        %v7279 = vsub.s32 %v7276, %v7278
        %v7280 = vrot.slane %v7266, %v7279
        %v7281 = vcombine.high %v7273, %v7273
        %v7282 = vcombine.high %v7280, %v7280
        %v7283 = vcombine.high %v7011, %v7011
        %v7285 = vunpack.c.l.s4 1983009808
        %v7286 = vunpack.c.0.s8 %v7285
        %v7287 = vlaneseq
        %v7288 = vshrl.u32 %v7287, 7
        %v7289 = vsub.s32 %v7286, %v7288
        %v7290 = vrot.slane %v7011, %v7289
        %v7292 = vunpack.c.l.s4 1983009808
        %v7293 = vunpack.c.0.s8 %v7292
        %v7294 = vlaneseq
        %v7295 = vshrl.u32 %v7294, 7
        %v7296 = vsub.s32 %v7293, %v7295
        %v7297 = vrot.slane %v7283, %v7296
        %v7298 = vcombine.high %v7290, %v7290
        %v7299 = vcombine.high %v7297, %v7297
        %v7300 = vcombine.high %v7012, %v7012
        %v7302 = vunpack.c.l.s4 1983009808
        %v7303 = vunpack.c.0.s8 %v7302
        %v7304 = vlaneseq
        %v7305 = vshrl.u32 %v7304, 7
        %v7306 = vsub.s32 %v7303, %v7305
        %v7307 = vrot.slane %v7012, %v7306
        %v7309 = vunpack.c.l.s4 1983009808
        %v7310 = vunpack.c.0.s8 %v7309
        %v7311 = vlaneseq
        %v7312 = vshrl.u32 %v7311, 7
        %v7313 = vsub.s32 %v7310, %v7312
        %v7314 = vrot.slane %v7300, %v7313
        %v7315 = vcombine.high %v7307, %v7307
        %v7316 = vcombine.high %v7314, %v7314
        %v7317 = vcombine.high %v7013, %v7013
        %v7319 = vunpack.c.l.s4 1983009808
        %v7320 = vunpack.c.0.s8 %v7319
        %v7321 = vlaneseq
        %v7322 = vshrl.u32 %v7321, 7
        %v7323 = vsub.s32 %v7320, %v7322
        %v7324 = vrot.slane %v7013, %v7323
        %v7326 = vunpack.c.l.s4 1983009808
        %v7327 = vunpack.c.0.s8 %v7326
        %v7328 = vlaneseq
        %v7329 = vshrl.u32 %v7328, 7
        %v7330 = vsub.s32 %v7327, %v7329
        %v7331 = vrot.slane %v7317, %v7330
        %v7332 = vcombine.high %v7324, %v7324
        %v7333 = vcombine.high %v7331, %v7331
        %v7334 = vcombine.high %v7014, %v7014
        %v7336 = vunpack.c.l.s4 1983009808
        %v7337 = vunpack.c.0.s8 %v7336
        %v7338 = vlaneseq
        %v7339 = vshrl.u32 %v7338, 7
        %v7340 = vsub.s32 %v7337, %v7339
        %v7341 = vrot.slane %v7014, %v7340
        %v7343 = vunpack.c.l.s4 1983009808
        %v7344 = vunpack.c.0.s8 %v7343
        %v7345 = vlaneseq
        %v7346 = vshrl.u32 %v7345, 7
        %v7347 = vsub.s32 %v7344, %v7346
        %v7348 = vrot.slane %v7334, %v7347
        %v7349 = vcombine.high %v7341, %v7341
        %v7350 = vcombine.high %v7348, %v7348
        %v7351 = vcombine.high %v7015, %v7015
        %v7353 = vunpack.c.l.s4 1983009808
        %v7354 = vunpack.c.0.s8 %v7353
        %v7355 = vlaneseq
        %v7356 = vshrl.u32 %v7355, 7
        %v7357 = vsub.s32 %v7354, %v7356
        %v7358 = vrot.slane %v7015, %v7357
        %v7360 = vunpack.c.l.s4 1983009808
        %v7361 = vunpack.c.0.s8 %v7360
        %v7362 = vlaneseq
        %v7363 = vshrl.u32 %v7362, 7
        %v7364 = vsub.s32 %v7361, %v7363
        %v7365 = vrot.slane %v7351, %v7364
        %v7366 = vcombine.high %v7358, %v7358
        %v7367 = vcombine.high %v7365, %v7365
        %v7368 = vcombine.high %v7016, %v7016
        %v7370 = vunpack.c.l.s4 1983009808
        %v7371 = vunpack.c.0.s8 %v7370
        %v7372 = vlaneseq
        %v7373 = vshrl.u32 %v7372, 7
        %v7374 = vsub.s32 %v7371, %v7373
        %v7375 = vrot.slane %v7016, %v7374
        %v7377 = vunpack.c.l.s4 1983009808
        %v7378 = vunpack.c.0.s8 %v7377
        %v7379 = vlaneseq
        %v7380 = vshrl.u32 %v7379, 7
        %v7381 = vsub.s32 %v7378, %v7380
        %v7382 = vrot.slane %v7368, %v7381
        %v7383 = vcombine.high %v7375, %v7375
        %v7384 = vcombine.high %v7382, %v7382
        %v7385 = vcombine.high %v7017, %v7017
        %v7387 = vunpack.c.l.s4 1983009808
        %v7388 = vunpack.c.0.s8 %v7387
        %v7389 = vlaneseq
        %v7390 = vshrl.u32 %v7389, 7
        %v7391 = vsub.s32 %v7388, %v7390
        %v7392 = vrot.slane %v7017, %v7391
        %v7394 = vunpack.c.l.s4 1983009808
        %v7395 = vunpack.c.0.s8 %v7394
        %v7396 = vlaneseq
        %v7397 = vshrl.u32 %v7396, 7
        %v7398 = vsub.s32 %v7395, %v7397
        %v7399 = vrot.slane %v7385, %v7398
        %v7400 = vcombine.high %v7392, %v7392
        %v7401 = vcombine.high %v7399, %v7399
        %v7402 = vcombine.high %v7018, %v7018
        %v7404 = vunpack.c.l.s4 1983009808
        %v7405 = vunpack.c.0.s8 %v7404
        %v7406 = vlaneseq
        %v7407 = vshrl.u32 %v7406, 7
        %v7408 = vsub.s32 %v7405, %v7407
        %v7409 = vrot.slane %v7018, %v7408
        %v7411 = vunpack.c.l.s4 1983009808
        %v7412 = vunpack.c.0.s8 %v7411
        %v7413 = vlaneseq
        %v7414 = vshrl.u32 %v7413, 7
        %v7415 = vsub.s32 %v7412, %v7414
        %v7416 = vrot.slane %v7402, %v7415
        %v7417 = vcombine.high %v7409, %v7409
        %v7418 = vcombine.high %v7416, %v7416
        %v7419 = vcombine.high %v7019, %v7019
        %v7421 = vunpack.c.l.s4 1983009808
        %v7422 = vunpack.c.0.s8 %v7421
        %v7423 = vlaneseq
        %v7424 = vshrl.u32 %v7423, 7
        %v7425 = vsub.s32 %v7422, %v7424
        %v7426 = vrot.slane %v7019, %v7425
        %v7428 = vunpack.c.l.s4 1983009808
        %v7429 = vunpack.c.0.s8 %v7428
        %v7430 = vlaneseq
        %v7431 = vshrl.u32 %v7430, 7
        %v7432 = vsub.s32 %v7429, %v7431
        %v7433 = vrot.slane %v7419, %v7432
        %v7434 = vcombine.high %v7426, %v7426
        %v7435 = vcombine.high %v7433, %v7433
        %v7436 = vcombine.high %v7020, %v7020
        %v7438 = vunpack.c.l.s4 1983009808
        %v7439 = vunpack.c.0.s8 %v7438
        %v7440 = vlaneseq
        %v7441 = vshrl.u32 %v7440, 7
        %v7442 = vsub.s32 %v7439, %v7441
        %v7443 = vrot.slane %v7020, %v7442
        %v7445 = vunpack.c.l.s4 1983009808
        %v7446 = vunpack.c.0.s8 %v7445
        %v7447 = vlaneseq
        %v7448 = vshrl.u32 %v7447, 7
        %v7449 = vsub.s32 %v7446, %v7448
        %v7450 = vrot.slane %v7436, %v7449
        %v7451 = vcombine.high %v7443, %v7443
        %v7452 = vcombine.high %v7450, %v7450
        %v7453 = vcombine.high %v7021, %v7021
        %v7455 = vunpack.c.l.s4 1983009808
        %v7456 = vunpack.c.0.s8 %v7455
        %v7457 = vlaneseq
        %v7458 = vshrl.u32 %v7457, 7
        %v7459 = vsub.s32 %v7456, %v7458
        %v7460 = vrot.slane %v7021, %v7459
        %v7462 = vunpack.c.l.s4 1983009808
        %v7463 = vunpack.c.0.s8 %v7462
        %v7464 = vlaneseq
        %v7465 = vshrl.u32 %v7464, 7
        %v7466 = vsub.s32 %v7463, %v7465
        %v7467 = vrot.slane %v7453, %v7466
        %v7468 = vcombine.high %v7460, %v7460
        %v7469 = vcombine.high %v7467, %v7467
        %v7470 = vcombine.high %v7022, %v7022
        %v7472 = vunpack.c.l.s4 1983009808
        %v7473 = vunpack.c.0.s8 %v7472
        %v7474 = vlaneseq
        %v7475 = vshrl.u32 %v7474, 7
        %v7476 = vsub.s32 %v7473, %v7475
        %v7477 = vrot.slane %v7022, %v7476
        %v7479 = vunpack.c.l.s4 1983009808
        %v7480 = vunpack.c.0.s8 %v7479
        %v7481 = vlaneseq
        %v7482 = vshrl.u32 %v7481, 7
        %v7483 = vsub.s32 %v7480, %v7482
        %v7484 = vrot.slane %v7470, %v7483
        %v7485 = vcombine.high %v7477, %v7477
        %v7486 = vcombine.high %v7484, %v7484
        %v7487 = vcombine.high %v7023, %v7023
        %v7489 = vunpack.c.l.s4 1983009808
        %v7490 = vunpack.c.0.s8 %v7489
        %v7491 = vlaneseq
        %v7492 = vshrl.u32 %v7491, 7
        %v7493 = vsub.s32 %v7490, %v7492
        %v7494 = vrot.slane %v7023, %v7493
        %v7496 = vunpack.c.l.s4 1983009808
        %v7497 = vunpack.c.0.s8 %v7496
        %v7498 = vlaneseq
        %v7499 = vshrl.u32 %v7498, 7
        %v7500 = vsub.s32 %v7497, %v7499
        %v7501 = vrot.slane %v7487, %v7500
        %v7502 = vcombine.high %v7494, %v7494
        %v7503 = vcombine.high %v7501, %v7501
        %v7504 = vcombine.high %v7024, %v7024
        %v7506 = vunpack.c.l.s4 1983009808
        %v7507 = vunpack.c.0.s8 %v7506
        %v7508 = vlaneseq
        %v7509 = vshrl.u32 %v7508, 7
        %v7510 = vsub.s32 %v7507, %v7509
        %v7511 = vrot.slane %v7024, %v7510
        %v7513 = vunpack.c.l.s4 1983009808
        %v7514 = vunpack.c.0.s8 %v7513
        %v7515 = vlaneseq
        %v7516 = vshrl.u32 %v7515, 7
        %v7517 = vsub.s32 %v7514, %v7516
        %v7518 = vrot.slane %v7504, %v7517
        %v7519 = vcombine.high %v7511, %v7511
        %v7520 = vcombine.high %v7518, %v7518
        %v7521 = vcombine.high %v7025, %v7025
        %v7523 = vunpack.c.l.s4 1983009808
        %v7524 = vunpack.c.0.s8 %v7523
        %v7525 = vlaneseq
        %v7526 = vshrl.u32 %v7525, 7
        %v7527 = vsub.s32 %v7524, %v7526
        %v7528 = vrot.slane %v7025, %v7527
        %v7530 = vunpack.c.l.s4 1983009808
        %v7531 = vunpack.c.0.s8 %v7530
        %v7532 = vlaneseq
        %v7533 = vshrl.u32 %v7532, 7
        %v7534 = vsub.s32 %v7531, %v7533
        %v7535 = vrot.slane %v7521, %v7534
        %v7536 = vcombine.high %v7528, %v7528
        %v7537 = vcombine.high %v7535, %v7535
        %v7538 = vcombine.high %v7026, %v7026
        %v7540 = vunpack.c.l.s4 1983009808
        %v7541 = vunpack.c.0.s8 %v7540
        %v7542 = vlaneseq
        %v7543 = vshrl.u32 %v7542, 7
        %v7544 = vsub.s32 %v7541, %v7543
        %v7545 = vrot.slane %v7026, %v7544
        %v7547 = vunpack.c.l.s4 1983009808
        %v7548 = vunpack.c.0.s8 %v7547
        %v7549 = vlaneseq
        %v7550 = vshrl.u32 %v7549, 7
        %v7551 = vsub.s32 %v7548, %v7550
        %v7552 = vrot.slane %v7538, %v7551
        %v7553 = vcombine.high %v7545, %v7545
        %v7554 = vcombine.high %v7552, %v7552
        %v7555 = vcombine.high %v7027, %v7027
        %v7557 = vunpack.c.l.s4 1983009808
        %v7558 = vunpack.c.0.s8 %v7557
        %v7559 = vlaneseq
        %v7560 = vshrl.u32 %v7559, 7
        %v7561 = vsub.s32 %v7558, %v7560
        %v7562 = vrot.slane %v7027, %v7561
        %v7564 = vunpack.c.l.s4 1983009808
        %v7565 = vunpack.c.0.s8 %v7564
        %v7566 = vlaneseq
        %v7567 = vshrl.u32 %v7566, 7
        %v7568 = vsub.s32 %v7565, %v7567
        %v7569 = vrot.slane %v7555, %v7568
        %v7570 = vcombine.high %v7562, %v7562
        %v7571 = vcombine.high %v7569, %v7569
        %v7572 = vcombine.high %v7028, %v7028
        %v7574 = vunpack.c.l.s4 1983009808
        %v7575 = vunpack.c.0.s8 %v7574
        %v7576 = vlaneseq
        %v7577 = vshrl.u32 %v7576, 7
        %v7578 = vsub.s32 %v7575, %v7577
        %v7579 = vrot.slane %v7028, %v7578
        %v7581 = vunpack.c.l.s4 1983009808
        %v7582 = vunpack.c.0.s8 %v7581
        %v7583 = vlaneseq
        %v7584 = vshrl.u32 %v7583, 7
        %v7585 = vsub.s32 %v7582, %v7584
        %v7586 = vrot.slane %v7572, %v7585
        %v7587 = vcombine.high %v7579, %v7579
        %v7588 = vcombine.high %v7586, %v7586
        %v7589 = vcombine.high %v7029, %v7029
        %v7591 = vunpack.c.l.s4 1983009808
        %v7592 = vunpack.c.0.s8 %v7591
        %v7593 = vlaneseq
        %v7594 = vshrl.u32 %v7593, 7
        %v7595 = vsub.s32 %v7592, %v7594
        %v7596 = vrot.slane %v7029, %v7595
        %v7598 = vunpack.c.l.s4 1983009808
        %v7599 = vunpack.c.0.s8 %v7598
        %v7600 = vlaneseq
        %v7601 = vshrl.u32 %v7600, 7
        %v7602 = vsub.s32 %v7599, %v7601
        %v7603 = vrot.slane %v7589, %v7602
        %v7604 = vcombine.high %v7596, %v7596
        %v7605 = vcombine.high %v7603, %v7603
        %vm7734 = vcmask 517120
        %v7735 = vsel %vm7734, %v7069, -inf
        %v7736 = vrot.slane %v7735, 4
        %v7737 = vmax.f32 %v7735, %v7736
        %v7738 = vrot.slane %v7737, 2
        %v7739 = vmax.f32 %v7737, %v7738
        %v7740 = vrot.slane %v7739, 1
        %v7741 = vmax.f32 %v7739, %v7740
        %v7742 = vsel %vm7734, %v7077, -inf
        %v7743 = vrot.slane %v7742, 4
        %v7744 = vmax.f32 %v7742, %v7743
        %v7745 = vrot.slane %v7744, 2
        %v7746 = vmax.f32 %v7744, %v7745
        %v7747 = vrot.slane %v7746, 1
        %v7748 = vmax.f32 %v7746, %v7747
        %v7749 = vsel %vm7734, %v7076, -inf
        %v7750 = vrot.slane %v7749, 4
        %v7751 = vmax.f32 %v7749, %v7750
        %v7752 = vrot.slane %v7751, 2
        %v7753 = vmax.f32 %v7751, %v7752
        %v7754 = vrot.slane %v7753, 1
        %v7755 = vmax.f32 %v7753, %v7754
        %v7756 = vsel %vm7734, %v7078, -inf
        %v7757 = vrot.slane %v7756, 4
        %v7758 = vmax.f32 %v7756, %v7757
        %v7759 = vrot.slane %v7758, 2
        %v7760 = vmax.f32 %v7758, %v7759
        %v7761 = vrot.slane %v7760, 1
        %v7762 = vmax.f32 %v7760, %v7761
        %v7763 = vsel %vm7734, %v7086, -inf
        %v7764 = vrot.slane %v7763, 4
        %v7765 = vmax.f32 %v7763, %v7764
        %v7766 = vrot.slane %v7765, 2
        %v7767 = vmax.f32 %v7765, %v7766
        %v7768 = vrot.slane %v7767, 1
        %v7769 = vmax.f32 %v7767, %v7768
        %v7770 = vsel %vm7734, %v7094, -inf
        %v7771 = vrot.slane %v7770, 4
        %v7772 = vmax.f32 %v7770, %v7771
        %v7773 = vrot.slane %v7772, 2
        %v7774 = vmax.f32 %v7772, %v7773
        %v7775 = vrot.slane %v7774, 1
        %v7776 = vmax.f32 %v7774, %v7775
        %v7777 = vsel %vm7734, %v7093, -inf
        %v7778 = vrot.slane %v7777, 4
        %v7779 = vmax.f32 %v7777, %v7778
        %v7780 = vrot.slane %v7779, 2
        %v7781 = vmax.f32 %v7779, %v7780
        %v7782 = vrot.slane %v7781, 1
        %v7783 = vmax.f32 %v7781, %v7782
        %v7784 = vsel %vm7734, %v7095, -inf
        %v7785 = vrot.slane %v7784, 4
        %v7786 = vmax.f32 %v7784, %v7785
        %v7787 = vrot.slane %v7786, 2
        %v7788 = vmax.f32 %v7786, %v7787
        %v7789 = vrot.slane %v7788, 1
        %v7790 = vmax.f32 %v7788, %v7789
        %v7791 = vsel %vm7734, %v7103, -inf
        %v7792 = vrot.slane %v7791, 4
        %v7793 = vmax.f32 %v7791, %v7792
        %v7794 = vrot.slane %v7793, 2
        %v7795 = vmax.f32 %v7793, %v7794
        %v7796 = vrot.slane %v7795, 1
        %v7797 = vmax.f32 %v7795, %v7796
        %v7798 = vsel %vm7734, %v7111, -inf
        %v7799 = vrot.slane %v7798, 4
        %v7800 = vmax.f32 %v7798, %v7799
        %v7801 = vrot.slane %v7800, 2
        %v7802 = vmax.f32 %v7800, %v7801
        %v7803 = vrot.slane %v7802, 1
        %v7804 = vmax.f32 %v7802, %v7803
        %v7805 = vsel %vm7734, %v7110, -inf
        %v7806 = vrot.slane %v7805, 4
        %v7807 = vmax.f32 %v7805, %v7806
        %v7808 = vrot.slane %v7807, 2
        %v7809 = vmax.f32 %v7807, %v7808
        %v7810 = vrot.slane %v7809, 1
        %v7811 = vmax.f32 %v7809, %v7810
        %v7812 = vsel %vm7734, %v7112, -inf
        %v7813 = vrot.slane %v7812, 4
        %v7814 = vmax.f32 %v7812, %v7813
        %v7815 = vrot.slane %v7814, 2
        %v7816 = vmax.f32 %v7814, %v7815
        %v7817 = vrot.slane %v7816, 1
        %v7818 = vmax.f32 %v7816, %v7817
        %v7819 = vsel %vm7734, %v7120, -inf
        %v7820 = vrot.slane %v7819, 4
        %v7821 = vmax.f32 %v7819, %v7820
        %v7822 = vrot.slane %v7821, 2
        %v7823 = vmax.f32 %v7821, %v7822
        %v7824 = vrot.slane %v7823, 1
        %v7825 = vmax.f32 %v7823, %v7824
        %v7826 = vsel %vm7734, %v7128, -inf
        %v7827 = vrot.slane %v7826, 4
        %v7828 = vmax.f32 %v7826, %v7827
        %v7829 = vrot.slane %v7828, 2
        %v7830 = vmax.f32 %v7828, %v7829
        %v7831 = vrot.slane %v7830, 1
        %v7832 = vmax.f32 %v7830, %v7831
        %v7833 = vsel %vm7734, %v7127, -inf
        %v7834 = vrot.slane %v7833, 4
        %v7835 = vmax.f32 %v7833, %v7834
        %v7836 = vrot.slane %v7835, 2
        %v7837 = vmax.f32 %v7835, %v7836
        %v7838 = vrot.slane %v7837, 1
        %v7839 = vmax.f32 %v7837, %v7838
        %v7840 = vsel %vm7734, %v7129, -inf
        %v7841 = vrot.slane %v7840, 4
        %v7842 = vmax.f32 %v7840, %v7841
        %v7843 = vrot.slane %v7842, 2
        %v7844 = vmax.f32 %v7842, %v7843
        %v7845 = vrot.slane %v7844, 1
        %v7846 = vmax.f32 %v7844, %v7845
        %v7847 = vsel %vm7734, %v7137, -inf
        %v7848 = vrot.slane %v7847, 4
        %v7849 = vmax.f32 %v7847, %v7848
        %v7850 = vrot.slane %v7849, 2
        %v7851 = vmax.f32 %v7849, %v7850
        %v7852 = vrot.slane %v7851, 1
        %v7853 = vmax.f32 %v7851, %v7852
        %v7854 = vsel %vm7734, %v7145, -inf
        %v7855 = vrot.slane %v7854, 4
        %v7856 = vmax.f32 %v7854, %v7855
        %v7857 = vrot.slane %v7856, 2
        %v7858 = vmax.f32 %v7856, %v7857
        %v7859 = vrot.slane %v7858, 1
        %v7860 = vmax.f32 %v7858, %v7859
        %v7861 = vsel %vm7734, %v7144, -inf
        %v7862 = vrot.slane %v7861, 4
        %v7863 = vmax.f32 %v7861, %v7862
        %v7864 = vrot.slane %v7863, 2
        %v7865 = vmax.f32 %v7863, %v7864
        %v7866 = vrot.slane %v7865, 1
        %v7867 = vmax.f32 %v7865, %v7866
        %v7868 = vsel %vm7734, %v7146, -inf
        %v7869 = vrot.slane %v7868, 4
        %v7870 = vmax.f32 %v7868, %v7869
        %v7871 = vrot.slane %v7870, 2
        %v7872 = vmax.f32 %v7870, %v7871
        %v7873 = vrot.slane %v7872, 1
        %v7874 = vmax.f32 %v7872, %v7873
        %v7875 = vsel %vm7734, %v7154, -inf
        %v7876 = vrot.slane %v7875, 4
        %v7877 = vmax.f32 %v7875, %v7876
        %v7878 = vrot.slane %v7877, 2
        %v7879 = vmax.f32 %v7877, %v7878
        %v7880 = vrot.slane %v7879, 1
        %v7881 = vmax.f32 %v7879, %v7880
        %v7882 = vsel %vm7734, %v7162, -inf
        %v7883 = vrot.slane %v7882, 4
        %v7884 = vmax.f32 %v7882, %v7883
        %v7885 = vrot.slane %v7884, 2
        %v7886 = vmax.f32 %v7884, %v7885
        %v7887 = vrot.slane %v7886, 1
        %v7888 = vmax.f32 %v7886, %v7887
        %v7889 = vsel %vm7734, %v7161, -inf
        %v7890 = vrot.slane %v7889, 4
        %v7891 = vmax.f32 %v7889, %v7890
        %v7892 = vrot.slane %v7891, 2
        %v7893 = vmax.f32 %v7891, %v7892
        %v7894 = vrot.slane %v7893, 1
        %v7895 = vmax.f32 %v7893, %v7894
        %v7896 = vsel %vm7734, %v7163, -inf
        %v7897 = vrot.slane %v7896, 4
        %v7898 = vmax.f32 %v7896, %v7897
        %v7899 = vrot.slane %v7898, 2
        %v7900 = vmax.f32 %v7898, %v7899
        %v7901 = vrot.slane %v7900, 1
        %v7902 = vmax.f32 %v7900, %v7901
        %v7903 = vsel %vm7734, %v7171, -inf
        %v7904 = vrot.slane %v7903, 4
        %v7905 = vmax.f32 %v7903, %v7904
        %v7906 = vrot.slane %v7905, 2
        %v7907 = vmax.f32 %v7905, %v7906
        %v7908 = vrot.slane %v7907, 1
        %v7909 = vmax.f32 %v7907, %v7908
        %v7910 = vsel %vm7734, %v7179, -inf
        %v7911 = vrot.slane %v7910, 4
        %v7912 = vmax.f32 %v7910, %v7911
        %v7913 = vrot.slane %v7912, 2
        %v7914 = vmax.f32 %v7912, %v7913
        %v7915 = vrot.slane %v7914, 1
        %v7916 = vmax.f32 %v7914, %v7915
        %v7917 = vsel %vm7734, %v7178, -inf
        %v7918 = vrot.slane %v7917, 4
        %v7919 = vmax.f32 %v7917, %v7918
        %v7920 = vrot.slane %v7919, 2
        %v7921 = vmax.f32 %v7919, %v7920
        %v7922 = vrot.slane %v7921, 1
        %v7923 = vmax.f32 %v7921, %v7922
        %v7924 = vsel %vm7734, %v7180, -inf
        %v7925 = vrot.slane %v7924, 4
        %v7926 = vmax.f32 %v7924, %v7925
        %v7927 = vrot.slane %v7926, 2
        %v7928 = vmax.f32 %v7926, %v7927
        %v7929 = vrot.slane %v7928, 1
        %v7930 = vmax.f32 %v7928, %v7929
        %v7931 = vsel %vm7734, %v7188, -inf
        %v7932 = vrot.slane %v7931, 4
        %v7933 = vmax.f32 %v7931, %v7932
        %v7934 = vrot.slane %v7933, 2
        %v7935 = vmax.f32 %v7933, %v7934
        %v7936 = vrot.slane %v7935, 1
        %v7937 = vmax.f32 %v7935, %v7936
        %v7938 = vsel %vm7734, %v7196, -inf
        %v7939 = vrot.slane %v7938, 4
        %v7940 = vmax.f32 %v7938, %v7939
        %v7941 = vrot.slane %v7940, 2
        %v7942 = vmax.f32 %v7940, %v7941
        %v7943 = vrot.slane %v7942, 1
        %v7944 = vmax.f32 %v7942, %v7943
        %v7945 = vsel %vm7734, %v7195, -inf
        %v7946 = vrot.slane %v7945, 4
        %v7947 = vmax.f32 %v7945, %v7946
        %v7948 = vrot.slane %v7947, 2
        %v7949 = vmax.f32 %v7947, %v7948
        %v7950 = vrot.slane %v7949, 1
        %v7951 = vmax.f32 %v7949, %v7950
        %v7952 = vsel %vm7734, %v7197, -inf
        %v7953 = vrot.slane %v7952, 4
        %v7954 = vmax.f32 %v7952, %v7953
        %v7955 = vrot.slane %v7954, 2
        %v7956 = vmax.f32 %v7954, %v7955
        %v7957 = vrot.slane %v7956, 1
        %v7958 = vmax.f32 %v7956, %v7957
        %v7959 = vsel %vm7734, %v7205, -inf
        %v7960 = vrot.slane %v7959, 4
        %v7961 = vmax.f32 %v7959, %v7960
        %v7962 = vrot.slane %v7961, 2
        %v7963 = vmax.f32 %v7961, %v7962
        %v7964 = vrot.slane %v7963, 1
        %v7965 = vmax.f32 %v7963, %v7964
        %v7966 = vsel %vm7734, %v7213, -inf
        %v7967 = vrot.slane %v7966, 4
        %v7968 = vmax.f32 %v7966, %v7967
        %v7969 = vrot.slane %v7968, 2
        %v7970 = vmax.f32 %v7968, %v7969
        %v7971 = vrot.slane %v7970, 1
        %v7972 = vmax.f32 %v7970, %v7971
        %v7973 = vsel %vm7734, %v7212, -inf
        %v7974 = vrot.slane %v7973, 4
        %v7975 = vmax.f32 %v7973, %v7974
        %v7976 = vrot.slane %v7975, 2
        %v7977 = vmax.f32 %v7975, %v7976
        %v7978 = vrot.slane %v7977, 1
        %v7979 = vmax.f32 %v7977, %v7978
        %v7980 = vsel %vm7734, %v7214, -inf
        %v7981 = vrot.slane %v7980, 4
        %v7982 = vmax.f32 %v7980, %v7981
        %v7983 = vrot.slane %v7982, 2
        %v7984 = vmax.f32 %v7982, %v7983
        %v7985 = vrot.slane %v7984, 1
        %v7986 = vmax.f32 %v7984, %v7985
        %v7987 = vsel %vm7734, %v7222, -inf
        %v7988 = vrot.slane %v7987, 4
        %v7989 = vmax.f32 %v7987, %v7988
        %v7990 = vrot.slane %v7989, 2
        %v7991 = vmax.f32 %v7989, %v7990
        %v7992 = vrot.slane %v7991, 1
        %v7993 = vmax.f32 %v7991, %v7992
        %v7994 = vsel %vm7734, %v7230, -inf
        %v7995 = vrot.slane %v7994, 4
        %v7996 = vmax.f32 %v7994, %v7995
        %v7997 = vrot.slane %v7996, 2
        %v7998 = vmax.f32 %v7996, %v7997
        %v7999 = vrot.slane %v7998, 1
        %v8000 = vmax.f32 %v7998, %v7999
        %v8001 = vsel %vm7734, %v7229, -inf
        %v8002 = vrot.slane %v8001, 4
        %v8003 = vmax.f32 %v8001, %v8002
        %v8004 = vrot.slane %v8003, 2
        %v8005 = vmax.f32 %v8003, %v8004
        %v8006 = vrot.slane %v8005, 1
        %v8007 = vmax.f32 %v8005, %v8006
        %v8008 = vsel %vm7734, %v7231, -inf
        %v8009 = vrot.slane %v8008, 4
        %v8010 = vmax.f32 %v8008, %v8009
        %v8011 = vrot.slane %v8010, 2
        %v8012 = vmax.f32 %v8010, %v8011
        %v8013 = vrot.slane %v8012, 1
        %v8014 = vmax.f32 %v8012, %v8013
        %v8015 = vsel %vm7734, %v7239, -inf
        %v8016 = vrot.slane %v8015, 4
        %v8017 = vmax.f32 %v8015, %v8016
        %v8018 = vrot.slane %v8017, 2
        %v8019 = vmax.f32 %v8017, %v8018
        %v8020 = vrot.slane %v8019, 1
        %v8021 = vmax.f32 %v8019, %v8020
        %v8022 = vsel %vm7734, %v7247, -inf
        %v8023 = vrot.slane %v8022, 4
        %v8024 = vmax.f32 %v8022, %v8023
        %v8025 = vrot.slane %v8024, 2
        %v8026 = vmax.f32 %v8024, %v8025
        %v8027 = vrot.slane %v8026, 1
        %v8028 = vmax.f32 %v8026, %v8027
        %v8029 = vsel %vm7734, %v7246, -inf
        %v8030 = vrot.slane %v8029, 4
        %v8031 = vmax.f32 %v8029, %v8030
        %v8032 = vrot.slane %v8031, 2
        %v8033 = vmax.f32 %v8031, %v8032
        %v8034 = vrot.slane %v8033, 1
        %v8035 = vmax.f32 %v8033, %v8034
        %v8036 = vsel %vm7734, %v7248, -inf
        %v8037 = vrot.slane %v8036, 4
        %v8038 = vmax.f32 %v8036, %v8037
        %v8039 = vrot.slane %v8038, 2
        %v8040 = vmax.f32 %v8038, %v8039
        %v8041 = vrot.slane %v8040, 1
        %v8042 = vmax.f32 %v8040, %v8041
        %v8043 = vsel %vm7734, %v7256, -inf
        %v8044 = vrot.slane %v8043, 4
        %v8045 = vmax.f32 %v8043, %v8044
        %v8046 = vrot.slane %v8045, 2
        %v8047 = vmax.f32 %v8045, %v8046
        %v8048 = vrot.slane %v8047, 1
        %v8049 = vmax.f32 %v8047, %v8048
        %v8050 = vsel %vm7734, %v7264, -inf
        %v8051 = vrot.slane %v8050, 4
        %v8052 = vmax.f32 %v8050, %v8051
        %v8053 = vrot.slane %v8052, 2
        %v8054 = vmax.f32 %v8052, %v8053
        %v8055 = vrot.slane %v8054, 1
        %v8056 = vmax.f32 %v8054, %v8055
        %v8057 = vsel %vm7734, %v7263, -inf
        %v8058 = vrot.slane %v8057, 4
        %v8059 = vmax.f32 %v8057, %v8058
        %v8060 = vrot.slane %v8059, 2
        %v8061 = vmax.f32 %v8059, %v8060
        %v8062 = vrot.slane %v8061, 1
        %v8063 = vmax.f32 %v8061, %v8062
        %v8064 = vsel %vm7734, %v7265, -inf
        %v8065 = vrot.slane %v8064, 4
        %v8066 = vmax.f32 %v8064, %v8065
        %v8067 = vrot.slane %v8066, 2
        %v8068 = vmax.f32 %v8066, %v8067
        %v8069 = vrot.slane %v8068, 1
        %v8070 = vmax.f32 %v8068, %v8069
        %v8071 = vsel %vm7734, %v7273, -inf
        %v8072 = vrot.slane %v8071, 4
        %v8073 = vmax.f32 %v8071, %v8072
        %v8074 = vrot.slane %v8073, 2
        %v8075 = vmax.f32 %v8073, %v8074
        %v8076 = vrot.slane %v8075, 1
        %v8077 = vmax.f32 %v8075, %v8076
        %v8078 = vsel %vm7734, %v7281, -inf
        %v8079 = vrot.slane %v8078, 4
        %v8080 = vmax.f32 %v8078, %v8079
        %v8081 = vrot.slane %v8080, 2
        %v8082 = vmax.f32 %v8080, %v8081
        %v8083 = vrot.slane %v8082, 1
        %v8084 = vmax.f32 %v8082, %v8083
        %v8085 = vsel %vm7734, %v7280, -inf
        %v8086 = vrot.slane %v8085, 4
        %v8087 = vmax.f32 %v8085, %v8086
        %v8088 = vrot.slane %v8087, 2
        %v8089 = vmax.f32 %v8087, %v8088
        %v8090 = vrot.slane %v8089, 1
        %v8091 = vmax.f32 %v8089, %v8090
        %v8092 = vsel %vm7734, %v7282, -inf
        %v8093 = vrot.slane %v8092, 4
        %v8094 = vmax.f32 %v8092, %v8093
        %v8095 = vrot.slane %v8094, 2
        %v8096 = vmax.f32 %v8094, %v8095
        %v8097 = vrot.slane %v8096, 1
        %v8098 = vmax.f32 %v8096, %v8097
        %v8099 = vsel %vm7734, %v7290, -inf
        %v8100 = vrot.slane %v8099, 4
        %v8101 = vmax.f32 %v8099, %v8100
        %v8102 = vrot.slane %v8101, 2
        %v8103 = vmax.f32 %v8101, %v8102
        %v8104 = vrot.slane %v8103, 1
        %v8105 = vmax.f32 %v8103, %v8104
        %v8106 = vsel %vm7734, %v7298, -inf
        %v8107 = vrot.slane %v8106, 4
        %v8108 = vmax.f32 %v8106, %v8107
        %v8109 = vrot.slane %v8108, 2
        %v8110 = vmax.f32 %v8108, %v8109
        %v8111 = vrot.slane %v8110, 1
        %v8112 = vmax.f32 %v8110, %v8111
        %v8113 = vsel %vm7734, %v7297, -inf
        %v8114 = vrot.slane %v8113, 4
        %v8115 = vmax.f32 %v8113, %v8114
        %v8116 = vrot.slane %v8115, 2
        %v8117 = vmax.f32 %v8115, %v8116
        %v8118 = vrot.slane %v8117, 1
        %v8119 = vmax.f32 %v8117, %v8118
        %v8120 = vsel %vm7734, %v7299, -inf
        %v8121 = vrot.slane %v8120, 4
        %v8122 = vmax.f32 %v8120, %v8121
        %v8123 = vrot.slane %v8122, 2
        %v8124 = vmax.f32 %v8122, %v8123
        %v8125 = vrot.slane %v8124, 1
        %v8126 = vmax.f32 %v8124, %v8125
        %v8127 = vsel %vm7734, %v7307, -inf
        %v8128 = vrot.slane %v8127, 4
        %v8129 = vmax.f32 %v8127, %v8128
        %v8130 = vrot.slane %v8129, 2
        %v8131 = vmax.f32 %v8129, %v8130
        %v8132 = vrot.slane %v8131, 1
        %v8133 = vmax.f32 %v8131, %v8132
        %v8134 = vsel %vm7734, %v7315, -inf
        %v8135 = vrot.slane %v8134, 4
        %v8136 = vmax.f32 %v8134, %v8135
        %v8137 = vrot.slane %v8136, 2
        %v8138 = vmax.f32 %v8136, %v8137
        %v8139 = vrot.slane %v8138, 1
        %v8140 = vmax.f32 %v8138, %v8139
        %v8141 = vsel %vm7734, %v7314, -inf
        %v8142 = vrot.slane %v8141, 4
        %v8143 = vmax.f32 %v8141, %v8142
        %v8144 = vrot.slane %v8143, 2
        %v8145 = vmax.f32 %v8143, %v8144
        %v8146 = vrot.slane %v8145, 1
        %v8147 = vmax.f32 %v8145, %v8146
        %v8148 = vsel %vm7734, %v7316, -inf
        %v8149 = vrot.slane %v8148, 4
        %v8150 = vmax.f32 %v8148, %v8149
        %v8151 = vrot.slane %v8150, 2
        %v8152 = vmax.f32 %v8150, %v8151
        %v8153 = vrot.slane %v8152, 1
        %v8154 = vmax.f32 %v8152, %v8153
        %v8155 = vsel %vm7734, %v7324, -inf
        %v8156 = vrot.slane %v8155, 4
        %v8157 = vmax.f32 %v8155, %v8156
        %v8158 = vrot.slane %v8157, 2
        %v8159 = vmax.f32 %v8157, %v8158
        %v8160 = vrot.slane %v8159, 1
        %v8161 = vmax.f32 %v8159, %v8160
        %v8162 = vsel %vm7734, %v7332, -inf
        %v8163 = vrot.slane %v8162, 4
        %v8164 = vmax.f32 %v8162, %v8163
        %v8165 = vrot.slane %v8164, 2
        %v8166 = vmax.f32 %v8164, %v8165
        %v8167 = vrot.slane %v8166, 1
        %v8168 = vmax.f32 %v8166, %v8167
        %v8169 = vsel %vm7734, %v7331, -inf
        %v8170 = vrot.slane %v8169, 4
        %v8171 = vmax.f32 %v8169, %v8170
        %v8172 = vrot.slane %v8171, 2
        %v8173 = vmax.f32 %v8171, %v8172
        %v8174 = vrot.slane %v8173, 1
        %v8175 = vmax.f32 %v8173, %v8174
        %v8176 = vsel %vm7734, %v7333, -inf
        %v8177 = vrot.slane %v8176, 4
        %v8178 = vmax.f32 %v8176, %v8177
        %v8179 = vrot.slane %v8178, 2
        %v8180 = vmax.f32 %v8178, %v8179
        %v8181 = vrot.slane %v8180, 1
        %v8182 = vmax.f32 %v8180, %v8181
        %v8183 = vsel %vm7734, %v7341, -inf
        %v8184 = vrot.slane %v8183, 4
        %v8185 = vmax.f32 %v8183, %v8184
        %v8186 = vrot.slane %v8185, 2
        %v8187 = vmax.f32 %v8185, %v8186
        %v8188 = vrot.slane %v8187, 1
        %v8189 = vmax.f32 %v8187, %v8188
        %v8190 = vsel %vm7734, %v7349, -inf
        %v8191 = vrot.slane %v8190, 4
        %v8192 = vmax.f32 %v8190, %v8191
        %v8193 = vrot.slane %v8192, 2
        %v8194 = vmax.f32 %v8192, %v8193
        %v8195 = vrot.slane %v8194, 1
        %v8196 = vmax.f32 %v8194, %v8195
        %v8197 = vsel %vm7734, %v7348, -inf
        %v8198 = vrot.slane %v8197, 4
        %v8199 = vmax.f32 %v8197, %v8198
        %v8200 = vrot.slane %v8199, 2
        %v8201 = vmax.f32 %v8199, %v8200
        %v8202 = vrot.slane %v8201, 1
        %v8203 = vmax.f32 %v8201, %v8202
        %v8204 = vsel %vm7734, %v7350, -inf
        %v8205 = vrot.slane %v8204, 4
        %v8206 = vmax.f32 %v8204, %v8205
        %v8207 = vrot.slane %v8206, 2
        %v8208 = vmax.f32 %v8206, %v8207
        %v8209 = vrot.slane %v8208, 1
        %v8210 = vmax.f32 %v8208, %v8209
        %v8211 = vsel %vm7734, %v7358, -inf
        %v8212 = vrot.slane %v8211, 4
        %v8213 = vmax.f32 %v8211, %v8212
        %v8214 = vrot.slane %v8213, 2
        %v8215 = vmax.f32 %v8213, %v8214
        %v8216 = vrot.slane %v8215, 1
        %v8217 = vmax.f32 %v8215, %v8216
        %v8218 = vsel %vm7734, %v7366, -inf
        %v8219 = vrot.slane %v8218, 4
        %v8220 = vmax.f32 %v8218, %v8219
        %v8221 = vrot.slane %v8220, 2
        %v8222 = vmax.f32 %v8220, %v8221
        %v8223 = vrot.slane %v8222, 1
        %v8224 = vmax.f32 %v8222, %v8223
        %v8225 = vsel %vm7734, %v7365, -inf
        %v8226 = vrot.slane %v8225, 4
        %v8227 = vmax.f32 %v8225, %v8226
        %v8228 = vrot.slane %v8227, 2
        %v8229 = vmax.f32 %v8227, %v8228
        %v8230 = vrot.slane %v8229, 1
        %v8231 = vmax.f32 %v8229, %v8230
        %v8232 = vsel %vm7734, %v7367, -inf
        %v8233 = vrot.slane %v8232, 4
        %v8234 = vmax.f32 %v8232, %v8233
        %v8235 = vrot.slane %v8234, 2
        %v8236 = vmax.f32 %v8234, %v8235
        %v8237 = vrot.slane %v8236, 1
        %v8238 = vmax.f32 %v8236, %v8237
        %v8239 = vsel %vm7734, %v7375, -inf
        %v8240 = vrot.slane %v8239, 4
        %v8241 = vmax.f32 %v8239, %v8240
        %v8242 = vrot.slane %v8241, 2
        %v8243 = vmax.f32 %v8241, %v8242
        %v8244 = vrot.slane %v8243, 1
        %v8245 = vmax.f32 %v8243, %v8244
        %v8246 = vsel %vm7734, %v7383, -inf
        %v8247 = vrot.slane %v8246, 4
        %v8248 = vmax.f32 %v8246, %v8247
        %v8249 = vrot.slane %v8248, 2
        %v8250 = vmax.f32 %v8248, %v8249
        %v8251 = vrot.slane %v8250, 1
        %v8252 = vmax.f32 %v8250, %v8251
        %v8253 = vsel %vm7734, %v7382, -inf
        %v8254 = vrot.slane %v8253, 4
        %v8255 = vmax.f32 %v8253, %v8254
        %v8256 = vrot.slane %v8255, 2
        %v8257 = vmax.f32 %v8255, %v8256
        %v8258 = vrot.slane %v8257, 1
        %v8259 = vmax.f32 %v8257, %v8258
        %v8260 = vsel %vm7734, %v7384, -inf
        %v8261 = vrot.slane %v8260, 4
        %v8262 = vmax.f32 %v8260, %v8261
        %v8263 = vrot.slane %v8262, 2
        %v8264 = vmax.f32 %v8262, %v8263
        %v8265 = vrot.slane %v8264, 1
        %v8266 = vmax.f32 %v8264, %v8265
        %v8267 = vsel %vm7734, %v7392, -inf
        %v8268 = vrot.slane %v8267, 4
        %v8269 = vmax.f32 %v8267, %v8268
        %v8270 = vrot.slane %v8269, 2
        %v8271 = vmax.f32 %v8269, %v8270
        %v8272 = vrot.slane %v8271, 1
        %v8273 = vmax.f32 %v8271, %v8272
        %v8274 = vsel %vm7734, %v7400, -inf
        %v8275 = vrot.slane %v8274, 4
        %v8276 = vmax.f32 %v8274, %v8275
        %v8277 = vrot.slane %v8276, 2
        %v8278 = vmax.f32 %v8276, %v8277
        %v8279 = vrot.slane %v8278, 1
        %v8280 = vmax.f32 %v8278, %v8279
        %v8281 = vsel %vm7734, %v7399, -inf
        %v8282 = vrot.slane %v8281, 4
        %v8283 = vmax.f32 %v8281, %v8282
        %v8284 = vrot.slane %v8283, 2
        %v8285 = vmax.f32 %v8283, %v8284
        %v8286 = vrot.slane %v8285, 1
        %v8287 = vmax.f32 %v8285, %v8286
        %v8288 = vsel %vm7734, %v7401, -inf
        %v8289 = vrot.slane %v8288, 4
        %v8290 = vmax.f32 %v8288, %v8289
        %v8291 = vrot.slane %v8290, 2
        %v8292 = vmax.f32 %v8290, %v8291
        %v8293 = vrot.slane %v8292, 1
        %v8294 = vmax.f32 %v8292, %v8293
        %v8295 = vsel %vm7734, %v7409, -inf
        %v8296 = vrot.slane %v8295, 4
        %v8297 = vmax.f32 %v8295, %v8296
        %v8298 = vrot.slane %v8297, 2
        %v8299 = vmax.f32 %v8297, %v8298
        %v8300 = vrot.slane %v8299, 1
        %v8301 = vmax.f32 %v8299, %v8300
        %v8302 = vsel %vm7734, %v7417, -inf
        %v8303 = vrot.slane %v8302, 4
        %v8304 = vmax.f32 %v8302, %v8303
        %v8305 = vrot.slane %v8304, 2
        %v8306 = vmax.f32 %v8304, %v8305
        %v8307 = vrot.slane %v8306, 1
        %v8308 = vmax.f32 %v8306, %v8307
        %v8309 = vsel %vm7734, %v7416, -inf
        %v8310 = vrot.slane %v8309, 4
        %v8311 = vmax.f32 %v8309, %v8310
        %v8312 = vrot.slane %v8311, 2
        %v8313 = vmax.f32 %v8311, %v8312
        %v8314 = vrot.slane %v8313, 1
        %v8315 = vmax.f32 %v8313, %v8314
        %v8316 = vsel %vm7734, %v7418, -inf
        %v8317 = vrot.slane %v8316, 4
        %v8318 = vmax.f32 %v8316, %v8317
        %v8319 = vrot.slane %v8318, 2
        %v8320 = vmax.f32 %v8318, %v8319
        %v8321 = vrot.slane %v8320, 1
        %v8322 = vmax.f32 %v8320, %v8321
        %v8323 = vsel %vm7734, %v7426, -inf
        %v8324 = vrot.slane %v8323, 4
        %v8325 = vmax.f32 %v8323, %v8324
        %v8326 = vrot.slane %v8325, 2
        %v8327 = vmax.f32 %v8325, %v8326
        %v8328 = vrot.slane %v8327, 1
        %v8329 = vmax.f32 %v8327, %v8328
        %v8330 = vsel %vm7734, %v7434, -inf
        %v8331 = vrot.slane %v8330, 4
        %v8332 = vmax.f32 %v8330, %v8331
        %v8333 = vrot.slane %v8332, 2
        %v8334 = vmax.f32 %v8332, %v8333
        %v8335 = vrot.slane %v8334, 1
        %v8336 = vmax.f32 %v8334, %v8335
        %v8337 = vsel %vm7734, %v7433, -inf
        %v8338 = vrot.slane %v8337, 4
        %v8339 = vmax.f32 %v8337, %v8338
        %v8340 = vrot.slane %v8339, 2
        %v8341 = vmax.f32 %v8339, %v8340
        %v8342 = vrot.slane %v8341, 1
        %v8343 = vmax.f32 %v8341, %v8342
        %v8344 = vsel %vm7734, %v7435, -inf
        %v8345 = vrot.slane %v8344, 4
        %v8346 = vmax.f32 %v8344, %v8345
        %v8347 = vrot.slane %v8346, 2
        %v8348 = vmax.f32 %v8346, %v8347
        %v8349 = vrot.slane %v8348, 1
        %v8350 = vmax.f32 %v8348, %v8349
        %v8351 = vsel %vm7734, %v7443, -inf
        %v8352 = vrot.slane %v8351, 4
        %v8353 = vmax.f32 %v8351, %v8352
        %v8354 = vrot.slane %v8353, 2
        %v8355 = vmax.f32 %v8353, %v8354
        %v8356 = vrot.slane %v8355, 1
        %v8357 = vmax.f32 %v8355, %v8356
        %v8358 = vsel %vm7734, %v7451, -inf
        %v8359 = vrot.slane %v8358, 4
        %v8360 = vmax.f32 %v8358, %v8359
        %v8361 = vrot.slane %v8360, 2
        %v8362 = vmax.f32 %v8360, %v8361
        %v8363 = vrot.slane %v8362, 1
        %v8364 = vmax.f32 %v8362, %v8363
        %v8365 = vsel %vm7734, %v7450, -inf
        %v8366 = vrot.slane %v8365, 4
        %v8367 = vmax.f32 %v8365, %v8366
        %v8368 = vrot.slane %v8367, 2
        %v8369 = vmax.f32 %v8367, %v8368
        %v8370 = vrot.slane %v8369, 1
        %v8371 = vmax.f32 %v8369, %v8370
        %v8372 = vsel %vm7734, %v7452, -inf
        %v8373 = vrot.slane %v8372, 4
        %v8374 = vmax.f32 %v8372, %v8373
        %v8375 = vrot.slane %v8374, 2
        %v8376 = vmax.f32 %v8374, %v8375
        %v8377 = vrot.slane %v8376, 1
        %v8378 = vmax.f32 %v8376, %v8377
        %v8379 = vsel %vm7734, %v7460, -inf
        %v8380 = vrot.slane %v8379, 4
        %v8381 = vmax.f32 %v8379, %v8380
        %v8382 = vrot.slane %v8381, 2
        %v8383 = vmax.f32 %v8381, %v8382
        %v8384 = vrot.slane %v8383, 1
        %v8385 = vmax.f32 %v8383, %v8384
        %v8386 = vsel %vm7734, %v7468, -inf
        %v8387 = vrot.slane %v8386, 4
        %v8388 = vmax.f32 %v8386, %v8387
        %v8389 = vrot.slane %v8388, 2
        %v8390 = vmax.f32 %v8388, %v8389
        %v8391 = vrot.slane %v8390, 1
        %v8392 = vmax.f32 %v8390, %v8391
        %v8393 = vsel %vm7734, %v7467, -inf
        %v8394 = vrot.slane %v8393, 4
        %v8395 = vmax.f32 %v8393, %v8394
        %v8396 = vrot.slane %v8395, 2
        %v8397 = vmax.f32 %v8395, %v8396
        %v8398 = vrot.slane %v8397, 1
        %v8399 = vmax.f32 %v8397, %v8398
        %v8400 = vsel %vm7734, %v7469, -inf
        %v8401 = vrot.slane %v8400, 4
        %v8402 = vmax.f32 %v8400, %v8401
        %v8403 = vrot.slane %v8402, 2
        %v8404 = vmax.f32 %v8402, %v8403
        %v8405 = vrot.slane %v8404, 1
        %v8406 = vmax.f32 %v8404, %v8405
        %v8407 = vsel %vm7734, %v7477, -inf
        %v8408 = vrot.slane %v8407, 4
        %v8409 = vmax.f32 %v8407, %v8408
        %v8410 = vrot.slane %v8409, 2
        %v8411 = vmax.f32 %v8409, %v8410
        %v8412 = vrot.slane %v8411, 1
        %v8413 = vmax.f32 %v8411, %v8412
        %v8414 = vsel %vm7734, %v7485, -inf
        %v8415 = vrot.slane %v8414, 4
        %v8416 = vmax.f32 %v8414, %v8415
        %v8417 = vrot.slane %v8416, 2
        %v8418 = vmax.f32 %v8416, %v8417
        %v8419 = vrot.slane %v8418, 1
        %v8420 = vmax.f32 %v8418, %v8419
        %v8421 = vsel %vm7734, %v7484, -inf
        %v8422 = vrot.slane %v8421, 4
        %v8423 = vmax.f32 %v8421, %v8422
        %v8424 = vrot.slane %v8423, 2
        %v8425 = vmax.f32 %v8423, %v8424
        %v8426 = vrot.slane %v8425, 1
        %v8427 = vmax.f32 %v8425, %v8426
        %v8428 = vsel %vm7734, %v7486, -inf
        %v8429 = vrot.slane %v8428, 4
        %v8430 = vmax.f32 %v8428, %v8429
        %v8431 = vrot.slane %v8430, 2
        %v8432 = vmax.f32 %v8430, %v8431
        %v8433 = vrot.slane %v8432, 1
        %v8434 = vmax.f32 %v8432, %v8433
        %v8435 = vsel %vm7734, %v7494, -inf
        %v8436 = vrot.slane %v8435, 4
        %v8437 = vmax.f32 %v8435, %v8436
        %v8438 = vrot.slane %v8437, 2
        %v8439 = vmax.f32 %v8437, %v8438
        %v8440 = vrot.slane %v8439, 1
        %v8441 = vmax.f32 %v8439, %v8440
        %v8442 = vsel %vm7734, %v7502, -inf
        %v8443 = vrot.slane %v8442, 4
        %v8444 = vmax.f32 %v8442, %v8443
        %v8445 = vrot.slane %v8444, 2
        %v8446 = vmax.f32 %v8444, %v8445
        %v8447 = vrot.slane %v8446, 1
        %v8448 = vmax.f32 %v8446, %v8447
        %v8449 = vsel %vm7734, %v7501, -inf
        %v8450 = vrot.slane %v8449, 4
        %v8451 = vmax.f32 %v8449, %v8450
        %v8452 = vrot.slane %v8451, 2
        %v8453 = vmax.f32 %v8451, %v8452
        %v8454 = vrot.slane %v8453, 1
        %v8455 = vmax.f32 %v8453, %v8454
        %v8456 = vsel %vm7734, %v7503, -inf
        %v8457 = vrot.slane %v8456, 4
        %v8458 = vmax.f32 %v8456, %v8457
        %v8459 = vrot.slane %v8458, 2
        %v8460 = vmax.f32 %v8458, %v8459
        %v8461 = vrot.slane %v8460, 1
        %v8462 = vmax.f32 %v8460, %v8461
        %v8463 = vsel %vm7734, %v7511, -inf
        %v8464 = vrot.slane %v8463, 4
        %v8465 = vmax.f32 %v8463, %v8464
        %v8466 = vrot.slane %v8465, 2
        %v8467 = vmax.f32 %v8465, %v8466
        %v8468 = vrot.slane %v8467, 1
        %v8469 = vmax.f32 %v8467, %v8468
        %v8470 = vsel %vm7734, %v7519, -inf
        %v8471 = vrot.slane %v8470, 4
        %v8472 = vmax.f32 %v8470, %v8471
        %v8473 = vrot.slane %v8472, 2
        %v8474 = vmax.f32 %v8472, %v8473
        %v8475 = vrot.slane %v8474, 1
        %v8476 = vmax.f32 %v8474, %v8475
        %v8477 = vsel %vm7734, %v7518, -inf
        %v8478 = vrot.slane %v8477, 4
        %v8479 = vmax.f32 %v8477, %v8478
        %v8480 = vrot.slane %v8479, 2
        %v8481 = vmax.f32 %v8479, %v8480
        %v8482 = vrot.slane %v8481, 1
        %v8483 = vmax.f32 %v8481, %v8482
        %v8484 = vsel %vm7734, %v7520, -inf
        %v8485 = vrot.slane %v8484, 4
        %v8486 = vmax.f32 %v8484, %v8485
        %v8487 = vrot.slane %v8486, 2
        %v8488 = vmax.f32 %v8486, %v8487
        %v8489 = vrot.slane %v8488, 1
        %v8490 = vmax.f32 %v8488, %v8489
        %v8491 = vsel %vm7734, %v7528, -inf
        %v8492 = vrot.slane %v8491, 4
        %v8493 = vmax.f32 %v8491, %v8492
        %v8494 = vrot.slane %v8493, 2
        %v8495 = vmax.f32 %v8493, %v8494
        %v8496 = vrot.slane %v8495, 1
        %v8497 = vmax.f32 %v8495, %v8496
        %v8498 = vsel %vm7734, %v7536, -inf
        %v8499 = vrot.slane %v8498, 4
        %v8500 = vmax.f32 %v8498, %v8499
        %v8501 = vrot.slane %v8500, 2
        %v8502 = vmax.f32 %v8500, %v8501
        %v8503 = vrot.slane %v8502, 1
        %v8504 = vmax.f32 %v8502, %v8503
        %v8505 = vsel %vm7734, %v7535, -inf
        %v8506 = vrot.slane %v8505, 4
        %v8507 = vmax.f32 %v8505, %v8506
        %v8508 = vrot.slane %v8507, 2
        %v8509 = vmax.f32 %v8507, %v8508
        %v8510 = vrot.slane %v8509, 1
        %v8511 = vmax.f32 %v8509, %v8510
        %v8512 = vsel %vm7734, %v7537, -inf
        %v8513 = vrot.slane %v8512, 4
        %v8514 = vmax.f32 %v8512, %v8513
        %v8515 = vrot.slane %v8514, 2
        %v8516 = vmax.f32 %v8514, %v8515
        %v8517 = vrot.slane %v8516, 1
        %v8518 = vmax.f32 %v8516, %v8517
        %v8519 = vsel %vm7734, %v7545, -inf
        %v8520 = vrot.slane %v8519, 4
        %v8521 = vmax.f32 %v8519, %v8520
        %v8522 = vrot.slane %v8521, 2
        %v8523 = vmax.f32 %v8521, %v8522
        %v8524 = vrot.slane %v8523, 1
        %v8525 = vmax.f32 %v8523, %v8524
        %v8526 = vsel %vm7734, %v7553, -inf
        %v8527 = vrot.slane %v8526, 4
        %v8528 = vmax.f32 %v8526, %v8527
        %v8529 = vrot.slane %v8528, 2
        %v8530 = vmax.f32 %v8528, %v8529
        %v8531 = vrot.slane %v8530, 1
        %v8532 = vmax.f32 %v8530, %v8531
        %v8533 = vsel %vm7734, %v7552, -inf
        %v8534 = vrot.slane %v8533, 4
        %v8535 = vmax.f32 %v8533, %v8534
        %v8536 = vrot.slane %v8535, 2
        %v8537 = vmax.f32 %v8535, %v8536
        %v8538 = vrot.slane %v8537, 1
        %v8539 = vmax.f32 %v8537, %v8538
        %v8540 = vsel %vm7734, %v7554, -inf
        %v8541 = vrot.slane %v8540, 4
        %v8542 = vmax.f32 %v8540, %v8541
        %v8543 = vrot.slane %v8542, 2
        %v8544 = vmax.f32 %v8542, %v8543
        %v8545 = vrot.slane %v8544, 1
        %v8546 = vmax.f32 %v8544, %v8545
        %v8547 = vsel %vm7734, %v7562, -inf
        %v8548 = vrot.slane %v8547, 4
        %v8549 = vmax.f32 %v8547, %v8548
        %v8550 = vrot.slane %v8549, 2
        %v8551 = vmax.f32 %v8549, %v8550
        %v8552 = vrot.slane %v8551, 1
        %v8553 = vmax.f32 %v8551, %v8552
        %v8554 = vsel %vm7734, %v7570, -inf
        %v8555 = vrot.slane %v8554, 4
        %v8556 = vmax.f32 %v8554, %v8555
        %v8557 = vrot.slane %v8556, 2
        %v8558 = vmax.f32 %v8556, %v8557
        %v8559 = vrot.slane %v8558, 1
        %v8560 = vmax.f32 %v8558, %v8559
        %v8561 = vsel %vm7734, %v7569, -inf
        %v8562 = vrot.slane %v8561, 4
        %v8563 = vmax.f32 %v8561, %v8562
        %v8564 = vrot.slane %v8563, 2
        %v8565 = vmax.f32 %v8563, %v8564
        %v8566 = vrot.slane %v8565, 1
        %v8567 = vmax.f32 %v8565, %v8566
        %v8568 = vsel %vm7734, %v7571, -inf
        %v8569 = vrot.slane %v8568, 4
        %v8570 = vmax.f32 %v8568, %v8569
        %v8571 = vrot.slane %v8570, 2
        %v8572 = vmax.f32 %v8570, %v8571
        %v8573 = vrot.slane %v8572, 1
        %v8574 = vmax.f32 %v8572, %v8573
        %v8575 = vsel %vm7734, %v7579, -inf
        %v8576 = vrot.slane %v8575, 4
        %v8577 = vmax.f32 %v8575, %v8576
        %v8578 = vrot.slane %v8577, 2
        %v8579 = vmax.f32 %v8577, %v8578
        %v8580 = vrot.slane %v8579, 1
        %v8581 = vmax.f32 %v8579, %v8580
        %v8582 = vsel %vm7734, %v7587, -inf
        %v8583 = vrot.slane %v8582, 4
        %v8584 = vmax.f32 %v8582, %v8583
        %v8585 = vrot.slane %v8584, 2
        %v8586 = vmax.f32 %v8584, %v8585
        %v8587 = vrot.slane %v8586, 1
        %v8588 = vmax.f32 %v8586, %v8587
        %v8589 = vsel %vm7734, %v7586, -inf
        %v8590 = vrot.slane %v8589, 4
        %v8591 = vmax.f32 %v8589, %v8590
        %v8592 = vrot.slane %v8591, 2
        %v8593 = vmax.f32 %v8591, %v8592
        %v8594 = vrot.slane %v8593, 1
        %v8595 = vmax.f32 %v8593, %v8594
        %v8596 = vsel %vm7734, %v7588, -inf
        %v8597 = vrot.slane %v8596, 4
        %v8598 = vmax.f32 %v8596, %v8597
        %v8599 = vrot.slane %v8598, 2
        %v8600 = vmax.f32 %v8598, %v8599
        %v8601 = vrot.slane %v8600, 1
        %v8602 = vmax.f32 %v8600, %v8601
        %v8603 = vsel %vm7734, %v7596, -inf
        %v8604 = vrot.slane %v8603, 4
        %v8605 = vmax.f32 %v8603, %v8604
        %v8606 = vrot.slane %v8605, 2
        %v8607 = vmax.f32 %v8605, %v8606
        %v8608 = vrot.slane %v8607, 1
        %v8609 = vmax.f32 %v8607, %v8608
        %v8610 = vsel %vm7734, %v7604, -inf
        %v8611 = vrot.slane %v8610, 4
        %v8612 = vmax.f32 %v8610, %v8611
        %v8613 = vrot.slane %v8612, 2
        %v8614 = vmax.f32 %v8612, %v8613
        %v8615 = vrot.slane %v8614, 1
        %v8616 = vmax.f32 %v8614, %v8615
        %v8617 = vsel %vm7734, %v7603, -inf
        %v8618 = vrot.slane %v8617, 4
        %v8619 = vmax.f32 %v8617, %v8618
        %v8620 = vrot.slane %v8619, 2
        %v8621 = vmax.f32 %v8619, %v8620
        %v8622 = vrot.slane %v8621, 1
        %v8623 = vmax.f32 %v8621, %v8622
        %v8624 = vsel %vm7734, %v7605, -inf
        %v8625 = vrot.slane %v8624, 4
        %v8626 = vmax.f32 %v8624, %v8625
        %v8627 = vrot.slane %v8626, 2
        %v8628 = vmax.f32 %v8626, %v8627
        %v8629 = vrot.slane %v8628, 1
        %v8630 = vmax.f32 %v8628, %v8629
        %v8759 = vsel %vm5903, %v7748, %v7741
        %v8760 = vsel %vm5905, %v7755, %v8759
        %v8761 = vsel %vm5907, %v7762, %v8760
        %v8762 = vsel %vm5909, %v7769, %v8761
        %v8763 = vsel %vm5911, %v7776, %v8762
        %v8764 = vsel %vm5913, %v7783, %v8763
        %v8765 = vsel %vm5915, %v7797, %v7790
        %v8766 = vsel %vm5903, %v7804, %v8765
        %v8767 = vsel %vm5905, %v7811, %v8766
        %v8768 = vsel %vm5907, %v7818, %v8767
        %v8769 = vsel %vm5909, %v7825, %v8768
        %v8770 = vsel %vm5911, %v7832, %v8769
        %v8771 = vsel %vm5913, %v7839, %v8770
        %v8772 = vsel %vm5903, %v7860, %v7853
        %v8773 = vsel %vm5905, %v7867, %v8772
        %v8774 = vsel %vm5907, %v7874, %v8773
        %v8775 = vsel %vm5909, %v7881, %v8774
        %v8776 = vsel %vm5911, %v7888, %v8775
        %v8777 = vsel %vm5913, %v7895, %v8776
        %v8778 = vsel %vm5915, %v7909, %v7902
        %v8779 = vsel %vm5903, %v7916, %v8778
        %v8780 = vsel %vm5905, %v7923, %v8779
        %v8781 = vsel %vm5907, %v7930, %v8780
        %v8782 = vsel %vm5909, %v7937, %v8781
        %v8783 = vsel %vm5911, %v7944, %v8782
        %v8784 = vsel %vm5913, %v7951, %v8783
        %v8785 = vsel %vm5903, %v7972, %v7965
        %v8786 = vsel %vm5905, %v7979, %v8785
        %v8787 = vsel %vm5907, %v7986, %v8786
        %v8788 = vsel %vm5909, %v7993, %v8787
        %v8789 = vsel %vm5911, %v8000, %v8788
        %v8790 = vsel %vm5913, %v8007, %v8789
        %v8791 = vsel %vm5915, %v8021, %v8014
        %v8792 = vsel %vm5903, %v8028, %v8791
        %v8793 = vsel %vm5905, %v8035, %v8792
        %v8794 = vsel %vm5907, %v8042, %v8793
        %v8795 = vsel %vm5909, %v8049, %v8794
        %v8796 = vsel %vm5911, %v8056, %v8795
        %v8797 = vsel %vm5913, %v8063, %v8796
        %v8798 = vsel %vm5903, %v8084, %v8077
        %v8799 = vsel %vm5905, %v8091, %v8798
        %v8800 = vsel %vm5907, %v8098, %v8799
        %v8801 = vsel %vm5909, %v8105, %v8800
        %v8802 = vsel %vm5911, %v8112, %v8801
        %v8803 = vsel %vm5913, %v8119, %v8802
        %v8804 = vsel %vm5915, %v8133, %v8126
        %v8805 = vsel %vm5903, %v8140, %v8804
        %v8806 = vsel %vm5905, %v8147, %v8805
        %v8807 = vsel %vm5907, %v8154, %v8806
        %v8808 = vsel %vm5909, %v8161, %v8807
        %v8809 = vsel %vm5911, %v8168, %v8808
        %v8810 = vsel %vm5913, %v8175, %v8809
        %v8811 = vsel %vm5903, %v8196, %v8189
        %v8812 = vsel %vm5905, %v8203, %v8811
        %v8813 = vsel %vm5907, %v8210, %v8812
        %v8814 = vsel %vm5909, %v8217, %v8813
        %v8815 = vsel %vm5911, %v8224, %v8814
        %v8816 = vsel %vm5913, %v8231, %v8815
        %v8817 = vsel %vm5915, %v8245, %v8238
        %v8818 = vsel %vm5903, %v8252, %v8817
        %v8819 = vsel %vm5905, %v8259, %v8818
        %v8820 = vsel %vm5907, %v8266, %v8819
        %v8821 = vsel %vm5909, %v8273, %v8820
        %v8822 = vsel %vm5911, %v8280, %v8821
        %v8823 = vsel %vm5913, %v8287, %v8822
        %v8824 = vsel %vm5903, %v8308, %v8301
        %v8825 = vsel %vm5905, %v8315, %v8824
        %v8826 = vsel %vm5907, %v8322, %v8825
        %v8827 = vsel %vm5909, %v8329, %v8826
        %v8828 = vsel %vm5911, %v8336, %v8827
        %v8829 = vsel %vm5913, %v8343, %v8828
        %v8830 = vsel %vm5915, %v8357, %v8350
        %v8831 = vsel %vm5903, %v8364, %v8830
        %v8832 = vsel %vm5905, %v8371, %v8831
        %v8833 = vsel %vm5907, %v8378, %v8832
        %v8834 = vsel %vm5909, %v8385, %v8833
        %v8835 = vsel %vm5911, %v8392, %v8834
        %v8836 = vsel %vm5913, %v8399, %v8835
        %v8837 = vsel %vm5903, %v8420, %v8413
        %v8838 = vsel %vm5905, %v8427, %v8837
        %v8839 = vsel %vm5907, %v8434, %v8838
        %v8840 = vsel %vm5909, %v8441, %v8839
        %v8841 = vsel %vm5911, %v8448, %v8840
        %v8842 = vsel %vm5913, %v8455, %v8841
        %v8843 = vsel %vm5915, %v8469, %v8462
        %v8844 = vsel %vm5903, %v8476, %v8843
        %v8845 = vsel %vm5905, %v8483, %v8844
        %v8846 = vsel %vm5907, %v8490, %v8845
        %v8847 = vsel %vm5909, %v8497, %v8846
        %v8848 = vsel %vm5911, %v8504, %v8847
        %v8849 = vsel %vm5913, %v8511, %v8848
        %v8850 = vsel %vm5903, %v8532, %v8525
        %v8851 = vsel %vm5905, %v8539, %v8850
        %v8852 = vsel %vm5907, %v8546, %v8851
        %v8853 = vsel %vm5909, %v8553, %v8852
        %v8854 = vsel %vm5911, %v8560, %v8853
        %v8855 = vsel %vm5913, %v8567, %v8854
        %v8856 = vsel %vm5915, %v8581, %v8574
        %v8857 = vsel %vm5903, %v8588, %v8856
        %v8858 = vsel %vm5905, %v8595, %v8857
        %v8859 = vsel %vm5907, %v8602, %v8858
        %v8860 = vsel %vm5909, %v8609, %v8859
        %v8861 = vsel %vm5911, %v8616, %v8860
        %v8862 = vsel %vm5913, %v8623, %v8861
        %v8887 = vsel %vm891, 0.0, %v8764
        %v8888 = vsel %vm891, 0.0, %v8777
        %v8889 = vsel %vm891, 0.0, %v8790
        %v8890 = vsel %vm891, 0.0, %v8803
        %v8891 = vsel %vm891, 0.0, %v8816
        %v8892 = vsel %vm891, 0.0, %v8829
        %v8893 = vsel %vm891, 0.0, %v8842
        %v8894 = vsel %vm891, 0.0, %v8855
        %v8895 = vsel %vm891, %v7846, 0.0
        %v8896 = vsel %vm891, %v7958, 0.0
        %v8897 = vsel %vm891, %v8070, 0.0
        %v8898 = vsel %vm891, %v8182, 0.0
        %v8899 = vsel %vm891, %v8294, 0.0
        %v8900 = vsel %vm891, %v8406, 0.0
        %v8901 = vsel %vm891, %v8518, 0.0
        %v8902 = vsel %vm891, %v8630, 0.0
        %v8919 = vrot.slane %v8887, 1
        %v8920 = vrot.slane %v8771, 1
        %v8921 = vsel %vm1564, %v8919, %v8920
        %v8922 = vrot.slane %v8895, 1
        %v8923 = vsel %vm1564, %v8920, %v8922
        %v8924 = vrot.slane %v8888, 1
        %v8925 = vrot.slane %v8784, 1
        %v8926 = vsel %vm1564, %v8924, %v8925
        %v8927 = vrot.slane %v8896, 1
        %v8928 = vsel %vm1564, %v8925, %v8927
        %v8929 = vrot.slane %v8889, 1
        %v8930 = vrot.slane %v8797, 1
        %v8931 = vsel %vm1564, %v8929, %v8930
        %v8932 = vrot.slane %v8897, 1
        %v8933 = vsel %vm1564, %v8930, %v8932
        %v8934 = vrot.slane %v8890, 1
        %v8935 = vrot.slane %v8810, 1
        %v8936 = vsel %vm1564, %v8934, %v8935
        %v8937 = vrot.slane %v8898, 1
        %v8938 = vsel %vm1564, %v8935, %v8937
        %v8939 = vrot.slane %v8891, 1
        %v8940 = vrot.slane %v8823, 1
        %v8941 = vsel %vm1564, %v8939, %v8940
        %v8942 = vrot.slane %v8899, 1
        %v8943 = vsel %vm1564, %v8940, %v8942
        %v8944 = vrot.slane %v8892, 1
        %v8945 = vrot.slane %v8836, 1
        %v8946 = vsel %vm1564, %v8944, %v8945
        %v8947 = vrot.slane %v8900, 1
        %v8948 = vsel %vm1564, %v8945, %v8947
        %v8949 = vrot.slane %v8893, 1
        %v8950 = vrot.slane %v8849, 1
        %v8951 = vsel %vm1564, %v8949, %v8950
        %v8952 = vrot.slane %v8901, 1
        %v8953 = vsel %vm1564, %v8950, %v8952
        %v8954 = vrot.slane %v8894, 1
        %v8955 = vrot.slane %v8862, 1
        %v8956 = vsel %vm1564, %v8954, %v8955
        %v8957 = vrot.slane %v8902, 1
        %v8958 = vsel %vm1564, %v8955, %v8957
        %8959 = vrot.lane.b32.xlu0 %v8921, 64
        %v8960 = vpop.permute.xlu0 %8959
        %8961 = vrot.lane.b32.xlu0 %v8923, 64
        %v8962 = vpop.permute.xlu0 %8961
        %8963 = vrot.lane.b32.xlu0 %v8926, 64
        %v8964 = vpop.permute.xlu0 %8963
        %8965 = vrot.lane.b32.xlu0 %v8928, 64
        %v8966 = vpop.permute.xlu0 %8965
        %8967 = vrot.lane.b32.xlu0 %v8931, 64
        %v8968 = vpop.permute.xlu0 %8967
        %8969 = vrot.lane.b32.xlu0 %v8933, 64
        %v8970 = vpop.permute.xlu0 %8969
        %8971 = vrot.lane.b32.xlu0 %v8936, 64
        %v8972 = vpop.permute.xlu0 %8971
        %8973 = vrot.lane.b32.xlu0 %v8938, 64
        %v8974 = vpop.permute.xlu0 %8973
        %8975 = vrot.lane.b32.xlu0 %v8941, 64
        %v8976 = vpop.permute.xlu0 %8975
        %8977 = vrot.lane.b32.xlu0 %v8943, 64
        %v8978 = vpop.permute.xlu0 %8977
        %8979 = vrot.lane.b32.xlu0 %v8946, 64
        %v8980 = vpop.permute.xlu0 %8979
        %8981 = vrot.lane.b32.xlu0 %v8948, 64
        %v8982 = vpop.permute.xlu0 %8981
        %8983 = vrot.lane.b32.xlu0 %v8951, 64
        %v8984 = vpop.permute.xlu0 %8983
        %8985 = vrot.lane.b32.xlu0 %v8953, 64
        %v8986 = vpop.permute.xlu0 %8985
        %8987 = vrot.lane.b32.xlu0 %v8956, 64
        %v8988 = vpop.permute.xlu0 %8987
        %8989 = vrot.lane.b32.xlu0 %v8958, 64
        %v8990 = vpop.permute.xlu0 %8989
        %v9007 = vrot.slane %v8887, 2
        %v9008 = vrot.slane %v8771, 2
        %v9009 = vsel %vm1977, %v9007, %v9008
        %v9010 = vrot.slane %v8895, 2
        %v9011 = vsel %vm1977, %v9008, %v9010
        %v9012 = vrot.slane %v8888, 2
        %v9013 = vrot.slane %v8784, 2
        %v9014 = vsel %vm1977, %v9012, %v9013
        %v9015 = vrot.slane %v8896, 2
        %v9016 = vsel %vm1977, %v9013, %v9015
        %v9017 = vrot.slane %v8889, 2
        %v9018 = vrot.slane %v8797, 2
        %v9019 = vsel %vm1977, %v9017, %v9018
        %v9020 = vrot.slane %v8897, 2
        %v9021 = vsel %vm1977, %v9018, %v9020
        %v9022 = vrot.slane %v8890, 2
        %v9023 = vrot.slane %v8810, 2
        %v9024 = vsel %vm1977, %v9022, %v9023
        %v9025 = vrot.slane %v8898, 2
        %v9026 = vsel %vm1977, %v9023, %v9025
        %v9027 = vrot.slane %v8891, 2
        %v9028 = vrot.slane %v8823, 2
        %v9029 = vsel %vm1977, %v9027, %v9028
        %v9030 = vrot.slane %v8899, 2
        %v9031 = vsel %vm1977, %v9028, %v9030
        %v9032 = vrot.slane %v8892, 2
        %v9033 = vrot.slane %v8836, 2
        %v9034 = vsel %vm1977, %v9032, %v9033
        %v9035 = vrot.slane %v8900, 2
        %v9036 = vsel %vm1977, %v9033, %v9035
        %v9037 = vrot.slane %v8893, 2
        %v9038 = vrot.slane %v8849, 2
        %v9039 = vsel %vm1977, %v9037, %v9038
        %v9040 = vrot.slane %v8901, 2
        %v9041 = vsel %vm1977, %v9038, %v9040
        %v9042 = vrot.slane %v8894, 2
        %v9043 = vrot.slane %v8862, 2
        %v9044 = vsel %vm1977, %v9042, %v9043
        %v9045 = vrot.slane %v8902, 2
        %v9046 = vsel %vm1977, %v9043, %v9045
        %v9047 = vsel %vm6567, %v8887, %v8960
        %v9048 = vsel %vm6567, %v8771, %v8962
        %v9049 = vsel %vm6567, %v8888, %v8964
        %v9050 = vsel %vm6567, %v8784, %v8966
        %v9051 = vsel %vm6567, %v8889, %v8968
        %v9052 = vsel %vm6567, %v8797, %v8970
        %v9053 = vsel %vm6567, %v8890, %v8972
        %v9054 = vsel %vm6567, %v8810, %v8974
        %v9055 = vsel %vm6567, %v8891, %v8976
        %v9056 = vsel %vm6567, %v8823, %v8978
        %v9057 = vsel %vm6567, %v8892, %v8980
        %v9058 = vsel %vm6567, %v8836, %v8982
        %v9059 = vsel %vm6567, %v8893, %v8984
        %v9060 = vsel %vm6567, %v8849, %v8986
        %v9061 = vsel %vm6567, %v8894, %v8988
        %v9062 = vsel %vm6567, %v8862, %v8990
        %v9063 = vsel %vm6567, %v9009, 0
        %v9065 = vsel %vm6567, %v9011, 0
        %v9067 = vsel %vm6567, %v9014, 0
        %v9069 = vsel %vm6567, %v9016, 0
        %v9071 = vsel %vm6567, %v9019, 0
        %v9073 = vsel %vm6567, %v9021, 0
        %v9075 = vsel %vm6567, %v9024, 0
        %v9077 = vsel %vm6567, %v9026, 0
        %v9079 = vsel %vm6567, %v9029, 0
        %v9081 = vsel %vm6567, %v9031, 0
        %v9083 = vsel %vm6567, %v9034, 0
        %v9085 = vsel %vm6567, %v9036, 0
        %v9087 = vsel %vm6567, %v9039, 0
        %v9089 = vsel %vm6567, %v9041, 0
        %v9091 = vsel %vm6567, %v9044, 0
        %v9093 = vsel %vm6567, %v9046, 0
        %9095 = vmatprep.subr.mxu0 0.0
        %9096 = vmatpush1.msra.mxu0 %v670
        %9097 = vmatprep.subr.mxu0 0.0
        %9098 = vmatpush1.msra.mxu0 %v669
        %9099 = vmatprep.subr.mxu0 0.0
        %9100 = vmatpush1.msra.mxu0 %v668
        %9101 = vmatprep.subr.mxu0 0.0
        %9102 = vmatpush1.msra.mxu0 %v667
        %9103 = vmatprep.subr.mxu0 0.0
        %9104 = vmatpush1.msra.mxu0 %v666
        %9105 = vmatprep.subr.mxu0 0.0
        %9106 = vmatpush1.msra.mxu0 %v665
        %9107 = vmatprep.subr.mxu0 0.0
        %9108 = vmatpush1.msra.mxu0 %v664
        %9109 = vmatprep.subr.mxu0 0.0
        %9110 = vmatpush1.msra.mxu0 %v663
        %9111 = vmatprep.subr.mxu0 0.0
        %9112 = vmatpush1.msra.mxu0 %v662
        %9113 = vmatprep.subr.mxu0 0.0
        %9114 = vmatpush1.msra.mxu0 %v661
        %9115 = vmatprep.subr.mxu0 0.0
        %9116 = vmatpush1.msra.mxu0 %v660
        %9117 = vmatprep.subr.mxu0 0.0
        %9118 = vmatpush1.msra.mxu0 %v659
        %9119 = vmatprep.subr.mxu0 0.0
        %9120 = vmatpush1.msra.mxu0 %v658
        %9121 = vmatprep.subr.mxu0 0.0
        %9122 = vmatpush1.msra.mxu0 %v657
        %9123 = vmatprep.subr.mxu0 0.0
        %9124 = vmatpush1.msra.mxu0 %v656
        %9125 = vmatprep.subr.mxu0 0.0
        %9126 = vmatpush1.msra.mxu0 %v655
        %9127 = vmatprep.subr.mxu0 0.0
        %9128 = vmatpush2.msra.mxu0 0.0
        %9129 = vmatprep.subr.mxu0 0.0
        %9130 = vmatpush2.msra.mxu0 0.0
        %9131 = vmatprep.subr.mxu0 0.0
        %9132 = vmatpush2.msra.mxu0 0.0
        %9133 = vmatprep.subr.mxu0 0.0
        %9134 = vmatpush2.msra.mxu0 0.0
        %9135 = vmatprep.subr.mxu0 0.0
        %9136 = vmatpush2.msra.mxu0 0.0
        %9137 = vmatprep.subr.mxu0 0.0
        %9138 = vmatpush2.msra.mxu0 0.0
        %9139 = vmatprep.subr.mxu0 0.0
        %9140 = vmatpush2.msra.mxu0 0.0
        %9141 = vmatprep.subr.mxu0 0.0
        %9142 = vmatpush2.msra.mxu0 0.0
        %9143 = vmatprep.subr.mxu0 0.0
        %9144 = vmatpush2.msra.mxu0 %v678
        %9145 = vmatprep.subr.mxu0 0.0
        %9146 = vmatpush2.msra.mxu0 %v677
        %9147 = vmatprep.subr.mxu0 0.0
        %9148 = vmatpush2.msra.mxu0 %v676
        %9149 = vmatprep.subr.mxu0 0.0
        %9150 = vmatpush2.msra.mxu0 %v675
        %9151 = vmatprep.subr.mxu0 0.0
        %9152 = vmatpush2.msra.mxu0 %v674
        %9153 = vmatprep.subr.mxu0 0.0
        %9154 = vmatpush2.msra.mxu0 %v673
        %9155 = vmatprep.subr.mxu0 0.0
        %9156 = vmatpush2.msra.mxu0 %v672
        %9157 = vmatprep.subr.mxu0 0.0
        %9158 = vmatpush2.msra.mxu0 %v671
        %9159 = vmatprep.mubr.f32.mxu0 %v9063
        %9160 = vmatmul.mubr.f32.gmra.mxu0 %v9047
        %v9161 = vpop.f32.mrf.mxu0
        %v9162 = vadd.f32 0.0, %v9161
        %v9163 = vpop.f32.mrf.mxu0
        %9164 = vmatprep.mubr.f32.mxu0 %v9065
        %9165 = vmatmul.mubr.f32.gmra.mxu0 %v9048
        %v9166 = vpop.f32.mrf.mxu0
        %v9167 = vadd.f32 0.0, %v9166
        %v9168 = vpop.f32.mrf.mxu0
        %9169 = vmatprep.mubr.f32.mxu0 %v9067
        %9170 = vmatmul.mubr.f32.gmra.mxu0 %v9049
        %v9171 = vpop.f32.mrf.mxu0
        %v9172 = vadd.f32 0.0, %v9171
        %v9173 = vpop.f32.mrf.mxu0
        %9174 = vmatprep.mubr.f32.mxu0 %v9069
        %9175 = vmatmul.mubr.f32.gmra.mxu0 %v9050
        %v9176 = vpop.f32.mrf.mxu0
        %v9177 = vadd.f32 0.0, %v9176
        %v9178 = vpop.f32.mrf.mxu0
        %9179 = vmatprep.mubr.f32.mxu0 %v9071
        %9180 = vmatmul.mubr.f32.gmra.mxu0 %v9051
        %v9181 = vpop.f32.mrf.mxu0
        %v9182 = vadd.f32 0.0, %v9181
        %v9183 = vpop.f32.mrf.mxu0
        %9184 = vmatprep.mubr.f32.mxu0 %v9073
        %9185 = vmatmul.mubr.f32.gmra.mxu0 %v9052
        %v9186 = vpop.f32.mrf.mxu0
        %v9187 = vadd.f32 0.0, %v9186
        %v9188 = vpop.f32.mrf.mxu0
        %9189 = vmatprep.mubr.f32.mxu0 %v9075
        %9190 = vmatmul.mubr.f32.gmra.mxu0 %v9053
        %v9191 = vpop.f32.mrf.mxu0
        %v9192 = vadd.f32 0.0, %v9191
        %v9193 = vpop.f32.mrf.mxu0
        %9194 = vmatprep.mubr.f32.mxu0 %v9077
        %9195 = vmatmul.mubr.f32.gmra.mxu0 %v9054
        %v9196 = vpop.f32.mrf.mxu0
        %v9197 = vadd.f32 0.0, %v9196
        %v9198 = vpop.f32.mrf.mxu0
        %9199 = vmatprep.mubr.f32.mxu0 %v9079
        %9200 = vmatmul.mubr.f32.gmra.mxu0 %v9055
        %v9201 = vpop.f32.mrf.mxu0
        %v9202 = vadd.f32 0.0, %v9201
        %v9203 = vpop.f32.mrf.mxu0
        %9204 = vmatprep.mubr.f32.mxu0 %v9081
        %9205 = vmatmul.mubr.f32.gmra.mxu0 %v9056
        %v9206 = vpop.f32.mrf.mxu0
        %v9207 = vadd.f32 0.0, %v9206
        %v9208 = vpop.f32.mrf.mxu0
        %9209 = vmatprep.mubr.f32.mxu0 %v9083
        %9210 = vmatmul.mubr.f32.gmra.mxu0 %v9057
        %v9211 = vpop.f32.mrf.mxu0
        %v9212 = vadd.f32 0.0, %v9211
        %v9213 = vpop.f32.mrf.mxu0
        %9214 = vmatprep.mubr.f32.mxu0 %v9085
        %9215 = vmatmul.mubr.f32.gmra.mxu0 %v9058
        %v9216 = vpop.f32.mrf.mxu0
        %v9217 = vadd.f32 0.0, %v9216
        %v9218 = vpop.f32.mrf.mxu0
        %9219 = vmatprep.mubr.f32.mxu0 %v9087
        %9220 = vmatmul.mubr.f32.gmra.mxu0 %v9059
        %v9221 = vpop.f32.mrf.mxu0
        %v9222 = vadd.f32 0.0, %v9221
        %v9223 = vpop.f32.mrf.mxu0
        %9224 = vmatprep.mubr.f32.mxu0 %v9089
        %9225 = vmatmul.mubr.f32.gmra.mxu0 %v9060
        %v9226 = vpop.f32.mrf.mxu0
        %v9227 = vadd.f32 0.0, %v9226
        %v9228 = vpop.f32.mrf.mxu0
        %9229 = vmatprep.mubr.f32.mxu0 %v9091
        %9230 = vmatmul.mubr.f32.gmra.mxu0 %v9061
        %v9231 = vpop.f32.mrf.mxu0
        %v9232 = vadd.f32 0.0, %v9231
        %v9233 = vpop.f32.mrf.mxu0
        %9234 = vmatprep.mubr.f32.mxu0 %v9093
        %9235 = vmatmul.mubr.f32.gmra.mxu0 %v9062
        %v9236 = vpop.f32.mrf.mxu0
        %v9237 = vadd.f32 0.0, %v9236
        %v9238 = vpop.f32.mrf.mxu0
        %9239 = vdwg.mxu0
        %v9241 = vlaneseq
        %v9242 = vshrl.u32 %v9241, 7
        %v9243 = vsub.s32 0, %v9242
        %v9244 = vrot.slane %v679, %v9243
        %v9246 = vmul.f32 %v9162, %v9244
        %v9247 = vmul.f32 %v9167, %v9244
        %v9248 = vmul.f32 %v9172, %v9244
        %v9249 = vmul.f32 %v9177, %v9244
        %v9250 = vmul.f32 %v9182, %v9244
        %v9251 = vmul.f32 %v9187, %v9244
        %v9252 = vmul.f32 %v9192, %v9244
        %v9253 = vmul.f32 %v9197, %v9244
        %v9254 = vmul.f32 %v9202, %v9244
        %v9255 = vmul.f32 %v9207, %v9244
        %v9256 = vmul.f32 %v9212, %v9244
        %v9257 = vmul.f32 %v9217, %v9244
        %v9258 = vmul.f32 %v9222, %v9244
        %v9259 = vmul.f32 %v9227, %v9244
        %v9260 = vmul.f32 %v9232, %v9244
        %v9261 = vmul.f32 %v9237, %v9244
        %v9263 = vlaneseq
        %v9264 = vshrl.u32 %v9263, 7
        %v9265 = vsub.s32 0, %v9264
        %v9266 = vrot.slane %v680, %v9265
        %v9268 = vadd.f32 %v9246, %v9266
        %v9269 = vadd.f32 %v9247, %v9266
        %v9270 = vadd.f32 %v9248, %v9266
        %v9271 = vadd.f32 %v9249, %v9266
        %v9272 = vadd.f32 %v9250, %v9266
        %v9273 = vadd.f32 %v9251, %v9266
        %v9274 = vadd.f32 %v9252, %v9266
        %v9275 = vadd.f32 %v9253, %v9266
        %v9276 = vadd.f32 %v9254, %v9266
        %v9277 = vadd.f32 %v9255, %v9266
        %v9278 = vadd.f32 %v9256, %v9266
        %v9279 = vadd.f32 %v9257, %v9266
        %v9280 = vadd.f32 %v9258, %v9266
        %v9281 = vadd.f32 %v9259, %v9266
        %v9282 = vadd.f32 %v9260, %v9266
        %v9283 = vadd.f32 %v9261, %v9266
        %v9284 = vmax.f32 %v9268, 0.0
        %v9285 = vmax.f32 %v9269, 0.0
        %v9286 = vmax.f32 %v9270, 0.0
        %v9287 = vmax.f32 %v9271, 0.0
        %v9288 = vmax.f32 %v9272, 0.0
        %v9289 = vmax.f32 %v9273, 0.0
        %v9290 = vmax.f32 %v9274, 0.0
        %v9291 = vmax.f32 %v9275, 0.0
        %v9292 = vmax.f32 %v9276, 0.0
        %v9293 = vmax.f32 %v9277, 0.0
        %v9294 = vmax.f32 %v9278, 0.0
        %v9295 = vmax.f32 %v9279, 0.0
        %v9296 = vmax.f32 %v9280, 0.0
        %v9297 = vmax.f32 %v9281, 0.0
        %v9298 = vmax.f32 %v9282, 0.0
        %v9299 = vmax.f32 %v9283, 0.0
        %v9316 = vcombine.high %v9284, %v9284
        %v9318 = vunpack.c.l.s4 1983009808
        %v9319 = vunpack.c.0.s8 %v9318
        %v9320 = vlaneseq
        %v9321 = vshrl.u32 %v9320, 7
        %v9322 = vsub.s32 %v9319, %v9321
        %v9323 = vrot.slane %v9284, %v9322
        %v9325 = vunpack.c.l.s4 1983009808
        %v9326 = vunpack.c.0.s8 %v9325
        %v9327 = vlaneseq
        %v9328 = vshrl.u32 %v9327, 7
        %v9329 = vsub.s32 %v9326, %v9328
        %v9330 = vrot.slane %v9316, %v9329
        %v9331 = vcombine.high %v9323, %v9323
        %v9332 = vcombine.high %v9330, %v9330
        %v9333 = vcombine.high %v9285, %v9285
        %v9335 = vunpack.c.l.s4 1983009808
        %v9336 = vunpack.c.0.s8 %v9335
        %v9337 = vlaneseq
        %v9338 = vshrl.u32 %v9337, 7
        %v9339 = vsub.s32 %v9336, %v9338
        %v9340 = vrot.slane %v9285, %v9339
        %v9342 = vunpack.c.l.s4 1983009808
        %v9343 = vunpack.c.0.s8 %v9342
        %v9344 = vlaneseq
        %v9345 = vshrl.u32 %v9344, 7
        %v9346 = vsub.s32 %v9343, %v9345
        %v9347 = vrot.slane %v9333, %v9346
        %v9348 = vcombine.high %v9340, %v9340
        %v9349 = vcombine.high %v9347, %v9347
        %v9350 = vcombine.high %v9286, %v9286
        %v9352 = vunpack.c.l.s4 1983009808
        %v9353 = vunpack.c.0.s8 %v9352
        %v9354 = vlaneseq
        %v9355 = vshrl.u32 %v9354, 7
        %v9356 = vsub.s32 %v9353, %v9355
        %v9357 = vrot.slane %v9286, %v9356
        %v9359 = vunpack.c.l.s4 1983009808
        %v9360 = vunpack.c.0.s8 %v9359
        %v9361 = vlaneseq
        %v9362 = vshrl.u32 %v9361, 7
        %v9363 = vsub.s32 %v9360, %v9362
        %v9364 = vrot.slane %v9350, %v9363
        %v9365 = vcombine.high %v9357, %v9357
        %v9366 = vcombine.high %v9364, %v9364
        %v9367 = vcombine.high %v9287, %v9287
        %v9369 = vunpack.c.l.s4 1983009808
        %v9370 = vunpack.c.0.s8 %v9369
        %v9371 = vlaneseq
        %v9372 = vshrl.u32 %v9371, 7
        %v9373 = vsub.s32 %v9370, %v9372
        %v9374 = vrot.slane %v9287, %v9373
        %v9376 = vunpack.c.l.s4 1983009808
        %v9377 = vunpack.c.0.s8 %v9376
        %v9378 = vlaneseq
        %v9379 = vshrl.u32 %v9378, 7
        %v9380 = vsub.s32 %v9377, %v9379
        %v9381 = vrot.slane %v9367, %v9380
        %v9382 = vcombine.high %v9374, %v9374
        %v9383 = vcombine.high %v9381, %v9381
        %v9384 = vcombine.high %v9288, %v9288
        %v9386 = vunpack.c.l.s4 1983009808
        %v9387 = vunpack.c.0.s8 %v9386
        %v9388 = vlaneseq
        %v9389 = vshrl.u32 %v9388, 7
        %v9390 = vsub.s32 %v9387, %v9389
        %v9391 = vrot.slane %v9288, %v9390
        %v9393 = vunpack.c.l.s4 1983009808
        %v9394 = vunpack.c.0.s8 %v9393
        %v9395 = vlaneseq
        %v9396 = vshrl.u32 %v9395, 7
        %v9397 = vsub.s32 %v9394, %v9396
        %v9398 = vrot.slane %v9384, %v9397
        %v9399 = vcombine.high %v9391, %v9391
        %v9400 = vcombine.high %v9398, %v9398
        %v9401 = vcombine.high %v9289, %v9289
        %v9403 = vunpack.c.l.s4 1983009808
        %v9404 = vunpack.c.0.s8 %v9403
        %v9405 = vlaneseq
        %v9406 = vshrl.u32 %v9405, 7
        %v9407 = vsub.s32 %v9404, %v9406
        %v9408 = vrot.slane %v9289, %v9407
        %v9410 = vunpack.c.l.s4 1983009808
        %v9411 = vunpack.c.0.s8 %v9410
        %v9412 = vlaneseq
        %v9413 = vshrl.u32 %v9412, 7
        %v9414 = vsub.s32 %v9411, %v9413
        %v9415 = vrot.slane %v9401, %v9414
        %v9416 = vcombine.high %v9408, %v9408
        %v9417 = vcombine.high %v9415, %v9415
        %v9418 = vcombine.high %v9290, %v9290
        %v9420 = vunpack.c.l.s4 1983009808
        %v9421 = vunpack.c.0.s8 %v9420
        %v9422 = vlaneseq
        %v9423 = vshrl.u32 %v9422, 7
        %v9424 = vsub.s32 %v9421, %v9423
        %v9425 = vrot.slane %v9290, %v9424
        %v9427 = vunpack.c.l.s4 1983009808
        %v9428 = vunpack.c.0.s8 %v9427
        %v9429 = vlaneseq
        %v9430 = vshrl.u32 %v9429, 7
        %v9431 = vsub.s32 %v9428, %v9430
        %v9432 = vrot.slane %v9418, %v9431
        %v9433 = vcombine.high %v9425, %v9425
        %v9434 = vcombine.high %v9432, %v9432
        %v9435 = vcombine.high %v9291, %v9291
        %v9437 = vunpack.c.l.s4 1983009808
        %v9438 = vunpack.c.0.s8 %v9437
        %v9439 = vlaneseq
        %v9440 = vshrl.u32 %v9439, 7
        %v9441 = vsub.s32 %v9438, %v9440
        %v9442 = vrot.slane %v9291, %v9441
        %v9444 = vunpack.c.l.s4 1983009808
        %v9445 = vunpack.c.0.s8 %v9444
        %v9446 = vlaneseq
        %v9447 = vshrl.u32 %v9446, 7
        %v9448 = vsub.s32 %v9445, %v9447
        %v9449 = vrot.slane %v9435, %v9448
        %v9450 = vcombine.high %v9442, %v9442
        %v9451 = vcombine.high %v9449, %v9449
        %v9452 = vcombine.high %v9292, %v9292
        %v9454 = vunpack.c.l.s4 1983009808
        %v9455 = vunpack.c.0.s8 %v9454
        %v9456 = vlaneseq
        %v9457 = vshrl.u32 %v9456, 7
        %v9458 = vsub.s32 %v9455, %v9457
        %v9459 = vrot.slane %v9292, %v9458
        %v9461 = vunpack.c.l.s4 1983009808
        %v9462 = vunpack.c.0.s8 %v9461
        %v9463 = vlaneseq
        %v9464 = vshrl.u32 %v9463, 7
        %v9465 = vsub.s32 %v9462, %v9464
        %v9466 = vrot.slane %v9452, %v9465
        %v9467 = vcombine.high %v9459, %v9459
        %v9468 = vcombine.high %v9466, %v9466
        %v9469 = vcombine.high %v9293, %v9293
        %v9471 = vunpack.c.l.s4 1983009808
        %v9472 = vunpack.c.0.s8 %v9471
        %v9473 = vlaneseq
        %v9474 = vshrl.u32 %v9473, 7
        %v9475 = vsub.s32 %v9472, %v9474
        %v9476 = vrot.slane %v9293, %v9475
        %v9478 = vunpack.c.l.s4 1983009808
        %v9479 = vunpack.c.0.s8 %v9478
        %v9480 = vlaneseq
        %v9481 = vshrl.u32 %v9480, 7
        %v9482 = vsub.s32 %v9479, %v9481
        %v9483 = vrot.slane %v9469, %v9482
        %v9484 = vcombine.high %v9476, %v9476
        %v9485 = vcombine.high %v9483, %v9483
        %v9486 = vcombine.high %v9294, %v9294
        %v9488 = vunpack.c.l.s4 1983009808
        %v9489 = vunpack.c.0.s8 %v9488
        %v9490 = vlaneseq
        %v9491 = vshrl.u32 %v9490, 7
        %v9492 = vsub.s32 %v9489, %v9491
        %v9493 = vrot.slane %v9294, %v9492
        %v9495 = vunpack.c.l.s4 1983009808
        %v9496 = vunpack.c.0.s8 %v9495
        %v9497 = vlaneseq
        %v9498 = vshrl.u32 %v9497, 7
        %v9499 = vsub.s32 %v9496, %v9498
        %v9500 = vrot.slane %v9486, %v9499
        %v9501 = vcombine.high %v9493, %v9493
        %v9502 = vcombine.high %v9500, %v9500
        %v9503 = vcombine.high %v9295, %v9295
        %v9505 = vunpack.c.l.s4 1983009808
        %v9506 = vunpack.c.0.s8 %v9505
        %v9507 = vlaneseq
        %v9508 = vshrl.u32 %v9507, 7
        %v9509 = vsub.s32 %v9506, %v9508
        %v9510 = vrot.slane %v9295, %v9509
        %v9512 = vunpack.c.l.s4 1983009808
        %v9513 = vunpack.c.0.s8 %v9512
        %v9514 = vlaneseq
        %v9515 = vshrl.u32 %v9514, 7
        %v9516 = vsub.s32 %v9513, %v9515
        %v9517 = vrot.slane %v9503, %v9516
        %v9518 = vcombine.high %v9510, %v9510
        %v9519 = vcombine.high %v9517, %v9517
        %v9520 = vcombine.high %v9296, %v9296
        %v9522 = vunpack.c.l.s4 1983009808
        %v9523 = vunpack.c.0.s8 %v9522
        %v9524 = vlaneseq
        %v9525 = vshrl.u32 %v9524, 7
        %v9526 = vsub.s32 %v9523, %v9525
        %v9527 = vrot.slane %v9296, %v9526
        %v9529 = vunpack.c.l.s4 1983009808
        %v9530 = vunpack.c.0.s8 %v9529
        %v9531 = vlaneseq
        %v9532 = vshrl.u32 %v9531, 7
        %v9533 = vsub.s32 %v9530, %v9532
        %v9534 = vrot.slane %v9520, %v9533
        %v9535 = vcombine.high %v9527, %v9527
        %v9536 = vcombine.high %v9534, %v9534
        %v9537 = vcombine.high %v9297, %v9297
        %v9539 = vunpack.c.l.s4 1983009808
        %v9540 = vunpack.c.0.s8 %v9539
        %v9541 = vlaneseq
        %v9542 = vshrl.u32 %v9541, 7
        %v9543 = vsub.s32 %v9540, %v9542
        %v9544 = vrot.slane %v9297, %v9543
        %v9546 = vunpack.c.l.s4 1983009808
        %v9547 = vunpack.c.0.s8 %v9546
        %v9548 = vlaneseq
        %v9549 = vshrl.u32 %v9548, 7
        %v9550 = vsub.s32 %v9547, %v9549
        %v9551 = vrot.slane %v9537, %v9550
        %v9552 = vcombine.high %v9544, %v9544
        %v9553 = vcombine.high %v9551, %v9551
        %v9554 = vcombine.high %v9298, %v9298
        %v9556 = vunpack.c.l.s4 1983009808
        %v9557 = vunpack.c.0.s8 %v9556
        %v9558 = vlaneseq
        %v9559 = vshrl.u32 %v9558, 7
        %v9560 = vsub.s32 %v9557, %v9559
        %v9561 = vrot.slane %v9298, %v9560
        %v9563 = vunpack.c.l.s4 1983009808
        %v9564 = vunpack.c.0.s8 %v9563
        %v9565 = vlaneseq
        %v9566 = vshrl.u32 %v9565, 7
        %v9567 = vsub.s32 %v9564, %v9566
        %v9568 = vrot.slane %v9554, %v9567
        %v9569 = vcombine.high %v9561, %v9561
        %v9570 = vcombine.high %v9568, %v9568
        %v9571 = vcombine.high %v9299, %v9299
        %v9573 = vunpack.c.l.s4 1983009808
        %v9574 = vunpack.c.0.s8 %v9573
        %v9575 = vlaneseq
        %v9576 = vshrl.u32 %v9575, 7
        %v9577 = vsub.s32 %v9574, %v9576
        %v9578 = vrot.slane %v9299, %v9577
        %v9580 = vunpack.c.l.s4 1983009808
        %v9581 = vunpack.c.0.s8 %v9580
        %v9582 = vlaneseq
        %v9583 = vshrl.u32 %v9582, 7
        %v9584 = vsub.s32 %v9581, %v9583
        %v9585 = vrot.slane %v9571, %v9584
        %v9586 = vcombine.high %v9578, %v9578
        %v9587 = vcombine.high %v9585, %v9585
        %vm9652 = vcmask 1041408
        %v9653 = vsel %vm9652, %v9323, -inf
        %v9654 = vrot.slane %v9653, 4
        %v9655 = vmax.f32 %v9653, %v9654
        %v9656 = vrot.slane %v9655, 2
        %v9657 = vmax.f32 %v9655, %v9656
        %v9658 = vrot.slane %v9657, 1
        %v9659 = vmax.f32 %v9657, %v9658
        %v9660 = vsel %vm9652, %v9331, -inf
        %v9661 = vrot.slane %v9660, 4
        %v9662 = vmax.f32 %v9660, %v9661
        %v9663 = vrot.slane %v9662, 2
        %v9664 = vmax.f32 %v9662, %v9663
        %v9665 = vrot.slane %v9664, 1
        %v9666 = vmax.f32 %v9664, %v9665
        %v9667 = vsel %vm9652, %v9330, -inf
        %v9668 = vrot.slane %v9667, 4
        %v9669 = vmax.f32 %v9667, %v9668
        %v9670 = vrot.slane %v9669, 2
        %v9671 = vmax.f32 %v9669, %v9670
        %v9672 = vrot.slane %v9671, 1
        %v9673 = vmax.f32 %v9671, %v9672
        %v9674 = vsel %vm9652, %v9332, -inf
        %v9675 = vrot.slane %v9674, 4
        %v9676 = vmax.f32 %v9674, %v9675
        %v9677 = vrot.slane %v9676, 2
        %v9678 = vmax.f32 %v9676, %v9677
        %v9679 = vrot.slane %v9678, 1
        %v9680 = vmax.f32 %v9678, %v9679
        %v9681 = vsel %vm9652, %v9340, -inf
        %v9682 = vrot.slane %v9681, 4
        %v9683 = vmax.f32 %v9681, %v9682
        %v9684 = vrot.slane %v9683, 2
        %v9685 = vmax.f32 %v9683, %v9684
        %v9686 = vrot.slane %v9685, 1
        %v9687 = vmax.f32 %v9685, %v9686
        %v9688 = vsel %vm9652, %v9348, -inf
        %v9689 = vrot.slane %v9688, 4
        %v9690 = vmax.f32 %v9688, %v9689
        %v9691 = vrot.slane %v9690, 2
        %v9692 = vmax.f32 %v9690, %v9691
        %v9693 = vrot.slane %v9692, 1
        %v9694 = vmax.f32 %v9692, %v9693
        %v9695 = vsel %vm9652, %v9347, -inf
        %v9696 = vrot.slane %v9695, 4
        %v9697 = vmax.f32 %v9695, %v9696
        %v9698 = vrot.slane %v9697, 2
        %v9699 = vmax.f32 %v9697, %v9698
        %v9700 = vrot.slane %v9699, 1
        %v9701 = vmax.f32 %v9699, %v9700
        %v9702 = vsel %vm9652, %v9349, -inf
        %v9703 = vrot.slane %v9702, 4
        %v9704 = vmax.f32 %v9702, %v9703
        %v9705 = vrot.slane %v9704, 2
        %v9706 = vmax.f32 %v9704, %v9705
        %v9707 = vrot.slane %v9706, 1
        %v9708 = vmax.f32 %v9706, %v9707
        %v9709 = vsel %vm9652, %v9357, -inf
        %v9710 = vrot.slane %v9709, 4
        %v9711 = vmax.f32 %v9709, %v9710
        %v9712 = vrot.slane %v9711, 2
        %v9713 = vmax.f32 %v9711, %v9712
        %v9714 = vrot.slane %v9713, 1
        %v9715 = vmax.f32 %v9713, %v9714
        %v9716 = vsel %vm9652, %v9365, -inf
        %v9717 = vrot.slane %v9716, 4
        %v9718 = vmax.f32 %v9716, %v9717
        %v9719 = vrot.slane %v9718, 2
        %v9720 = vmax.f32 %v9718, %v9719
        %v9721 = vrot.slane %v9720, 1
        %v9722 = vmax.f32 %v9720, %v9721
        %v9723 = vsel %vm9652, %v9364, -inf
        %v9724 = vrot.slane %v9723, 4
        %v9725 = vmax.f32 %v9723, %v9724
        %v9726 = vrot.slane %v9725, 2
        %v9727 = vmax.f32 %v9725, %v9726
        %v9728 = vrot.slane %v9727, 1
        %v9729 = vmax.f32 %v9727, %v9728
        %v9730 = vsel %vm9652, %v9366, -inf
        %v9731 = vrot.slane %v9730, 4
        %v9732 = vmax.f32 %v9730, %v9731
        %v9733 = vrot.slane %v9732, 2
        %v9734 = vmax.f32 %v9732, %v9733
        %v9735 = vrot.slane %v9734, 1
        %v9736 = vmax.f32 %v9734, %v9735
        %v9737 = vsel %vm9652, %v9374, -inf
        %v9738 = vrot.slane %v9737, 4
        %v9739 = vmax.f32 %v9737, %v9738
        %v9740 = vrot.slane %v9739, 2
        %v9741 = vmax.f32 %v9739, %v9740
        %v9742 = vrot.slane %v9741, 1
        %v9743 = vmax.f32 %v9741, %v9742
        %v9744 = vsel %vm9652, %v9382, -inf
        %v9745 = vrot.slane %v9744, 4
        %v9746 = vmax.f32 %v9744, %v9745
        %v9747 = vrot.slane %v9746, 2
        %v9748 = vmax.f32 %v9746, %v9747
        %v9749 = vrot.slane %v9748, 1
        %v9750 = vmax.f32 %v9748, %v9749
        %v9751 = vsel %vm9652, %v9381, -inf
        %v9752 = vrot.slane %v9751, 4
        %v9753 = vmax.f32 %v9751, %v9752
        %v9754 = vrot.slane %v9753, 2
        %v9755 = vmax.f32 %v9753, %v9754
        %v9756 = vrot.slane %v9755, 1
        %v9757 = vmax.f32 %v9755, %v9756
        %v9758 = vsel %vm9652, %v9383, -inf
        %v9759 = vrot.slane %v9758, 4
        %v9760 = vmax.f32 %v9758, %v9759
        %v9761 = vrot.slane %v9760, 2
        %v9762 = vmax.f32 %v9760, %v9761
        %v9763 = vrot.slane %v9762, 1
        %v9764 = vmax.f32 %v9762, %v9763
        %v9765 = vsel %vm9652, %v9391, -inf
        %v9766 = vrot.slane %v9765, 4
        %v9767 = vmax.f32 %v9765, %v9766
        %v9768 = vrot.slane %v9767, 2
        %v9769 = vmax.f32 %v9767, %v9768
        %v9770 = vrot.slane %v9769, 1
        %v9771 = vmax.f32 %v9769, %v9770
        %v9772 = vsel %vm9652, %v9399, -inf
        %v9773 = vrot.slane %v9772, 4
        %v9774 = vmax.f32 %v9772, %v9773
        %v9775 = vrot.slane %v9774, 2
        %v9776 = vmax.f32 %v9774, %v9775
        %v9777 = vrot.slane %v9776, 1
        %v9778 = vmax.f32 %v9776, %v9777
        %v9779 = vsel %vm9652, %v9398, -inf
        %v9780 = vrot.slane %v9779, 4
        %v9781 = vmax.f32 %v9779, %v9780
        %v9782 = vrot.slane %v9781, 2
        %v9783 = vmax.f32 %v9781, %v9782
        %v9784 = vrot.slane %v9783, 1
        %v9785 = vmax.f32 %v9783, %v9784
        %v9786 = vsel %vm9652, %v9400, -inf
        %v9787 = vrot.slane %v9786, 4
        %v9788 = vmax.f32 %v9786, %v9787
        %v9789 = vrot.slane %v9788, 2
        %v9790 = vmax.f32 %v9788, %v9789
        %v9791 = vrot.slane %v9790, 1
        %v9792 = vmax.f32 %v9790, %v9791
        %v9793 = vsel %vm9652, %v9408, -inf
        %v9794 = vrot.slane %v9793, 4
        %v9795 = vmax.f32 %v9793, %v9794
        %v9796 = vrot.slane %v9795, 2
        %v9797 = vmax.f32 %v9795, %v9796
        %v9798 = vrot.slane %v9797, 1
        %v9799 = vmax.f32 %v9797, %v9798
        %v9800 = vsel %vm9652, %v9416, -inf
        %v9801 = vrot.slane %v9800, 4
        %v9802 = vmax.f32 %v9800, %v9801
        %v9803 = vrot.slane %v9802, 2
        %v9804 = vmax.f32 %v9802, %v9803
        %v9805 = vrot.slane %v9804, 1
        %v9806 = vmax.f32 %v9804, %v9805
        %v9807 = vsel %vm9652, %v9415, -inf
        %v9808 = vrot.slane %v9807, 4
        %v9809 = vmax.f32 %v9807, %v9808
        %v9810 = vrot.slane %v9809, 2
        %v9811 = vmax.f32 %v9809, %v9810
        %v9812 = vrot.slane %v9811, 1
        %v9813 = vmax.f32 %v9811, %v9812
        %v9814 = vsel %vm9652, %v9417, -inf
        %v9815 = vrot.slane %v9814, 4
        %v9816 = vmax.f32 %v9814, %v9815
        %v9817 = vrot.slane %v9816, 2
        %v9818 = vmax.f32 %v9816, %v9817
        %v9819 = vrot.slane %v9818, 1
        %v9820 = vmax.f32 %v9818, %v9819
        %v9821 = vsel %vm9652, %v9425, -inf
        %v9822 = vrot.slane %v9821, 4
        %v9823 = vmax.f32 %v9821, %v9822
        %v9824 = vrot.slane %v9823, 2
        %v9825 = vmax.f32 %v9823, %v9824
        %v9826 = vrot.slane %v9825, 1
        %v9827 = vmax.f32 %v9825, %v9826
        %v9828 = vsel %vm9652, %v9433, -inf
        %v9829 = vrot.slane %v9828, 4
        %v9830 = vmax.f32 %v9828, %v9829
        %v9831 = vrot.slane %v9830, 2
        %v9832 = vmax.f32 %v9830, %v9831
        %v9833 = vrot.slane %v9832, 1
        %v9834 = vmax.f32 %v9832, %v9833
        %v9835 = vsel %vm9652, %v9432, -inf
        %v9836 = vrot.slane %v9835, 4
        %v9837 = vmax.f32 %v9835, %v9836
        %v9838 = vrot.slane %v9837, 2
        %v9839 = vmax.f32 %v9837, %v9838
        %v9840 = vrot.slane %v9839, 1
        %v9841 = vmax.f32 %v9839, %v9840
        %v9842 = vsel %vm9652, %v9434, -inf
        %v9843 = vrot.slane %v9842, 4
        %v9844 = vmax.f32 %v9842, %v9843
        %v9845 = vrot.slane %v9844, 2
        %v9846 = vmax.f32 %v9844, %v9845
        %v9847 = vrot.slane %v9846, 1
        %v9848 = vmax.f32 %v9846, %v9847
        %v9849 = vsel %vm9652, %v9442, -inf
        %v9850 = vrot.slane %v9849, 4
        %v9851 = vmax.f32 %v9849, %v9850
        %v9852 = vrot.slane %v9851, 2
        %v9853 = vmax.f32 %v9851, %v9852
        %v9854 = vrot.slane %v9853, 1
        %v9855 = vmax.f32 %v9853, %v9854
        %v9856 = vsel %vm9652, %v9450, -inf
        %v9857 = vrot.slane %v9856, 4
        %v9858 = vmax.f32 %v9856, %v9857
        %v9859 = vrot.slane %v9858, 2
        %v9860 = vmax.f32 %v9858, %v9859
        %v9861 = vrot.slane %v9860, 1
        %v9862 = vmax.f32 %v9860, %v9861
        %v9863 = vsel %vm9652, %v9449, -inf
        %v9864 = vrot.slane %v9863, 4
        %v9865 = vmax.f32 %v9863, %v9864
        %v9866 = vrot.slane %v9865, 2
        %v9867 = vmax.f32 %v9865, %v9866
        %v9868 = vrot.slane %v9867, 1
        %v9869 = vmax.f32 %v9867, %v9868
        %v9870 = vsel %vm9652, %v9451, -inf
        %v9871 = vrot.slane %v9870, 4
        %v9872 = vmax.f32 %v9870, %v9871
        %v9873 = vrot.slane %v9872, 2
        %v9874 = vmax.f32 %v9872, %v9873
        %v9875 = vrot.slane %v9874, 1
        %v9876 = vmax.f32 %v9874, %v9875
        %v9877 = vsel %vm9652, %v9459, -inf
        %v9878 = vrot.slane %v9877, 4
        %v9879 = vmax.f32 %v9877, %v9878
        %v9880 = vrot.slane %v9879, 2
        %v9881 = vmax.f32 %v9879, %v9880
        %v9882 = vrot.slane %v9881, 1
        %v9883 = vmax.f32 %v9881, %v9882
        %v9884 = vsel %vm9652, %v9467, -inf
        %v9885 = vrot.slane %v9884, 4
        %v9886 = vmax.f32 %v9884, %v9885
        %v9887 = vrot.slane %v9886, 2
        %v9888 = vmax.f32 %v9886, %v9887
        %v9889 = vrot.slane %v9888, 1
        %v9890 = vmax.f32 %v9888, %v9889
        %v9891 = vsel %vm9652, %v9466, -inf
        %v9892 = vrot.slane %v9891, 4
        %v9893 = vmax.f32 %v9891, %v9892
        %v9894 = vrot.slane %v9893, 2
        %v9895 = vmax.f32 %v9893, %v9894
        %v9896 = vrot.slane %v9895, 1
        %v9897 = vmax.f32 %v9895, %v9896
        %v9898 = vsel %vm9652, %v9468, -inf
        %v9899 = vrot.slane %v9898, 4
        %v9900 = vmax.f32 %v9898, %v9899
        %v9901 = vrot.slane %v9900, 2
        %v9902 = vmax.f32 %v9900, %v9901
        %v9903 = vrot.slane %v9902, 1
        %v9904 = vmax.f32 %v9902, %v9903
        %v9905 = vsel %vm9652, %v9476, -inf
        %v9906 = vrot.slane %v9905, 4
        %v9907 = vmax.f32 %v9905, %v9906
        %v9908 = vrot.slane %v9907, 2
        %v9909 = vmax.f32 %v9907, %v9908
        %v9910 = vrot.slane %v9909, 1
        %v9911 = vmax.f32 %v9909, %v9910
        %v9912 = vsel %vm9652, %v9484, -inf
        %v9913 = vrot.slane %v9912, 4
        %v9914 = vmax.f32 %v9912, %v9913
        %v9915 = vrot.slane %v9914, 2
        %v9916 = vmax.f32 %v9914, %v9915
        %v9917 = vrot.slane %v9916, 1
        %v9918 = vmax.f32 %v9916, %v9917
        %v9919 = vsel %vm9652, %v9483, -inf
        %v9920 = vrot.slane %v9919, 4
        %v9921 = vmax.f32 %v9919, %v9920
        %v9922 = vrot.slane %v9921, 2
        %v9923 = vmax.f32 %v9921, %v9922
        %v9924 = vrot.slane %v9923, 1
        %v9925 = vmax.f32 %v9923, %v9924
        %v9926 = vsel %vm9652, %v9485, -inf
        %v9927 = vrot.slane %v9926, 4
        %v9928 = vmax.f32 %v9926, %v9927
        %v9929 = vrot.slane %v9928, 2
        %v9930 = vmax.f32 %v9928, %v9929
        %v9931 = vrot.slane %v9930, 1
        %v9932 = vmax.f32 %v9930, %v9931
        %v9933 = vsel %vm9652, %v9493, -inf
        %v9934 = vrot.slane %v9933, 4
        %v9935 = vmax.f32 %v9933, %v9934
        %v9936 = vrot.slane %v9935, 2
        %v9937 = vmax.f32 %v9935, %v9936
        %v9938 = vrot.slane %v9937, 1
        %v9939 = vmax.f32 %v9937, %v9938
        %v9940 = vsel %vm9652, %v9501, -inf
        %v9941 = vrot.slane %v9940, 4
        %v9942 = vmax.f32 %v9940, %v9941
        %v9943 = vrot.slane %v9942, 2
        %v9944 = vmax.f32 %v9942, %v9943
        %v9945 = vrot.slane %v9944, 1
        %v9946 = vmax.f32 %v9944, %v9945
        %v9947 = vsel %vm9652, %v9500, -inf
        %v9948 = vrot.slane %v9947, 4
        %v9949 = vmax.f32 %v9947, %v9948
        %v9950 = vrot.slane %v9949, 2
        %v9951 = vmax.f32 %v9949, %v9950
        %v9952 = vrot.slane %v9951, 1
        %v9953 = vmax.f32 %v9951, %v9952
        %v9954 = vsel %vm9652, %v9502, -inf
        %v9955 = vrot.slane %v9954, 4
        %v9956 = vmax.f32 %v9954, %v9955
        %v9957 = vrot.slane %v9956, 2
        %v9958 = vmax.f32 %v9956, %v9957
        %v9959 = vrot.slane %v9958, 1
        %v9960 = vmax.f32 %v9958, %v9959
        %v9961 = vsel %vm9652, %v9510, -inf
        %v9962 = vrot.slane %v9961, 4
        %v9963 = vmax.f32 %v9961, %v9962
        %v9964 = vrot.slane %v9963, 2
        %v9965 = vmax.f32 %v9963, %v9964
        %v9966 = vrot.slane %v9965, 1
        %v9967 = vmax.f32 %v9965, %v9966
        %v9968 = vsel %vm9652, %v9518, -inf
        %v9969 = vrot.slane %v9968, 4
        %v9970 = vmax.f32 %v9968, %v9969
        %v9971 = vrot.slane %v9970, 2
        %v9972 = vmax.f32 %v9970, %v9971
        %v9973 = vrot.slane %v9972, 1
        %v9974 = vmax.f32 %v9972, %v9973
        %v9975 = vsel %vm9652, %v9517, -inf
        %v9976 = vrot.slane %v9975, 4
        %v9977 = vmax.f32 %v9975, %v9976
        %v9978 = vrot.slane %v9977, 2
        %v9979 = vmax.f32 %v9977, %v9978
        %v9980 = vrot.slane %v9979, 1
        %v9981 = vmax.f32 %v9979, %v9980
        %v9982 = vsel %vm9652, %v9519, -inf
        %v9983 = vrot.slane %v9982, 4
        %v9984 = vmax.f32 %v9982, %v9983
        %v9985 = vrot.slane %v9984, 2
        %v9986 = vmax.f32 %v9984, %v9985
        %v9987 = vrot.slane %v9986, 1
        %v9988 = vmax.f32 %v9986, %v9987
        %v9989 = vsel %vm9652, %v9527, -inf
        %v9990 = vrot.slane %v9989, 4
        %v9991 = vmax.f32 %v9989, %v9990
        %v9992 = vrot.slane %v9991, 2
        %v9993 = vmax.f32 %v9991, %v9992
        %v9994 = vrot.slane %v9993, 1
        %v9995 = vmax.f32 %v9993, %v9994
        %v9996 = vsel %vm9652, %v9535, -inf
        %v9997 = vrot.slane %v9996, 4
        %v9998 = vmax.f32 %v9996, %v9997
        %v9999 = vrot.slane %v9998, 2
        %v10000 = vmax.f32 %v9998, %v9999
        %v10001 = vrot.slane %v10000, 1
        %v10002 = vmax.f32 %v10000, %v10001
        %v10003 = vsel %vm9652, %v9534, -inf
        %v10004 = vrot.slane %v10003, 4
        %v10005 = vmax.f32 %v10003, %v10004
        %v10006 = vrot.slane %v10005, 2
        %v10007 = vmax.f32 %v10005, %v10006
        %v10008 = vrot.slane %v10007, 1
        %v10009 = vmax.f32 %v10007, %v10008
        %v10010 = vsel %vm9652, %v9536, -inf
        %v10011 = vrot.slane %v10010, 4
        %v10012 = vmax.f32 %v10010, %v10011
        %v10013 = vrot.slane %v10012, 2
        %v10014 = vmax.f32 %v10012, %v10013
        %v10015 = vrot.slane %v10014, 1
        %v10016 = vmax.f32 %v10014, %v10015
        %v10017 = vsel %vm9652, %v9544, -inf
        %v10018 = vrot.slane %v10017, 4
        %v10019 = vmax.f32 %v10017, %v10018
        %v10020 = vrot.slane %v10019, 2
        %v10021 = vmax.f32 %v10019, %v10020
        %v10022 = vrot.slane %v10021, 1
        %v10023 = vmax.f32 %v10021, %v10022
        %v10024 = vsel %vm9652, %v9552, -inf
        %v10025 = vrot.slane %v10024, 4
        %v10026 = vmax.f32 %v10024, %v10025
        %v10027 = vrot.slane %v10026, 2
        %v10028 = vmax.f32 %v10026, %v10027
        %v10029 = vrot.slane %v10028, 1
        %v10030 = vmax.f32 %v10028, %v10029
        %v10031 = vsel %vm9652, %v9551, -inf
        %v10032 = vrot.slane %v10031, 4
        %v10033 = vmax.f32 %v10031, %v10032
        %v10034 = vrot.slane %v10033, 2
        %v10035 = vmax.f32 %v10033, %v10034
        %v10036 = vrot.slane %v10035, 1
        %v10037 = vmax.f32 %v10035, %v10036
        %v10038 = vsel %vm9652, %v9553, -inf
        %v10039 = vrot.slane %v10038, 4
        %v10040 = vmax.f32 %v10038, %v10039
        %v10041 = vrot.slane %v10040, 2
        %v10042 = vmax.f32 %v10040, %v10041
        %v10043 = vrot.slane %v10042, 1
        %v10044 = vmax.f32 %v10042, %v10043
        %v10045 = vsel %vm9652, %v9561, -inf
        %v10046 = vrot.slane %v10045, 4
        %v10047 = vmax.f32 %v10045, %v10046
        %v10048 = vrot.slane %v10047, 2
        %v10049 = vmax.f32 %v10047, %v10048
        %v10050 = vrot.slane %v10049, 1
        %v10051 = vmax.f32 %v10049, %v10050
        %v10052 = vsel %vm9652, %v9569, -inf
        %v10053 = vrot.slane %v10052, 4
        %v10054 = vmax.f32 %v10052, %v10053
        %v10055 = vrot.slane %v10054, 2
        %v10056 = vmax.f32 %v10054, %v10055
        %v10057 = vrot.slane %v10056, 1
        %v10058 = vmax.f32 %v10056, %v10057
        %v10059 = vsel %vm9652, %v9568, -inf
        %v10060 = vrot.slane %v10059, 4
        %v10061 = vmax.f32 %v10059, %v10060
        %v10062 = vrot.slane %v10061, 2
        %v10063 = vmax.f32 %v10061, %v10062
        %v10064 = vrot.slane %v10063, 1
        %v10065 = vmax.f32 %v10063, %v10064
        %v10066 = vsel %vm9652, %v9570, -inf
        %v10067 = vrot.slane %v10066, 4
        %v10068 = vmax.f32 %v10066, %v10067
        %v10069 = vrot.slane %v10068, 2
        %v10070 = vmax.f32 %v10068, %v10069
        %v10071 = vrot.slane %v10070, 1
        %v10072 = vmax.f32 %v10070, %v10071
        %v10073 = vsel %vm9652, %v9578, -inf
        %v10074 = vrot.slane %v10073, 4
        %v10075 = vmax.f32 %v10073, %v10074
        %v10076 = vrot.slane %v10075, 2
        %v10077 = vmax.f32 %v10075, %v10076
        %v10078 = vrot.slane %v10077, 1
        %v10079 = vmax.f32 %v10077, %v10078
        %v10080 = vsel %vm9652, %v9586, -inf
        %v10081 = vrot.slane %v10080, 4
        %v10082 = vmax.f32 %v10080, %v10081
        %v10083 = vrot.slane %v10082, 2
        %v10084 = vmax.f32 %v10082, %v10083
        %v10085 = vrot.slane %v10084, 1
        %v10086 = vmax.f32 %v10084, %v10085
        %v10087 = vsel %vm9652, %v9585, -inf
        %v10088 = vrot.slane %v10087, 4
        %v10089 = vmax.f32 %v10087, %v10088
        %v10090 = vrot.slane %v10089, 2
        %v10091 = vmax.f32 %v10089, %v10090
        %v10092 = vrot.slane %v10091, 1
        %v10093 = vmax.f32 %v10091, %v10092
        %v10094 = vsel %vm9652, %v9587, -inf
        %v10095 = vrot.slane %v10094, 4
        %v10096 = vmax.f32 %v10094, %v10095
        %v10097 = vrot.slane %v10096, 2
        %v10098 = vmax.f32 %v10096, %v10097
        %v10099 = vrot.slane %v10098, 1
        %v10100 = vmax.f32 %v10098, %v10099
        %v10109 = vsel %vm5915, %v9722, %v9666
        %v10110 = vsel %vm5903, %v9778, %v10109
        %v10111 = vsel %vm5905, %v9834, %v10110
        %v10112 = vsel %vm5907, %v9890, %v10111
        %v10113 = vsel %vm5909, %v9946, %v10112
        %v10114 = vsel %vm5911, %v10002, %v10113
        %v10115 = vsel %vm5913, %v10058, %v10114
        %10117 = vmatprep.subr.mxu0 0.0
        %10118 = vmatpush1.msra.mxu0 %v712
        %10119 = vmatprep.subr.mxu0 0.0
        %10120 = vmatpush1.msra.mxu0 %v711
        %10121 = vmatprep.subr.mxu0 0.0
        %10122 = vmatpush1.msra.mxu0 %v710
        %10123 = vmatprep.subr.mxu0 0.0
        %10124 = vmatpush1.msra.mxu0 %v709
        %10125 = vmatprep.subr.mxu0 0.0
        %10126 = vmatpush1.msra.mxu0 %v708
        %10127 = vmatprep.subr.mxu0 0.0
        %10128 = vmatpush1.msra.mxu0 %v707
        %10129 = vmatprep.subr.mxu0 0.0
        %10130 = vmatpush1.msra.mxu0 %v706
        %10131 = vmatprep.subr.mxu0 0.0
        %10132 = vmatpush1.msra.mxu0 %v705
        %10133 = vmatprep.subr.mxu0 0.0
        %10134 = vmatpush1.msra.mxu0 %v704
        %10135 = vmatprep.subr.mxu0 0.0
        %10136 = vmatpush1.msra.mxu0 %v703
        %10137 = vmatprep.subr.mxu0 0.0
        %10138 = vmatpush1.msra.mxu0 %v702
        %10139 = vmatprep.subr.mxu0 0.0
        %10140 = vmatpush1.msra.mxu0 %v701
        %10141 = vmatprep.subr.mxu0 0.0
        %10142 = vmatpush1.msra.mxu0 %v700
        %10143 = vmatprep.subr.mxu0 0.0
        %10144 = vmatpush1.msra.mxu0 %v699
        %10145 = vmatprep.subr.mxu0 0.0
        %10146 = vmatpush1.msra.mxu0 %v698
        %10147 = vmatprep.subr.mxu0 0.0
        %10148 = vmatpush1.msra.mxu0 %v697
        %10149 = vmatprep.subr.mxu0 0.0
        %10150 = vmatpush2.msra.mxu0 0.0
        %10151 = vmatprep.subr.mxu0 0.0
        %10152 = vmatpush2.msra.mxu0 0.0
        %10153 = vmatprep.subr.mxu0 0.0
        %10154 = vmatpush2.msra.mxu0 0.0
        %10155 = vmatprep.subr.mxu0 0.0
        %10156 = vmatpush2.msra.mxu0 0.0
        %10157 = vmatprep.subr.mxu0 0.0
        %10158 = vmatpush2.msra.mxu0 0.0
        %10159 = vmatprep.subr.mxu0 0.0
        %10160 = vmatpush2.msra.mxu0 0.0
        %10161 = vmatprep.subr.mxu0 0.0
        %10162 = vmatpush2.msra.mxu0 0.0
        %10163 = vmatprep.subr.mxu0 0.0
        %10164 = vmatpush2.msra.mxu0 0.0
        %10165 = vmatprep.subr.mxu0 0.0
        %10166 = vmatpush2.msra.mxu0 0.0
        %10167 = vmatprep.subr.mxu0 0.0
        %10168 = vmatpush2.msra.mxu0 0.0
        %10169 = vmatprep.subr.mxu0 0.0
        %10170 = vmatpush2.msra.mxu0 0.0
        %10171 = vmatprep.subr.mxu0 0.0
        %10172 = vmatpush2.msra.mxu0 0.0
        %10173 = vmatprep.subr.mxu0 0.0
        %10174 = vmatpush2.msra.mxu0 0.0
        %10175 = vmatprep.subr.mxu0 0.0
        %10176 = vmatpush2.msra.mxu0 0.0
        %10177 = vmatprep.subr.mxu0 0.0
        %10178 = vmatpush2.msra.mxu0 0.0
        %10179 = vmatprep.subr.mxu0 0.0
        %10180 = vmatpush2.msra.mxu0 0.0
        %10181 = vmatprep.mubr.f32.mxu0 0.0
        %10182 = vmatmul.mubr.f32.gmra.mxu0 %v10115
        %v10183 = vpop.f32.mrf.mxu0
        %v10184 = vadd.f32 0.0, %v10183
        %v10185 = vpop.f32.mrf.mxu0
        %10186 = vdwg.mxu0
        %v10195 = vsel %vm5915, %v9715, %v9659
        %v10196 = vsel %vm5903, %v9771, %v10195
        %v10197 = vsel %vm5905, %v9827, %v10196
        %v10198 = vsel %vm5907, %v9883, %v10197
        %v10199 = vsel %vm5909, %v9939, %v10198
        %v10200 = vsel %vm5911, %v9995, %v10199
        %v10201 = vsel %vm5913, %v10051, %v10200
        %10203 = vmatprep.subr.mxu0 0.0
        %10204 = vmatpush1.msra.mxu0 %v696
        %10205 = vmatprep.subr.mxu0 0.0
        %10206 = vmatpush1.msra.mxu0 %v695
        %10207 = vmatprep.subr.mxu0 0.0
        %10208 = vmatpush1.msra.mxu0 %v694
        %10209 = vmatprep.subr.mxu0 0.0
        %10210 = vmatpush1.msra.mxu0 %v693
        %10211 = vmatprep.subr.mxu0 0.0
        %10212 = vmatpush1.msra.mxu0 %v692
        %10213 = vmatprep.subr.mxu0 0.0
        %10214 = vmatpush1.msra.mxu0 %v691
        %10215 = vmatprep.subr.mxu0 0.0
        %10216 = vmatpush1.msra.mxu0 %v690
        %10217 = vmatprep.subr.mxu0 0.0
        %10218 = vmatpush1.msra.mxu0 %v689
        %10219 = vmatprep.subr.mxu0 0.0
        %10220 = vmatpush1.msra.mxu0 %v688
        %10221 = vmatprep.subr.mxu0 0.0
        %10222 = vmatpush1.msra.mxu0 %v687
        %10223 = vmatprep.subr.mxu0 0.0
        %10224 = vmatpush1.msra.mxu0 %v686
        %10225 = vmatprep.subr.mxu0 0.0
        %10226 = vmatpush1.msra.mxu0 %v685
        %10227 = vmatprep.subr.mxu0 0.0
        %10228 = vmatpush1.msra.mxu0 %v684
        %10229 = vmatprep.subr.mxu0 0.0
        %10230 = vmatpush1.msra.mxu0 %v683
        %10231 = vmatprep.subr.mxu0 0.0
        %10232 = vmatpush1.msra.mxu0 %v682
        %10233 = vmatprep.subr.mxu0 0.0
        %10234 = vmatpush1.msra.mxu0 %v681
        %10235 = vmatprep.subr.mxu0 0.0
        %10236 = vmatpush2.msra.mxu0 0.0
        %10237 = vmatprep.subr.mxu0 0.0
        %10238 = vmatpush2.msra.mxu0 0.0
        %10239 = vmatprep.subr.mxu0 0.0
        %10240 = vmatpush2.msra.mxu0 0.0
        %10241 = vmatprep.subr.mxu0 0.0
        %10242 = vmatpush2.msra.mxu0 0.0
        %10243 = vmatprep.subr.mxu0 0.0
        %10244 = vmatpush2.msra.mxu0 0.0
        %10245 = vmatprep.subr.mxu0 0.0
        %10246 = vmatpush2.msra.mxu0 0.0
        %10247 = vmatprep.subr.mxu0 0.0
        %10248 = vmatpush2.msra.mxu0 0.0
        %10249 = vmatprep.subr.mxu0 0.0
        %10250 = vmatpush2.msra.mxu0 0.0
        %10251 = vmatprep.subr.mxu0 0.0
        %10252 = vmatpush2.msra.mxu0 0.0
        %10253 = vmatprep.subr.mxu0 0.0
        %10254 = vmatpush2.msra.mxu0 0.0
        %10255 = vmatprep.subr.mxu0 0.0
        %10256 = vmatpush2.msra.mxu0 0.0
        %10257 = vmatprep.subr.mxu0 0.0
        %10258 = vmatpush2.msra.mxu0 0.0
        %10259 = vmatprep.subr.mxu0 0.0
        %10260 = vmatpush2.msra.mxu0 0.0
        %10261 = vmatprep.subr.mxu0 0.0
        %10262 = vmatpush2.msra.mxu0 0.0
        %10263 = vmatprep.subr.mxu0 0.0
        %10264 = vmatpush2.msra.mxu0 0.0
        %10265 = vmatprep.subr.mxu0 0.0
        %10266 = vmatpush2.msra.mxu0 0.0
        %10267 = vmatprep.mubr.f32.mxu0 0.0
        %10268 = vmatmul.mubr.f32.gmra.mxu0 %v10201
        %v10269 = vpop.f32.mrf.mxu0
        %v10270 = vadd.f32 %v10184, %v10269
        %v10271 = vpop.f32.mrf.mxu0
        %10272 = vdwg.mxu0
        %v10281 = vsel %vm5915, %v9729, %v9673
        %v10282 = vsel %vm5903, %v9785, %v10281
        %v10283 = vsel %vm5905, %v9841, %v10282
        %v10284 = vsel %vm5907, %v9897, %v10283
        %v10285 = vsel %vm5909, %v9953, %v10284
        %v10286 = vsel %vm5911, %v10009, %v10285
        %v10287 = vsel %vm5913, %v10065, %v10286
        %10289 = vmatprep.subr.mxu0 0.0
        %10290 = vmatpush1.msra.mxu0 %v728
        %10291 = vmatprep.subr.mxu0 0.0
        %10292 = vmatpush1.msra.mxu0 %v727
        %10293 = vmatprep.subr.mxu0 0.0
        %10294 = vmatpush1.msra.mxu0 %v726
        %10295 = vmatprep.subr.mxu0 0.0
        %10296 = vmatpush1.msra.mxu0 %v725
        %10297 = vmatprep.subr.mxu0 0.0
        %10298 = vmatpush1.msra.mxu0 %v724
        %10299 = vmatprep.subr.mxu0 0.0
        %10300 = vmatpush1.msra.mxu0 %v723
        %10301 = vmatprep.subr.mxu0 0.0
        %10302 = vmatpush1.msra.mxu0 %v722
        %10303 = vmatprep.subr.mxu0 0.0
        %10304 = vmatpush1.msra.mxu0 %v721
        %10305 = vmatprep.subr.mxu0 0.0
        %10306 = vmatpush1.msra.mxu0 %v720
        %10307 = vmatprep.subr.mxu0 0.0
        %10308 = vmatpush1.msra.mxu0 %v719
        %10309 = vmatprep.subr.mxu0 0.0
        %10310 = vmatpush1.msra.mxu0 %v718
        %10311 = vmatprep.subr.mxu0 0.0
        %10312 = vmatpush1.msra.mxu0 %v717
        %10313 = vmatprep.subr.mxu0 0.0
        %10314 = vmatpush1.msra.mxu0 %v716
        %10315 = vmatprep.subr.mxu0 0.0
        %10316 = vmatpush1.msra.mxu0 %v715
        %10317 = vmatprep.subr.mxu0 0.0
        %10318 = vmatpush1.msra.mxu0 %v714
        %10319 = vmatprep.subr.mxu0 0.0
        %10320 = vmatpush1.msra.mxu0 %v713
        %10321 = vmatprep.subr.mxu0 0.0
        %10322 = vmatpush2.msra.mxu0 0.0
        %10323 = vmatprep.subr.mxu0 0.0
        %10324 = vmatpush2.msra.mxu0 0.0
        %10325 = vmatprep.subr.mxu0 0.0
        %10326 = vmatpush2.msra.mxu0 0.0
        %10327 = vmatprep.subr.mxu0 0.0
        %10328 = vmatpush2.msra.mxu0 0.0
        %10329 = vmatprep.subr.mxu0 0.0
        %10330 = vmatpush2.msra.mxu0 0.0
        %10331 = vmatprep.subr.mxu0 0.0
        %10332 = vmatpush2.msra.mxu0 0.0
        %10333 = vmatprep.subr.mxu0 0.0
        %10334 = vmatpush2.msra.mxu0 0.0
        %10335 = vmatprep.subr.mxu0 0.0
        %10336 = vmatpush2.msra.mxu0 0.0
        %10337 = vmatprep.subr.mxu0 0.0
        %10338 = vmatpush2.msra.mxu0 0.0
        %10339 = vmatprep.subr.mxu0 0.0
        %10340 = vmatpush2.msra.mxu0 0.0
        %10341 = vmatprep.subr.mxu0 0.0
        %10342 = vmatpush2.msra.mxu0 0.0
        %10343 = vmatprep.subr.mxu0 0.0
        %10344 = vmatpush2.msra.mxu0 0.0
        %10345 = vmatprep.subr.mxu0 0.0
        %10346 = vmatpush2.msra.mxu0 0.0
        %10347 = vmatprep.subr.mxu0 0.0
        %10348 = vmatpush2.msra.mxu0 0.0
        %10349 = vmatprep.subr.mxu0 0.0
        %10350 = vmatpush2.msra.mxu0 0.0
        %10351 = vmatprep.subr.mxu0 0.0
        %10352 = vmatpush2.msra.mxu0 0.0
        %10353 = vmatprep.mubr.f32.mxu0 0.0
        %10354 = vmatmul.mubr.f32.gmra.mxu0 %v10287
        %v10355 = vpop.f32.mrf.mxu0
        %v10356 = vadd.f32 0.0, %v10355
        %v10357 = vpop.f32.mrf.mxu0
        %10358 = vdwg.mxu0
        %v10359 = vadd.f32 %v10270, %v10356
        %v10368 = vsel %vm5915, %v9736, %v9680
        %v10369 = vsel %vm5903, %v9792, %v10368
        %v10370 = vsel %vm5905, %v9848, %v10369
        %v10371 = vsel %vm5907, %v9904, %v10370
        %v10372 = vsel %vm5909, %v9960, %v10371
        %v10373 = vsel %vm5911, %v10016, %v10372
        %v10374 = vsel %vm5913, %v10072, %v10373
        %10376 = vmatprep.subr.mxu0 0.0
        %10377 = vmatpush1.msra.mxu0 %v744
        %10378 = vmatprep.subr.mxu0 0.0
        %10379 = vmatpush1.msra.mxu0 %v743
        %10380 = vmatprep.subr.mxu0 0.0
        %10381 = vmatpush1.msra.mxu0 %v742
        %10382 = vmatprep.subr.mxu0 0.0
        %10383 = vmatpush1.msra.mxu0 %v741
        %10384 = vmatprep.subr.mxu0 0.0
        %10385 = vmatpush1.msra.mxu0 %v740
        %10386 = vmatprep.subr.mxu0 0.0
        %10387 = vmatpush1.msra.mxu0 %v739
        %10388 = vmatprep.subr.mxu0 0.0
        %10389 = vmatpush1.msra.mxu0 %v738
        %10390 = vmatprep.subr.mxu0 0.0
        %10391 = vmatpush1.msra.mxu0 %v737
        %10392 = vmatprep.subr.mxu0 0.0
        %10393 = vmatpush1.msra.mxu0 %v736
        %10394 = vmatprep.subr.mxu0 0.0
        %10395 = vmatpush1.msra.mxu0 %v735
        %10396 = vmatprep.subr.mxu0 0.0
        %10397 = vmatpush1.msra.mxu0 %v734
        %10398 = vmatprep.subr.mxu0 0.0
        %10399 = vmatpush1.msra.mxu0 %v733
        %10400 = vmatprep.subr.mxu0 0.0
        %10401 = vmatpush1.msra.mxu0 %v732
        %10402 = vmatprep.subr.mxu0 0.0
        %10403 = vmatpush1.msra.mxu0 %v731
        %10404 = vmatprep.subr.mxu0 0.0
        %10405 = vmatpush1.msra.mxu0 %v730
        %10406 = vmatprep.subr.mxu0 0.0
        %10407 = vmatpush1.msra.mxu0 %v729
        %10408 = vmatprep.subr.mxu0 0.0
        %10409 = vmatpush2.msra.mxu0 0.0
        %10410 = vmatprep.subr.mxu0 0.0
        %10411 = vmatpush2.msra.mxu0 0.0
        %10412 = vmatprep.subr.mxu0 0.0
        %10413 = vmatpush2.msra.mxu0 0.0
        %10414 = vmatprep.subr.mxu0 0.0
        %10415 = vmatpush2.msra.mxu0 0.0
        %10416 = vmatprep.subr.mxu0 0.0
        %10417 = vmatpush2.msra.mxu0 0.0
        %10418 = vmatprep.subr.mxu0 0.0
        %10419 = vmatpush2.msra.mxu0 0.0
        %10420 = vmatprep.subr.mxu0 0.0
        %10421 = vmatpush2.msra.mxu0 0.0
        %10422 = vmatprep.subr.mxu0 0.0
        %10423 = vmatpush2.msra.mxu0 0.0
        %10424 = vmatprep.subr.mxu0 0.0
        %10425 = vmatpush2.msra.mxu0 0.0
        %10426 = vmatprep.subr.mxu0 0.0
        %10427 = vmatpush2.msra.mxu0 0.0
        %10428 = vmatprep.subr.mxu0 0.0
        %10429 = vmatpush2.msra.mxu0 0.0
        %10430 = vmatprep.subr.mxu0 0.0
        %10431 = vmatpush2.msra.mxu0 0.0
        %10432 = vmatprep.subr.mxu0 0.0
        %10433 = vmatpush2.msra.mxu0 0.0
        %10434 = vmatprep.subr.mxu0 0.0
        %10435 = vmatpush2.msra.mxu0 0.0
        %10436 = vmatprep.subr.mxu0 0.0
        %10437 = vmatpush2.msra.mxu0 0.0
        %10438 = vmatprep.subr.mxu0 0.0
        %10439 = vmatpush2.msra.mxu0 0.0
        %10440 = vmatprep.mubr.f32.mxu0 0.0
        %10441 = vmatmul.mubr.f32.gmra.mxu0 %v10374
        %v10442 = vpop.f32.mrf.mxu0
        %v10443 = vadd.f32 0.0, %v10442
        %v10444 = vpop.f32.mrf.mxu0
        %10445 = vdwg.mxu0
        %v10446 = vadd.f32 %v10359, %v10443
        %v10455 = vsel %vm5915, %v9743, %v9687
        %v10456 = vsel %vm5903, %v9799, %v10455
        %v10457 = vsel %vm5905, %v9855, %v10456
        %v10458 = vsel %vm5907, %v9911, %v10457
        %v10459 = vsel %vm5909, %v9967, %v10458
        %v10460 = vsel %vm5911, %v10023, %v10459
        %v10461 = vsel %vm5913, %v10079, %v10460
        %10463 = vmatprep.subr.mxu0 0.0
        %10464 = vmatpush1.msra.mxu0 %v760
        %10465 = vmatprep.subr.mxu0 0.0
        %10466 = vmatpush1.msra.mxu0 %v759
        %10467 = vmatprep.subr.mxu0 0.0
        %10468 = vmatpush1.msra.mxu0 %v758
        %10469 = vmatprep.subr.mxu0 0.0
        %10470 = vmatpush1.msra.mxu0 %v757
        %10471 = vmatprep.subr.mxu0 0.0
        %10472 = vmatpush1.msra.mxu0 %v756
        %10473 = vmatprep.subr.mxu0 0.0
        %10474 = vmatpush1.msra.mxu0 %v755
        %10475 = vmatprep.subr.mxu0 0.0
        %10476 = vmatpush1.msra.mxu0 %v754
        %10477 = vmatprep.subr.mxu0 0.0
        %10478 = vmatpush1.msra.mxu0 %v753
        %10479 = vmatprep.subr.mxu0 0.0
        %10480 = vmatpush1.msra.mxu0 %v752
        %10481 = vmatprep.subr.mxu0 0.0
        %10482 = vmatpush1.msra.mxu0 %v751
        %10483 = vmatprep.subr.mxu0 0.0
        %10484 = vmatpush1.msra.mxu0 %v750
        %10485 = vmatprep.subr.mxu0 0.0
        %10486 = vmatpush1.msra.mxu0 %v749
        %10487 = vmatprep.subr.mxu0 0.0
        %10488 = vmatpush1.msra.mxu0 %v748
        %10489 = vmatprep.subr.mxu0 0.0
        %10490 = vmatpush1.msra.mxu0 %v747
        %10491 = vmatprep.subr.mxu0 0.0
        %10492 = vmatpush1.msra.mxu0 %v746
        %10493 = vmatprep.subr.mxu0 0.0
        %10494 = vmatpush1.msra.mxu0 %v745
        %10495 = vmatprep.subr.mxu0 0.0
        %10496 = vmatpush2.msra.mxu0 0.0
        %10497 = vmatprep.subr.mxu0 0.0
        %10498 = vmatpush2.msra.mxu0 0.0
        %10499 = vmatprep.subr.mxu0 0.0
        %10500 = vmatpush2.msra.mxu0 0.0
        %10501 = vmatprep.subr.mxu0 0.0
        %10502 = vmatpush2.msra.mxu0 0.0
        %10503 = vmatprep.subr.mxu0 0.0
        %10504 = vmatpush2.msra.mxu0 0.0
        %10505 = vmatprep.subr.mxu0 0.0
        %10506 = vmatpush2.msra.mxu0 0.0
        %10507 = vmatprep.subr.mxu0 0.0
        %10508 = vmatpush2.msra.mxu0 0.0
        %10509 = vmatprep.subr.mxu0 0.0
        %10510 = vmatpush2.msra.mxu0 0.0
        %10511 = vmatprep.subr.mxu0 0.0
        %10512 = vmatpush2.msra.mxu0 0.0
        %10513 = vmatprep.subr.mxu0 0.0
        %10514 = vmatpush2.msra.mxu0 0.0
        %10515 = vmatprep.subr.mxu0 0.0
        %10516 = vmatpush2.msra.mxu0 0.0
        %10517 = vmatprep.subr.mxu0 0.0
        %10518 = vmatpush2.msra.mxu0 0.0
        %10519 = vmatprep.subr.mxu0 0.0
        %10520 = vmatpush2.msra.mxu0 0.0
        %10521 = vmatprep.subr.mxu0 0.0
        %10522 = vmatpush2.msra.mxu0 0.0
        %10523 = vmatprep.subr.mxu0 0.0
        %10524 = vmatpush2.msra.mxu0 0.0
        %10525 = vmatprep.subr.mxu0 0.0
        %10526 = vmatpush2.msra.mxu0 0.0
        %10527 = vmatprep.mubr.f32.mxu0 0.0
        %10528 = vmatmul.mubr.f32.gmra.mxu0 %v10461
        %v10529 = vpop.f32.mrf.mxu0
        %v10530 = vadd.f32 0.0, %v10529
        %v10531 = vpop.f32.mrf.mxu0
        %10532 = vdwg.mxu0
        %v10533 = vadd.f32 %v10446, %v10530
        %v10542 = vsel %vm5915, %v9750, %v9694
        %v10543 = vsel %vm5903, %v9806, %v10542
        %v10544 = vsel %vm5905, %v9862, %v10543
        %v10545 = vsel %vm5907, %v9918, %v10544
        %v10546 = vsel %vm5909, %v9974, %v10545
        %v10547 = vsel %vm5911, %v10030, %v10546
        %v10548 = vsel %vm5913, %v10086, %v10547
        %10550 = vmatprep.subr.mxu0 0.0
        %10551 = vmatpush1.msra.mxu0 %v776
        %10552 = vmatprep.subr.mxu0 0.0
        %10553 = vmatpush1.msra.mxu0 %v775
        %10554 = vmatprep.subr.mxu0 0.0
        %10555 = vmatpush1.msra.mxu0 %v774
        %10556 = vmatprep.subr.mxu0 0.0
        %10557 = vmatpush1.msra.mxu0 %v773
        %10558 = vmatprep.subr.mxu0 0.0
        %10559 = vmatpush1.msra.mxu0 %v772
        %10560 = vmatprep.subr.mxu0 0.0
        %10561 = vmatpush1.msra.mxu0 %v771
        %10562 = vmatprep.subr.mxu0 0.0
        %10563 = vmatpush1.msra.mxu0 %v770
        %10564 = vmatprep.subr.mxu0 0.0
        %10565 = vmatpush1.msra.mxu0 %v769
        %10566 = vmatprep.subr.mxu0 0.0
        %10567 = vmatpush1.msra.mxu0 %v768
        %10568 = vmatprep.subr.mxu0 0.0
        %10569 = vmatpush1.msra.mxu0 %v767
        %10570 = vmatprep.subr.mxu0 0.0
        %10571 = vmatpush1.msra.mxu0 %v766
        %10572 = vmatprep.subr.mxu0 0.0
        %10573 = vmatpush1.msra.mxu0 %v765
        %10574 = vmatprep.subr.mxu0 0.0
        %10575 = vmatpush1.msra.mxu0 %v764
        %10576 = vmatprep.subr.mxu0 0.0
        %10577 = vmatpush1.msra.mxu0 %v763
        %10578 = vmatprep.subr.mxu0 0.0
        %10579 = vmatpush1.msra.mxu0 %v762
        %10580 = vmatprep.subr.mxu0 0.0
        %10581 = vmatpush1.msra.mxu0 %v761
        %10582 = vmatprep.subr.mxu0 0.0
        %10583 = vmatpush2.msra.mxu0 0.0
        %10584 = vmatprep.subr.mxu0 0.0
        %10585 = vmatpush2.msra.mxu0 0.0
        %10586 = vmatprep.subr.mxu0 0.0
        %10587 = vmatpush2.msra.mxu0 0.0
        %10588 = vmatprep.subr.mxu0 0.0
        %10589 = vmatpush2.msra.mxu0 0.0
        %10590 = vmatprep.subr.mxu0 0.0
        %10591 = vmatpush2.msra.mxu0 0.0
        %10592 = vmatprep.subr.mxu0 0.0
        %10593 = vmatpush2.msra.mxu0 0.0
        %10594 = vmatprep.subr.mxu0 0.0
        %10595 = vmatpush2.msra.mxu0 0.0
        %10596 = vmatprep.subr.mxu0 0.0
        %10597 = vmatpush2.msra.mxu0 0.0
        %10598 = vmatprep.subr.mxu0 0.0
        %10599 = vmatpush2.msra.mxu0 0.0
        %10600 = vmatprep.subr.mxu0 0.0
        %10601 = vmatpush2.msra.mxu0 0.0
        %10602 = vmatprep.subr.mxu0 0.0
        %10603 = vmatpush2.msra.mxu0 0.0
        %10604 = vmatprep.subr.mxu0 0.0
        %10605 = vmatpush2.msra.mxu0 0.0
        %10606 = vmatprep.subr.mxu0 0.0
        %10607 = vmatpush2.msra.mxu0 0.0
        %10608 = vmatprep.subr.mxu0 0.0
        %10609 = vmatpush2.msra.mxu0 0.0
        %10610 = vmatprep.subr.mxu0 0.0
        %10611 = vmatpush2.msra.mxu0 0.0
        %10612 = vmatprep.subr.mxu0 0.0
        %10613 = vmatpush2.msra.mxu0 0.0
        %10614 = vmatprep.mubr.f32.mxu0 0.0
        %10615 = vmatmul.mubr.f32.gmra.mxu0 %v10548
        %v10616 = vpop.f32.mrf.mxu0
        %v10617 = vadd.f32 0.0, %v10616
        %v10618 = vpop.f32.mrf.mxu0
        %10619 = vdwg.mxu0
        %v10620 = vadd.f32 %v10533, %v10617
        %v10629 = vsel %vm5915, %v9757, %v9701
        %v10630 = vsel %vm5903, %v9813, %v10629
        %v10631 = vsel %vm5905, %v9869, %v10630
        %v10632 = vsel %vm5907, %v9925, %v10631
        %v10633 = vsel %vm5909, %v9981, %v10632
        %v10634 = vsel %vm5911, %v10037, %v10633
        %v10635 = vsel %vm5913, %v10093, %v10634
        %10637 = vmatprep.subr.mxu0 0.0
        %10638 = vmatpush1.msra.mxu0 %v792
        %10639 = vmatprep.subr.mxu0 0.0
        %10640 = vmatpush1.msra.mxu0 %v791
        %10641 = vmatprep.subr.mxu0 0.0
        %10642 = vmatpush1.msra.mxu0 %v790
        %10643 = vmatprep.subr.mxu0 0.0
        %10644 = vmatpush1.msra.mxu0 %v789
        %10645 = vmatprep.subr.mxu0 0.0
        %10646 = vmatpush1.msra.mxu0 %v788
        %10647 = vmatprep.subr.mxu0 0.0
        %10648 = vmatpush1.msra.mxu0 %v787
        %10649 = vmatprep.subr.mxu0 0.0
        %10650 = vmatpush1.msra.mxu0 %v786
        %10651 = vmatprep.subr.mxu0 0.0
        %10652 = vmatpush1.msra.mxu0 %v785
        %10653 = vmatprep.subr.mxu0 0.0
        %10654 = vmatpush1.msra.mxu0 %v784
        %10655 = vmatprep.subr.mxu0 0.0
        %10656 = vmatpush1.msra.mxu0 %v783
        %10657 = vmatprep.subr.mxu0 0.0
        %10658 = vmatpush1.msra.mxu0 %v782
        %10659 = vmatprep.subr.mxu0 0.0
        %10660 = vmatpush1.msra.mxu0 %v781
        %10661 = vmatprep.subr.mxu0 0.0
        %10662 = vmatpush1.msra.mxu0 %v780
        %10663 = vmatprep.subr.mxu0 0.0
        %10664 = vmatpush1.msra.mxu0 %v779
        %10665 = vmatprep.subr.mxu0 0.0
        %10666 = vmatpush1.msra.mxu0 %v778
        %10667 = vmatprep.subr.mxu0 0.0
        %10668 = vmatpush1.msra.mxu0 %v777
        %10669 = vmatprep.subr.mxu0 0.0
        %10670 = vmatpush2.msra.mxu0 0.0
        %10671 = vmatprep.subr.mxu0 0.0
        %10672 = vmatpush2.msra.mxu0 0.0
        %10673 = vmatprep.subr.mxu0 0.0
        %10674 = vmatpush2.msra.mxu0 0.0
        %10675 = vmatprep.subr.mxu0 0.0
        %10676 = vmatpush2.msra.mxu0 0.0
        %10677 = vmatprep.subr.mxu0 0.0
        %10678 = vmatpush2.msra.mxu0 0.0
        %10679 = vmatprep.subr.mxu0 0.0
        %10680 = vmatpush2.msra.mxu0 0.0
        %10681 = vmatprep.subr.mxu0 0.0
        %10682 = vmatpush2.msra.mxu0 0.0
        %10683 = vmatprep.subr.mxu0 0.0
        %10684 = vmatpush2.msra.mxu0 0.0
        %10685 = vmatprep.subr.mxu0 0.0
        %10686 = vmatpush2.msra.mxu0 0.0
        %10687 = vmatprep.subr.mxu0 0.0
        %10688 = vmatpush2.msra.mxu0 0.0
        %10689 = vmatprep.subr.mxu0 0.0
        %10690 = vmatpush2.msra.mxu0 0.0
        %10691 = vmatprep.subr.mxu0 0.0
        %10692 = vmatpush2.msra.mxu0 0.0
        %10693 = vmatprep.subr.mxu0 0.0
        %10694 = vmatpush2.msra.mxu0 0.0
        %10695 = vmatprep.subr.mxu0 0.0
        %10696 = vmatpush2.msra.mxu0 0.0
        %10697 = vmatprep.subr.mxu0 0.0
        %10698 = vmatpush2.msra.mxu0 0.0
        %10699 = vmatprep.subr.mxu0 0.0
        %10700 = vmatpush2.msra.mxu0 0.0
        %10701 = vmatprep.mubr.f32.mxu0 0.0
        %10702 = vmatmul.mubr.f32.gmra.mxu0 %v10635
        %v10703 = vpop.f32.mrf.mxu0
        %v10704 = vadd.f32 0.0, %v10703
        %v10705 = vpop.f32.mrf.mxu0
        %10706 = vdwg.mxu0
        %v10707 = vadd.f32 %v10620, %v10704
        %v10716 = vsel %vm5915, %v9764, %v9708
        %v10717 = vsel %vm5903, %v9820, %v10716
        %v10718 = vsel %vm5905, %v9876, %v10717
        %v10719 = vsel %vm5907, %v9932, %v10718
        %v10720 = vsel %vm5909, %v9988, %v10719
        %v10721 = vsel %vm5911, %v10044, %v10720
        %v10722 = vsel %vm5913, %v10100, %v10721
        %10724 = vmatprep.subr.mxu0 0.0
        %10725 = vmatpush1.msra.mxu0 %v808
        %10726 = vmatprep.subr.mxu0 0.0
        %10727 = vmatpush1.msra.mxu0 %v807
        %10728 = vmatprep.subr.mxu0 0.0
        %10729 = vmatpush1.msra.mxu0 %v806
        %10730 = vmatprep.subr.mxu0 0.0
        %10731 = vmatpush1.msra.mxu0 %v805
        %10732 = vmatprep.subr.mxu0 0.0
        %10733 = vmatpush1.msra.mxu0 %v804
        %10734 = vmatprep.subr.mxu0 0.0
        %10735 = vmatpush1.msra.mxu0 %v803
        %10736 = vmatprep.subr.mxu0 0.0
        %10737 = vmatpush1.msra.mxu0 %v802
        %10738 = vmatprep.subr.mxu0 0.0
        %10739 = vmatpush1.msra.mxu0 %v801
        %10740 = vmatprep.subr.mxu0 0.0
        %10741 = vmatpush1.msra.mxu0 %v800
        %10742 = vmatprep.subr.mxu0 0.0
        %10743 = vmatpush1.msra.mxu0 %v799
        %10744 = vmatprep.subr.mxu0 0.0
        %10745 = vmatpush1.msra.mxu0 %v798
        %10746 = vmatprep.subr.mxu0 0.0
        %10747 = vmatpush1.msra.mxu0 %v797
        %10748 = vmatprep.subr.mxu0 0.0
        %10749 = vmatpush1.msra.mxu0 %v796
        %10750 = vmatprep.subr.mxu0 0.0
        %10751 = vmatpush1.msra.mxu0 %v795
        %10752 = vmatprep.subr.mxu0 0.0
        %10753 = vmatpush1.msra.mxu0 %v794
        %10754 = vmatprep.subr.mxu0 0.0
        %10755 = vmatpush1.msra.mxu0 %v793
        %10756 = vmatprep.subr.mxu0 0.0
        %10757 = vmatpush2.msra.mxu0 0.0
        %10758 = vmatprep.subr.mxu0 0.0
        %10759 = vmatpush2.msra.mxu0 0.0
        %10760 = vmatprep.subr.mxu0 0.0
        %10761 = vmatpush2.msra.mxu0 0.0
        %10762 = vmatprep.subr.mxu0 0.0
        %10763 = vmatpush2.msra.mxu0 0.0
        %10764 = vmatprep.subr.mxu0 0.0
        %10765 = vmatpush2.msra.mxu0 0.0
        %10766 = vmatprep.subr.mxu0 0.0
        %10767 = vmatpush2.msra.mxu0 0.0
        %10768 = vmatprep.subr.mxu0 0.0
        %10769 = vmatpush2.msra.mxu0 0.0
        %10770 = vmatprep.subr.mxu0 0.0
        %10771 = vmatpush2.msra.mxu0 0.0
        %10772 = vmatprep.subr.mxu0 0.0
        %10773 = vmatpush2.msra.mxu0 0.0
        %10774 = vmatprep.subr.mxu0 0.0
        %10775 = vmatpush2.msra.mxu0 0.0
        %10776 = vmatprep.subr.mxu0 0.0
        %10777 = vmatpush2.msra.mxu0 0.0
        %10778 = vmatprep.subr.mxu0 0.0
        %10779 = vmatpush2.msra.mxu0 0.0
        %10780 = vmatprep.subr.mxu0 0.0
        %10781 = vmatpush2.msra.mxu0 0.0
        %10782 = vmatprep.subr.mxu0 0.0
        %10783 = vmatpush2.msra.mxu0 0.0
        %10784 = vmatprep.subr.mxu0 0.0
        %10785 = vmatpush2.msra.mxu0 0.0
        %10786 = vmatprep.subr.mxu0 0.0
        %10787 = vmatpush2.msra.mxu0 0.0
        %10788 = vmatprep.mubr.f32.mxu0 0.0
        %10789 = vmatmul.mubr.f32.gmra.mxu0 %v10722
        %v10790 = vpop.f32.mrf.mxu0
        %v10791 = vadd.f32 0.0, %v10790
        %v10792 = vpop.f32.mrf.mxu0
        %10793 = vdwg.mxu0
        %v10794 = vadd.f32 %v10707, %v10791
        %v10796 = vlaneseq
        %v10797 = vshrl.u32 %v10796, 7
        %v10798 = vsub.s32 0, %v10797
        %v10799 = vrot.slane %v809, %v10798
        %v10801 = vadd.f32 %v10794, %v10799
        %v10803 = vlaneseq
        %v10804 = vshrl.u32 %v10803, 7
        %v10805 = vsub.s32 0, %v10804
        %v10806 = vrot.slane %v826, %v10805
        %10808 = vmatprep.subr.mxu0 0.0
        %10809 = vmatpush1.msra.mxu0 %v825
        %10810 = vmatprep.subr.mxu0 0.0
        %10811 = vmatpush1.msra.mxu0 %v824
        %10812 = vmatprep.subr.mxu0 0.0
        %10813 = vmatpush1.msra.mxu0 %v823
        %10814 = vmatprep.subr.mxu0 0.0
        %10815 = vmatpush1.msra.mxu0 %v822
        %10816 = vmatprep.subr.mxu0 0.0
        %10817 = vmatpush1.msra.mxu0 %v821
        %10818 = vmatprep.subr.mxu0 0.0
        %10819 = vmatpush1.msra.mxu0 %v820
        %10820 = vmatprep.subr.mxu0 0.0
        %10821 = vmatpush1.msra.mxu0 %v819
        %10822 = vmatprep.subr.mxu0 0.0
        %10823 = vmatpush1.msra.mxu0 %v818
        %10824 = vmatprep.subr.mxu0 0.0
        %10825 = vmatpush1.msra.mxu0 %v817
        %10826 = vmatprep.subr.mxu0 0.0
        %10827 = vmatpush1.msra.mxu0 %v816
        %10828 = vmatprep.subr.mxu0 0.0
        %10829 = vmatpush1.msra.mxu0 %v815
        %10830 = vmatprep.subr.mxu0 0.0
        %10831 = vmatpush1.msra.mxu0 %v814
        %10832 = vmatprep.subr.mxu0 0.0
        %10833 = vmatpush1.msra.mxu0 %v813
        %10834 = vmatprep.subr.mxu0 0.0
        %10835 = vmatpush1.msra.mxu0 %v812
        %10836 = vmatprep.subr.mxu0 0.0
        %10837 = vmatpush1.msra.mxu0 %v811
        %10838 = vmatprep.subr.mxu0 0.0
        %10839 = vmatpush1.msra.mxu0 %v810
        %10840 = vmatprep.subr.mxu0 0.0
        %10841 = vmatpush2.msra.mxu0 0.0
        %10842 = vmatprep.subr.mxu0 0.0
        %10843 = vmatpush2.msra.mxu0 0.0
        %10844 = vmatprep.subr.mxu0 0.0
        %10845 = vmatpush2.msra.mxu0 0.0
        %10846 = vmatprep.subr.mxu0 0.0
        %10847 = vmatpush2.msra.mxu0 0.0
        %10848 = vmatprep.subr.mxu0 0.0
        %10849 = vmatpush2.msra.mxu0 0.0
        %10850 = vmatprep.subr.mxu0 0.0
        %10851 = vmatpush2.msra.mxu0 0.0
        %10852 = vmatprep.subr.mxu0 0.0
        %10853 = vmatpush2.msra.mxu0 0.0
        %10854 = vmatprep.subr.mxu0 0.0
        %10855 = vmatpush2.msra.mxu0 0.0
        %10856 = vmatprep.subr.mxu0 0.0
        %10857 = vmatpush2.msra.mxu0 0.0
        %10858 = vmatprep.subr.mxu0 0.0
        %10859 = vmatpush2.msra.mxu0 0.0
        %10860 = vmatprep.subr.mxu0 0.0
        %10861 = vmatpush2.msra.mxu0 0.0
        %10862 = vmatprep.subr.mxu0 0.0
        %10863 = vmatpush2.msra.mxu0 0.0
        %10864 = vmatprep.subr.mxu0 0.0
        %10865 = vmatpush2.msra.mxu0 0.0
        %10866 = vmatprep.subr.mxu0 0.0
        %10867 = vmatpush2.msra.mxu0 0.0
        %10868 = vmatprep.subr.mxu0 0.0
        %10869 = vmatpush2.msra.mxu0 0.0
        %10870 = vmatprep.subr.mxu0 0.0
        %10871 = vmatpush2.msra.mxu0 0.0
        %10872 = vmatprep.mubr.f32.mxu0 0.0
        %10873 = vmatmul.mubr.f32.gmra.mxu0 %v10801
        %v10874 = vpop.f32.mrf.mxu0
        %v10875 = vadd.f32 %v10806, %v10874
        %v10876 = vpop.f32.mrf.mxu0
        %10877 = vdwg.mxu0
        %10878 = vst [vmem:[%s566] sm:$0xff] %v10875
        %s10879 = sand.u32 %s340, 1
        %s10880 = scalar_lea.sflag [#allocation4], %s10879
        %s10881 = sand.u32 %s340, 1
        %s10882 = smul.addr %s10881, 8
        %s10883 = scalar_lea.vmem [#allocation16], %s10882
        // Predicated region
        $region109: #{tpu_custom_call.1} parent=75 // pred_check
          %p10884 = pneg %p350
        $region110: #{tpu_custom_call.1} parent=75 // pred_check_branch
          %10886 = sbr.rel (%p10884) target = $region112
        $region111: #{tpu_custom_call.1} parent=75 // pred_region
          %s10888 = ssub.s32 128, 128
          %10889 = vsyncadd %s10880, %s10888
          %s10890 = smul.addr %s33, 128
          %s10891 = scalar_lea.hbm %s14, %s10890
          %s10893 = sshll.u32 %s10883, 4
          %s10894 = int_to_ptr.vmem [resolvable:$true] %s10893
          %10896 = dma.vmem_to_hbm [thread:$0]  %s10894, 128, %s10891, %s10880
        $region112: #{tpu_custom_call.1} parent=75 // pred_fallthru
          _
      $region76: #{tpu_custom_call.1} parent=5 // pred_fallthru
        _
      %p10897 = scmp.le.s32.totalorder 2, %s28
      // Predicated region
      $region113: #{tpu_custom_call.1} parent=5 // pred_check
        %p10898 = pneg %p10897
      $region114: #{tpu_custom_call.1} parent=5 // pred_check_branch
        %10900 = sbr.rel (%p10898) target = $region116
      $region115: #{tpu_custom_call.1} parent=5 // pred_region
        %s10901 = ssub.s32 %s28, 2
        // Predicated region
        $region117: #{tpu_custom_call.1} parent=115 // pred_check
          %p10902 = pneg %p356
        $region118: #{tpu_custom_call.1} parent=115 // pred_check_branch
          %10904 = sbr.rel (%p10902) target = $region120
        $region119: #{tpu_custom_call.1} parent=115 // pred_region
          %s10905 = sand.u32 %s341, 1
          %s10906 = scalar_lea.sflag [#allocation4], %s10905
          %s10907 = sand.u32 %s341, 1
          %s10908 = smul.addr %s10907, 8
          %s10909 = scalar_lea.vmem [#allocation16], %s10908
          %10910 = dma.done %s10906, 128
        $region120: #{tpu_custom_call.1} parent=115 // pred_fallthru
          _
      $region116: #{tpu_custom_call.1} parent=5 // pred_fallthru
        _
    $region6: #{tpu_custom_call.1} parent=1 // loop_footer
      %s32 = sadd.s32 1, %s28
    $region7: #{tpu_custom_call.1} parent=1 // loop_footer_branch
      %27 = sbr.rel target = $region3
    $region8: #{tpu_custom_call.1} parent=1 // loop_exit
      _
    %10911 = vsyncpa [#allocation3], 1
    %s10912 = scalar_lea.sflag [#allocation3], 1
    %10913 = vsyncpa %s10912, 1
    %10914 = vsyncpa [#allocation6], 1
    %10915 = vsyncpa [#allocation9], 1
    %10916 = vsyncpa [#allocation12], 1
    %10917 = vsyncpa [#allocation15], 1
    %10918 = vsyncpa [#allocation4], 1
    %s10919 = scalar_lea.sflag [#allocation4], 1
    %10920 = vsyncpa %s10919, 1

</llo_original>
